<compile_context>
chip_gen: v7x
topology: tpu7x:2x2x1
jax: 0.10.0
libtpu: 0.0.40
codegen_flags: <defaults>
</compile_context>

<pallas_src>
import functools

import jax
import jax.numpy as jnp
from jax import lax
from jax.experimental import pallas as pl
from jax.experimental.pallas import tpu as pltpu

BN_EPS = 1e-5
LRELU_SLOPE = 0.01          # PyTorch nn.LeakyReLU() default
LANE = 128
SUBLANE = 8


def _round_up(x, m):
    return (x + m - 1) // m * m


@functools.lru_cache(maxsize=None)
def _tpu_defaults():
    """(max_tile_m, vmem_limit_bytes) per TPU generation.

    v5e/v6e have 128 MiB physical VMEM -> 1024-row tiles + 64 MiB scoped limit.
    v7x has 64 MiB -> keep the conservative 512 / 32 MiB setting.
    """
    max_tile_m, vmem_limit = 512, 32 * 1024 * 1024
    try:
        info = pltpu.get_tpu_info()
        vmem_cap = getattr(info, "vmem_capacity_bytes", 0)
        if vmem_cap and vmem_cap >= 96 * 1024 * 1024:
            max_tile_m, vmem_limit = 1024, 64 * 1024 * 1024
    except Exception:       # no TPU info available -> safe defaults
        pass
    return max_tile_m, vmem_limit


def _pick_tile_m(m, max_tile):
    """Largest multiple-of-16 divisor of m that is <= max_tile, so the grid
    needs no row padding (bf16-safe sublane multiple).  Falls back to a single
    full-extent tile, which is always allowed by the (8,128) block rule."""
    if m % 16 != 0:
        return m
    d = min(max_tile, m)
    d -= d % 16
    while d >= 16:
        if m % d == 0:
            return d
        d -= 16
    return m


# -----------------------------------------------------------------------------
# Pass 1 kernel: bf16 matmul (MXU, f32 acc) + per-tile BN partial statistics.
# y is written back in bf16; stats stay f32.
# -----------------------------------------------------------------------------
def _matmul_stats_kernel(p_ref, w_ref, y_ref, stats_ref):
    # p_ref: [1, TM, K] bf16   w_ref: [1, K, Cp] bf16
    y = jnp.dot(p_ref[0], w_ref[0], preferred_element_type=jnp.float32)
    y_ref[...] = y[None].astype(y_ref.dtype)            # bf16 writeback
    s = jnp.sum(y, axis=0, keepdims=True)                # [1, Cp] f32
    ss = jnp.sum(y * y, axis=0, keepdims=True)           # [1, Cp] f32
    stats_ref[...] = jnp.concatenate([s, ss], axis=0)[None, None]   # [1,1,2,Cp]


def _pass1_matmul_stats(patches_b, wmat_b, tile_m, vmem_limit):
    """patches_b: [P, M, K] bf16, wmat_b: [P, K, Cp] bf16 ->
       (y [P, M, Cp] bf16, stats [P, G, 2, Cp] f32)."""
    P, M, K = patches_b.shape
    Cp = wmat_b.shape[2]
    G = M // tile_m
    return pl.pallas_call(
        _matmul_stats_kernel,
        out_shape=(jax.ShapeDtypeStruct((P, M, Cp), jnp.bfloat16),
                   jax.ShapeDtypeStruct((P, G, 2, Cp), jnp.float32)),
        grid=(P, G),
        in_specs=[
            pl.BlockSpec((1, tile_m, K), lambda p, i: (p, i, 0)),
            # Full [K, Cp] weight resident per step (fine for decoder-sized K).
            pl.BlockSpec((1, K, Cp), lambda p, i: (p, 0, 0)),
        ],
        out_specs=(
            pl.BlockSpec((1, tile_m, Cp), lambda p, i: (p, i, 0)),
            pl.BlockSpec((1, 1, 2, Cp), lambda p, i: (p, i, 0, 0)),
        ),
        compiler_params=pltpu.CompilerParams(
            dimension_semantics=("parallel", "parallel"),
            vmem_limit_bytes=vmem_limit),
    )(patches_b, wmat_b)


# -----------------------------------------------------------------------------
# Pass 2 kernel: y*scale + shift (folded BN affine) -> LeakyReLU -> (+residual).
# Optionally also emits a bf16 copy of the new activation for the next layer.
# -----------------------------------------------------------------------------
def _bn_lrelu_kernel(*refs, has_residual, emit_bf16):
    y_ref, scale_ref, shift_ref = refs[:3]
    idx = 3
    res_ref = None
    if has_residual:
        res_ref = refs[idx]
        idx += 1
    out_ref = refs[idx]
    bf_ref = refs[idx + 1] if emit_bf16 else None

    z = y_ref[0].astype(jnp.float32) * scale_ref[...] + shift_ref[...]  # f32 FMA
    z = jnp.maximum(z, LRELU_SLOPE * z)                  # LeakyReLU, slope<1
    if has_residual:
        z = res_ref[0] + z
    out_ref[...] = z[None]
    if emit_bf16:
        bf_ref[...] = z[None].astype(jnp.bfloat16)


def _pass2_bn_lrelu(y, scale_2d, shift_2d, residual, tile_m, vmem_limit,
                    emit_bf16):
    P, M, Cp = y.shape
    G = M // tile_m
    has_res = residual is not None
    tile_spec = pl.BlockSpec((1, tile_m, Cp), lambda p, i: (p, i, 0))
    vec_spec = pl.BlockSpec((1, Cp), lambda p, i: (0, 0))

    in_specs = [tile_spec, vec_spec, vec_spec]
    args = [y, scale_2d, shift_2d]
    if has_res:
        in_specs.append(tile_spec)
        args.append(residual)

    if emit_bf16:
        out_shape = (jax.ShapeDtypeStruct((P, M, Cp), jnp.float32),
                     jax.ShapeDtypeStruct((P, M, Cp), jnp.bfloat16))
        out_specs = (tile_spec, tile_spec)
    else:
        out_shape = jax.ShapeDtypeStruct((P, M, Cp), jnp.float32)
        out_specs = tile_spec

    kernel = functools.partial(_bn_lrelu_kernel,
                               has_residual=has_res, emit_bf16=emit_bf16)
    # y is bf16 now, so alias the f32 output onto the residual slab instead.
    aliases = {3: 0} if has_res else {}
    outs = pl.pallas_call(
        kernel,
        out_shape=out_shape,
        grid=(P, G),
        in_specs=in_specs,
        out_specs=out_specs,
        input_output_aliases=aliases,
        compiler_params=pltpu.CompilerParams(
            dimension_semantics=("parallel", "parallel"),
            vmem_limit_bytes=vmem_limit),
    )(*args)
    if emit_bf16:
        return outs[0], outs[1]
    return outs, None


# -----------------------------------------------------------------------------
# Fused block: (patches @ W) -> BatchNorm(train) -> LeakyReLU -> (+residual)
# -----------------------------------------------------------------------------
def _fused_conv_bn_lrelu(patches_b, wmat_b, gamma, beta, m_total,
                         residual=None, emit_bf16=False):
    """patches_b: [P, M, K] bf16 (K % 128 == 0), wmat_b: [P, K, Cp] bf16.
    gamma/beta: [C] f32 (C <= Cp).  m_total: number of real output pixels (BN
    divisor).  residual: optional [P, M, Cp] f32 (aliased with the output).
    Returns (act_f32 [P, M, Cp], act_bf16 or None)."""
    P, M, K = patches_b.shape
    Cp = wmat_b.shape[2]
    assert K % LANE == 0 and Cp % LANE == 0, (K, Cp)
    max_tile_m, vmem_limit = _tpu_defaults()
    tile_m = _pick_tile_m(M, max_tile_m)
    assert M % tile_m == 0

    y, stats = _pass1_matmul_stats(patches_b, wmat_b, tile_m, vmem_limit)

    # Tiny [Cp]-sized reduction + BN fold (plain XLA; negligible cost).
    totals = jnp.sum(stats, axis=(0, 1))                  # [2, Cp]
    inv_m = jnp.float32(1.0 / m_total)
    mean = totals[0] * inv_m
    var = jnp.maximum(totals[1] * inv_m - mean * mean, 0.0)   # biased variance
    inv_std = lax.rsqrt(var + BN_EPS)
    C = gamma.shape[0]
    g_pad = jnp.pad(gamma.astype(jnp.float32), (0, Cp - C))
    b_pad = jnp.pad(beta.astype(jnp.float32), (0, Cp - C))
    scale = (g_pad * inv_std)[None, :]                    # [1, Cp]
    shift = (b_pad - mean * g_pad * inv_std)[None, :]     # [1, Cp]

    if residual is not None:
        assert residual.shape == (P, M, Cp), (residual.shape, (P, M, Cp))
    return _pass2_bn_lrelu(y, scale, shift, residual, tile_m, vmem_limit,
                           emit_bf16)


# -----------------------------------------------------------------------------
# im2col glue (bf16, channel-padded NHWC, no zero-inserted inputs)
# -----------------------------------------------------------------------------
def _im2col_upsample_4x4_s2(x_b, w, cinp, cp):
    """Sub-pixel decomposition of ConvTranspose2d(k=4, stride=2, pad=1).
    x_b: [N, H, W, cinp] bf16 (channel-padded NHWC); w: [Cin, Cout, 4, 4] f32.
    Returns patches [4, N*H*W, 4*cinp] bf16, wmat [4, 4*cinp, cp] bf16;
    phase p = py*2 + px produces output pixels (2h+py, 2w+px)."""
    N, H, W, _ = x_b.shape
    Cin, Cout = w.shape[0], w.shape[1]
    # phase -> ((pad_before, pad_after), (kernel idx for tap offset 0, 1))
    #   even outputs: x[m-1]*w[3] + x[m]*w[1] ; odd: x[m]*w[2] + x[m+1]*w[0]
    taps = {0: ((1, 0), (3, 1)), 1: ((0, 1), (2, 0))}
    patch_list, w_list = [], []
    for py in range(2):
        (pt, pb), kys = taps[py]
        for px in range(2):
            (lt, lb), kxs = taps[px]
            xp = jnp.pad(x_b, ((0, 0), (pt, pb), (lt, lb), (0, 0)))
            slabs, rows = [], []
            for a in range(2):
                for b in range(2):
                    slabs.append(xp[:, a:a + H, b:b + W, :])
                    wk = w[:, :, kys[a], kxs[b]]                   # [Cin, Cout]
                    rows.append(jnp.pad(wk, ((0, cinp - Cin), (0, cp - Cout))))
            patch_list.append(
                jnp.concatenate(slabs, axis=-1).reshape(N * H * W, 4 * cinp))
            w_list.append(jnp.concatenate(rows, axis=0))           # [4*cinp, cp]
    return (jnp.stack(patch_list, axis=0),
            jnp.stack(w_list, axis=0).astype(jnp.bfloat16))


def _im2col_3x3_same(x_b, w, cp):
    """ConvTranspose2d(k=3, stride=1, pad=1) == 3x3 'same' correlation with the
    spatially flipped kernel.  x_b: [N, H, W, cp] bf16 (channel-padded);
    w: [Cin, Cout, 3, 3] f32.
    Returns patches [N*H*W, 9*cp] bf16, wmat [9*cp, cp] bf16."""
    N, H, W, _ = x_b.shape
    Cin, Cout = w.shape[0], w.shape[1]
    xp = jnp.pad(x_b, ((0, 0), (1, 1), (1, 1), (0, 0)))
    slabs, rows = [], []
    for a in range(3):
        for b in range(3):
            slabs.append(xp[:, a:a + H, b:b + W, :])
            wk = w[:, :, 2 - a, 2 - b]                             # flipped
            rows.append(jnp.pad(wk, ((0, cp - Cin), (0, cp - Cout))))
    patches = jnp.concatenate(slabs, axis=-1).reshape(N * H * W, 9 * cp)
    wmat = jnp.concatenate(rows, axis=0).astype(jnp.bfloat16)
    return patches, wmat


# -----------------------------------------------------------------------------
# DecoderLayer forward
# -----------------------------------------------------------------------------
def init_decoder_layer_params(key, nfilters, nlayers):
    nf2 = nfilters // 2
    keys = jax.random.split(key, nlayers + 1)
    params = {
        "up_w": 0.1 * jax.random.normal(keys[0], (nfilters, nf2, 4, 4),
                                        jnp.float32),
        "up_gamma": jnp.ones((nf2,), jnp.float32),     # BatchNorm2d defaults
        "up_beta": jnp.zeros((nf2,), jnp.float32),
        "res": [],
    }
    for l in range(nlayers):
        params["res"].append(
            (0.1 * jax.random.normal(keys[l + 1], (nf2, nf2, 3, 3), jnp.float32),
             jnp.ones((nf2,), jnp.float32),
             jnp.zeros((nf2,), jnp.float32)))
    return params


def decoder_layer_forward(x_nchw, params):
    """x: [N, nfilters, H, W] -> [N, nfilters//2, 2H, 2W]  (NCHW, float32)."""
    x = jnp.transpose(x_nchw, (0, 2, 3, 1)).astype(jnp.float32)   # NHWC once
    N, H, W, Cin = x.shape
    Cout = params["up_w"].shape[1]
    Cinp = _round_up(Cin, LANE)
    Cp = _round_up(Cout, LANE)

    # --- upscale: ConvTranspose2d(nf, nf/2, 4, 2, 1) + BN + LeakyReLU ---
    x_b = jnp.pad(x.astype(jnp.bfloat16),
                  ((0, 0), (0, 0), (0, 0), (0, Cinp - Cin)))
    patches_b, wmat_b = _im2col_upsample_4x4_s2(x_b, params["up_w"], Cinp, Cp)
    out_b, _ = _fused_conv_bn_lrelu(patches_b, wmat_b,
                                    params["up_gamma"], params["up_beta"],
                                    m_total=4 * N * H * W)
    # Pixel shuffle (phase-major -> spatial), keeping the Cp channel padding so
    # the activation stays a lane-dense, padded NHWC slab for the whole stack.
    Ho, Wo = 2 * H, 2 * W
    phases = out_b.reshape(2, 2, N, H, W, Cp)
    act = jnp.transpose(phases, (2, 3, 0, 4, 1, 5)).reshape(N, Ho, Wo, Cp)
    act_b = act.astype(jnp.bfloat16)

    # --- residual stack: x = x + LeakyReLU(BN(ConvT3x3(x))) ---
    M = N * Ho * Wo
    nres = len(params["res"])
    for li, (w, g, b) in enumerate(params["res"]):
        patches, wmat = _im2col_3x3_same(act_b.reshape(N, Ho, Wo, Cp), w, Cp)
        act_flat, act_b = _fused_conv_bn_lrelu(
            patches[None], wmat[None], g, b, m_total=M,
            residual=act.reshape(1, M, Cp),      # aliased with the f32 output
            emit_bf16=(li != nres - 1))          # bf16 act for the next im2col
        act = act_flat.reshape(N, Ho, Wo, Cp)

    out = act[..., :Cout]
    return jnp.transpose(out, (0, 3, 1, 2))                   # back to NCHW


if __name__ == "__main__":
    batch, nfilters, map_size, nlayers = 2, 8, 8, 2
    key = jax.random.PRNGKey(0)
    k_x, k_p = jax.random.split(key)

    x = jax.random.normal(k_x, (batch, nfilters, map_size, map_size),
                          jnp.float32)
    params = init_decoder_layer_params(k_p, nfilters, nlayers)

    out = jax.jit(decoder_layer_forward)(x, params)
    out = jax.block_until_ready(out)

    expected_shape = (batch, nfilters // 2, map_size * 2, map_size * 2)
    assert out.shape == expected_shape, (out.shape, expected_shape)
    assert bool(jnp.all(jnp.isfinite(out)))
    print("KERNEL_OK")
</pallas_src>

<mosaic_0001>
module attributes {stable_mosaic.version = 11 : i64} {
  func.func @_matmul_stats_kernel(%arg0: i32, %arg1: i32, %arg2: memref<1x128x512xbf16, #tpu.memory_space<vmem>>, %arg3: memref<1x512x128xbf16, #tpu.memory_space<vmem>>, %arg4: memref<1x128x128xbf16, #tpu.memory_space<vmem>>, %arg5: memref<1x1x2x128xf32, #tpu.memory_space<vmem>>) attributes {dimension_semantics = [#tpu.dimension_semantics<parallel>, #tpu.dimension_semantics<parallel>], iteration_bounds = array<i64: 4, 1>, scalar_prefetch = 0 : i64, scratch_operands = 0 : i64, tpu.core_type = #tpu.core_type<tc>, window_params = [{transform_indices = @transform_0, window_bounds = array<i64: 1, 128, 512>}, {transform_indices = @transform_1, window_bounds = array<i64: 1, 512, 128>}, {transform_indices = @transform_2, window_bounds = array<i64: 1, 128, 128>}, {transform_indices = @transform_3, window_bounds = array<i64: 1, 1, 2, 128>}]} {
    %c0 = arith.constant 0 : index
    %c0_0 = arith.constant 0 : index
    %c0_1 = arith.constant 0 : index
    %0 = vector.load %arg2[%c0, %c0_0, %c0_1] : memref<1x128x512xbf16, #tpu.memory_space<vmem>>, vector<1x128x512xbf16>
    %1 = vector.shape_cast %0 : vector<1x128x512xbf16> to vector<128x512xbf16>
    %c0_2 = arith.constant 0 : index
    %c0_3 = arith.constant 0 : index
    %c0_4 = arith.constant 0 : index
    %2 = vector.load %arg3[%c0_2, %c0_3, %c0_4] : memref<1x512x128xbf16, #tpu.memory_space<vmem>>, vector<1x512x128xbf16>
    %3 = vector.shape_cast %2 : vector<1x512x128xbf16> to vector<512x128xbf16>
    %cst = arith.constant dense<0.000000e+00> : vector<128x128xf32>
    %4 = tpu.matmul %1, %3, %cst {dimension_numbers = #tpu.dot_dimension_numbers<[1], [0], [0], [1], [0, 0, 1, 1], [], []>} : vector<128x512xbf16>, vector<512x128xbf16>, vector<128x128xf32> -> vector<128x128xf32>
    %5 = vector.shape_cast %4 : vector<128x128xf32> to vector<1x128x128xf32>
    %6 = arith.truncf %5 : vector<1x128x128xf32> to vector<1x128x128xbf16>
    %c0_5 = arith.constant 0 : index
    %c0_6 = arith.constant 0 : index
    %c0_7 = arith.constant 0 : index
    %7 = vector.load %arg4[%c0_5, %c0_6, %c0_7] : memref<1x128x128xbf16, #tpu.memory_space<vmem>>, vector<1x128x128xbf16>
    tpu.vector_store %arg4[%c0_5, %c0_6, %c0_7], %6 {strides = array<i32>} : memref<1x128x128xbf16, #tpu.memory_space<vmem>>, vector<1x128x128xbf16>,
    %cst_8 = arith.constant dense<0.000000e+00> : vector<128xf32>
    %8 = vector.multi_reduction <add>, %4, %cst_8 [0] : vector<128x128xf32> to vector<128xf32>
    %9 = vector.shape_cast %8 : vector<128xf32> to vector<1x128xf32>
    %10 = arith.mulf %4, %4 : vector<128x128xf32>
    %cst_9 = arith.constant dense<0.000000e+00> : vector<128xf32>
    %11 = vector.multi_reduction <add>, %10, %cst_9 [0] : vector<128x128xf32> to vector<128xf32>
    %12 = vector.shape_cast %11 : vector<128xf32> to vector<1x128xf32>
    %13 = tpu.concatenate %9, %12 in 0 : vector<1x128xf32>, vector<1x128xf32> -> vector<2x128xf32>
    %14 = vector.shape_cast %13 : vector<2x128xf32> to vector<1x1x2x128xf32>
    %c0_10 = arith.constant 0 : index
    %c0_11 = arith.constant 0 : index
    %c0_12 = arith.constant 0 : index
    %c0_13 = arith.constant 0 : index
    %15 = vector.load %arg5[%c0_10, %c0_11, %c0_12, %c0_13] : memref<1x1x2x128xf32, #tpu.memory_space<vmem>>, vector<1x1x2x128xf32>
    tpu.vector_store %arg5[%c0_10, %c0_11, %c0_12, %c0_13], %14 {strides = array<i32>} : memref<1x1x2x128xf32, #tpu.memory_space<vmem>>, vector<1x1x2x128xf32>,
    return
  }
  func.func @transform_0(%arg0: i32, %arg1: i32) -> (i32, i32, i32) {
    %c0_i32 = arith.constant 0 : i32
    %c0_i32_0 = arith.constant 0 : i32
    return %arg0, %arg1, %c0_i32 : i32, i32, i32
  }
  func.func @transform_1(%arg0: i32, %arg1: i32) -> (i32, i32, i32) {
    %c0_i32 = arith.constant 0 : i32
    %c0_i32_0 = arith.constant 0 : i32
    %c0_i32_1 = arith.constant 0 : i32
    return %arg0, %c0_i32, %c0_i32_0 : i32, i32, i32
  }
  func.func @transform_2(%arg0: i32, %arg1: i32) -> (i32, i32, i32) {
    %c0_i32 = arith.constant 0 : i32
    %c0_i32_0 = arith.constant 0 : i32
    return %arg0, %arg1, %c0_i32 : i32, i32, i32
  }
  func.func @transform_3(%arg0: i32, %arg1: i32) -> (i32, i32, i32, i32) {
    %c0_i32 = arith.constant 0 : i32
    %c0_i32_0 = arith.constant 0 : i32
    %c0_i32_1 = arith.constant 0 : i32
    return %arg0, %arg1, %c0_i32, %c0_i32_0 : i32, i32, i32, i32
  }
}

module attributes {stable_mosaic.version = 11 : i64} {
  func.func @_bn_lrelu_kernel(%arg0: i32, %arg1: i32, %arg2: memref<1x128x128xbf16, #tpu.memory_space<vmem>>, %arg3: memref<1x128xf32, #tpu.memory_space<vmem>>, %arg4: memref<1x128xf32, #tpu.memory_space<vmem>>, %arg5: memref<1x128x128xf32, #tpu.memory_space<vmem>>) attributes {dimension_semantics = [#tpu.dimension_semantics<parallel>, #tpu.dimension_semantics<parallel>], iteration_bounds = array<i64: 4, 1>, scalar_prefetch = 0 : i64, scratch_operands = 0 : i64, tpu.core_type = #tpu.core_type<tc>, window_params = [{transform_indices = @transform_0, window_bounds = array<i64: 1, 128, 128>}, {pipeline_mode = #tpu.pipeline_mode<synchronous>, transform_indices = @transform_1, window_bounds = array<i64: 1, 128>}, {pipeline_mode = #tpu.pipeline_mode<synchronous>, transform_indices = @transform_2, window_bounds = array<i64: 1, 128>}, {transform_indices = @transform_3, window_bounds = array<i64: 1, 128, 128>}]} {
    %c0 = arith.constant 0 : index
    %c0_0 = arith.constant 0 : index
    %c0_1 = arith.constant 0 : index
    %0 = vector.load %arg2[%c0, %c0_0, %c0_1] : memref<1x128x128xbf16, #tpu.memory_space<vmem>>, vector<1x128x128xbf16>
    %1 = vector.shape_cast %0 : vector<1x128x128xbf16> to vector<128x128xbf16>
    %2 = arith.extf %1 : vector<128x128xbf16> to vector<128x128xf32>
    %c0_2 = arith.constant 0 : index
    %c0_3 = arith.constant 0 : index
    %3 = vector.load %arg3[%c0_2, %c0_3] : memref<1x128xf32, #tpu.memory_space<vmem>>, vector<1x128xf32>
    %4 = vector.broadcast %3 : vector<1x128xf32> to vector<128x128xf32>
    %5 = arith.mulf %2, %4 : vector<128x128xf32>
    %c0_4 = arith.constant 0 : index
    %c0_5 = arith.constant 0 : index
    %6 = vector.load %arg4[%c0_4, %c0_5] : memref<1x128xf32, #tpu.memory_space<vmem>>, vector<1x128xf32>
    %7 = vector.broadcast %6 : vector<1x128xf32> to vector<128x128xf32>
    %8 = arith.addf %5, %7 : vector<128x128xf32>
    %cst = arith.constant 0.00999999977 : f32
    %9 = vector.broadcast %cst : f32 to vector<128x128xf32>
    %10 = arith.mulf %9, %8 : vector<128x128xf32>
    %11 = arith.maximumf %8, %10 : vector<128x128xf32>
    %12 = vector.shape_cast %11 : vector<128x128xf32> to vector<1x128x128xf32>
    %c0_6 = arith.constant 0 : index
    %c0_7 = arith.constant 0 : index
    %c0_8 = arith.constant 0 : index
    %13 = vector.load %arg5[%c0_6, %c0_7, %c0_8] : memref<1x128x128xf32, #tpu.memory_space<vmem>>, vector<1x128x128xf32>
    tpu.vector_store %arg5[%c0_6, %c0_7, %c0_8], %12 {strides = array<i32>} : memref<1x128x128xf32, #tpu.memory_space<vmem>>, vector<1x128x128xf32>,
    return
  }
  func.func @transform_0(%arg0: i32, %arg1: i32) -> (i32, i32, i32) {
    %c0_i32 = arith.constant 0 : i32
    %c0_i32_0 = arith.constant 0 : i32
    return %arg0, %arg1, %c0_i32 : i32, i32, i32
  }
  func.func @transform_1(%arg0: i32, %arg1: i32) -> (i32, i32) {
    %c0_i32 = arith.constant 0 : i32
    %c0_i32_0 = arith.constant 0 : i32
    %c0_i32_1 = arith.constant 0 : i32
    return %c0_i32, %c0_i32_0 : i32, i32
  }
  func.func @transform_2(%arg0: i32, %arg1: i32) -> (i32, i32) {
    %c0_i32 = arith.constant 0 : i32
    %c0_i32_0 = arith.constant 0 : i32
    %c0_i32_1 = arith.constant 0 : i32
    return %c0_i32, %c0_i32_0 : i32, i32
  }
  func.func @transform_3(%arg0: i32, %arg1: i32) -> (i32, i32, i32) {
    %c0_i32 = arith.constant 0 : i32
    %c0_i32_0 = arith.constant 0 : i32
    return %arg0, %arg1, %c0_i32 : i32, i32, i32
  }
}

module attributes {stable_mosaic.version = 11 : i64} {
  func.func @_matmul_stats_kernel(%arg0: i32, %arg1: i32, %arg2: memref<1x512x1152xbf16, #tpu.memory_space<vmem>>, %arg3: memref<1x1152x128xbf16, #tpu.memory_space<vmem>>, %arg4: memref<1x512x128xbf16, #tpu.memory_space<vmem>>, %arg5: memref<1x1x2x128xf32, #tpu.memory_space<vmem>>) attributes {dimension_semantics = [#tpu.dimension_semantics<parallel>, #tpu.dimension_semantics<parallel>], iteration_bounds = array<i64: 1, 1>, scalar_prefetch = 0 : i64, scratch_operands = 0 : i64, tpu.core_type = #tpu.core_type<tc>, window_params = [{transform_indices = @transform_0, window_bounds = array<i64: 1, 512, 1152>}, {transform_indices = @transform_1, window_bounds = array<i64: 1, 1152, 128>}, {transform_indices = @transform_2, window_bounds = array<i64: 1, 512, 128>}, {transform_indices = @transform_3, window_bounds = array<i64: 1, 1, 2, 128>}]} {
    %c0 = arith.constant 0 : index
    %c0_0 = arith.constant 0 : index
    %c0_1 = arith.constant 0 : index
    %0 = vector.load %arg2[%c0, %c0_0, %c0_1] : memref<1x512x1152xbf16, #tpu.memory_space<vmem>>, vector<1x512x1152xbf16>
    %1 = vector.shape_cast %0 : vector<1x512x1152xbf16> to vector<512x1152xbf16>
    %c0_2 = arith.constant 0 : index
    %c0_3 = arith.constant 0 : index
    %c0_4 = arith.constant 0 : index
    %2 = vector.load %arg3[%c0_2, %c0_3, %c0_4] : memref<1x1152x128xbf16, #tpu.memory_space<vmem>>, vector<1x1152x128xbf16>
    %3 = vector.shape_cast %2 : vector<1x1152x128xbf16> to vector<1152x128xbf16>
    %cst = arith.constant dense<0.000000e+00> : vector<512x128xf32>
    %4 = tpu.matmul %1, %3, %cst {dimension_numbers = #tpu.dot_dimension_numbers<[1], [0], [0], [1], [0, 0, 1, 1], [], []>} : vector<512x1152xbf16>, vector<1152x128xbf16>, vector<512x128xf32> -> vector<512x128xf32>
    %5 = vector.shape_cast %4 : vector<512x128xf32> to vector<1x512x128xf32>
    %6 = arith.truncf %5 : vector<1x512x128xf32> to vector<1x512x128xbf16>
    %c0_5 = arith.constant 0 : index
    %c0_6 = arith.constant 0 : index
    %c0_7 = arith.constant 0 : index
    %7 = vector.load %arg4[%c0_5, %c0_6, %c0_7] : memref<1x512x128xbf16, #tpu.memory_space<vmem>>, vector<1x512x128xbf16>
    tpu.vector_store %arg4[%c0_5, %c0_6, %c0_7], %6 {strides = array<i32>} : memref<1x512x128xbf16, #tpu.memory_space<vmem>>, vector<1x512x128xbf16>,
    %cst_8 = arith.constant dense<0.000000e+00> : vector<128xf32>
    %8 = vector.multi_reduction <add>, %4, %cst_8 [0] : vector<512x128xf32> to vector<128xf32>
    %9 = vector.shape_cast %8 : vector<128xf32> to vector<1x128xf32>
    %10 = arith.mulf %4, %4 : vector<512x128xf32>
    %cst_9 = arith.constant dense<0.000000e+00> : vector<128xf32>
    %11 = vector.multi_reduction <add>, %10, %cst_9 [0] : vector<512x128xf32> to vector<128xf32>
    %12 = vector.shape_cast %11 : vector<128xf32> to vector<1x128xf32>
    %13 = tpu.concatenate %9, %12 in 0 : vector<1x128xf32>, vector<1x128xf32> -> vector<2x128xf32>
    %14 = vector.shape_cast %13 : vector<2x128xf32> to vector<1x1x2x128xf32>
    %c0_10 = arith.constant 0 : index
    %c0_11 = arith.constant 0 : index
    %c0_12 = arith.constant 0 : index
    %c0_13 = arith.constant 0 : index
    %15 = vector.load %arg5[%c0_10, %c0_11, %c0_12, %c0_13] : memref<1x1x2x128xf32, #tpu.memory_space<vmem>>, vector<1x1x2x128xf32>
    tpu.vector_store %arg5[%c0_10, %c0_11, %c0_12, %c0_13], %14 {strides = array<i32>} : memref<1x1x2x128xf32, #tpu.memory_space<vmem>>, vector<1x1x2x128xf32>,
    return
  }
  func.func @transform_0(%arg0: i32, %arg1: i32) -> (i32, i32, i32) {
    %c0_i32 = arith.constant 0 : i32
    %c0_i32_0 = arith.constant 0 : i32
    return %arg0, %arg1, %c0_i32 : i32, i32, i32
  }
  func.func @transform_1(%arg0: i32, %arg1: i32) -> (i32, i32, i32) {
    %c0_i32 = arith.constant 0 : i32
    %c0_i32_0 = arith.constant 0 : i32
    %c0_i32_1 = arith.constant 0 : i32
    return %arg0, %c0_i32, %c0_i32_0 : i32, i32, i32
  }
  func.func @transform_2(%arg0: i32, %arg1: i32) -> (i32, i32, i32) {
    %c0_i32 = arith.constant 0 : i32
    %c0_i32_0 = arith.constant 0 : i32
    return %arg0, %arg1, %c0_i32 : i32, i32, i32
  }
  func.func @transform_3(%arg0: i32, %arg1: i32) -> (i32, i32, i32, i32) {
    %c0_i32 = arith.constant 0 : i32
    %c0_i32_0 = arith.constant 0 : i32
    %c0_i32_1 = arith.constant 0 : i32
    return %arg0, %arg1, %c0_i32, %c0_i32_0 : i32, i32, i32, i32
  }
}

module attributes {stable_mosaic.version = 11 : i64} {
  func.func @_bn_lrelu_kernel(%arg0: i32, %arg1: i32, %arg2: memref<1x512x128xbf16, #tpu.memory_space<vmem>>, %arg3: memref<1x128xf32, #tpu.memory_space<vmem>>, %arg4: memref<1x128xf32, #tpu.memory_space<vmem>>, %arg5: memref<1x512x128xf32, #tpu.memory_space<vmem>>, %arg6: memref<1x512x128xf32, #tpu.memory_space<vmem>>, %arg7: memref<1x512x128xbf16, #tpu.memory_space<vmem>>) attributes {dimension_semantics = [#tpu.dimension_semantics<parallel>, #tpu.dimension_semantics<parallel>], iteration_bounds = array<i64: 1, 1>, scalar_prefetch = 0 : i64, scratch_operands = 0 : i64, tpu.core_type = #tpu.core_type<tc>, window_params = [{transform_indices = @transform_0, window_bounds = array<i64: 1, 512, 128>}, {pipeline_mode = #tpu.pipeline_mode<synchronous>, transform_indices = @transform_1, window_bounds = array<i64: 1, 128>}, {pipeline_mode = #tpu.pipeline_mode<synchronous>, transform_indices = @transform_2, window_bounds = array<i64: 1, 128>}, {transform_indices = @transform_3, window_bounds = array<i64: 1, 512, 128>}, {transform_indices = @transform_4, window_bounds = array<i64: 1, 512, 128>}, {transform_indices = @transform_5, window_bounds = array<i64: 1, 512, 128>}]} {
    %c0 = arith.constant 0 : index
    %c0_0 = arith.constant 0 : index
    %c0_1 = arith.constant 0 : index
    %0 = vector.load %arg2[%c0, %c0_0, %c0_1] : memref<1x512x128xbf16, #tpu.memory_space<vmem>>, vector<1x512x128xbf16>
    %1 = vector.shape_cast %0 : vector<1x512x128xbf16> to vector<512x128xbf16>
    %2 = arith.extf %1 : vector<512x128xbf16> to vector<512x128xf32>
    %c0_2 = arith.constant 0 : index
    %c0_3 = arith.constant 0 : index
    %3 = vector.load %arg3[%c0_2, %c0_3] : memref<1x128xf32, #tpu.memory_space<vmem>>, vector<1x128xf32>
    %4 = vector.broadcast %3 : vector<1x128xf32> to vector<512x128xf32>
    %5 = arith.mulf %2, %4 : vector<512x128xf32>
    %c0_4 = arith.constant 0 : index
    %c0_5 = arith.constant 0 : index
    %6 = vector.load %arg4[%c0_4, %c0_5] : memref<1x128xf32, #tpu.memory_space<vmem>>, vector<1x128xf32>
    %7 = vector.broadcast %6 : vector<1x128xf32> to vector<512x128xf32>
    %8 = arith.addf %5, %7 : vector<512x128xf32>
    %cst = arith.constant 0.00999999977 : f32
    %9 = vector.broadcast %cst : f32 to vector<512x128xf32>
    %10 = arith.mulf %9, %8 : vector<512x128xf32>
    %11 = arith.maximumf %8, %10 : vector<512x128xf32>
    %c0_6 = arith.constant 0 : index
    %c0_7 = arith.constant 0 : index
    %c0_8 = arith.constant 0 : index
    %12 = vector.load %arg5[%c0_6, %c0_7, %c0_8] : memref<1x512x128xf32, #tpu.memory_space<vmem>>, vector<1x512x128xf32>
    %13 = vector.shape_cast %12 : vector<1x512x128xf32> to vector<512x128xf32>
    %14 = arith.addf %13, %11 : vector<512x128xf32>
    %15 = vector.shape_cast %14 : vector<512x128xf32> to vector<1x512x128xf32>
    %c0_9 = arith.constant 0 : index
    %c0_10 = arith.constant 0 : index
    %c0_11 = arith.constant 0 : index
    %16 = vector.load %arg6[%c0_9, %c0_10, %c0_11] : memref<1x512x128xf32, #tpu.memory_space<vmem>>, vector<1x512x128xf32>
    tpu.vector_store %arg6[%c0_9, %c0_10, %c0_11], %15 {strides = array<i32>} : memref<1x512x128xf32, #tpu.memory_space<vmem>>, vector<1x512x128xf32>,
    %17 = vector.shape_cast %14 : vector<512x128xf32> to vector<1x512x128xf32>
    %18 = arith.truncf %17 : vector<1x512x128xf32> to vector<1x512x128xbf16>
    %c0_12 = arith.constant 0 : index
    %c0_13 = arith.constant 0 : index
    %c0_14 = arith.constant 0 : index
    %19 = vector.load %arg7[%c0_12, %c0_13, %c0_14] : memref<1x512x128xbf16, #tpu.memory_space<vmem>>, vector<1x512x128xbf16>
    tpu.vector_store %arg7[%c0_12, %c0_13, %c0_14], %18 {strides = array<i32>} : memref<1x512x128xbf16, #tpu.memory_space<vmem>>, vector<1x512x128xbf16>,
    return
  }
  func.func @transform_0(%arg0: i32, %arg1: i32) -> (i32, i32, i32) {
    %c0_i32 = arith.constant 0 : i32
    %c0_i32_0 = arith.constant 0 : i32
    return %arg0, %arg1, %c0_i32 : i32, i32, i32
  }
  func.func @transform_1(%arg0: i32, %arg1: i32) -> (i32, i32) {
    %c0_i32 = arith.constant 0 : i32
    %c0_i32_0 = arith.constant 0 : i32
    %c0_i32_1 = arith.constant 0 : i32
    return %c0_i32, %c0_i32_0 : i32, i32
  }
  func.func @transform_2(%arg0: i32, %arg1: i32) -> (i32, i32) {
    %c0_i32 = arith.constant 0 : i32
    %c0_i32_0 = arith.constant 0 : i32
    %c0_i32_1 = arith.constant 0 : i32
    return %c0_i32, %c0_i32_0 : i32, i32
  }
  func.func @transform_3(%arg0: i32, %arg1: i32) -> (i32, i32, i32) {
    %c0_i32 = arith.constant 0 : i32
    %c0_i32_0 = arith.constant 0 : i32
    return %arg0, %arg1, %c0_i32 : i32, i32, i32
  }
  func.func @transform_4(%arg0: i32, %arg1: i32) -> (i32, i32, i32) {
    %c0_i32 = arith.constant 0 : i32
    %c0_i32_0 = arith.constant 0 : i32
    return %arg0, %arg1, %c0_i32 : i32, i32, i32
  }
  func.func @transform_5(%arg0: i32, %arg1: i32) -> (i32, i32, i32) {
    %c0_i32 = arith.constant 0 : i32
    %c0_i32_0 = arith.constant 0 : i32
    return %arg0, %arg1, %c0_i32 : i32, i32, i32
  }
}

module attributes {stable_mosaic.version = 11 : i64} {
  func.func @_bn_lrelu_kernel(%arg0: i32, %arg1: i32, %arg2: memref<1x512x128xbf16, #tpu.memory_space<vmem>>, %arg3: memref<1x128xf32, #tpu.memory_space<vmem>>, %arg4: memref<1x128xf32, #tpu.memory_space<vmem>>, %arg5: memref<1x512x128xf32, #tpu.memory_space<vmem>>, %arg6: memref<1x512x128xf32, #tpu.memory_space<vmem>>) attributes {dimension_semantics = [#tpu.dimension_semantics<parallel>, #tpu.dimension_semantics<parallel>], iteration_bounds = array<i64: 1, 1>, scalar_prefetch = 0 : i64, scratch_operands = 0 : i64, tpu.core_type = #tpu.core_type<tc>, window_params = [{transform_indices = @transform_0, window_bounds = array<i64: 1, 512, 128>}, {pipeline_mode = #tpu.pipeline_mode<synchronous>, transform_indices = @transform_1, window_bounds = array<i64: 1, 128>}, {pipeline_mode = #tpu.pipeline_mode<synchronous>, transform_indices = @transform_2, window_bounds = array<i64: 1, 128>}, {transform_indices = @transform_3, window_bounds = array<i64: 1, 512, 128>}, {transform_indices = @transform_4, window_bounds = array<i64: 1, 512, 128>}]} {
    %c0 = arith.constant 0 : index
    %c0_0 = arith.constant 0 : index
    %c0_1 = arith.constant 0 : index
    %0 = vector.load %arg2[%c0, %c0_0, %c0_1] : memref<1x512x128xbf16, #tpu.memory_space<vmem>>, vector<1x512x128xbf16>
    %1 = vector.shape_cast %0 : vector<1x512x128xbf16> to vector<512x128xbf16>
    %2 = arith.extf %1 : vector<512x128xbf16> to vector<512x128xf32>
    %c0_2 = arith.constant 0 : index
    %c0_3 = arith.constant 0 : index
    %3 = vector.load %arg3[%c0_2, %c0_3] : memref<1x128xf32, #tpu.memory_space<vmem>>, vector<1x128xf32>
    %4 = vector.broadcast %3 : vector<1x128xf32> to vector<512x128xf32>
    %5 = arith.mulf %2, %4 : vector<512x128xf32>
    %c0_4 = arith.constant 0 : index
    %c0_5 = arith.constant 0 : index
    %6 = vector.load %arg4[%c0_4, %c0_5] : memref<1x128xf32, #tpu.memory_space<vmem>>, vector<1x128xf32>
    %7 = vector.broadcast %6 : vector<1x128xf32> to vector<512x128xf32>
    %8 = arith.addf %5, %7 : vector<512x128xf32>
    %cst = arith.constant 0.00999999977 : f32
    %9 = vector.broadcast %cst : f32 to vector<512x128xf32>
    %10 = arith.mulf %9, %8 : vector<512x128xf32>
    %11 = arith.maximumf %8, %10 : vector<512x128xf32>
    %c0_6 = arith.constant 0 : index
    %c0_7 = arith.constant 0 : index
    %c0_8 = arith.constant 0 : index
    %12 = vector.load %arg5[%c0_6, %c0_7, %c0_8] : memref<1x512x128xf32, #tpu.memory_space<vmem>>, vector<1x512x128xf32>
    %13 = vector.shape_cast %12 : vector<1x512x128xf32> to vector<512x128xf32>
    %14 = arith.addf %13, %11 : vector<512x128xf32>
    %15 = vector.shape_cast %14 : vector<512x128xf32> to vector<1x512x128xf32>
    %c0_9 = arith.constant 0 : index
    %c0_10 = arith.constant 0 : index
    %c0_11 = arith.constant 0 : index
    %16 = vector.load %arg6[%c0_9, %c0_10, %c0_11] : memref<1x512x128xf32, #tpu.memory_space<vmem>>, vector<1x512x128xf32>
    tpu.vector_store %arg6[%c0_9, %c0_10, %c0_11], %15 {strides = array<i32>} : memref<1x512x128xf32, #tpu.memory_space<vmem>>, vector<1x512x128xf32>,
    return
  }
  func.func @transform_0(%arg0: i32, %arg1: i32) -> (i32, i32, i32) {
    %c0_i32 = arith.constant 0 : i32
    %c0_i32_0 = arith.constant 0 : i32
    return %arg0, %arg1, %c0_i32 : i32, i32, i32
  }
  func.func @transform_1(%arg0: i32, %arg1: i32) -> (i32, i32) {
    %c0_i32 = arith.constant 0 : i32
    %c0_i32_0 = arith.constant 0 : i32
    %c0_i32_1 = arith.constant 0 : i32
    return %c0_i32, %c0_i32_0 : i32, i32
  }
  func.func @transform_2(%arg0: i32, %arg1: i32) -> (i32, i32) {
    %c0_i32 = arith.constant 0 : i32
    %c0_i32_0 = arith.constant 0 : i32
    %c0_i32_1 = arith.constant 0 : i32
    return %c0_i32, %c0_i32_0 : i32, i32
  }
  func.func @transform_3(%arg0: i32, %arg1: i32) -> (i32, i32, i32) {
    %c0_i32 = arith.constant 0 : i32
    %c0_i32_0 = arith.constant 0 : i32
    return %arg0, %arg1, %c0_i32 : i32, i32, i32
  }
  func.func @transform_4(%arg0: i32, %arg1: i32) -> (i32, i32, i32) {
    %c0_i32 = arith.constant 0 : i32
    %c0_i32_0 = arith.constant 0 : i32
    return %arg0, %arg1, %c0_i32 : i32, i32, i32
  }
}

</mosaic_0001>

<llo_original>
// kernel: decoder_layer_forward.7
$region0: #{decoder_layer_forward.7}
  #allocation0 [shape = 'u32[]', space=smem, size = 0x4, offset = 0x4, fixed_abs, tag = 'smem constant byte address 0x4 - core index']
  #allocation1 [shape = 'u32[144,128]{1,0:T(1,128)}', space=vmem, size = 0x12000, scoped, tag = 'internal scratch']
  %s0 = inlined_call_operand.vmem [shape: bf16[4,128,128], index: 0, kind: input, shape index: {}]
  %s1 = inlined_call_operand.vmem [shape: f32[1,128], index: 1, kind: input, shape index: {}]
  %s2 = inlined_call_operand.vmem [shape: f32[1,128], index: 2, kind: input, shape index: {}]
  %s3 = inlined_call_operand.vmem [shape: f32[4,128,128], index: 3, kind: output, shape index: {}]
  %s4 = sld [smem:[#allocation0]]
  $region45: #{decoder_layer_forward.7} parent=0
    _
  %s6 = ssub.s32 1, %s4
  %s7 = scalar_select 0, %s6, %s4
  loop: start=0, step=1, limit=6
  $region2: #{decoder_layer_forward.7} parent=0 // loop_pre_header
    _
  $region3: #{decoder_layer_forward.7} parent=0 // loop_header
    %s9 = sphi 0, %s13
    %p10 = scmp.ge.s32.totalorder %s9, 6
    %s16 = sphi 0, %s28
    %s17 = sphi 0, %s24
    %s18 = sphi 0, %s16
    %s19 = sphi 0, %s17
    %s20 = sphi 0, %s18
    %s21 = sphi 0, %s19
    %s33 = sphi 0, %s35
    %s36 = sphi 0, %s33
    %s37 = sphi 0, %s36
    %s53 = sphi 0, %s37
    %s57 = sphi 0, %s57
    %s59 = sphi 0, %s57
    %s60 = sphi 0, %s59
    %s74 = sphi 0, %s60
    %s78 = sphi 0, %s78
    %s80 = sphi 0, %s78
    %s81 = sphi 0, %s80
    %s95 = sphi 0, %s81
    %s103 = sphi 0, %s105
    %s106 = sphi 0, %s103
    %s107 = sphi 0, %s106
    %s123 = sphi 0, %s107
  $region4: #{decoder_layer_forward.7} parent=0 // loop_header_branch
    %12 = sbr.rel (%p10) target = $region8
  $region5: #{decoder_layer_forward.7} parent=0 // loop_body
    %s14 = ssub.s32 %s9, 1
    %s15 = ssub.s32 %s9, 2
    %s22 = sadd.s32 1, %s17
    %p23 = scmp.ge.s32.totalorder %s22, 1
    %s24 = scalar_select %p23, 0, %s22
    %s25 = sadd.s32 1, %s16
    %s26 = scalar_select %p23, %s25, %s16
    %p27 = scmp.ge.s32.totalorder %s26, 4
    %s28 = scalar_select %p27, 0, %s26
    %s29 = ssub.s32 %s16, %s28
    %s30 = ssub.s32 %s17, %s24
    %s31 = sor.u32 %s29, %s30
    %p32 = scmp.eq.s32.totalorder %s31, 0
    %s34 = sadd.s32 %s33, 1
    %s35 = scalar_select %p32, %s33, %s34
    %p38 = pneg %p32
    %p39 = scmp.eq.s32.totalorder %s9, 3
    %p40 = por %p38, %p39
    %p41 = scmp.ne.s32.totalorder %s33, %s36
    %p42 = scmp.eq.s32.totalorder %s9, 0
    %p43 = por %p41, %p42
    %p44 = scmp.ne.s32.totalorder %s33, %s36
    %p45 = scmp.eq.s32.totalorder %s14, 3
    %p46 = por %p44, %p45
    %p47 = scmp.ne.s32.totalorder %s36, %s37
    %p48 = scmp.eq.s32.totalorder %s14, 0
    %p49 = por %p47, %p48
    %p50 = scmp.ne.s32.totalorder %s36, %s37
    %p51 = scmp.eq.s32.totalorder %s15, 3
    %p52 = por %p50, %p51
    %p54 = scmp.ne.s32.totalorder %s37, %s53
    %p55 = scmp.eq.s32.totalorder %s15, 0
    %p56 = por %p54, %p55
    %s58 = sadd.s32 %s57, 1
    %p61 = scmp.eq.s32.totalorder %s9, 3
    %p62 = scmp.ne.s32.totalorder %s57, %s59
    %p63 = scmp.eq.s32.totalorder %s9, 0
    %p64 = por %p62, %p63
    %p65 = scmp.ne.s32.totalorder %s57, %s59
    %p66 = scmp.eq.s32.totalorder %s14, 3
    %p67 = por %p65, %p66
    %p68 = scmp.ne.s32.totalorder %s59, %s60
    %p69 = scmp.eq.s32.totalorder %s14, 0
    %p70 = por %p68, %p69
    %p71 = scmp.ne.s32.totalorder %s59, %s60
    %p72 = scmp.eq.s32.totalorder %s15, 3
    %p73 = por %p71, %p72
    %p75 = scmp.ne.s32.totalorder %s60, %s74
    %p76 = scmp.eq.s32.totalorder %s15, 0
    %p77 = por %p75, %p76
    %s79 = sadd.s32 %s78, 1
    %p82 = scmp.eq.s32.totalorder %s9, 3
    %p83 = scmp.ne.s32.totalorder %s78, %s80
    %p84 = scmp.eq.s32.totalorder %s9, 0
    %p85 = por %p83, %p84
    %p86 = scmp.ne.s32.totalorder %s78, %s80
    %p87 = scmp.eq.s32.totalorder %s14, 3
    %p88 = por %p86, %p87
    %p89 = scmp.ne.s32.totalorder %s80, %s81
    %p90 = scmp.eq.s32.totalorder %s14, 0
    %p91 = por %p89, %p90
    %p92 = scmp.ne.s32.totalorder %s80, %s81
    %p93 = scmp.eq.s32.totalorder %s15, 3
    %p94 = por %p92, %p93
    %p96 = scmp.ne.s32.totalorder %s81, %s95
    %p97 = scmp.eq.s32.totalorder %s15, 0
    %p98 = por %p96, %p97
    %s99 = ssub.s32 %s16, %s28
    %s100 = ssub.s32 %s17, %s24
    %s101 = sor.u32 %s99, %s100
    %p102 = scmp.eq.s32.totalorder %s101, 0
    %s104 = sadd.s32 %s103, 1
    %s105 = scalar_select %p102, %s103, %s104
    %p108 = pneg %p102
    %p109 = scmp.eq.s32.totalorder %s9, 3
    %p110 = por %p108, %p109
    %p111 = scmp.ne.s32.totalorder %s103, %s106
    %p112 = scmp.eq.s32.totalorder %s9, 0
    %p113 = por %p111, %p112
    %p114 = scmp.ne.s32.totalorder %s103, %s106
    %p115 = scmp.eq.s32.totalorder %s14, 3
    %p116 = por %p114, %p115
    %p117 = scmp.ne.s32.totalorder %s106, %s107
    %p118 = scmp.eq.s32.totalorder %s14, 0
    %p119 = por %p117, %p118
    %p120 = scmp.ne.s32.totalorder %s106, %s107
    %p121 = scmp.eq.s32.totalorder %s15, 3
    %p122 = por %p120, %p121
    %p124 = scmp.ne.s32.totalorder %s107, %s123
    %p125 = scmp.eq.s32.totalorder %s15, 0
    %p126 = por %p124, %p125
    %p127 = scmp.le.s32.totalorder 1, %s9
    %p128 = scmp.lt.s32.totalorder %s9, 5
    %p129 = pnand %p127, %p128
    %p130 = pneg %p129
    // Predicated region
    $region9: #{decoder_layer_forward.7} parent=5 // pred_check
      _
    $region10: #{decoder_layer_forward.7} parent=5 // pred_check_branch
      %132 = sbr.rel (%p129) target = $region12
    $region11: #{decoder_layer_forward.7} parent=5 // pred_region
      %s133 = ssub.s32 %s9, 1
      // Predicated region
      $region13: #{decoder_layer_forward.7} parent=11 // pred_check
        %p134 = pneg %p70
      $region14: #{decoder_layer_forward.7} parent=11 // pred_check_branch
        %136 = sbr.rel (%p134) target = $region16
      $region15: #{decoder_layer_forward.7} parent=11 // pred_region
        _
      $region16: #{decoder_layer_forward.7} parent=11 // pred_fallthru
        _
      // Predicated region
      $region17: #{decoder_layer_forward.7} parent=11 // pred_check
        %p137 = pneg %p91
      $region18: #{decoder_layer_forward.7} parent=11 // pred_check_branch
        %139 = sbr.rel (%p137) target = $region20
      $region19: #{decoder_layer_forward.7} parent=11 // pred_region
        _
      $region20: #{decoder_layer_forward.7} parent=11 // pred_fallthru
        _
    $region12: #{decoder_layer_forward.7} parent=5 // pred_fallthru
      _
    %p140 = scmp.lt.s32.totalorder %s9, 4
    // Predicated region
    $region21: #{decoder_layer_forward.7} parent=5 // pred_check
      %p141 = pneg %p140
    $region22: #{decoder_layer_forward.7} parent=5 // pred_check_branch
      %143 = sbr.rel (%p141) target = $region24
    $region23: #{decoder_layer_forward.7} parent=5 // pred_region
      // Predicated region
      $region25: #{decoder_layer_forward.7} parent=23 // pred_check
        %p144 = pneg %p43
      $region26: #{decoder_layer_forward.7} parent=23 // pred_check_branch
        %146 = sbr.rel (%p144) target = $region28
      $region27: #{decoder_layer_forward.7} parent=23 // pred_region
        %s147 = smul.u32 16, %s17
        %p148 = scmp.lt.s32.totalorder %s16, 3
        %s149 = scalar_select %p148, %s16, 3
        %p150 = scmp.lt.s32.totalorder %s147, 15
        %s151 = scalar_select %p150, %s147, 15
        %s152 = smul.addr %s149, 16
        %s153 = sadd.s32 %s151, %s152
        %s154 = smul.addr %s153, 4
        %s155 = scalar_lea.vmem %s0, %s154
        %s156 = smul.u32 16, %s17
      $region28: #{decoder_layer_forward.7} parent=23 // pred_fallthru
        _
    $region24: #{decoder_layer_forward.7} parent=5 // pred_fallthru
      _
    %p157 = scmp.le.s32.totalorder 1, %s9
    %p158 = scmp.lt.s32.totalorder %s9, 5
    %p159 = pnand %p157, %p158
    %p160 = pneg %p159
    // Predicated region
    $region29: #{decoder_layer_forward.7} parent=5 // pred_check
      _
    $region30: #{decoder_layer_forward.7} parent=5 // pred_check_branch
      %162 = sbr.rel (%p159) target = $region32
    $region31: #{decoder_layer_forward.7} parent=5 // pred_region
      %s163 = ssub.s32 %s9, 1
      %s164 = smul.u32 16, %s19
      %p165 = scmp.lt.s32.totalorder %s18, 3
      %s166 = scalar_select %p165, %s18, 3
      %p167 = scmp.lt.s32.totalorder %s164, 15
      %s168 = scalar_select %p167, %s164, 15
      %s169 = smul.addr %s166, 16
      %s170 = sadd.s32 %s168, %s169
      %s171 = smul.addr %s170, 4
      %s172 = scalar_lea.vmem %s0, %s171
      %p173 = pneg %p49
      %p174 = pneg %p46
      %p175 = pneg %p70
      %p176 = pneg %p67
      %p177 = pneg %p91
      %p178 = pneg %p88
      %p179 = pneg %p119
      %p180 = pneg %p116
      %s181 = smul.u32 16, %s19
      %p182 = scmp.lt.s32.totalorder %s18, 3
      %s183 = scalar_select %p182, %s18, 3
      %p184 = scmp.lt.s32.totalorder %s181, 15
      %s185 = scalar_select %p184, %s181, 15
      %s186 = smul.addr %s183, 16
      %s187 = sadd.s32 %s185, %s186
      %s188 = smul.addr %s187, 8
      %s189 = scalar_lea.vmem %s3, %s188
      %s190 = smul.u32 16, %s19
      %p191 = scmp.lt.s32.totalorder %s18, 3
      %s192 = scalar_select %p191, %s18, 3
      %p193 = scmp.lt.s32.totalorder %s190, 15
      %s194 = scalar_select %p193, %s190, 15
      %s195 = smul.addr %s192, 16
      %s196 = sadd.s32 %s194, %s195
      %s197 = smul.addr %s196, 4
      %s198 = scalar_lea.vmem %s0, %s197
      %s199 = smul.u32 16, %s19
      %s200 = smul.u32 16, %s19
      %p201 = scmp.lt.s32.totalorder %s18, 3
      %s202 = scalar_select %p201, %s18, 3
      %p203 = scmp.lt.s32.totalorder %s200, 15
      %s204 = scalar_select %p203, %s200, 15
      %s205 = smul.addr %s202, 16
      %s206 = sadd.s32 %s204, %s205
      %s207 = smul.addr %s206, 8
      %s208 = scalar_lea.vmem %s3, %s207
      %s209 = smul.u32 16, %s19
      %v210 = vld [vmem:[%s198] sm:$0xf]
      %v211 = vld [vmem:[%s198 + $0x4] sm:$0xf]
      %v212 = vld [vmem:[%s198 + $0x8] sm:$0xf]
      %v213 = vld [vmem:[%s198 + $0xc] sm:$0xf]
      %v214 = vld [vmem:[%s198 + $0x10] sm:$0xf]
      %v215 = vld [vmem:[%s198 + $0x14] sm:$0xf]
      %v216 = vld [vmem:[%s198 + $0x18] sm:$0xf]
      %v217 = vld [vmem:[%s198 + $0x1c] sm:$0xf]
      %v218 = vld [vmem:[%s198 + $0x20] sm:$0xf]
      %v219 = vld [vmem:[%s198 + $0x24] sm:$0xf]
      %v220 = vld [vmem:[%s198 + $0x28] sm:$0xf]
      %v221 = vld [vmem:[%s198 + $0x2c] sm:$0xf]
      %v222 = vld [vmem:[%s198 + $0x30] sm:$0xf]
      %v223 = vld [vmem:[%s198 + $0x34] sm:$0xf]
      %v224 = vld [vmem:[%s198 + $0x38] sm:$0xf]
      %v225 = vld [vmem:[%s198 + $0x3c] sm:$0xf]
      %v226 = vunpack.c.l.bf16 %v210
      %v227 = vunpack.c.l.bf16 %v211
      %v228 = vunpack.c.l.bf16 %v212
      %v229 = vunpack.c.l.bf16 %v213
      %v230 = vunpack.c.l.bf16 %v214
      %v231 = vunpack.c.l.bf16 %v215
      %v232 = vunpack.c.l.bf16 %v216
      %v233 = vunpack.c.l.bf16 %v217
      %v234 = vunpack.c.l.bf16 %v218
      %v235 = vunpack.c.l.bf16 %v219
      %v236 = vunpack.c.l.bf16 %v220
      %v237 = vunpack.c.l.bf16 %v221
      %v238 = vunpack.c.l.bf16 %v222
      %v239 = vunpack.c.l.bf16 %v223
      %v240 = vunpack.c.l.bf16 %v224
      %v241 = vunpack.c.l.bf16 %v225
      %v242 = vld [vmem:[%s1] sm:$0x1]
      %v244 = vlaneseq
      %v245 = vshrl.u32 %v244, 7
      %v246 = vsub.s32 0, %v245
      %v247 = vrot.slane %v242, %v246
      %v249 = vmul.f32 %v226, %v247
      %v250 = vmul.f32 %v227, %v247
      %v251 = vmul.f32 %v228, %v247
      %v252 = vmul.f32 %v229, %v247
      %v253 = vmul.f32 %v230, %v247
      %v254 = vmul.f32 %v231, %v247
      %v255 = vmul.f32 %v232, %v247
      %v256 = vmul.f32 %v233, %v247
      %v257 = vmul.f32 %v234, %v247
      %v258 = vmul.f32 %v235, %v247
      %v259 = vmul.f32 %v236, %v247
      %v260 = vmul.f32 %v237, %v247
      %v261 = vmul.f32 %v238, %v247
      %v262 = vmul.f32 %v239, %v247
      %v263 = vmul.f32 %v240, %v247
      %v264 = vmul.f32 %v241, %v247
      %v265 = vld [vmem:[%s2] sm:$0x1]
      %v267 = vlaneseq
      %v268 = vshrl.u32 %v267, 7
      %v269 = vsub.s32 0, %v268
      %v270 = vrot.slane %v265, %v269
      %v272 = vadd.f32 %v249, %v270
      %v273 = vadd.f32 %v250, %v270
      %v274 = vadd.f32 %v251, %v270
      %v275 = vadd.f32 %v252, %v270
      %v276 = vadd.f32 %v253, %v270
      %v277 = vadd.f32 %v254, %v270
      %v278 = vadd.f32 %v255, %v270
      %v279 = vadd.f32 %v256, %v270
      %v280 = vadd.f32 %v257, %v270
      %v281 = vadd.f32 %v258, %v270
      %v282 = vadd.f32 %v259, %v270
      %v283 = vadd.f32 %v260, %v270
      %v284 = vadd.f32 %v261, %v270
      %v285 = vadd.f32 %v262, %v270
      %v286 = vadd.f32 %v263, %v270
      %v287 = vadd.f32 %v264, %v270
      %v288 = vmul.f32 %v272, 0.01
      %v289 = vmul.f32 %v273, 0.01
      %v290 = vmul.f32 %v274, 0.01
      %v291 = vmul.f32 %v275, 0.01
      %v292 = vmul.f32 %v276, 0.01
      %v293 = vmul.f32 %v277, 0.01
      %v294 = vmul.f32 %v278, 0.01
      %v295 = vmul.f32 %v279, 0.01
      %v296 = vmul.f32 %v280, 0.01
      %v297 = vmul.f32 %v281, 0.01
      %v298 = vmul.f32 %v282, 0.01
      %v299 = vmul.f32 %v283, 0.01
      %v300 = vmul.f32 %v284, 0.01
      %v301 = vmul.f32 %v285, 0.01
      %v302 = vmul.f32 %v286, 0.01
      %v303 = vmul.f32 %v287, 0.01
      %v304 = vmax.f32 %v272, %v288
      %v305 = vmax.f32 %v273, %v289
      %v306 = vmax.f32 %v274, %v290
      %v307 = vmax.f32 %v275, %v291
      %v308 = vmax.f32 %v276, %v292
      %v309 = vmax.f32 %v277, %v293
      %v310 = vmax.f32 %v278, %v294
      %v311 = vmax.f32 %v279, %v295
      %v312 = vmax.f32 %v280, %v296
      %v313 = vmax.f32 %v281, %v297
      %v314 = vmax.f32 %v282, %v298
      %v315 = vmax.f32 %v283, %v299
      %v316 = vmax.f32 %v284, %v300
      %v317 = vmax.f32 %v285, %v301
      %v318 = vmax.f32 %v286, %v302
      %v319 = vmax.f32 %v287, %v303
      %320 = vst [vmem:[%s208] sm:$0xff] %v304
      %321 = vst [vmem:[%s208 + $0x8] sm:$0xff] %v305
      %322 = vst [vmem:[%s208 + $0x10] sm:$0xff] %v306
      %323 = vst [vmem:[%s208 + $0x18] sm:$0xff] %v307
      %324 = vst [vmem:[%s208 + $0x20] sm:$0xff] %v308
      %325 = vst [vmem:[%s208 + $0x28] sm:$0xff] %v309
      %326 = vst [vmem:[%s208 + $0x30] sm:$0xff] %v310
      %327 = vst [vmem:[%s208 + $0x38] sm:$0xff] %v311
      %328 = vst [vmem:[%s208 + $0x40] sm:$0xff] %v312
      %329 = vst [vmem:[%s208 + $0x48] sm:$0xff] %v313
      %330 = vst [vmem:[%s208 + $0x50] sm:$0xff] %v314
      %331 = vst [vmem:[%s208 + $0x58] sm:$0xff] %v315
      %332 = vst [vmem:[%s208 + $0x60] sm:$0xff] %v316
      %333 = vst [vmem:[%s208 + $0x68] sm:$0xff] %v317
      %334 = vst [vmem:[%s208 + $0x70] sm:$0xff] %v318
      %335 = vst [vmem:[%s208 + $0x78] sm:$0xff] %v319
      %s336 = smul.u32 16, %s19
      %p337 = scmp.lt.s32.totalorder %s18, 3
      %s338 = scalar_select %p337, %s18, 3
      %p339 = scmp.lt.s32.totalorder %s336, 15
      %s340 = scalar_select %p339, %s336, 15
      %s341 = smul.addr %s338, 16
      %s342 = sadd.s32 %s340, %s341
      %s343 = smul.addr %s342, 8
      %s344 = scalar_lea.vmem %s3, %s343
      // Predicated region
      $region33: #{decoder_layer_forward.7} parent=31 // pred_check
        %p345 = pneg %p116
      $region34: #{decoder_layer_forward.7} parent=31 // pred_check_branch
        %347 = sbr.rel (%p345) target = $region36
      $region35: #{decoder_layer_forward.7} parent=31 // pred_region
        %s348 = smul.u32 16, %s19
      $region36: #{decoder_layer_forward.7} parent=31 // pred_fallthru
        _
    $region32: #{decoder_layer_forward.7} parent=5 // pred_fallthru
      _
    %p349 = scmp.le.s32.totalorder 2, %s9
    // Predicated region
    $region37: #{decoder_layer_forward.7} parent=5 // pred_check
      %p350 = pneg %p349
    $region38: #{decoder_layer_forward.7} parent=5 // pred_check_branch
      %352 = sbr.rel (%p350) target = $region40
    $region39: #{decoder_layer_forward.7} parent=5 // pred_region
      %s353 = ssub.s32 %s9, 2
      // Predicated region
      $region41: #{decoder_layer_forward.7} parent=39 // pred_check
        %p354 = pneg %p122
      $region42: #{decoder_layer_forward.7} parent=39 // pred_check_branch
        %356 = sbr.rel (%p354) target = $region44
      $region43: #{decoder_layer_forward.7} parent=39 // pred_region
        %s357 = smul.u32 16, %s21
        %p358 = scmp.lt.s32.totalorder %s20, 3
        %s359 = scalar_select %p358, %s20, 3
        %p360 = scmp.lt.s32.totalorder %s357, 15
        %s361 = scalar_select %p360, %s357, 15
        %s362 = smul.addr %s359, 16
        %s363 = sadd.s32 %s361, %s362
        %s364 = smul.addr %s363, 8
        %s365 = scalar_lea.vmem %s3, %s364
      $region44: #{decoder_layer_forward.7} parent=39 // pred_fallthru
        _
    $region40: #{decoder_layer_forward.7} parent=5 // pred_fallthru
      _
  $region6: #{decoder_layer_forward.7} parent=0 // loop_footer
    %s13 = sadd.s32 1, %s9
  $region7: #{decoder_layer_forward.7} parent=0 // loop_footer_branch
    %8 = sbr.rel target = $region3
  $region8: #{decoder_layer_forward.7} parent=0 // loop_exit
    _

// kernel: decoder_layer_forward.6
$region0: #{decoder_layer_forward.6}
  #allocation0 [shape = 'u32[]', space=smem, size = 0x4, offset = 0x4, fixed_abs, tag = 'smem constant byte address 0x4 - core index']
  #allocation1 [shape = 'u32[144,128]{1,0:T(1,128)}', space=vmem, size = 0x12000, scoped, tag = 'internal scratch']
  %s0 = inlined_call_operand.vmem [shape: bf16[4,128,512], index: 0, kind: input, shape index: {}]
  %s1 = inlined_call_operand.vmem [shape: bf16[4,512,128], index: 1, kind: input, shape index: {}]
  %s2 = inlined_call_operand.vmem [shape: bf16[4,128,128], index: 2, kind: output, shape index: {0}]
  %s3 = inlined_call_operand.vmem [shape: f32[4,1,2,128], index: 3, kind: output, shape index: {1}]
  %4 = xla_tuple %s2, %s3
  %s5 = sld [smem:[#allocation0]]
  $region49: #{decoder_layer_forward.6} parent=0
    _
  %s7 = ssub.s32 1, %s5
  %s8 = scalar_select 0, %s7, %s5
  loop: start=0, step=1, limit=6
  $region2: #{decoder_layer_forward.6} parent=0 // loop_pre_header
    _
  $region3: #{decoder_layer_forward.6} parent=0 // loop_header
    %s10 = sphi 0, %s14
    %p11 = scmp.ge.s32.totalorder %s10, 6
    %s17 = sphi 0, %s29
    %s18 = sphi 0, %s25
    %s19 = sphi 0, %s17
    %s20 = sphi 0, %s18
    %s21 = sphi 0, %s19
    %s22 = sphi 0, %s20
    %s34 = sphi 0, %s36
    %s37 = sphi 0, %s34
    %s38 = sphi 0, %s37
    %s54 = sphi 0, %s38
    %s60 = sphi 0, %s62
    %s63 = sphi 0, %s60
    %s64 = sphi 0, %s63
    %s80 = sphi 0, %s64
    %s88 = sphi 0, %s90
    %s91 = sphi 0, %s88
    %s92 = sphi 0, %s91
    %s108 = sphi 0, %s92
    %s116 = sphi 0, %s118
    %s119 = sphi 0, %s116
    %s120 = sphi 0, %s119
    %s136 = sphi 0, %s120
  $region4: #{decoder_layer_forward.6} parent=0 // loop_header_branch
    %13 = sbr.rel (%p11) target = $region8
  $region5: #{decoder_layer_forward.6} parent=0 // loop_body
    %s15 = ssub.s32 %s10, 1
    %s16 = ssub.s32 %s10, 2
    %s23 = sadd.s32 1, %s18
    %p24 = scmp.ge.s32.totalorder %s23, 1
    %s25 = scalar_select %p24, 0, %s23
    %s26 = sadd.s32 1, %s17
    %s27 = scalar_select %p24, %s26, %s17
    %p28 = scmp.ge.s32.totalorder %s27, 4
    %s29 = scalar_select %p28, 0, %s27
    %s30 = ssub.s32 %s17, %s29
    %s31 = ssub.s32 %s18, %s25
    %s32 = sor.u32 %s30, %s31
    %p33 = scmp.eq.s32.totalorder %s32, 0
    %s35 = sadd.s32 %s34, 1
    %s36 = scalar_select %p33, %s34, %s35
    %p39 = pneg %p33
    %p40 = scmp.eq.s32.totalorder %s10, 3
    %p41 = por %p39, %p40
    %p42 = scmp.ne.s32.totalorder %s34, %s37
    %p43 = scmp.eq.s32.totalorder %s10, 0
    %p44 = por %p42, %p43
    %p45 = scmp.ne.s32.totalorder %s34, %s37
    %p46 = scmp.eq.s32.totalorder %s15, 3
    %p47 = por %p45, %p46
    %p48 = scmp.ne.s32.totalorder %s37, %s38
    %p49 = scmp.eq.s32.totalorder %s15, 0
    %p50 = por %p48, %p49
    %p51 = scmp.ne.s32.totalorder %s37, %s38
    %p52 = scmp.eq.s32.totalorder %s16, 3
    %p53 = por %p51, %p52
    %p55 = scmp.ne.s32.totalorder %s38, %s54
    %p56 = scmp.eq.s32.totalorder %s16, 0
    %p57 = por %p55, %p56
    %s58 = ssub.s32 %s17, %s29
    %p59 = scmp.eq.s32.totalorder %s58, 0
    %s61 = sadd.s32 %s60, 1
    %s62 = scalar_select %p59, %s60, %s61
    %p65 = pneg %p59
    %p66 = scmp.eq.s32.totalorder %s10, 3
    %p67 = por %p65, %p66
    %p68 = scmp.ne.s32.totalorder %s60, %s63
    %p69 = scmp.eq.s32.totalorder %s10, 0
    %p70 = por %p68, %p69
    %p71 = scmp.ne.s32.totalorder %s60, %s63
    %p72 = scmp.eq.s32.totalorder %s15, 3
    %p73 = por %p71, %p72
    %p74 = scmp.ne.s32.totalorder %s63, %s64
    %p75 = scmp.eq.s32.totalorder %s15, 0
    %p76 = por %p74, %p75
    %p77 = scmp.ne.s32.totalorder %s63, %s64
    %p78 = scmp.eq.s32.totalorder %s16, 3
    %p79 = por %p77, %p78
    %p81 = scmp.ne.s32.totalorder %s64, %s80
    %p82 = scmp.eq.s32.totalorder %s16, 0
    %p83 = por %p81, %p82
    %s84 = ssub.s32 %s17, %s29
    %s85 = ssub.s32 %s18, %s25
    %s86 = sor.u32 %s84, %s85
    %p87 = scmp.eq.s32.totalorder %s86, 0
    %s89 = sadd.s32 %s88, 1
    %s90 = scalar_select %p87, %s88, %s89
    %p93 = pneg %p87
    %p94 = scmp.eq.s32.totalorder %s10, 3
    %p95 = por %p93, %p94
    %p96 = scmp.ne.s32.totalorder %s88, %s91
    %p97 = scmp.eq.s32.totalorder %s10, 0
    %p98 = por %p96, %p97
    %p99 = scmp.ne.s32.totalorder %s88, %s91
    %p100 = scmp.eq.s32.totalorder %s15, 3
    %p101 = por %p99, %p100
    %p102 = scmp.ne.s32.totalorder %s91, %s92
    %p103 = scmp.eq.s32.totalorder %s15, 0
    %p104 = por %p102, %p103
    %p105 = scmp.ne.s32.totalorder %s91, %s92
    %p106 = scmp.eq.s32.totalorder %s16, 3
    %p107 = por %p105, %p106
    %p109 = scmp.ne.s32.totalorder %s92, %s108
    %p110 = scmp.eq.s32.totalorder %s16, 0
    %p111 = por %p109, %p110
    %s112 = ssub.s32 %s17, %s29
    %s113 = ssub.s32 %s18, %s25
    %s114 = sor.u32 %s112, %s113
    %p115 = scmp.eq.s32.totalorder %s114, 0
    %s117 = sadd.s32 %s116, 1
    %s118 = scalar_select %p115, %s116, %s117
    %p121 = pneg %p115
    %p122 = scmp.eq.s32.totalorder %s10, 3
    %p123 = por %p121, %p122
    %p124 = scmp.ne.s32.totalorder %s116, %s119
    %p125 = scmp.eq.s32.totalorder %s10, 0
    %p126 = por %p124, %p125
    %p127 = scmp.ne.s32.totalorder %s116, %s119
    %p128 = scmp.eq.s32.totalorder %s15, 3
    %p129 = por %p127, %p128
    %p130 = scmp.ne.s32.totalorder %s119, %s120
    %p131 = scmp.eq.s32.totalorder %s15, 0
    %p132 = por %p130, %p131
    %p133 = scmp.ne.s32.totalorder %s119, %s120
    %p134 = scmp.eq.s32.totalorder %s16, 3
    %p135 = por %p133, %p134
    %p137 = scmp.ne.s32.totalorder %s120, %s136
    %p138 = scmp.eq.s32.totalorder %s16, 0
    %p139 = por %p137, %p138
    %p140 = scmp.le.s32.totalorder 1, %s10
    %p141 = scmp.lt.s32.totalorder %s10, 5
    %p142 = pnand %p140, %p141
    %p143 = pneg %p142
    // Predicated region
    $region9: #{decoder_layer_forward.6} parent=5 // pred_check
      _
    $region10: #{decoder_layer_forward.6} parent=5 // pred_check_branch
      %145 = sbr.rel (%p142) target = $region12
    $region11: #{decoder_layer_forward.6} parent=5 // pred_region
      %s146 = ssub.s32 %s10, 1
    $region12: #{decoder_layer_forward.6} parent=5 // pred_fallthru
      _
    %p147 = scmp.lt.s32.totalorder %s10, 4
    // Predicated region
    $region13: #{decoder_layer_forward.6} parent=5 // pred_check
      %p148 = pneg %p147
    $region14: #{decoder_layer_forward.6} parent=5 // pred_check_branch
      %150 = sbr.rel (%p148) target = $region16
    $region15: #{decoder_layer_forward.6} parent=5 // pred_region
      // Predicated region
      $region17: #{decoder_layer_forward.6} parent=15 // pred_check
        %p151 = pneg %p44
      $region18: #{decoder_layer_forward.6} parent=15 // pred_check_branch
        %153 = sbr.rel (%p151) target = $region20
      $region19: #{decoder_layer_forward.6} parent=15 // pred_region
        %s154 = smul.u32 16, %s18
        %p155 = scmp.lt.s32.totalorder %s17, 3
        %s156 = scalar_select %p155, %s17, 3
        %p157 = scmp.lt.s32.totalorder %s154, 15
        %s158 = scalar_select %p157, %s154, 15
        %s159 = smul.addr %s158, 4
        %s160 = smul.addr %s156, 64
        %s161 = sadd.s32 %s159, %s160
        %s162 = smul.addr %s161, 4
        %s163 = scalar_lea.vmem %s0, %s162
        %s164 = smul.u32 16, %s18
      $region20: #{decoder_layer_forward.6} parent=15 // pred_fallthru
        _
      // Predicated region
      $region21: #{decoder_layer_forward.6} parent=15 // pred_check
        %p165 = pneg %p70
      $region22: #{decoder_layer_forward.6} parent=15 // pred_check_branch
        %167 = sbr.rel (%p165) target = $region24
      $region23: #{decoder_layer_forward.6} parent=15 // pred_region
        %p168 = scmp.lt.s32.totalorder %s17, 3
        %s169 = scalar_select %p168, %s17, 3
        %s170 = smul.addr %s169, 64
        %s171 = smul.addr %s170, 4
        %s172 = scalar_lea.vmem %s1, %s171
      $region24: #{decoder_layer_forward.6} parent=15 // pred_fallthru
        _
    $region16: #{decoder_layer_forward.6} parent=5 // pred_fallthru
      _
    %p173 = scmp.le.s32.totalorder 1, %s10
    %p174 = scmp.lt.s32.totalorder %s10, 5
    %p175 = pnand %p173, %p174
    %p176 = pneg %p175
    // Predicated region
    $region25: #{decoder_layer_forward.6} parent=5 // pred_check
      _
    $region26: #{decoder_layer_forward.6} parent=5 // pred_check_branch
      %178 = sbr.rel (%p175) target = $region28
    $region27: #{decoder_layer_forward.6} parent=5 // pred_region
      %s179 = ssub.s32 %s10, 1
      %s180 = smul.u32 16, %s20
      %p181 = scmp.lt.s32.totalorder %s19, 3
      %s182 = scalar_select %p181, %s19, 3
      %p183 = scmp.lt.s32.totalorder %s180, 15
      %s184 = scalar_select %p183, %s180, 15
      %s185 = smul.addr %s184, 4
      %s186 = smul.addr %s182, 64
      %s187 = sadd.s32 %s185, %s186
      %s188 = smul.addr %s187, 4
      %s189 = scalar_lea.vmem %s0, %s188
      %p190 = pneg %p50
      %p191 = pneg %p47
      %p192 = scmp.lt.s32.totalorder %s19, 3
      %s193 = scalar_select %p192, %s19, 3
      %s194 = smul.addr %s193, 64
      %s195 = smul.addr %s194, 4
      %s196 = scalar_lea.vmem %s1, %s195
      %p197 = pneg %p76
      %p198 = pneg %p73
      %p199 = pneg %p104
      %p200 = pneg %p101
      %s201 = smul.u32 16, %s20
      %p202 = scmp.lt.s32.totalorder %s19, 3
      %s203 = scalar_select %p202, %s19, 3
      %p204 = scmp.lt.s32.totalorder %s201, 15
      %s205 = scalar_select %p204, %s201, 15
      %s206 = smul.addr %s203, 16
      %s207 = sadd.s32 %s205, %s206
      %s208 = smul.addr %s207, 4
      %s209 = scalar_lea.vmem %s2, %s208
      %p210 = pneg %p132
      %p211 = pneg %p129
      %p212 = scmp.lt.s32.totalorder %s19, 3
      %s213 = scalar_select %p212, %s19, 3
      %p214 = scmp.lt.s32.totalorder %s20, 0
      %s215 = scalar_select %p214, %s20, 0
      %s216 = sadd.s32 %s215, %s213
      %s217 = smul.addr %s216, 2
      %s218 = scalar_lea.vmem %s3, %s217
      %s219 = smul.u32 16, %s20
      %p220 = scmp.lt.s32.totalorder %s19, 3
      %s221 = scalar_select %p220, %s19, 3
      %p222 = scmp.lt.s32.totalorder %s219, 15
      %s223 = scalar_select %p222, %s219, 15
      %s224 = smul.addr %s223, 4
      %s225 = smul.addr %s221, 64
      %s226 = sadd.s32 %s224, %s225
      %s227 = smul.addr %s226, 4
      %s228 = scalar_lea.vmem %s0, %s227
      %s229 = smul.u32 16, %s20
      %p230 = scmp.lt.s32.totalorder %s19, 3
      %s231 = scalar_select %p230, %s19, 3
      %s232 = smul.addr %s231, 64
      %s233 = smul.addr %s232, 4
      %s234 = scalar_lea.vmem %s1, %s233
      %s235 = smul.u32 16, %s20
      %p236 = scmp.lt.s32.totalorder %s19, 3
      %s237 = scalar_select %p236, %s19, 3
      %p238 = scmp.lt.s32.totalorder %s235, 15
      %s239 = scalar_select %p238, %s235, 15
      %s240 = smul.addr %s237, 16
      %s241 = sadd.s32 %s239, %s240
      %s242 = smul.addr %s241, 4
      %s243 = scalar_lea.vmem %s2, %s242
      %s244 = smul.u32 16, %s20
      %p245 = scmp.lt.s32.totalorder %s19, 3
      %s246 = scalar_select %p245, %s19, 3
      %p247 = scmp.lt.s32.totalorder %s20, 0
      %s248 = scalar_select %p247, %s20, 0
      %s249 = sadd.s32 %s248, %s246
      %s250 = smul.addr %s249, 2
      %s251 = scalar_lea.vmem %s3, %s250
      %v253 = vld [vmem:[%s228] sm:$0xff]
      %v254 = vld [vmem:[%s228 + $0x8] sm:$0xff]
      %v255 = vld [vmem:[%s228 + $0x10] sm:$0xff]
      %v256 = vld [vmem:[%s228 + $0x18] sm:$0xff]
      %v257 = vld [vmem:[%s228 + $0x20] sm:$0xff]
      %v258 = vld [vmem:[%s228 + $0x28] sm:$0xff]
      %v259 = vld [vmem:[%s228 + $0x30] sm:$0xff]
      %v260 = vld [vmem:[%s228 + $0x38] sm:$0xff]
      %v261 = vld [vmem:[%s228 + $0x40] sm:$0xff]
      %v262 = vld [vmem:[%s228 + $0x48] sm:$0xff]
      %v263 = vld [vmem:[%s228 + $0x50] sm:$0xff]
      %v264 = vld [vmem:[%s228 + $0x58] sm:$0xff]
      %v265 = vld [vmem:[%s228 + $0x60] sm:$0xff]
      %v266 = vld [vmem:[%s228 + $0x68] sm:$0xff]
      %v267 = vld [vmem:[%s228 + $0x70] sm:$0xff]
      %v268 = vld [vmem:[%s228 + $0x78] sm:$0xff]
      %v269 = vld [vmem:[%s228 + $0x80] sm:$0xff]
      %v270 = vld [vmem:[%s228 + $0x88] sm:$0xff]
      %v271 = vld [vmem:[%s228 + $0x90] sm:$0xff]
      %v272 = vld [vmem:[%s228 + $0x98] sm:$0xff]
      %v273 = vld [vmem:[%s228 + $0xa0] sm:$0xff]
      %v274 = vld [vmem:[%s228 + $0xa8] sm:$0xff]
      %v275 = vld [vmem:[%s228 + $0xb0] sm:$0xff]
      %v276 = vld [vmem:[%s228 + $0xb8] sm:$0xff]
      %v277 = vld [vmem:[%s228 + $0xc0] sm:$0xff]
      %v278 = vld [vmem:[%s228 + $0xc8] sm:$0xff]
      %v279 = vld [vmem:[%s228 + $0xd0] sm:$0xff]
      %v280 = vld [vmem:[%s228 + $0xd8] sm:$0xff]
      %v281 = vld [vmem:[%s228 + $0xe0] sm:$0xff]
      %v282 = vld [vmem:[%s228 + $0xe8] sm:$0xff]
      %v283 = vld [vmem:[%s228 + $0xf0] sm:$0xff]
      %v284 = vld [vmem:[%s228 + $0xf8] sm:$0xff]
      %v285 = vld [vmem:[%s234] sm:$0xf]
      %v286 = vld [vmem:[%s234 + $0x4] sm:$0xf]
      %v287 = vld [vmem:[%s234 + $0x8] sm:$0xf]
      %v288 = vld [vmem:[%s234 + $0xc] sm:$0xf]
      %v289 = vld [vmem:[%s234 + $0x10] sm:$0xf]
      %v290 = vld [vmem:[%s234 + $0x14] sm:$0xf]
      %v291 = vld [vmem:[%s234 + $0x18] sm:$0xf]
      %v292 = vld [vmem:[%s234 + $0x1c] sm:$0xf]
      %v293 = vld [vmem:[%s234 + $0x20] sm:$0xf]
      %v294 = vld [vmem:[%s234 + $0x24] sm:$0xf]
      %v295 = vld [vmem:[%s234 + $0x28] sm:$0xf]
      %v296 = vld [vmem:[%s234 + $0x2c] sm:$0xf]
      %v297 = vld [vmem:[%s234 + $0x30] sm:$0xf]
      %v298 = vld [vmem:[%s234 + $0x34] sm:$0xf]
      %v299 = vld [vmem:[%s234 + $0x38] sm:$0xf]
      %v300 = vld [vmem:[%s234 + $0x3c] sm:$0xf]
      %v301 = vld [vmem:[%s234 + $0x40] sm:$0xf]
      %v302 = vld [vmem:[%s234 + $0x44] sm:$0xf]
      %v303 = vld [vmem:[%s234 + $0x48] sm:$0xf]
      %v304 = vld [vmem:[%s234 + $0x4c] sm:$0xf]
      %v305 = vld [vmem:[%s234 + $0x50] sm:$0xf]
      %v306 = vld [vmem:[%s234 + $0x54] sm:$0xf]
      %v307 = vld [vmem:[%s234 + $0x58] sm:$0xf]
      %v308 = vld [vmem:[%s234 + $0x5c] sm:$0xf]
      %v309 = vld [vmem:[%s234 + $0x60] sm:$0xf]
      %v310 = vld [vmem:[%s234 + $0x64] sm:$0xf]
      %v311 = vld [vmem:[%s234 + $0x68] sm:$0xf]
      %v312 = vld [vmem:[%s234 + $0x6c] sm:$0xf]
      %v313 = vld [vmem:[%s234 + $0x70] sm:$0xf]
      %v314 = vld [vmem:[%s234 + $0x74] sm:$0xf]
      %v315 = vld [vmem:[%s234 + $0x78] sm:$0xf]
      %v316 = vld [vmem:[%s234 + $0x7c] sm:$0xf]
      %v317 = vld [vmem:[%s234 + $0x80] sm:$0xf]
      %v318 = vld [vmem:[%s234 + $0x84] sm:$0xf]
      %v319 = vld [vmem:[%s234 + $0x88] sm:$0xf]
      %v320 = vld [vmem:[%s234 + $0x8c] sm:$0xf]
      %v321 = vld [vmem:[%s234 + $0x90] sm:$0xf]
      %v322 = vld [vmem:[%s234 + $0x94] sm:$0xf]
      %v323 = vld [vmem:[%s234 + $0x98] sm:$0xf]
      %v324 = vld [vmem:[%s234 + $0x9c] sm:$0xf]
      %v325 = vld [vmem:[%s234 + $0xa0] sm:$0xf]
      %v326 = vld [vmem:[%s234 + $0xa4] sm:$0xf]
      %v327 = vld [vmem:[%s234 + $0xa8] sm:$0xf]
      %v328 = vld [vmem:[%s234 + $0xac] sm:$0xf]
      %v329 = vld [vmem:[%s234 + $0xb0] sm:$0xf]
      %v330 = vld [vmem:[%s234 + $0xb4] sm:$0xf]
      %v331 = vld [vmem:[%s234 + $0xb8] sm:$0xf]
      %v332 = vld [vmem:[%s234 + $0xbc] sm:$0xf]
      %v333 = vld [vmem:[%s234 + $0xc0] sm:$0xf]
      %v334 = vld [vmem:[%s234 + $0xc4] sm:$0xf]
      %v335 = vld [vmem:[%s234 + $0xc8] sm:$0xf]
      %v336 = vld [vmem:[%s234 + $0xcc] sm:$0xf]
      %v337 = vld [vmem:[%s234 + $0xd0] sm:$0xf]
      %v338 = vld [vmem:[%s234 + $0xd4] sm:$0xf]
      %v339 = vld [vmem:[%s234 + $0xd8] sm:$0xf]
      %v340 = vld [vmem:[%s234 + $0xdc] sm:$0xf]
      %v341 = vld [vmem:[%s234 + $0xe0] sm:$0xf]
      %v342 = vld [vmem:[%s234 + $0xe4] sm:$0xf]
      %v343 = vld [vmem:[%s234 + $0xe8] sm:$0xf]
      %v344 = vld [vmem:[%s234 + $0xec] sm:$0xf]
      %v345 = vld [vmem:[%s234 + $0xf0] sm:$0xf]
      %v346 = vld [vmem:[%s234 + $0xf4] sm:$0xf]
      %v347 = vld [vmem:[%s234 + $0xf8] sm:$0xf]
      %v348 = vld [vmem:[%s234 + $0xfc] sm:$0xf]
      %v381 = vunpack.c.l.b16 %v253
      %v382 = vunpack.c.h.b16 %v253
      %v383 = vunpack.c.l.b16 %v254
      %v384 = vunpack.c.h.b16 %v254
      %v385 = vunpack.c.l.b16 %v255
      %v386 = vunpack.c.h.b16 %v255
      %v387 = vunpack.c.l.b16 %v256
      %v388 = vunpack.c.h.b16 %v256
      %v389 = vunpack.c.l.b16 %v257
      %v390 = vunpack.c.h.b16 %v257
      %v391 = vunpack.c.l.b16 %v258
      %v392 = vunpack.c.h.b16 %v258
      %v393 = vunpack.c.l.b16 %v259
      %v394 = vunpack.c.h.b16 %v259
      %v395 = vunpack.c.l.b16 %v260
      %v396 = vunpack.c.h.b16 %v260
      %v397 = vunpack.c.l.b16 %v261
      %v398 = vunpack.c.h.b16 %v261
      %v399 = vunpack.c.l.b16 %v262
      %v400 = vunpack.c.h.b16 %v262
      %v401 = vunpack.c.l.b16 %v263
      %v402 = vunpack.c.h.b16 %v263
      %v403 = vunpack.c.l.b16 %v264
      %v404 = vunpack.c.h.b16 %v264
      %v405 = vunpack.c.l.b16 %v265
      %v406 = vunpack.c.h.b16 %v265
      %v407 = vunpack.c.l.b16 %v266
      %v408 = vunpack.c.h.b16 %v266
      %v409 = vunpack.c.l.b16 %v267
      %v410 = vunpack.c.h.b16 %v267
      %v411 = vunpack.c.l.b16 %v268
      %v412 = vunpack.c.h.b16 %v268
      %v413 = vunpack.c.l.b16 %v269
      %v414 = vunpack.c.h.b16 %v269
      %v415 = vunpack.c.l.b16 %v270
      %v416 = vunpack.c.h.b16 %v270
      %v417 = vunpack.c.l.b16 %v271
      %v418 = vunpack.c.h.b16 %v271
      %v419 = vunpack.c.l.b16 %v272
      %v420 = vunpack.c.h.b16 %v272
      %v421 = vunpack.c.l.b16 %v273
      %v422 = vunpack.c.h.b16 %v273
      %v423 = vunpack.c.l.b16 %v274
      %v424 = vunpack.c.h.b16 %v274
      %v425 = vunpack.c.l.b16 %v275
      %v426 = vunpack.c.h.b16 %v275
      %v427 = vunpack.c.l.b16 %v276
      %v428 = vunpack.c.h.b16 %v276
      %v429 = vunpack.c.l.b16 %v277
      %v430 = vunpack.c.h.b16 %v277
      %v431 = vunpack.c.l.b16 %v278
      %v432 = vunpack.c.h.b16 %v278
      %v433 = vunpack.c.l.b16 %v279
      %v434 = vunpack.c.h.b16 %v279
      %v435 = vunpack.c.l.b16 %v280
      %v436 = vunpack.c.h.b16 %v280
      %v437 = vunpack.c.l.b16 %v281
      %v438 = vunpack.c.h.b16 %v281
      %v439 = vunpack.c.l.b16 %v282
      %v440 = vunpack.c.h.b16 %v282
      %v441 = vunpack.c.l.b16 %v283
      %v442 = vunpack.c.h.b16 %v283
      %v443 = vunpack.c.l.b16 %v284
      %v444 = vunpack.c.h.b16 %v284
      %v445 = vpack.c.b16 %v385, %v381
      %v446 = vpack.c.b16 %v386, %v382
      %v447 = vpack.c.b16 %v387, %v383
      %v448 = vpack.c.b16 %v388, %v384
      %v449 = vpack.c.b16 %v393, %v389
      %v450 = vpack.c.b16 %v394, %v390
      %v451 = vpack.c.b16 %v395, %v391
      %v452 = vpack.c.b16 %v396, %v392
      %v453 = vpack.c.b16 %v401, %v397
      %v454 = vpack.c.b16 %v402, %v398
      %v455 = vpack.c.b16 %v403, %v399
      %v456 = vpack.c.b16 %v404, %v400
      %v457 = vpack.c.b16 %v409, %v405
      %v458 = vpack.c.b16 %v410, %v406
      %v459 = vpack.c.b16 %v411, %v407
      %v460 = vpack.c.b16 %v412, %v408
      %v461 = vpack.c.b16 %v417, %v413
      %v462 = vpack.c.b16 %v418, %v414
      %v463 = vpack.c.b16 %v419, %v415
      %v464 = vpack.c.b16 %v420, %v416
      %v465 = vpack.c.b16 %v425, %v421
      %v466 = vpack.c.b16 %v426, %v422
      %v467 = vpack.c.b16 %v427, %v423
      %v468 = vpack.c.b16 %v428, %v424
      %v469 = vpack.c.b16 %v433, %v429
      %v470 = vpack.c.b16 %v434, %v430
      %v471 = vpack.c.b16 %v435, %v431
      %v472 = vpack.c.b16 %v436, %v432
      %v473 = vpack.c.b16 %v441, %v437
      %v474 = vpack.c.b16 %v442, %v438
      %v475 = vpack.c.b16 %v443, %v439
      %v476 = vpack.c.b16 %v444, %v440
      %v573 = vunpack.c.l.b16 %v285
      %v574 = vunpack.c.l.b16 %v286
      %v575 = vunpack.c.l.b16 %v287
      %v576 = vunpack.c.l.b16 %v288
      %v577 = vunpack.c.l.b16 %v289
      %v578 = vunpack.c.l.b16 %v290
      %v579 = vunpack.c.l.b16 %v291
      %v580 = vunpack.c.l.b16 %v292
      %v581 = vunpack.c.l.b16 %v293
      %v582 = vunpack.c.l.b16 %v294
      %v583 = vunpack.c.l.b16 %v295
      %v584 = vunpack.c.l.b16 %v296
      %v585 = vunpack.c.l.b16 %v297
      %v586 = vunpack.c.l.b16 %v298
      %v587 = vunpack.c.l.b16 %v299
      %v588 = vunpack.c.l.b16 %v300
      %v589 = vunpack.c.l.b16 %v301
      %v590 = vunpack.c.l.b16 %v302
      %v591 = vunpack.c.l.b16 %v303
      %v592 = vunpack.c.l.b16 %v304
      %v593 = vunpack.c.l.b16 %v305
      %v594 = vunpack.c.l.b16 %v306
      %v595 = vunpack.c.l.b16 %v307
      %v596 = vunpack.c.l.b16 %v308
      %v597 = vunpack.c.l.b16 %v309
      %v598 = vunpack.c.l.b16 %v310
      %v599 = vunpack.c.l.b16 %v311
      %v600 = vunpack.c.l.b16 %v312
      %v601 = vunpack.c.l.b16 %v313
      %v602 = vunpack.c.l.b16 %v314
      %v603 = vunpack.c.l.b16 %v315
      %v604 = vunpack.c.l.b16 %v316
      %v605 = vunpack.c.l.b16 %v317
      %v606 = vunpack.c.l.b16 %v318
      %v607 = vunpack.c.l.b16 %v319
      %v608 = vunpack.c.l.b16 %v320
      %v609 = vunpack.c.l.b16 %v321
      %v610 = vunpack.c.l.b16 %v322
      %v611 = vunpack.c.l.b16 %v323
      %v612 = vunpack.c.l.b16 %v324
      %v613 = vunpack.c.l.b16 %v325
      %v614 = vunpack.c.l.b16 %v326
      %v615 = vunpack.c.l.b16 %v327
      %v616 = vunpack.c.l.b16 %v328
      %v617 = vunpack.c.l.b16 %v329
      %v618 = vunpack.c.l.b16 %v330
      %v619 = vunpack.c.l.b16 %v331
      %v620 = vunpack.c.l.b16 %v332
      %v621 = vunpack.c.l.b16 %v333
      %v622 = vunpack.c.l.b16 %v334
      %v623 = vunpack.c.l.b16 %v335
      %v624 = vunpack.c.l.b16 %v336
      %v625 = vunpack.c.l.b16 %v337
      %v626 = vunpack.c.l.b16 %v338
      %v627 = vunpack.c.l.b16 %v339
      %v628 = vunpack.c.l.b16 %v340
      %v629 = vunpack.c.l.b16 %v341
      %v630 = vunpack.c.l.b16 %v342
      %v631 = vunpack.c.l.b16 %v343
      %v632 = vunpack.c.l.b16 %v344
      %v633 = vunpack.c.l.b16 %v345
      %v634 = vunpack.c.l.b16 %v346
      %v635 = vunpack.c.l.b16 %v347
      %v636 = vunpack.c.l.b16 %v348
      %v637 = vpack.c.b16 %v574, %v573
      %v638 = vpack.c.b16 %v576, %v575
      %v639 = vpack.c.b16 %v578, %v577
      %v640 = vpack.c.b16 %v580, %v579
      %v641 = vpack.c.b16 %v582, %v581
      %v642 = vpack.c.b16 %v584, %v583
      %v643 = vpack.c.b16 %v586, %v585
      %v644 = vpack.c.b16 %v588, %v587
      %v645 = vpack.c.b16 %v590, %v589
      %v646 = vpack.c.b16 %v592, %v591
      %v647 = vpack.c.b16 %v594, %v593
      %v648 = vpack.c.b16 %v596, %v595
      %v649 = vpack.c.b16 %v598, %v597
      %v650 = vpack.c.b16 %v600, %v599
      %v651 = vpack.c.b16 %v602, %v601
      %v652 = vpack.c.b16 %v604, %v603
      %v653 = vpack.c.b16 %v606, %v605
      %v654 = vpack.c.b16 %v608, %v607
      %v655 = vpack.c.b16 %v610, %v609
      %v656 = vpack.c.b16 %v612, %v611
      %v657 = vpack.c.b16 %v614, %v613
      %v658 = vpack.c.b16 %v616, %v615
      %v659 = vpack.c.b16 %v618, %v617
      %v660 = vpack.c.b16 %v620, %v619
      %v661 = vpack.c.b16 %v622, %v621
      %v662 = vpack.c.b16 %v624, %v623
      %v663 = vpack.c.b16 %v626, %v625
      %v664 = vpack.c.b16 %v628, %v627
      %v665 = vpack.c.b16 %v630, %v629
      %v666 = vpack.c.b16 %v632, %v631
      %v667 = vpack.c.b16 %v634, %v633
      %v668 = vpack.c.b16 %v636, %v635
      %701 = vmatprep.subr.bf16.mxu0 0
      %702 = vmatpush1.bf16.msra.mxu0 %v637
      %703 = vmatprep.subr.bf16.mxu0 0
      %704 = vmatpush1.bf16.msra.mxu0 %v638
      %705 = vmatprep.subr.bf16.mxu0 0
      %706 = vmatpush1.bf16.msra.mxu0 %v639
      %707 = vmatprep.subr.bf16.mxu0 0
      %708 = vmatpush1.bf16.msra.mxu0 %v640
      %709 = vmatprep.subr.bf16.mxu0 0
      %710 = vmatpush1.bf16.msra.mxu0 %v641
      %711 = vmatprep.subr.bf16.mxu0 0
      %712 = vmatpush1.bf16.msra.mxu0 %v642
      %713 = vmatprep.subr.bf16.mxu0 0
      %714 = vmatpush1.bf16.msra.mxu0 %v643
      %715 = vmatprep.subr.bf16.mxu0 0
      %716 = vmatpush1.bf16.msra.mxu0 %v644
      %717 = vmatprep.subr.bf16.mxu0 0
      %718 = vmatpush1.bf16.msra.mxu0 %v645
      %719 = vmatprep.subr.bf16.mxu0 0
      %720 = vmatpush1.bf16.msra.mxu0 %v646
      %721 = vmatprep.subr.bf16.mxu0 0
      %722 = vmatpush1.bf16.msra.mxu0 %v647
      %723 = vmatprep.subr.bf16.mxu0 0
      %724 = vmatpush1.bf16.msra.mxu0 %v648
      %725 = vmatprep.subr.bf16.mxu0 0
      %726 = vmatpush1.bf16.msra.mxu0 %v649
      %727 = vmatprep.subr.bf16.mxu0 0
      %728 = vmatpush1.bf16.msra.mxu0 %v650
      %729 = vmatprep.subr.bf16.mxu0 0
      %730 = vmatpush1.bf16.msra.mxu0 %v651
      %731 = vmatprep.subr.bf16.mxu0 0
      %732 = vmatpush1.bf16.msra.mxu0 %v652
      %733 = vmatprep.mubr.bf16.mxu0 %v446
      %734 = vmatmul.mubr.bf16.gmra.mrb[0].mxu0 %v445
      %v735 = vpop.f32.mrb[0].mxu0
      %v736 = vadd.f32 0.0, %v735
      %v737 = vpop.f32.mrb[0].mxu0
      %v738 = vpop.f32.mrb[0].mxu0
      %v739 = vadd.f32 0.0, %v738
      %v740 = vpop.f32.mrb[0].mxu0
      %741 = vmatprep.mubr.bf16.mxu0 %v450
      %742 = vmatmul.mubr.bf16.gmra.mrb[0].mxu0 %v449
      %v743 = vpop.f32.mrb[0].mxu0
      %v744 = vadd.f32 0.0, %v743
      %v745 = vpop.f32.mrb[0].mxu0
      %v746 = vpop.f32.mrb[0].mxu0
      %v747 = vadd.f32 0.0, %v746
      %v748 = vpop.f32.mrb[0].mxu0
      %749 = vmatprep.mubr.bf16.mxu0 %v454
      %750 = vmatmul.mubr.bf16.gmra.mrb[0].mxu0 %v453
      %v751 = vpop.f32.mrb[0].mxu0
      %v752 = vadd.f32 0.0, %v751
      %v753 = vpop.f32.mrb[0].mxu0
      %v754 = vpop.f32.mrb[0].mxu0
      %v755 = vadd.f32 0.0, %v754
      %v756 = vpop.f32.mrb[0].mxu0
      %757 = vmatprep.mubr.bf16.mxu0 %v458
      %758 = vmatmul.mubr.bf16.gmra.mrb[0].mxu0 %v457
      %v759 = vpop.f32.mrb[0].mxu0
      %v760 = vadd.f32 0.0, %v759
      %v761 = vpop.f32.mrb[0].mxu0
      %v762 = vpop.f32.mrb[0].mxu0
      %v763 = vadd.f32 0.0, %v762
      %v764 = vpop.f32.mrb[0].mxu0
      %765 = vmatprep.mubr.bf16.mxu0 %v462
      %766 = vmatmul.mubr.bf16.gmra.mrb[0].mxu0 %v461
      %v767 = vpop.f32.mrb[0].mxu0
      %v768 = vadd.f32 0.0, %v767
      %v769 = vpop.f32.mrb[0].mxu0
      %v770 = vpop.f32.mrb[0].mxu0
      %v771 = vadd.f32 0.0, %v770
      %v772 = vpop.f32.mrb[0].mxu0
      %773 = vmatprep.mubr.bf16.mxu0 %v466
      %774 = vmatmul.mubr.bf16.gmra.mrb[0].mxu0 %v465
      %v775 = vpop.f32.mrb[0].mxu0
      %v776 = vadd.f32 0.0, %v775
      %v777 = vpop.f32.mrb[0].mxu0
      %v778 = vpop.f32.mrb[0].mxu0
      %v779 = vadd.f32 0.0, %v778
      %v780 = vpop.f32.mrb[0].mxu0
      %781 = vmatprep.mubr.bf16.mxu0 %v470
      %782 = vmatmul.mubr.bf16.gmra.mrb[0].mxu0 %v469
      %v783 = vpop.f32.mrb[0].mxu0
      %v784 = vadd.f32 0.0, %v783
      %v785 = vpop.f32.mrb[0].mxu0
      %v786 = vpop.f32.mrb[0].mxu0
      %v787 = vadd.f32 0.0, %v786
      %v788 = vpop.f32.mrb[0].mxu0
      %789 = vmatprep.mubr.bf16.mxu0 %v474
      %790 = vmatmul.mubr.bf16.gmra.mrb[0].mxu0 %v473
      %v791 = vpop.f32.mrb[0].mxu0
      %v792 = vadd.f32 0.0, %v791
      %v793 = vpop.f32.mrb[0].mxu0
      %v794 = vpop.f32.mrb[0].mxu0
      %v795 = vadd.f32 0.0, %v794
      %v796 = vpop.f32.mrb[0].mxu0
      %797 = vdwg.mxu0
      %798 = vmatprep.subr.bf16.mxu0 0
      %799 = vmatpush1.bf16.msra.mxu0 %v653
      %800 = vmatprep.subr.bf16.mxu0 0
      %801 = vmatpush1.bf16.msra.mxu0 %v654
      %802 = vmatprep.subr.bf16.mxu0 0
      %803 = vmatpush1.bf16.msra.mxu0 %v655
      %804 = vmatprep.subr.bf16.mxu0 0
      %805 = vmatpush1.bf16.msra.mxu0 %v656
      %806 = vmatprep.subr.bf16.mxu0 0
      %807 = vmatpush1.bf16.msra.mxu0 %v657
      %808 = vmatprep.subr.bf16.mxu0 0
      %809 = vmatpush1.bf16.msra.mxu0 %v658
      %810 = vmatprep.subr.bf16.mxu0 0
      %811 = vmatpush1.bf16.msra.mxu0 %v659
      %812 = vmatprep.subr.bf16.mxu0 0
      %813 = vmatpush1.bf16.msra.mxu0 %v660
      %814 = vmatprep.subr.bf16.mxu0 0
      %815 = vmatpush1.bf16.msra.mxu0 %v661
      %816 = vmatprep.subr.bf16.mxu0 0
      %817 = vmatpush1.bf16.msra.mxu0 %v662
      %818 = vmatprep.subr.bf16.mxu0 0
      %819 = vmatpush1.bf16.msra.mxu0 %v663
      %820 = vmatprep.subr.bf16.mxu0 0
      %821 = vmatpush1.bf16.msra.mxu0 %v664
      %822 = vmatprep.subr.bf16.mxu0 0
      %823 = vmatpush1.bf16.msra.mxu0 %v665
      %824 = vmatprep.subr.bf16.mxu0 0
      %825 = vmatpush1.bf16.msra.mxu0 %v666
      %826 = vmatprep.subr.bf16.mxu0 0
      %827 = vmatpush1.bf16.msra.mxu0 %v667
      %828 = vmatprep.subr.bf16.mxu0 0
      %829 = vmatpush1.bf16.msra.mxu0 %v668
      %830 = vmatprep.mubr.bf16.mxu0 %v448
      %831 = vmatmul.mubr.bf16.gmra.mrb[0].mxu0 %v447
      %v832 = vpop.f32.mrb[0].mxu0
      %v833 = vadd.f32 %v736, %v832
      %v834 = vpop.f32.mrb[0].mxu0
      %v835 = vpop.f32.mrb[0].mxu0
      %v836 = vadd.f32 %v739, %v835
      %v837 = vpop.f32.mrb[0].mxu0
      %838 = vmatprep.mubr.bf16.mxu0 %v452
      %839 = vmatmul.mubr.bf16.gmra.mrb[0].mxu0 %v451
      %v840 = vpop.f32.mrb[0].mxu0
      %v841 = vadd.f32 %v744, %v840
      %v842 = vpop.f32.mrb[0].mxu0
      %v843 = vpop.f32.mrb[0].mxu0
      %v844 = vadd.f32 %v747, %v843
      %v845 = vpop.f32.mrb[0].mxu0
      %846 = vmatprep.mubr.bf16.mxu0 %v456
      %847 = vmatmul.mubr.bf16.gmra.mrb[0].mxu0 %v455
      %v848 = vpop.f32.mrb[0].mxu0
      %v849 = vadd.f32 %v752, %v848
      %v850 = vpop.f32.mrb[0].mxu0
      %v851 = vpop.f32.mrb[0].mxu0
      %v852 = vadd.f32 %v755, %v851
      %v853 = vpop.f32.mrb[0].mxu0
      %854 = vmatprep.mubr.bf16.mxu0 %v460
      %855 = vmatmul.mubr.bf16.gmra.mrb[0].mxu0 %v459
      %v856 = vpop.f32.mrb[0].mxu0
      %v857 = vadd.f32 %v760, %v856
      %v858 = vpop.f32.mrb[0].mxu0
      %v859 = vpop.f32.mrb[0].mxu0
      %v860 = vadd.f32 %v763, %v859
      %v861 = vpop.f32.mrb[0].mxu0
      %862 = vmatprep.mubr.bf16.mxu0 %v464
      %863 = vmatmul.mubr.bf16.gmra.mrb[0].mxu0 %v463
      %v864 = vpop.f32.mrb[0].mxu0
      %v865 = vadd.f32 %v768, %v864
      %v866 = vpop.f32.mrb[0].mxu0
      %v867 = vpop.f32.mrb[0].mxu0
      %v868 = vadd.f32 %v771, %v867
      %v869 = vpop.f32.mrb[0].mxu0
      %870 = vmatprep.mubr.bf16.mxu0 %v468
      %871 = vmatmul.mubr.bf16.gmra.mrb[0].mxu0 %v467
      %v872 = vpop.f32.mrb[0].mxu0
      %v873 = vadd.f32 %v776, %v872
      %v874 = vpop.f32.mrb[0].mxu0
      %v875 = vpop.f32.mrb[0].mxu0
      %v876 = vadd.f32 %v779, %v875
      %v877 = vpop.f32.mrb[0].mxu0
      %878 = vmatprep.mubr.bf16.mxu0 %v472
      %879 = vmatmul.mubr.bf16.gmra.mrb[0].mxu0 %v471
      %v880 = vpop.f32.mrb[0].mxu0
      %v881 = vadd.f32 %v784, %v880
      %v882 = vpop.f32.mrb[0].mxu0
      %v883 = vpop.f32.mrb[0].mxu0
      %v884 = vadd.f32 %v787, %v883
      %v885 = vpop.f32.mrb[0].mxu0
      %886 = vmatprep.mubr.bf16.mxu0 %v476
      %887 = vmatmul.mubr.bf16.gmra.mrb[0].mxu0 %v475
      %v888 = vpop.f32.mrb[0].mxu0
      %v889 = vadd.f32 %v792, %v888
      %v890 = vpop.f32.mrb[0].mxu0
      %v891 = vpop.f32.mrb[0].mxu0
      %v892 = vadd.f32 %v795, %v891
      %v893 = vpop.f32.mrb[0].mxu0
      %894 = vdwg.mxu0
      %v895 = vpack.c.bf16 %v836, %v833
      %v896 = vpack.c.bf16 %v844, %v841
      %v897 = vpack.c.bf16 %v852, %v849
      %v898 = vpack.c.bf16 %v860, %v857
      %v899 = vpack.c.bf16 %v868, %v865
      %v900 = vpack.c.bf16 %v876, %v873
      %v901 = vpack.c.bf16 %v884, %v881
      %v902 = vpack.c.bf16 %v892, %v889
      %v911 = vunpack.c.l.b16 %v895
      %v912 = vunpack.c.h.b16 %v895
      %v913 = vunpack.c.l.b16 %v896
      %v914 = vunpack.c.h.b16 %v896
      %v915 = vunpack.c.l.b16 %v897
      %v916 = vunpack.c.h.b16 %v897
      %v917 = vunpack.c.l.b16 %v898
      %v918 = vunpack.c.h.b16 %v898
      %v919 = vunpack.c.l.b16 %v899
      %v920 = vunpack.c.h.b16 %v899
      %v921 = vunpack.c.l.b16 %v900
      %v922 = vunpack.c.h.b16 %v900
      %v923 = vunpack.c.l.b16 %v901
      %v924 = vunpack.c.h.b16 %v901
      %v925 = vunpack.c.l.b16 %v902
      %v926 = vunpack.c.h.b16 %v902
      %v927 = vpack.c.b16 %v911, %v911
      %v928 = vpack.c.b16 %v912, %v912
      %v929 = vpack.c.b16 %v913, %v913
      %v930 = vpack.c.b16 %v914, %v914
      %v931 = vpack.c.b16 %v915, %v915
      %v932 = vpack.c.b16 %v916, %v916
      %v933 = vpack.c.b16 %v917, %v917
      %v934 = vpack.c.b16 %v918, %v918
      %v935 = vpack.c.b16 %v919, %v919
      %v936 = vpack.c.b16 %v920, %v920
      %v937 = vpack.c.b16 %v921, %v921
      %v938 = vpack.c.b16 %v922, %v922
      %v939 = vpack.c.b16 %v923, %v923
      %v940 = vpack.c.b16 %v924, %v924
      %v941 = vpack.c.b16 %v925, %v925
      %v942 = vpack.c.b16 %v926, %v926
      %959 = vst [vmem:[%s243] sm:$0xf] %v927
      %960 = vst [vmem:[%s243 + $0x4] sm:$0xf] %v928
      %961 = vst [vmem:[%s243 + $0x8] sm:$0xf] %v929
      %962 = vst [vmem:[%s243 + $0xc] sm:$0xf] %v930
      %963 = vst [vmem:[%s243 + $0x10] sm:$0xf] %v931
      %964 = vst [vmem:[%s243 + $0x14] sm:$0xf] %v932
      %965 = vst [vmem:[%s243 + $0x18] sm:$0xf] %v933
      %966 = vst [vmem:[%s243 + $0x1c] sm:$0xf] %v934
      %967 = vst [vmem:[%s243 + $0x20] sm:$0xf] %v935
      %968 = vst [vmem:[%s243 + $0x24] sm:$0xf] %v936
      %969 = vst [vmem:[%s243 + $0x28] sm:$0xf] %v937
      %970 = vst [vmem:[%s243 + $0x2c] sm:$0xf] %v938
      %971 = vst [vmem:[%s243 + $0x30] sm:$0xf] %v939
      %972 = vst [vmem:[%s243 + $0x34] sm:$0xf] %v940
      %973 = vst [vmem:[%s243 + $0x38] sm:$0xf] %v941
      %974 = vst [vmem:[%s243 + $0x3c] sm:$0xf] %v942
      %v975 = vadd.f32 %v833, %v836
      %v976 = vadd.f32 %v975, %v841
      %v977 = vadd.f32 %v976, %v844
      %v978 = vadd.f32 %v977, %v849
      %v979 = vadd.f32 %v978, %v852
      %v980 = vadd.f32 %v979, %v857
      %v981 = vadd.f32 %v980, %v860
      %v982 = vadd.f32 %v981, %v865
      %v983 = vadd.f32 %v982, %v868
      %v984 = vadd.f32 %v983, %v873
      %v985 = vadd.f32 %v984, %v876
      %v986 = vadd.f32 %v985, %v881
      %v987 = vadd.f32 %v986, %v884
      %v988 = vadd.f32 %v987, %v889
      %v989 = vadd.f32 %v988, %v892
      %v990 = vrot.slane %v989, 4
      %v991 = vadd.f32 %v989, %v990
      %v992 = vrot.slane %v991, 2
      %v993 = vadd.f32 %v991, %v992
      %v994 = vrot.slane %v993, 1
      %v995 = vadd.f32 %v993, %v994
      %v996 = vmul.f32 %v833, %v833
      %v997 = vmul.f32 %v836, %v836
      %v998 = vmul.f32 %v841, %v841
      %v999 = vmul.f32 %v844, %v844
      %v1000 = vmul.f32 %v849, %v849
      %v1001 = vmul.f32 %v852, %v852
      %v1002 = vmul.f32 %v857, %v857
      %v1003 = vmul.f32 %v860, %v860
      %v1004 = vmul.f32 %v865, %v865
      %v1005 = vmul.f32 %v868, %v868
      %v1006 = vmul.f32 %v873, %v873
      %v1007 = vmul.f32 %v876, %v876
      %v1008 = vmul.f32 %v881, %v881
      %v1009 = vmul.f32 %v884, %v884
      %v1010 = vmul.f32 %v889, %v889
      %v1011 = vmul.f32 %v892, %v892
      %v1012 = vadd.f32 %v996, %v997
      %v1013 = vadd.f32 %v1012, %v998
      %v1014 = vadd.f32 %v1013, %v999
      %v1015 = vadd.f32 %v1014, %v1000
      %v1016 = vadd.f32 %v1015, %v1001
      %v1017 = vadd.f32 %v1016, %v1002
      %v1018 = vadd.f32 %v1017, %v1003
      %v1019 = vadd.f32 %v1018, %v1004
      %v1020 = vadd.f32 %v1019, %v1005
      %v1021 = vadd.f32 %v1020, %v1006
      %v1022 = vadd.f32 %v1021, %v1007
      %v1023 = vadd.f32 %v1022, %v1008
      %v1024 = vadd.f32 %v1023, %v1009
      %v1025 = vadd.f32 %v1024, %v1010
      %v1026 = vadd.f32 %v1025, %v1011
      %v1027 = vrot.slane %v1026, 4
      %v1028 = vadd.f32 %v1026, %v1027
      %v1029 = vrot.slane %v1028, 2
      %v1030 = vadd.f32 %v1028, %v1029
      %v1031 = vrot.slane %v1030, 1
      %v1032 = vadd.f32 %v1030, %v1031
      %vm1033 = vcmask 1040384
      %v1034 = vsel %vm1033, %v995, %v1032
      %1035 = vst [vmem:[%s251] sm:$0x3] %v1034
      %s1036 = smul.u32 16, %s20
      %p1037 = scmp.lt.s32.totalorder %s19, 3
      %s1038 = scalar_select %p1037, %s19, 3
      %p1039 = scmp.lt.s32.totalorder %s1036, 15
      %s1040 = scalar_select %p1039, %s1036, 15
      %s1041 = smul.addr %s1038, 16
      %s1042 = sadd.s32 %s1040, %s1041
      %s1043 = smul.addr %s1042, 4
      %s1044 = scalar_lea.vmem %s2, %s1043
      %p1045 = scmp.lt.s32.totalorder %s19, 3
      %s1046 = scalar_select %p1045, %s19, 3
      %p1047 = scmp.lt.s32.totalorder %s20, 0
      %s1048 = scalar_select %p1047, %s20, 0
      %s1049 = sadd.s32 %s1048, %s1046
      %s1050 = smul.addr %s1049, 2
      %s1051 = scalar_lea.vmem %s3, %s1050
      // Predicated region
      $region29: #{decoder_layer_forward.6} parent=27 // pred_check
        %p1052 = pneg %p101
      $region30: #{decoder_layer_forward.6} parent=27 // pred_check_branch
        %1054 = sbr.rel (%p1052) target = $region32
      $region31: #{decoder_layer_forward.6} parent=27 // pred_region
        %s1055 = smul.u32 16, %s20
      $region32: #{decoder_layer_forward.6} parent=27 // pred_fallthru
        _
      // Predicated region
      $region33: #{decoder_layer_forward.6} parent=27 // pred_check
        %p1056 = pneg %p129
      $region34: #{decoder_layer_forward.6} parent=27 // pred_check_branch
        %1058 = sbr.rel (%p1056) target = $region36
      $region35: #{decoder_layer_forward.6} parent=27 // pred_region
        _
      $region36: #{decoder_layer_forward.6} parent=27 // pred_fallthru
        _
    $region28: #{decoder_layer_forward.6} parent=5 // pred_fallthru
      _
    %p1059 = scmp.le.s32.totalorder 2, %s10
    // Predicated region
    $region37: #{decoder_layer_forward.6} parent=5 // pred_check
      %p1060 = pneg %p1059
    $region38: #{decoder_layer_forward.6} parent=5 // pred_check_branch
      %1062 = sbr.rel (%p1060) target = $region40
    $region39: #{decoder_layer_forward.6} parent=5 // pred_region
      %s1063 = ssub.s32 %s10, 2
      // Predicated region
      $region41: #{decoder_layer_forward.6} parent=39 // pred_check
        %p1064 = pneg %p107
      $region42: #{decoder_layer_forward.6} parent=39 // pred_check_branch
        %1066 = sbr.rel (%p1064) target = $region44
      $region43: #{decoder_layer_forward.6} parent=39 // pred_region
        %s1067 = smul.u32 16, %s22
        %p1068 = scmp.lt.s32.totalorder %s21, 3
        %s1069 = scalar_select %p1068, %s21, 3
        %p1070 = scmp.lt.s32.totalorder %s1067, 15
        %s1071 = scalar_select %p1070, %s1067, 15
        %s1072 = smul.addr %s1069, 16
        %s1073 = sadd.s32 %s1071, %s1072
        %s1074 = smul.addr %s1073, 4
        %s1075 = scalar_lea.vmem %s2, %s1074
      $region44: #{decoder_layer_forward.6} parent=39 // pred_fallthru
        _
      // Predicated region
      $region45: #{decoder_layer_forward.6} parent=39 // pred_check
        %p1076 = pneg %p135
      $region46: #{decoder_layer_forward.6} parent=39 // pred_check_branch
        %1078 = sbr.rel (%p1076) target = $region48
      $region47: #{decoder_layer_forward.6} parent=39 // pred_region
        %p1079 = scmp.lt.s32.totalorder %s21, 3
        %s1080 = scalar_select %p1079, %s21, 3
        %p1081 = scmp.lt.s32.totalorder %s22, 0
        %s1082 = scalar_select %p1081, %s22, 0
        %s1083 = sadd.s32 %s1082, %s1080
        %s1084 = smul.addr %s1083, 2
        %s1085 = scalar_lea.vmem %s3, %s1084
      $region48: #{decoder_layer_forward.6} parent=39 // pred_fallthru
        _
    $region40: #{decoder_layer_forward.6} parent=5 // pred_fallthru
      _
  $region6: #{decoder_layer_forward.6} parent=0 // loop_footer
    %s14 = sadd.s32 1, %s10
  $region7: #{decoder_layer_forward.6} parent=0 // loop_footer_branch
    %9 = sbr.rel target = $region3
  $region8: #{decoder_layer_forward.6} parent=0 // loop_exit
    _

// kernel: decoder_layer_forward.9
$region0: #{decoder_layer_forward.9}
  #allocation0 [shape = 'u32[]', space=smem, size = 0x4, offset = 0x4, fixed_abs, tag = 'smem constant byte address 0x4 - core index']
  #allocation1 [shape = 'u32[144,128]{1,0:T(1,128)}', space=vmem, size = 0x12000, scoped, tag = 'internal scratch']
  %s0 = inlined_call_operand.vmem [shape: bf16[1,512,128], index: 0, kind: input, shape index: {}]
  %s1 = inlined_call_operand.vmem [shape: f32[1,128], index: 1, kind: input, shape index: {}]
  %s2 = inlined_call_operand.vmem [shape: f32[1,128], index: 2, kind: input, shape index: {}]
  %s3 = inlined_call_operand.vmem [shape: f32[1,512,128], index: 3, kind: input, shape index: {}, may-alias: {3,4}]
  %s4 = inlined_call_operand.vmem [shape: f32[1,512,128], index: 4, kind: output, shape index: {0}, may-alias: {3,4}]
  %s5 = inlined_call_operand.vmem [shape: bf16[1,512,128], index: 5, kind: output, shape index: {1}]
  %6 = xla_tuple %s4, %s5
  %s7 = sld [smem:[#allocation0]]
  $region34: #{decoder_layer_forward.9} parent=0
    _
  %s9 = ssub.s32 1, %s7
  %s10 = scalar_select 0, %s9, %s7
  // Predicated region
  $region2: #{decoder_layer_forward.9} parent=0 // pred_check
    _
  $region3: #{decoder_layer_forward.9} parent=0 // pred_check_branch
    %12 = sbr.rel (0) target = $region5
  $region4: #{decoder_layer_forward.9} parent=0 // pred_region
    _
  $region5: #{decoder_layer_forward.9} parent=0 // pred_fallthru
    _
  // Predicated region
  $region6: #{decoder_layer_forward.9} parent=0 // pred_check
    _
  $region7: #{decoder_layer_forward.9} parent=0 // pred_check_branch
    %14 = sbr.rel (0) target = $region9
  $region8: #{decoder_layer_forward.9} parent=0 // pred_region
    _
  $region9: #{decoder_layer_forward.9} parent=0 // pred_fallthru
    _
  // Predicated region
  $region10: #{decoder_layer_forward.9} parent=0 // pred_check
    _
  $region11: #{decoder_layer_forward.9} parent=0 // pred_check_branch
    %16 = sbr.rel (0) target = $region13
  $region12: #{decoder_layer_forward.9} parent=0 // pred_region
    _
  $region13: #{decoder_layer_forward.9} parent=0 // pred_fallthru
    _
  // Predicated region
  $region14: #{decoder_layer_forward.9} parent=0 // pred_check
    _
  $region15: #{decoder_layer_forward.9} parent=0 // pred_check_branch
    %18 = sbr.rel (0) target = $region17
  $region16: #{decoder_layer_forward.9} parent=0 // pred_region
    _
  $region17: #{decoder_layer_forward.9} parent=0 // pred_fallthru
    _
  %v19 = vld [vmem:[%s0] sm:$0xf]
  %v20 = vld [vmem:[%s0 + $0x4] sm:$0xf]
  %v21 = vld [vmem:[%s0 + $0x8] sm:$0xf]
  %v22 = vld [vmem:[%s0 + $0xc] sm:$0xf]
  %v23 = vld [vmem:[%s0 + $0x10] sm:$0xf]
  %v24 = vld [vmem:[%s0 + $0x14] sm:$0xf]
  %v25 = vld [vmem:[%s0 + $0x18] sm:$0xf]
  %v26 = vld [vmem:[%s0 + $0x1c] sm:$0xf]
  %v27 = vld [vmem:[%s0 + $0x20] sm:$0xf]
  %v28 = vld [vmem:[%s0 + $0x24] sm:$0xf]
  %v29 = vld [vmem:[%s0 + $0x28] sm:$0xf]
  %v30 = vld [vmem:[%s0 + $0x2c] sm:$0xf]
  %v31 = vld [vmem:[%s0 + $0x30] sm:$0xf]
  %v32 = vld [vmem:[%s0 + $0x34] sm:$0xf]
  %v33 = vld [vmem:[%s0 + $0x38] sm:$0xf]
  %v34 = vld [vmem:[%s0 + $0x3c] sm:$0xf]
  %v35 = vld [vmem:[%s0 + $0x40] sm:$0xf]
  %v36 = vld [vmem:[%s0 + $0x44] sm:$0xf]
  %v37 = vld [vmem:[%s0 + $0x48] sm:$0xf]
  %v38 = vld [vmem:[%s0 + $0x4c] sm:$0xf]
  %v39 = vld [vmem:[%s0 + $0x50] sm:$0xf]
  %v40 = vld [vmem:[%s0 + $0x54] sm:$0xf]
  %v41 = vld [vmem:[%s0 + $0x58] sm:$0xf]
  %v42 = vld [vmem:[%s0 + $0x5c] sm:$0xf]
  %v43 = vld [vmem:[%s0 + $0x60] sm:$0xf]
  %v44 = vld [vmem:[%s0 + $0x64] sm:$0xf]
  %v45 = vld [vmem:[%s0 + $0x68] sm:$0xf]
  %v46 = vld [vmem:[%s0 + $0x6c] sm:$0xf]
  %v47 = vld [vmem:[%s0 + $0x70] sm:$0xf]
  %v48 = vld [vmem:[%s0 + $0x74] sm:$0xf]
  %v49 = vld [vmem:[%s0 + $0x78] sm:$0xf]
  %v50 = vld [vmem:[%s0 + $0x7c] sm:$0xf]
  %v51 = vld [vmem:[%s0 + $0x80] sm:$0xf]
  %v52 = vld [vmem:[%s0 + $0x84] sm:$0xf]
  %v53 = vld [vmem:[%s0 + $0x88] sm:$0xf]
  %v54 = vld [vmem:[%s0 + $0x8c] sm:$0xf]
  %v55 = vld [vmem:[%s0 + $0x90] sm:$0xf]
  %v56 = vld [vmem:[%s0 + $0x94] sm:$0xf]
  %v57 = vld [vmem:[%s0 + $0x98] sm:$0xf]
  %v58 = vld [vmem:[%s0 + $0x9c] sm:$0xf]
  %v59 = vld [vmem:[%s0 + $0xa0] sm:$0xf]
  %v60 = vld [vmem:[%s0 + $0xa4] sm:$0xf]
  %v61 = vld [vmem:[%s0 + $0xa8] sm:$0xf]
  %v62 = vld [vmem:[%s0 + $0xac] sm:$0xf]
  %v63 = vld [vmem:[%s0 + $0xb0] sm:$0xf]
  %v64 = vld [vmem:[%s0 + $0xb4] sm:$0xf]
  %v65 = vld [vmem:[%s0 + $0xb8] sm:$0xf]
  %v66 = vld [vmem:[%s0 + $0xbc] sm:$0xf]
  %v67 = vld [vmem:[%s0 + $0xc0] sm:$0xf]
  %v68 = vld [vmem:[%s0 + $0xc4] sm:$0xf]
  %v69 = vld [vmem:[%s0 + $0xc8] sm:$0xf]
  %v70 = vld [vmem:[%s0 + $0xcc] sm:$0xf]
  %v71 = vld [vmem:[%s0 + $0xd0] sm:$0xf]
  %v72 = vld [vmem:[%s0 + $0xd4] sm:$0xf]
  %v73 = vld [vmem:[%s0 + $0xd8] sm:$0xf]
  %v74 = vld [vmem:[%s0 + $0xdc] sm:$0xf]
  %v75 = vld [vmem:[%s0 + $0xe0] sm:$0xf]
  %v76 = vld [vmem:[%s0 + $0xe4] sm:$0xf]
  %v77 = vld [vmem:[%s0 + $0xe8] sm:$0xf]
  %v78 = vld [vmem:[%s0 + $0xec] sm:$0xf]
  %v79 = vld [vmem:[%s0 + $0xf0] sm:$0xf]
  %v80 = vld [vmem:[%s0 + $0xf4] sm:$0xf]
  %v81 = vld [vmem:[%s0 + $0xf8] sm:$0xf]
  %v82 = vld [vmem:[%s0 + $0xfc] sm:$0xf]
  %v83 = vunpack.c.l.bf16 %v19
  %v84 = vunpack.c.l.bf16 %v20
  %v85 = vunpack.c.l.bf16 %v21
  %v86 = vunpack.c.l.bf16 %v22
  %v87 = vunpack.c.l.bf16 %v23
  %v88 = vunpack.c.l.bf16 %v24
  %v89 = vunpack.c.l.bf16 %v25
  %v90 = vunpack.c.l.bf16 %v26
  %v91 = vunpack.c.l.bf16 %v27
  %v92 = vunpack.c.l.bf16 %v28
  %v93 = vunpack.c.l.bf16 %v29
  %v94 = vunpack.c.l.bf16 %v30
  %v95 = vunpack.c.l.bf16 %v31
  %v96 = vunpack.c.l.bf16 %v32
  %v97 = vunpack.c.l.bf16 %v33
  %v98 = vunpack.c.l.bf16 %v34
  %v99 = vunpack.c.l.bf16 %v35
  %v100 = vunpack.c.l.bf16 %v36
  %v101 = vunpack.c.l.bf16 %v37
  %v102 = vunpack.c.l.bf16 %v38
  %v103 = vunpack.c.l.bf16 %v39
  %v104 = vunpack.c.l.bf16 %v40
  %v105 = vunpack.c.l.bf16 %v41
  %v106 = vunpack.c.l.bf16 %v42
  %v107 = vunpack.c.l.bf16 %v43
  %v108 = vunpack.c.l.bf16 %v44
  %v109 = vunpack.c.l.bf16 %v45
  %v110 = vunpack.c.l.bf16 %v46
  %v111 = vunpack.c.l.bf16 %v47
  %v112 = vunpack.c.l.bf16 %v48
  %v113 = vunpack.c.l.bf16 %v49
  %v114 = vunpack.c.l.bf16 %v50
  %v115 = vunpack.c.l.bf16 %v51
  %v116 = vunpack.c.l.bf16 %v52
  %v117 = vunpack.c.l.bf16 %v53
  %v118 = vunpack.c.l.bf16 %v54
  %v119 = vunpack.c.l.bf16 %v55
  %v120 = vunpack.c.l.bf16 %v56
  %v121 = vunpack.c.l.bf16 %v57
  %v122 = vunpack.c.l.bf16 %v58
  %v123 = vunpack.c.l.bf16 %v59
  %v124 = vunpack.c.l.bf16 %v60
  %v125 = vunpack.c.l.bf16 %v61
  %v126 = vunpack.c.l.bf16 %v62
  %v127 = vunpack.c.l.bf16 %v63
  %v128 = vunpack.c.l.bf16 %v64
  %v129 = vunpack.c.l.bf16 %v65
  %v130 = vunpack.c.l.bf16 %v66
  %v131 = vunpack.c.l.bf16 %v67
  %v132 = vunpack.c.l.bf16 %v68
  %v133 = vunpack.c.l.bf16 %v69
  %v134 = vunpack.c.l.bf16 %v70
  %v135 = vunpack.c.l.bf16 %v71
  %v136 = vunpack.c.l.bf16 %v72
  %v137 = vunpack.c.l.bf16 %v73
  %v138 = vunpack.c.l.bf16 %v74
  %v139 = vunpack.c.l.bf16 %v75
  %v140 = vunpack.c.l.bf16 %v76
  %v141 = vunpack.c.l.bf16 %v77
  %v142 = vunpack.c.l.bf16 %v78
  %v143 = vunpack.c.l.bf16 %v79
  %v144 = vunpack.c.l.bf16 %v80
  %v145 = vunpack.c.l.bf16 %v81
  %v146 = vunpack.c.l.bf16 %v82
  %v147 = vld [vmem:[%s1] sm:$0x1]
  %v149 = vlaneseq
  %v150 = vshrl.u32 %v149, 7
  %v151 = vsub.s32 0, %v150
  %v152 = vrot.slane %v147, %v151
  %v154 = vmul.f32 %v83, %v152
  %v155 = vmul.f32 %v84, %v152
  %v156 = vmul.f32 %v85, %v152
  %v157 = vmul.f32 %v86, %v152
  %v158 = vmul.f32 %v87, %v152
  %v159 = vmul.f32 %v88, %v152
  %v160 = vmul.f32 %v89, %v152
  %v161 = vmul.f32 %v90, %v152
  %v162 = vmul.f32 %v91, %v152
  %v163 = vmul.f32 %v92, %v152
  %v164 = vmul.f32 %v93, %v152
  %v165 = vmul.f32 %v94, %v152
  %v166 = vmul.f32 %v95, %v152
  %v167 = vmul.f32 %v96, %v152
  %v168 = vmul.f32 %v97, %v152
  %v169 = vmul.f32 %v98, %v152
  %v170 = vmul.f32 %v99, %v152
  %v171 = vmul.f32 %v100, %v152
  %v172 = vmul.f32 %v101, %v152
  %v173 = vmul.f32 %v102, %v152
  %v174 = vmul.f32 %v103, %v152
  %v175 = vmul.f32 %v104, %v152
  %v176 = vmul.f32 %v105, %v152
  %v177 = vmul.f32 %v106, %v152
  %v178 = vmul.f32 %v107, %v152
  %v179 = vmul.f32 %v108, %v152
  %v180 = vmul.f32 %v109, %v152
  %v181 = vmul.f32 %v110, %v152
  %v182 = vmul.f32 %v111, %v152
  %v183 = vmul.f32 %v112, %v152
  %v184 = vmul.f32 %v113, %v152
  %v185 = vmul.f32 %v114, %v152
  %v186 = vmul.f32 %v115, %v152
  %v187 = vmul.f32 %v116, %v152
  %v188 = vmul.f32 %v117, %v152
  %v189 = vmul.f32 %v118, %v152
  %v190 = vmul.f32 %v119, %v152
  %v191 = vmul.f32 %v120, %v152
  %v192 = vmul.f32 %v121, %v152
  %v193 = vmul.f32 %v122, %v152
  %v194 = vmul.f32 %v123, %v152
  %v195 = vmul.f32 %v124, %v152
  %v196 = vmul.f32 %v125, %v152
  %v197 = vmul.f32 %v126, %v152
  %v198 = vmul.f32 %v127, %v152
  %v199 = vmul.f32 %v128, %v152
  %v200 = vmul.f32 %v129, %v152
  %v201 = vmul.f32 %v130, %v152
  %v202 = vmul.f32 %v131, %v152
  %v203 = vmul.f32 %v132, %v152
  %v204 = vmul.f32 %v133, %v152
  %v205 = vmul.f32 %v134, %v152
  %v206 = vmul.f32 %v135, %v152
  %v207 = vmul.f32 %v136, %v152
  %v208 = vmul.f32 %v137, %v152
  %v209 = vmul.f32 %v138, %v152
  %v210 = vmul.f32 %v139, %v152
  %v211 = vmul.f32 %v140, %v152
  %v212 = vmul.f32 %v141, %v152
  %v213 = vmul.f32 %v142, %v152
  %v214 = vmul.f32 %v143, %v152
  %v215 = vmul.f32 %v144, %v152
  %v216 = vmul.f32 %v145, %v152
  %v217 = vmul.f32 %v146, %v152
  %v218 = vld [vmem:[%s2] sm:$0x1]
  %v220 = vlaneseq
  %v221 = vshrl.u32 %v220, 7
  %v222 = vsub.s32 0, %v221
  %v223 = vrot.slane %v218, %v222
  %v225 = vadd.f32 %v154, %v223
  %v226 = vadd.f32 %v155, %v223
  %v227 = vadd.f32 %v156, %v223
  %v228 = vadd.f32 %v157, %v223
  %v229 = vadd.f32 %v158, %v223
  %v230 = vadd.f32 %v159, %v223
  %v231 = vadd.f32 %v160, %v223
  %v232 = vadd.f32 %v161, %v223
  %v233 = vadd.f32 %v162, %v223
  %v234 = vadd.f32 %v163, %v223
  %v235 = vadd.f32 %v164, %v223
  %v236 = vadd.f32 %v165, %v223
  %v237 = vadd.f32 %v166, %v223
  %v238 = vadd.f32 %v167, %v223
  %v239 = vadd.f32 %v168, %v223
  %v240 = vadd.f32 %v169, %v223
  %v241 = vadd.f32 %v170, %v223
  %v242 = vadd.f32 %v171, %v223
  %v243 = vadd.f32 %v172, %v223
  %v244 = vadd.f32 %v173, %v223
  %v245 = vadd.f32 %v174, %v223
  %v246 = vadd.f32 %v175, %v223
  %v247 = vadd.f32 %v176, %v223
  %v248 = vadd.f32 %v177, %v223
  %v249 = vadd.f32 %v178, %v223
  %v250 = vadd.f32 %v179, %v223
  %v251 = vadd.f32 %v180, %v223
  %v252 = vadd.f32 %v181, %v223
  %v253 = vadd.f32 %v182, %v223
  %v254 = vadd.f32 %v183, %v223
  %v255 = vadd.f32 %v184, %v223
  %v256 = vadd.f32 %v185, %v223
  %v257 = vadd.f32 %v186, %v223
  %v258 = vadd.f32 %v187, %v223
  %v259 = vadd.f32 %v188, %v223
  %v260 = vadd.f32 %v189, %v223
  %v261 = vadd.f32 %v190, %v223
  %v262 = vadd.f32 %v191, %v223
  %v263 = vadd.f32 %v192, %v223
  %v264 = vadd.f32 %v193, %v223
  %v265 = vadd.f32 %v194, %v223
  %v266 = vadd.f32 %v195, %v223
  %v267 = vadd.f32 %v196, %v223
  %v268 = vadd.f32 %v197, %v223
  %v269 = vadd.f32 %v198, %v223
  %v270 = vadd.f32 %v199, %v223
  %v271 = vadd.f32 %v200, %v223
  %v272 = vadd.f32 %v201, %v223
  %v273 = vadd.f32 %v202, %v223
  %v274 = vadd.f32 %v203, %v223
  %v275 = vadd.f32 %v204, %v223
  %v276 = vadd.f32 %v205, %v223
  %v277 = vadd.f32 %v206, %v223
  %v278 = vadd.f32 %v207, %v223
  %v279 = vadd.f32 %v208, %v223
  %v280 = vadd.f32 %v209, %v223
  %v281 = vadd.f32 %v210, %v223
  %v282 = vadd.f32 %v211, %v223
  %v283 = vadd.f32 %v212, %v223
  %v284 = vadd.f32 %v213, %v223
  %v285 = vadd.f32 %v214, %v223
  %v286 = vadd.f32 %v215, %v223
  %v287 = vadd.f32 %v216, %v223
  %v288 = vadd.f32 %v217, %v223
  %v289 = vmul.f32 %v225, 0.01
  %v290 = vmul.f32 %v226, 0.01
  %v291 = vmul.f32 %v227, 0.01
  %v292 = vmul.f32 %v228, 0.01
  %v293 = vmul.f32 %v229, 0.01
  %v294 = vmul.f32 %v230, 0.01
  %v295 = vmul.f32 %v231, 0.01
  %v296 = vmul.f32 %v232, 0.01
  %v297 = vmul.f32 %v233, 0.01
  %v298 = vmul.f32 %v234, 0.01
  %v299 = vmul.f32 %v235, 0.01
  %v300 = vmul.f32 %v236, 0.01
  %v301 = vmul.f32 %v237, 0.01
  %v302 = vmul.f32 %v238, 0.01
  %v303 = vmul.f32 %v239, 0.01
  %v304 = vmul.f32 %v240, 0.01
  %v305 = vmul.f32 %v241, 0.01
  %v306 = vmul.f32 %v242, 0.01
  %v307 = vmul.f32 %v243, 0.01
  %v308 = vmul.f32 %v244, 0.01
  %v309 = vmul.f32 %v245, 0.01
  %v310 = vmul.f32 %v246, 0.01
  %v311 = vmul.f32 %v247, 0.01
  %v312 = vmul.f32 %v248, 0.01
  %v313 = vmul.f32 %v249, 0.01
  %v314 = vmul.f32 %v250, 0.01
  %v315 = vmul.f32 %v251, 0.01
  %v316 = vmul.f32 %v252, 0.01
  %v317 = vmul.f32 %v253, 0.01
  %v318 = vmul.f32 %v254, 0.01
  %v319 = vmul.f32 %v255, 0.01
  %v320 = vmul.f32 %v256, 0.01
  %v321 = vmul.f32 %v257, 0.01
  %v322 = vmul.f32 %v258, 0.01
  %v323 = vmul.f32 %v259, 0.01
  %v324 = vmul.f32 %v260, 0.01
  %v325 = vmul.f32 %v261, 0.01
  %v326 = vmul.f32 %v262, 0.01
  %v327 = vmul.f32 %v263, 0.01
  %v328 = vmul.f32 %v264, 0.01
  %v329 = vmul.f32 %v265, 0.01
  %v330 = vmul.f32 %v266, 0.01
  %v331 = vmul.f32 %v267, 0.01
  %v332 = vmul.f32 %v268, 0.01
  %v333 = vmul.f32 %v269, 0.01
  %v334 = vmul.f32 %v270, 0.01
  %v335 = vmul.f32 %v271, 0.01
  %v336 = vmul.f32 %v272, 0.01
  %v337 = vmul.f32 %v273, 0.01
  %v338 = vmul.f32 %v274, 0.01
  %v339 = vmul.f32 %v275, 0.01
  %v340 = vmul.f32 %v276, 0.01
  %v341 = vmul.f32 %v277, 0.01
  %v342 = vmul.f32 %v278, 0.01
  %v343 = vmul.f32 %v279, 0.01
  %v344 = vmul.f32 %v280, 0.01
  %v345 = vmul.f32 %v281, 0.01
  %v346 = vmul.f32 %v282, 0.01
  %v347 = vmul.f32 %v283, 0.01
  %v348 = vmul.f32 %v284, 0.01
  %v349 = vmul.f32 %v285, 0.01
  %v350 = vmul.f32 %v286, 0.01
  %v351 = vmul.f32 %v287, 0.01
  %v352 = vmul.f32 %v288, 0.01
  %v353 = vmax.f32 %v225, %v289
  %v354 = vmax.f32 %v226, %v290
  %v355 = vmax.f32 %v227, %v291
  %v356 = vmax.f32 %v228, %v292
  %v357 = vmax.f32 %v229, %v293
  %v358 = vmax.f32 %v230, %v294
  %v359 = vmax.f32 %v231, %v295
  %v360 = vmax.f32 %v232, %v296
  %v361 = vmax.f32 %v233, %v297
  %v362 = vmax.f32 %v234, %v298
  %v363 = vmax.f32 %v235, %v299
  %v364 = vmax.f32 %v236, %v300
  %v365 = vmax.f32 %v237, %v301
  %v366 = vmax.f32 %v238, %v302
  %v367 = vmax.f32 %v239, %v303
  %v368 = vmax.f32 %v240, %v304
  %v369 = vmax.f32 %v241, %v305
  %v370 = vmax.f32 %v242, %v306
  %v371 = vmax.f32 %v243, %v307
  %v372 = vmax.f32 %v244, %v308
  %v373 = vmax.f32 %v245, %v309
  %v374 = vmax.f32 %v246, %v310
  %v375 = vmax.f32 %v247, %v311
  %v376 = vmax.f32 %v248, %v312
  %v377 = vmax.f32 %v249, %v313
  %v378 = vmax.f32 %v250, %v314
  %v379 = vmax.f32 %v251, %v315
  %v380 = vmax.f32 %v252, %v316
  %v381 = vmax.f32 %v253, %v317
  %v382 = vmax.f32 %v254, %v318
  %v383 = vmax.f32 %v255, %v319
  %v384 = vmax.f32 %v256, %v320
  %v385 = vmax.f32 %v257, %v321
  %v386 = vmax.f32 %v258, %v322
  %v387 = vmax.f32 %v259, %v323
  %v388 = vmax.f32 %v260, %v324
  %v389 = vmax.f32 %v261, %v325
  %v390 = vmax.f32 %v262, %v326
  %v391 = vmax.f32 %v263, %v327
  %v392 = vmax.f32 %v264, %v328
  %v393 = vmax.f32 %v265, %v329
  %v394 = vmax.f32 %v266, %v330
  %v395 = vmax.f32 %v267, %v331
  %v396 = vmax.f32 %v268, %v332
  %v397 = vmax.f32 %v269, %v333
  %v398 = vmax.f32 %v270, %v334
  %v399 = vmax.f32 %v271, %v335
  %v400 = vmax.f32 %v272, %v336
  %v401 = vmax.f32 %v273, %v337
  %v402 = vmax.f32 %v274, %v338
  %v403 = vmax.f32 %v275, %v339
  %v404 = vmax.f32 %v276, %v340
  %v405 = vmax.f32 %v277, %v341
  %v406 = vmax.f32 %v278, %v342
  %v407 = vmax.f32 %v279, %v343
  %v408 = vmax.f32 %v280, %v344
  %v409 = vmax.f32 %v281, %v345
  %v410 = vmax.f32 %v282, %v346
  %v411 = vmax.f32 %v283, %v347
  %v412 = vmax.f32 %v284, %v348
  %v413 = vmax.f32 %v285, %v349
  %v414 = vmax.f32 %v286, %v350
  %v415 = vmax.f32 %v287, %v351
  %v416 = vmax.f32 %v288, %v352
  %v417 = vld [vmem:[%s3] sm:$0xff]
  %v418 = vld [vmem:[%s3 + $0x8] sm:$0xff]
  %v419 = vld [vmem:[%s3 + $0x10] sm:$0xff]
  %v420 = vld [vmem:[%s3 + $0x18] sm:$0xff]
  %v421 = vld [vmem:[%s3 + $0x20] sm:$0xff]
  %v422 = vld [vmem:[%s3 + $0x28] sm:$0xff]
  %v423 = vld [vmem:[%s3 + $0x30] sm:$0xff]
  %v424 = vld [vmem:[%s3 + $0x38] sm:$0xff]
  %v425 = vld [vmem:[%s3 + $0x40] sm:$0xff]
  %v426 = vld [vmem:[%s3 + $0x48] sm:$0xff]
  %v427 = vld [vmem:[%s3 + $0x50] sm:$0xff]
  %v428 = vld [vmem:[%s3 + $0x58] sm:$0xff]
  %v429 = vld [vmem:[%s3 + $0x60] sm:$0xff]
  %v430 = vld [vmem:[%s3 + $0x68] sm:$0xff]
  %v431 = vld [vmem:[%s3 + $0x70] sm:$0xff]
  %v432 = vld [vmem:[%s3 + $0x78] sm:$0xff]
  %v433 = vld [vmem:[%s3 + $0x80] sm:$0xff]
  %v434 = vld [vmem:[%s3 + $0x88] sm:$0xff]
  %v435 = vld [vmem:[%s3 + $0x90] sm:$0xff]
  %v436 = vld [vmem:[%s3 + $0x98] sm:$0xff]
  %v437 = vld [vmem:[%s3 + $0xa0] sm:$0xff]
  %v438 = vld [vmem:[%s3 + $0xa8] sm:$0xff]
  %v439 = vld [vmem:[%s3 + $0xb0] sm:$0xff]
  %v440 = vld [vmem:[%s3 + $0xb8] sm:$0xff]
  %v441 = vld [vmem:[%s3 + $0xc0] sm:$0xff]
  %v442 = vld [vmem:[%s3 + $0xc8] sm:$0xff]
  %v443 = vld [vmem:[%s3 + $0xd0] sm:$0xff]
  %v444 = vld [vmem:[%s3 + $0xd8] sm:$0xff]
  %v445 = vld [vmem:[%s3 + $0xe0] sm:$0xff]
  %v446 = vld [vmem:[%s3 + $0xe8] sm:$0xff]
  %v447 = vld [vmem:[%s3 + $0xf0] sm:$0xff]
  %v448 = vld [vmem:[%s3 + $0xf8] sm:$0xff]
  %v449 = vld [vmem:[%s3 + $0x100] sm:$0xff]
  %v450 = vld [vmem:[%s3 + $0x108] sm:$0xff]
  %v451 = vld [vmem:[%s3 + $0x110] sm:$0xff]
  %v452 = vld [vmem:[%s3 + $0x118] sm:$0xff]
  %v453 = vld [vmem:[%s3 + $0x120] sm:$0xff]
  %v454 = vld [vmem:[%s3 + $0x128] sm:$0xff]
  %v455 = vld [vmem:[%s3 + $0x130] sm:$0xff]
  %v456 = vld [vmem:[%s3 + $0x138] sm:$0xff]
  %v457 = vld [vmem:[%s3 + $0x140] sm:$0xff]
  %v458 = vld [vmem:[%s3 + $0x148] sm:$0xff]
  %v459 = vld [vmem:[%s3 + $0x150] sm:$0xff]
  %v460 = vld [vmem:[%s3 + $0x158] sm:$0xff]
  %v461 = vld [vmem:[%s3 + $0x160] sm:$0xff]
  %v462 = vld [vmem:[%s3 + $0x168] sm:$0xff]
  %v463 = vld [vmem:[%s3 + $0x170] sm:$0xff]
  %v464 = vld [vmem:[%s3 + $0x178] sm:$0xff]
  %v465 = vld [vmem:[%s3 + $0x180] sm:$0xff]
  %v466 = vld [vmem:[%s3 + $0x188] sm:$0xff]
  %v467 = vld [vmem:[%s3 + $0x190] sm:$0xff]
  %v468 = vld [vmem:[%s3 + $0x198] sm:$0xff]
  %v469 = vld [vmem:[%s3 + $0x1a0] sm:$0xff]
  %v470 = vld [vmem:[%s3 + $0x1a8] sm:$0xff]
  %v471 = vld [vmem:[%s3 + $0x1b0] sm:$0xff]
  %v472 = vld [vmem:[%s3 + $0x1b8] sm:$0xff]
  %v473 = vld [vmem:[%s3 + $0x1c0] sm:$0xff]
  %v474 = vld [vmem:[%s3 + $0x1c8] sm:$0xff]
  %v475 = vld [vmem:[%s3 + $0x1d0] sm:$0xff]
  %v476 = vld [vmem:[%s3 + $0x1d8] sm:$0xff]
  %v477 = vld [vmem:[%s3 + $0x1e0] sm:$0xff]
  %v478 = vld [vmem:[%s3 + $0x1e8] sm:$0xff]
  %v479 = vld [vmem:[%s3 + $0x1f0] sm:$0xff]
  %v480 = vld [vmem:[%s3 + $0x1f8] sm:$0xff]
  %v481 = vadd.f32 %v417, %v353
  %v482 = vadd.f32 %v418, %v354
  %v483 = vadd.f32 %v419, %v355
  %v484 = vadd.f32 %v420, %v356
  %v485 = vadd.f32 %v421, %v357
  %v486 = vadd.f32 %v422, %v358
  %v487 = vadd.f32 %v423, %v359
  %v488 = vadd.f32 %v424, %v360
  %v489 = vadd.f32 %v425, %v361
  %v490 = vadd.f32 %v426, %v362
  %v491 = vadd.f32 %v427, %v363
  %v492 = vadd.f32 %v428, %v364
  %v493 = vadd.f32 %v429, %v365
  %v494 = vadd.f32 %v430, %v366
  %v495 = vadd.f32 %v431, %v367
  %v496 = vadd.f32 %v432, %v368
  %v497 = vadd.f32 %v433, %v369
  %v498 = vadd.f32 %v434, %v370
  %v499 = vadd.f32 %v435, %v371
  %v500 = vadd.f32 %v436, %v372
  %v501 = vadd.f32 %v437, %v373
  %v502 = vadd.f32 %v438, %v374
  %v503 = vadd.f32 %v439, %v375
  %v504 = vadd.f32 %v440, %v376
  %v505 = vadd.f32 %v441, %v377
  %v506 = vadd.f32 %v442, %v378
  %v507 = vadd.f32 %v443, %v379
  %v508 = vadd.f32 %v444, %v380
  %v509 = vadd.f32 %v445, %v381
  %v510 = vadd.f32 %v446, %v382
  %v511 = vadd.f32 %v447, %v383
  %v512 = vadd.f32 %v448, %v384
  %v513 = vadd.f32 %v449, %v385
  %v514 = vadd.f32 %v450, %v386
  %v515 = vadd.f32 %v451, %v387
  %v516 = vadd.f32 %v452, %v388
  %v517 = vadd.f32 %v453, %v389
  %v518 = vadd.f32 %v454, %v390
  %v519 = vadd.f32 %v455, %v391
  %v520 = vadd.f32 %v456, %v392
  %v521 = vadd.f32 %v457, %v393
  %v522 = vadd.f32 %v458, %v394
  %v523 = vadd.f32 %v459, %v395
  %v524 = vadd.f32 %v460, %v396
  %v525 = vadd.f32 %v461, %v397
  %v526 = vadd.f32 %v462, %v398
  %v527 = vadd.f32 %v463, %v399
  %v528 = vadd.f32 %v464, %v400
  %v529 = vadd.f32 %v465, %v401
  %v530 = vadd.f32 %v466, %v402
  %v531 = vadd.f32 %v467, %v403
  %v532 = vadd.f32 %v468, %v404
  %v533 = vadd.f32 %v469, %v405
  %v534 = vadd.f32 %v470, %v406
  %v535 = vadd.f32 %v471, %v407
  %v536 = vadd.f32 %v472, %v408
  %v537 = vadd.f32 %v473, %v409
  %v538 = vadd.f32 %v474, %v410
  %v539 = vadd.f32 %v475, %v411
  %v540 = vadd.f32 %v476, %v412
  %v541 = vadd.f32 %v477, %v413
  %v542 = vadd.f32 %v478, %v414
  %v543 = vadd.f32 %v479, %v415
  %v544 = vadd.f32 %v480, %v416
  %545 = vst [vmem:[%s4] sm:$0xff] %v481
  %546 = vst [vmem:[%s4 + $0x8] sm:$0xff] %v482
  %547 = vst [vmem:[%s4 + $0x10] sm:$0xff] %v483
  %548 = vst [vmem:[%s4 + $0x18] sm:$0xff] %v484
  %549 = vst [vmem:[%s4 + $0x20] sm:$0xff] %v485
  %550 = vst [vmem:[%s4 + $0x28] sm:$0xff] %v486
  %551 = vst [vmem:[%s4 + $0x30] sm:$0xff] %v487
  %552 = vst [vmem:[%s4 + $0x38] sm:$0xff] %v488
  %553 = vst [vmem:[%s4 + $0x40] sm:$0xff] %v489
  %554 = vst [vmem:[%s4 + $0x48] sm:$0xff] %v490
  %555 = vst [vmem:[%s4 + $0x50] sm:$0xff] %v491
  %556 = vst [vmem:[%s4 + $0x58] sm:$0xff] %v492
  %557 = vst [vmem:[%s4 + $0x60] sm:$0xff] %v493
  %558 = vst [vmem:[%s4 + $0x68] sm:$0xff] %v494
  %559 = vst [vmem:[%s4 + $0x70] sm:$0xff] %v495
  %560 = vst [vmem:[%s4 + $0x78] sm:$0xff] %v496
  %561 = vst [vmem:[%s4 + $0x80] sm:$0xff] %v497
  %562 = vst [vmem:[%s4 + $0x88] sm:$0xff] %v498
  %563 = vst [vmem:[%s4 + $0x90] sm:$0xff] %v499
  %564 = vst [vmem:[%s4 + $0x98] sm:$0xff] %v500
  %565 = vst [vmem:[%s4 + $0xa0] sm:$0xff] %v501
  %566 = vst [vmem:[%s4 + $0xa8] sm:$0xff] %v502
  %567 = vst [vmem:[%s4 + $0xb0] sm:$0xff] %v503
  %568 = vst [vmem:[%s4 + $0xb8] sm:$0xff] %v504
  %569 = vst [vmem:[%s4 + $0xc0] sm:$0xff] %v505
  %570 = vst [vmem:[%s4 + $0xc8] sm:$0xff] %v506
  %571 = vst [vmem:[%s4 + $0xd0] sm:$0xff] %v507
  %572 = vst [vmem:[%s4 + $0xd8] sm:$0xff] %v508
  %573 = vst [vmem:[%s4 + $0xe0] sm:$0xff] %v509
  %574 = vst [vmem:[%s4 + $0xe8] sm:$0xff] %v510
  %575 = vst [vmem:[%s4 + $0xf0] sm:$0xff] %v511
  %576 = vst [vmem:[%s4 + $0xf8] sm:$0xff] %v512
  %577 = vst [vmem:[%s4 + $0x100] sm:$0xff] %v513
  %578 = vst [vmem:[%s4 + $0x108] sm:$0xff] %v514
  %579 = vst [vmem:[%s4 + $0x110] sm:$0xff] %v515
  %580 = vst [vmem:[%s4 + $0x118] sm:$0xff] %v516
  %581 = vst [vmem:[%s4 + $0x120] sm:$0xff] %v517
  %582 = vst [vmem:[%s4 + $0x128] sm:$0xff] %v518
  %583 = vst [vmem:[%s4 + $0x130] sm:$0xff] %v519
  %584 = vst [vmem:[%s4 + $0x138] sm:$0xff] %v520
  %585 = vst [vmem:[%s4 + $0x140] sm:$0xff] %v521
  %586 = vst [vmem:[%s4 + $0x148] sm:$0xff] %v522
  %587 = vst [vmem:[%s4 + $0x150] sm:$0xff] %v523
  %588 = vst [vmem:[%s4 + $0x158] sm:$0xff] %v524
  %589 = vst [vmem:[%s4 + $0x160] sm:$0xff] %v525
  %590 = vst [vmem:[%s4 + $0x168] sm:$0xff] %v526
  %591 = vst [vmem:[%s4 + $0x170] sm:$0xff] %v527
  %592 = vst [vmem:[%s4 + $0x178] sm:$0xff] %v528
  %593 = vst [vmem:[%s4 + $0x180] sm:$0xff] %v529
  %594 = vst [vmem:[%s4 + $0x188] sm:$0xff] %v530
  %595 = vst [vmem:[%s4 + $0x190] sm:$0xff] %v531
  %596 = vst [vmem:[%s4 + $0x198] sm:$0xff] %v532
  %597 = vst [vmem:[%s4 + $0x1a0] sm:$0xff] %v533
  %598 = vst [vmem:[%s4 + $0x1a8] sm:$0xff] %v534
  %599 = vst [vmem:[%s4 + $0x1b0] sm:$0xff] %v535
  %600 = vst [vmem:[%s4 + $0x1b8] sm:$0xff] %v536
  %601 = vst [vmem:[%s4 + $0x1c0] sm:$0xff] %v537
  %602 = vst [vmem:[%s4 + $0x1c8] sm:$0xff] %v538
  %603 = vst [vmem:[%s4 + $0x1d0] sm:$0xff] %v539
  %604 = vst [vmem:[%s4 + $0x1d8] sm:$0xff] %v540
  %605 = vst [vmem:[%s4 + $0x1e0] sm:$0xff] %v541
  %606 = vst [vmem:[%s4 + $0x1e8] sm:$0xff] %v542
  %607 = vst [vmem:[%s4 + $0x1f0] sm:$0xff] %v543
  %608 = vst [vmem:[%s4 + $0x1f8] sm:$0xff] %v544
  %v609 = vpack.c.bf16 %v482, %v481
  %v610 = vpack.c.bf16 %v484, %v483
  %v611 = vpack.c.bf16 %v486, %v485
  %v612 = vpack.c.bf16 %v488, %v487
  %v613 = vpack.c.bf16 %v490, %v489
  %v614 = vpack.c.bf16 %v492, %v491
  %v615 = vpack.c.bf16 %v494, %v493
  %v616 = vpack.c.bf16 %v496, %v495
  %v617 = vpack.c.bf16 %v498, %v497
  %v618 = vpack.c.bf16 %v500, %v499
  %v619 = vpack.c.bf16 %v502, %v501
  %v620 = vpack.c.bf16 %v504, %v503
  %v621 = vpack.c.bf16 %v506, %v505
  %v622 = vpack.c.bf16 %v508, %v507
  %v623 = vpack.c.bf16 %v510, %v509
  %v624 = vpack.c.bf16 %v512, %v511
  %v625 = vpack.c.bf16 %v514, %v513
  %v626 = vpack.c.bf16 %v516, %v515
  %v627 = vpack.c.bf16 %v518, %v517
  %v628 = vpack.c.bf16 %v520, %v519
  %v629 = vpack.c.bf16 %v522, %v521
  %v630 = vpack.c.bf16 %v524, %v523
  %v631 = vpack.c.bf16 %v526, %v525
  %v632 = vpack.c.bf16 %v528, %v527
  %v633 = vpack.c.bf16 %v530, %v529
  %v634 = vpack.c.bf16 %v532, %v531
  %v635 = vpack.c.bf16 %v534, %v533
  %v636 = vpack.c.bf16 %v536, %v535
  %v637 = vpack.c.bf16 %v538, %v537
  %v638 = vpack.c.bf16 %v540, %v539
  %v639 = vpack.c.bf16 %v542, %v541
  %v640 = vpack.c.bf16 %v544, %v543
  %v673 = vunpack.c.l.b16 %v609
  %v674 = vunpack.c.h.b16 %v609
  %v675 = vunpack.c.l.b16 %v610
  %v676 = vunpack.c.h.b16 %v610
  %v677 = vunpack.c.l.b16 %v611
  %v678 = vunpack.c.h.b16 %v611
  %v679 = vunpack.c.l.b16 %v612
  %v680 = vunpack.c.h.b16 %v612
  %v681 = vunpack.c.l.b16 %v613
  %v682 = vunpack.c.h.b16 %v613
  %v683 = vunpack.c.l.b16 %v614
  %v684 = vunpack.c.h.b16 %v614
  %v685 = vunpack.c.l.b16 %v615
  %v686 = vunpack.c.h.b16 %v615
  %v687 = vunpack.c.l.b16 %v616
  %v688 = vunpack.c.h.b16 %v616
  %v689 = vunpack.c.l.b16 %v617
  %v690 = vunpack.c.h.b16 %v617
  %v691 = vunpack.c.l.b16 %v618
  %v692 = vunpack.c.h.b16 %v618
  %v693 = vunpack.c.l.b16 %v619
  %v694 = vunpack.c.h.b16 %v619
  %v695 = vunpack.c.l.b16 %v620
  %v696 = vunpack.c.h.b16 %v620
  %v697 = vunpack.c.l.b16 %v621
  %v698 = vunpack.c.h.b16 %v621
  %v699 = vunpack.c.l.b16 %v622
  %v700 = vunpack.c.h.b16 %v622
  %v701 = vunpack.c.l.b16 %v623
  %v702 = vunpack.c.h.b16 %v623
  %v703 = vunpack.c.l.b16 %v624
  %v704 = vunpack.c.h.b16 %v624
  %v705 = vunpack.c.l.b16 %v625
  %v706 = vunpack.c.h.b16 %v625
  %v707 = vunpack.c.l.b16 %v626
  %v708 = vunpack.c.h.b16 %v626
  %v709 = vunpack.c.l.b16 %v627
  %v710 = vunpack.c.h.b16 %v627
  %v711 = vunpack.c.l.b16 %v628
  %v712 = vunpack.c.h.b16 %v628
  %v713 = vunpack.c.l.b16 %v629
  %v714 = vunpack.c.h.b16 %v629
  %v715 = vunpack.c.l.b16 %v630
  %v716 = vunpack.c.h.b16 %v630
  %v717 = vunpack.c.l.b16 %v631
  %v718 = vunpack.c.h.b16 %v631
  %v719 = vunpack.c.l.b16 %v632
  %v720 = vunpack.c.h.b16 %v632
  %v721 = vunpack.c.l.b16 %v633
  %v722 = vunpack.c.h.b16 %v633
  %v723 = vunpack.c.l.b16 %v634
  %v724 = vunpack.c.h.b16 %v634
  %v725 = vunpack.c.l.b16 %v635
  %v726 = vunpack.c.h.b16 %v635
  %v727 = vunpack.c.l.b16 %v636
  %v728 = vunpack.c.h.b16 %v636
  %v729 = vunpack.c.l.b16 %v637
  %v730 = vunpack.c.h.b16 %v637
  %v731 = vunpack.c.l.b16 %v638
  %v732 = vunpack.c.h.b16 %v638
  %v733 = vunpack.c.l.b16 %v639
  %v734 = vunpack.c.h.b16 %v639
  %v735 = vunpack.c.l.b16 %v640
  %v736 = vunpack.c.h.b16 %v640
  %v737 = vpack.c.b16 %v673, %v673
  %v738 = vpack.c.b16 %v674, %v674
  %v739 = vpack.c.b16 %v675, %v675
  %v740 = vpack.c.b16 %v676, %v676
  %v741 = vpack.c.b16 %v677, %v677
  %v742 = vpack.c.b16 %v678, %v678
  %v743 = vpack.c.b16 %v679, %v679
  %v744 = vpack.c.b16 %v680, %v680
  %v745 = vpack.c.b16 %v681, %v681
  %v746 = vpack.c.b16 %v682, %v682
  %v747 = vpack.c.b16 %v683, %v683
  %v748 = vpack.c.b16 %v684, %v684
  %v749 = vpack.c.b16 %v685, %v685
  %v750 = vpack.c.b16 %v686, %v686
  %v751 = vpack.c.b16 %v687, %v687
  %v752 = vpack.c.b16 %v688, %v688
  %v753 = vpack.c.b16 %v689, %v689
  %v754 = vpack.c.b16 %v690, %v690
  %v755 = vpack.c.b16 %v691, %v691
  %v756 = vpack.c.b16 %v692, %v692
  %v757 = vpack.c.b16 %v693, %v693
  %v758 = vpack.c.b16 %v694, %v694
  %v759 = vpack.c.b16 %v695, %v695
  %v760 = vpack.c.b16 %v696, %v696
  %v761 = vpack.c.b16 %v697, %v697
  %v762 = vpack.c.b16 %v698, %v698
  %v763 = vpack.c.b16 %v699, %v699
  %v764 = vpack.c.b16 %v700, %v700
  %v765 = vpack.c.b16 %v701, %v701
  %v766 = vpack.c.b16 %v702, %v702
  %v767 = vpack.c.b16 %v703, %v703
  %v768 = vpack.c.b16 %v704, %v704
  %v769 = vpack.c.b16 %v705, %v705
  %v770 = vpack.c.b16 %v706, %v706
  %v771 = vpack.c.b16 %v707, %v707
  %v772 = vpack.c.b16 %v708, %v708
  %v773 = vpack.c.b16 %v709, %v709
  %v774 = vpack.c.b16 %v710, %v710
  %v775 = vpack.c.b16 %v711, %v711
  %v776 = vpack.c.b16 %v712, %v712
  %v777 = vpack.c.b16 %v713, %v713
  %v778 = vpack.c.b16 %v714, %v714
  %v779 = vpack.c.b16 %v715, %v715
  %v780 = vpack.c.b16 %v716, %v716
  %v781 = vpack.c.b16 %v717, %v717
  %v782 = vpack.c.b16 %v718, %v718
  %v783 = vpack.c.b16 %v719, %v719
  %v784 = vpack.c.b16 %v720, %v720
  %v785 = vpack.c.b16 %v721, %v721
  %v786 = vpack.c.b16 %v722, %v722
  %v787 = vpack.c.b16 %v723, %v723
  %v788 = vpack.c.b16 %v724, %v724
  %v789 = vpack.c.b16 %v725, %v725
  %v790 = vpack.c.b16 %v726, %v726
  %v791 = vpack.c.b16 %v727, %v727
  %v792 = vpack.c.b16 %v728, %v728
  %v793 = vpack.c.b16 %v729, %v729
  %v794 = vpack.c.b16 %v730, %v730
  %v795 = vpack.c.b16 %v731, %v731
  %v796 = vpack.c.b16 %v732, %v732
  %v797 = vpack.c.b16 %v733, %v733
  %v798 = vpack.c.b16 %v734, %v734
  %v799 = vpack.c.b16 %v735, %v735
  %v800 = vpack.c.b16 %v736, %v736
  %865 = vst [vmem:[%s5] sm:$0xf] %v737
  %866 = vst [vmem:[%s5 + $0x4] sm:$0xf] %v738
  %867 = vst [vmem:[%s5 + $0x8] sm:$0xf] %v739
  %868 = vst [vmem:[%s5 + $0xc] sm:$0xf] %v740
  %869 = vst [vmem:[%s5 + $0x10] sm:$0xf] %v741
  %870 = vst [vmem:[%s5 + $0x14] sm:$0xf] %v742
  %871 = vst [vmem:[%s5 + $0x18] sm:$0xf] %v743
  %872 = vst [vmem:[%s5 + $0x1c] sm:$0xf] %v744
  %873 = vst [vmem:[%s5 + $0x20] sm:$0xf] %v745
  %874 = vst [vmem:[%s5 + $0x24] sm:$0xf] %v746
  %875 = vst [vmem:[%s5 + $0x28] sm:$0xf] %v747
  %876 = vst [vmem:[%s5 + $0x2c] sm:$0xf] %v748
  %877 = vst [vmem:[%s5 + $0x30] sm:$0xf] %v749
  %878 = vst [vmem:[%s5 + $0x34] sm:$0xf] %v750
  %879 = vst [vmem:[%s5 + $0x38] sm:$0xf] %v751
  %880 = vst [vmem:[%s5 + $0x3c] sm:$0xf] %v752
  %881 = vst [vmem:[%s5 + $0x40] sm:$0xf] %v753
  %882 = vst [vmem:[%s5 + $0x44] sm:$0xf] %v754
  %883 = vst [vmem:[%s5 + $0x48] sm:$0xf] %v755
  %884 = vst [vmem:[%s5 + $0x4c] sm:$0xf] %v756
  %885 = vst [vmem:[%s5 + $0x50] sm:$0xf] %v757
  %886 = vst [vmem:[%s5 + $0x54] sm:$0xf] %v758
  %887 = vst [vmem:[%s5 + $0x58] sm:$0xf] %v759
  %888 = vst [vmem:[%s5 + $0x5c] sm:$0xf] %v760
  %889 = vst [vmem:[%s5 + $0x60] sm:$0xf] %v761
  %890 = vst [vmem:[%s5 + $0x64] sm:$0xf] %v762
  %891 = vst [vmem:[%s5 + $0x68] sm:$0xf] %v763
  %892 = vst [vmem:[%s5 + $0x6c] sm:$0xf] %v764
  %893 = vst [vmem:[%s5 + $0x70] sm:$0xf] %v765
  %894 = vst [vmem:[%s5 + $0x74] sm:$0xf] %v766
  %895 = vst [vmem:[%s5 + $0x78] sm:$0xf] %v767
  %896 = vst [vmem:[%s5 + $0x7c] sm:$0xf] %v768
  %897 = vst [vmem:[%s5 + $0x80] sm:$0xf] %v769
  %898 = vst [vmem:[%s5 + $0x84] sm:$0xf] %v770
  %899 = vst [vmem:[%s5 + $0x88] sm:$0xf] %v771
  %900 = vst [vmem:[%s5 + $0x8c] sm:$0xf] %v772
  %901 = vst [vmem:[%s5 + $0x90] sm:$0xf] %v773
  %902 = vst [vmem:[%s5 + $0x94] sm:$0xf] %v774
  %903 = vst [vmem:[%s5 + $0x98] sm:$0xf] %v775
  %904 = vst [vmem:[%s5 + $0x9c] sm:$0xf] %v776
  %905 = vst [vmem:[%s5 + $0xa0] sm:$0xf] %v777
  %906 = vst [vmem:[%s5 + $0xa4] sm:$0xf] %v778
  %907 = vst [vmem:[%s5 + $0xa8] sm:$0xf] %v779
  %908 = vst [vmem:[%s5 + $0xac] sm:$0xf] %v780
  %909 = vst [vmem:[%s5 + $0xb0] sm:$0xf] %v781
  %910 = vst [vmem:[%s5 + $0xb4] sm:$0xf] %v782
  %911 = vst [vmem:[%s5 + $0xb8] sm:$0xf] %v783
  %912 = vst [vmem:[%s5 + $0xbc] sm:$0xf] %v784
  %913 = vst [vmem:[%s5 + $0xc0] sm:$0xf] %v785
  %914 = vst [vmem:[%s5 + $0xc4] sm:$0xf] %v786
  %915 = vst [vmem:[%s5 + $0xc8] sm:$0xf] %v787
  %916 = vst [vmem:[%s5 + $0xcc] sm:$0xf] %v788
  %917 = vst [vmem:[%s5 + $0xd0] sm:$0xf] %v789
  %918 = vst [vmem:[%s5 + $0xd4] sm:$0xf] %v790
  %919 = vst [vmem:[%s5 + $0xd8] sm:$0xf] %v791
  %920 = vst [vmem:[%s5 + $0xdc] sm:$0xf] %v792
  %921 = vst [vmem:[%s5 + $0xe0] sm:$0xf] %v793
  %922 = vst [vmem:[%s5 + $0xe4] sm:$0xf] %v794
  %923 = vst [vmem:[%s5 + $0xe8] sm:$0xf] %v795
  %924 = vst [vmem:[%s5 + $0xec] sm:$0xf] %v796
  %925 = vst [vmem:[%s5 + $0xf0] sm:$0xf] %v797
  %926 = vst [vmem:[%s5 + $0xf4] sm:$0xf] %v798
  %927 = vst [vmem:[%s5 + $0xf8] sm:$0xf] %v799
  %928 = vst [vmem:[%s5 + $0xfc] sm:$0xf] %v800
  // Predicated region
  $region18: #{decoder_layer_forward.9} parent=0 // pred_check
    _
  $region19: #{decoder_layer_forward.9} parent=0 // pred_check_branch
    %930 = sbr.rel (0) target = $region21
  $region20: #{decoder_layer_forward.9} parent=0 // pred_region
    _
  $region21: #{decoder_layer_forward.9} parent=0 // pred_fallthru
    _
  // Predicated region
  $region22: #{decoder_layer_forward.9} parent=0 // pred_check
    _
  $region23: #{decoder_layer_forward.9} parent=0 // pred_check_branch
    %932 = sbr.rel (0) target = $region25
  $region24: #{decoder_layer_forward.9} parent=0 // pred_region
    _
  $region25: #{decoder_layer_forward.9} parent=0 // pred_fallthru
    _
  // Predicated region
  $region26: #{decoder_layer_forward.9} parent=0 // pred_check
    _
  $region27: #{decoder_layer_forward.9} parent=0 // pred_check_branch
    %934 = sbr.rel (0) target = $region29
  $region28: #{decoder_layer_forward.9} parent=0 // pred_region
    _
  $region29: #{decoder_layer_forward.9} parent=0 // pred_fallthru
    _
  // Predicated region
  $region30: #{decoder_layer_forward.9} parent=0 // pred_check
    _
  $region31: #{decoder_layer_forward.9} parent=0 // pred_check_branch
    %936 = sbr.rel (0) target = $region33
  $region32: #{decoder_layer_forward.9} parent=0 // pred_region
    _
  $region33: #{decoder_layer_forward.9} parent=0 // pred_fallthru
    _

// kernel: decoder_layer_forward.8
$region0: #{decoder_layer_forward.8}
  #allocation0 [shape = 'u32[]', space=smem, size = 0x4, offset = 0x4, fixed_abs, tag = 'smem constant byte address 0x4 - core index']
  #allocation1 [shape = 'u32[144,128]{1,0:T(1,128)}', space=vmem, size = 0x12000, scoped, tag = 'internal scratch']
  %s0 = inlined_call_operand.vmem [shape: bf16[1,512,1152], index: 0, kind: input, shape index: {}]
  %s1 = inlined_call_operand.vmem [shape: bf16[1,1152,128], index: 1, kind: input, shape index: {}]
  %s2 = inlined_call_operand.vmem [shape: bf16[1,512,128], index: 2, kind: output, shape index: {0}]
  %s3 = inlined_call_operand.vmem [shape: f32[1,1,2,128], index: 3, kind: output, shape index: {1}]
  %4 = xla_tuple %s2, %s3
  %s5 = sld [smem:[#allocation0]]
  $region26: #{decoder_layer_forward.8} parent=0
    _
  %s7 = ssub.s32 1, %s5
  %s8 = scalar_select 0, %s7, %s5
  // Predicated region
  $region2: #{decoder_layer_forward.8} parent=0 // pred_check
    _
  $region3: #{decoder_layer_forward.8} parent=0 // pred_check_branch
    %10 = sbr.rel (0) target = $region5
  $region4: #{decoder_layer_forward.8} parent=0 // pred_region
    _
  $region5: #{decoder_layer_forward.8} parent=0 // pred_fallthru
    _
  // Predicated region
  $region6: #{decoder_layer_forward.8} parent=0 // pred_check
    _
  $region7: #{decoder_layer_forward.8} parent=0 // pred_check_branch
    %12 = sbr.rel (0) target = $region9
  $region8: #{decoder_layer_forward.8} parent=0 // pred_region
    _
  $region9: #{decoder_layer_forward.8} parent=0 // pred_fallthru
    _
  %v14 = vld [vmem:[%s0] sm:$0xff]
  %v15 = vld [vmem:[%s0 + $0x8] sm:$0xff]
  %v16 = vld [vmem:[%s0 + $0x10] sm:$0xff]
  %v17 = vld [vmem:[%s0 + $0x18] sm:$0xff]
  %v18 = vld [vmem:[%s0 + $0x20] sm:$0xf]
  %v19 = vld [vmem:[%s0 + $0x24] sm:$0xff]
  %v20 = vld [vmem:[%s0 + $0x2c] sm:$0xff]
  %v21 = vld [vmem:[%s0 + $0x34] sm:$0xff]
  %v22 = vld [vmem:[%s0 + $0x3c] sm:$0xff]
  %v23 = vld [vmem:[%s0 + $0x44] sm:$0xf]
  %v24 = vld [vmem:[%s0 + $0x48] sm:$0xff]
  %v25 = vld [vmem:[%s0 + $0x50] sm:$0xff]
  %v26 = vld [vmem:[%s0 + $0x58] sm:$0xff]
  %v27 = vld [vmem:[%s0 + $0x60] sm:$0xff]
  %v28 = vld [vmem:[%s0 + $0x68] sm:$0xf]
  %v29 = vld [vmem:[%s0 + $0x6c] sm:$0xff]
  %v30 = vld [vmem:[%s0 + $0x74] sm:$0xff]
  %v31 = vld [vmem:[%s0 + $0x7c] sm:$0xff]
  %v32 = vld [vmem:[%s0 + $0x84] sm:$0xff]
  %v33 = vld [vmem:[%s0 + $0x8c] sm:$0xf]
  %v34 = vld [vmem:[%s0 + $0x90] sm:$0xff]
  %v35 = vld [vmem:[%s0 + $0x98] sm:$0xff]
  %v36 = vld [vmem:[%s0 + $0xa0] sm:$0xff]
  %v37 = vld [vmem:[%s0 + $0xa8] sm:$0xff]
  %v38 = vld [vmem:[%s0 + $0xb0] sm:$0xf]
  %v39 = vld [vmem:[%s0 + $0xb4] sm:$0xff]
  %v40 = vld [vmem:[%s0 + $0xbc] sm:$0xff]
  %v41 = vld [vmem:[%s0 + $0xc4] sm:$0xff]
  %v42 = vld [vmem:[%s0 + $0xcc] sm:$0xff]
  %v43 = vld [vmem:[%s0 + $0xd4] sm:$0xf]
  %v44 = vld [vmem:[%s0 + $0xd8] sm:$0xff]
  %v45 = vld [vmem:[%s0 + $0xe0] sm:$0xff]
  %v46 = vld [vmem:[%s0 + $0xe8] sm:$0xff]
  %v47 = vld [vmem:[%s0 + $0xf0] sm:$0xff]
  %v48 = vld [vmem:[%s0 + $0xf8] sm:$0xf]
  %v49 = vld [vmem:[%s0 + $0xfc] sm:$0xff]
  %v50 = vld [vmem:[%s0 + $0x104] sm:$0xff]
  %v51 = vld [vmem:[%s0 + $0x10c] sm:$0xff]
  %v52 = vld [vmem:[%s0 + $0x114] sm:$0xff]
  %v53 = vld [vmem:[%s0 + $0x11c] sm:$0xf]
  %v54 = vld [vmem:[%s0 + $0x120] sm:$0xff]
  %v55 = vld [vmem:[%s0 + $0x128] sm:$0xff]
  %v56 = vld [vmem:[%s0 + $0x130] sm:$0xff]
  %v57 = vld [vmem:[%s0 + $0x138] sm:$0xff]
  %v58 = vld [vmem:[%s0 + $0x140] sm:$0xf]
  %v59 = vld [vmem:[%s0 + $0x144] sm:$0xff]
  %v60 = vld [vmem:[%s0 + $0x14c] sm:$0xff]
  %v61 = vld [vmem:[%s0 + $0x154] sm:$0xff]
  %v62 = vld [vmem:[%s0 + $0x15c] sm:$0xff]
  %v63 = vld [vmem:[%s0 + $0x164] sm:$0xf]
  %v64 = vld [vmem:[%s0 + $0x168] sm:$0xff]
  %v65 = vld [vmem:[%s0 + $0x170] sm:$0xff]
  %v66 = vld [vmem:[%s0 + $0x178] sm:$0xff]
  %v67 = vld [vmem:[%s0 + $0x180] sm:$0xff]
  %v68 = vld [vmem:[%s0 + $0x188] sm:$0xf]
  %v69 = vld [vmem:[%s0 + $0x18c] sm:$0xff]
  %v70 = vld [vmem:[%s0 + $0x194] sm:$0xff]
  %v71 = vld [vmem:[%s0 + $0x19c] sm:$0xff]
  %v72 = vld [vmem:[%s0 + $0x1a4] sm:$0xff]
  %v73 = vld [vmem:[%s0 + $0x1ac] sm:$0xf]
  %v74 = vld [vmem:[%s0 + $0x1b0] sm:$0xff]
  %v75 = vld [vmem:[%s0 + $0x1b8] sm:$0xff]
  %v76 = vld [vmem:[%s0 + $0x1c0] sm:$0xff]
  %v77 = vld [vmem:[%s0 + $0x1c8] sm:$0xff]
  %v78 = vld [vmem:[%s0 + $0x1d0] sm:$0xf]
  %v79 = vld [vmem:[%s0 + $0x1d4] sm:$0xff]
  %v80 = vld [vmem:[%s0 + $0x1dc] sm:$0xff]
  %v81 = vld [vmem:[%s0 + $0x1e4] sm:$0xff]
  %v82 = vld [vmem:[%s0 + $0x1ec] sm:$0xff]
  %v83 = vld [vmem:[%s0 + $0x1f4] sm:$0xf]
  %v84 = vld [vmem:[%s0 + $0x1f8] sm:$0xff]
  %v85 = vld [vmem:[%s0 + $0x200] sm:$0xff]
  %v86 = vld [vmem:[%s0 + $0x208] sm:$0xff]
  %v87 = vld [vmem:[%s0 + $0x210] sm:$0xff]
  %v88 = vld [vmem:[%s0 + $0x218] sm:$0xf]
  %v89 = vld [vmem:[%s0 + $0x21c] sm:$0xff]
  %v90 = vld [vmem:[%s0 + $0x224] sm:$0xff]
  %v91 = vld [vmem:[%s0 + $0x22c] sm:$0xff]
  %v92 = vld [vmem:[%s0 + $0x234] sm:$0xff]
  %v93 = vld [vmem:[%s0 + $0x23c] sm:$0xf]
  %v94 = vld [vmem:[%s0 + $0x240] sm:$0xff]
  %v95 = vld [vmem:[%s0 + $0x248] sm:$0xff]
  %v96 = vld [vmem:[%s0 + $0x250] sm:$0xff]
  %v97 = vld [vmem:[%s0 + $0x258] sm:$0xff]
  %v98 = vld [vmem:[%s0 + $0x260] sm:$0xf]
  %v99 = vld [vmem:[%s0 + $0x264] sm:$0xff]
  %v100 = vld [vmem:[%s0 + $0x26c] sm:$0xff]
  %v101 = vld [vmem:[%s0 + $0x274] sm:$0xff]
  %v102 = vld [vmem:[%s0 + $0x27c] sm:$0xff]
  %v103 = vld [vmem:[%s0 + $0x284] sm:$0xf]
  %v104 = vld [vmem:[%s0 + $0x288] sm:$0xff]
  %v105 = vld [vmem:[%s0 + $0x290] sm:$0xff]
  %v106 = vld [vmem:[%s0 + $0x298] sm:$0xff]
  %v107 = vld [vmem:[%s0 + $0x2a0] sm:$0xff]
  %v108 = vld [vmem:[%s0 + $0x2a8] sm:$0xf]
  %v109 = vld [vmem:[%s0 + $0x2ac] sm:$0xff]
  %v110 = vld [vmem:[%s0 + $0x2b4] sm:$0xff]
  %v111 = vld [vmem:[%s0 + $0x2bc] sm:$0xff]
  %v112 = vld [vmem:[%s0 + $0x2c4] sm:$0xff]
  %v113 = vld [vmem:[%s0 + $0x2cc] sm:$0xf]
  %v114 = vld [vmem:[%s0 + $0x2d0] sm:$0xff]
  %v115 = vld [vmem:[%s0 + $0x2d8] sm:$0xff]
  %v116 = vld [vmem:[%s0 + $0x2e0] sm:$0xff]
  %v117 = vld [vmem:[%s0 + $0x2e8] sm:$0xff]
  %v118 = vld [vmem:[%s0 + $0x2f0] sm:$0xf]
  %v119 = vld [vmem:[%s0 + $0x2f4] sm:$0xff]
  %v120 = vld [vmem:[%s0 + $0x2fc] sm:$0xff]
  %v121 = vld [vmem:[%s0 + $0x304] sm:$0xff]
  %v122 = vld [vmem:[%s0 + $0x30c] sm:$0xff]
  %v123 = vld [vmem:[%s0 + $0x314] sm:$0xf]
  %v124 = vld [vmem:[%s0 + $0x318] sm:$0xff]
  %v125 = vld [vmem:[%s0 + $0x320] sm:$0xff]
  %v126 = vld [vmem:[%s0 + $0x328] sm:$0xff]
  %v127 = vld [vmem:[%s0 + $0x330] sm:$0xff]
  %v128 = vld [vmem:[%s0 + $0x338] sm:$0xf]
  %v129 = vld [vmem:[%s0 + $0x33c] sm:$0xff]
  %v130 = vld [vmem:[%s0 + $0x344] sm:$0xff]
  %v131 = vld [vmem:[%s0 + $0x34c] sm:$0xff]
  %v132 = vld [vmem:[%s0 + $0x354] sm:$0xff]
  %v133 = vld [vmem:[%s0 + $0x35c] sm:$0xf]
  %v134 = vld [vmem:[%s0 + $0x360] sm:$0xff]
  %v135 = vld [vmem:[%s0 + $0x368] sm:$0xff]
  %v136 = vld [vmem:[%s0 + $0x370] sm:$0xff]
  %v137 = vld [vmem:[%s0 + $0x378] sm:$0xff]
  %v138 = vld [vmem:[%s0 + $0x380] sm:$0xf]
  %v139 = vld [vmem:[%s0 + $0x384] sm:$0xff]
  %v140 = vld [vmem:[%s0 + $0x38c] sm:$0xff]
  %v141 = vld [vmem:[%s0 + $0x394] sm:$0xff]
  %v142 = vld [vmem:[%s0 + $0x39c] sm:$0xff]
  %v143 = vld [vmem:[%s0 + $0x3a4] sm:$0xf]
  %v144 = vld [vmem:[%s0 + $0x3a8] sm:$0xff]
  %v145 = vld [vmem:[%s0 + $0x3b0] sm:$0xff]
  %v146 = vld [vmem:[%s0 + $0x3b8] sm:$0xff]
  %v147 = vld [vmem:[%s0 + $0x3c0] sm:$0xff]
  %v148 = vld [vmem:[%s0 + $0x3c8] sm:$0xf]
  %v149 = vld [vmem:[%s0 + $0x3cc] sm:$0xff]
  %v150 = vld [vmem:[%s0 + $0x3d4] sm:$0xff]
  %v151 = vld [vmem:[%s0 + $0x3dc] sm:$0xff]
  %v152 = vld [vmem:[%s0 + $0x3e4] sm:$0xff]
  %v153 = vld [vmem:[%s0 + $0x3ec] sm:$0xf]
  %v154 = vld [vmem:[%s0 + $0x3f0] sm:$0xff]
  %v155 = vld [vmem:[%s0 + $0x3f8] sm:$0xff]
  %v156 = vld [vmem:[%s0 + $0x400] sm:$0xff]
  %v157 = vld [vmem:[%s0 + $0x408] sm:$0xff]
  %v158 = vld [vmem:[%s0 + $0x410] sm:$0xf]
  %v159 = vld [vmem:[%s0 + $0x414] sm:$0xff]
  %v160 = vld [vmem:[%s0 + $0x41c] sm:$0xff]
  %v161 = vld [vmem:[%s0 + $0x424] sm:$0xff]
  %v162 = vld [vmem:[%s0 + $0x42c] sm:$0xff]
  %v163 = vld [vmem:[%s0 + $0x434] sm:$0xf]
  %v164 = vld [vmem:[%s0 + $0x438] sm:$0xff]
  %v165 = vld [vmem:[%s0 + $0x440] sm:$0xff]
  %v166 = vld [vmem:[%s0 + $0x448] sm:$0xff]
  %v167 = vld [vmem:[%s0 + $0x450] sm:$0xff]
  %v168 = vld [vmem:[%s0 + $0x458] sm:$0xf]
  %v169 = vld [vmem:[%s0 + $0x45c] sm:$0xff]
  %v170 = vld [vmem:[%s0 + $0x464] sm:$0xff]
  %v171 = vld [vmem:[%s0 + $0x46c] sm:$0xff]
  %v172 = vld [vmem:[%s0 + $0x474] sm:$0xff]
  %v173 = vld [vmem:[%s0 + $0x47c] sm:$0xf]
  %v174 = vld [vmem:[%s0 + $0x480] sm:$0xff]
  %v175 = vld [vmem:[%s0 + $0x488] sm:$0xff]
  %v176 = vld [vmem:[%s0 + $0x490] sm:$0xff]
  %v177 = vld [vmem:[%s0 + $0x498] sm:$0xff]
  %v178 = vld [vmem:[%s0 + $0x4a0] sm:$0xf]
  %v179 = vld [vmem:[%s0 + $0x4a4] sm:$0xff]
  %v180 = vld [vmem:[%s0 + $0x4ac] sm:$0xff]
  %v181 = vld [vmem:[%s0 + $0x4b4] sm:$0xff]
  %v182 = vld [vmem:[%s0 + $0x4bc] sm:$0xff]
  %v183 = vld [vmem:[%s0 + $0x4c4] sm:$0xf]
  %v184 = vld [vmem:[%s0 + $0x4c8] sm:$0xff]
  %v185 = vld [vmem:[%s0 + $0x4d0] sm:$0xff]
  %v186 = vld [vmem:[%s0 + $0x4d8] sm:$0xff]
  %v187 = vld [vmem:[%s0 + $0x4e0] sm:$0xff]
  %v188 = vld [vmem:[%s0 + $0x4e8] sm:$0xf]
  %v189 = vld [vmem:[%s0 + $0x4ec] sm:$0xff]
  %v190 = vld [vmem:[%s0 + $0x4f4] sm:$0xff]
  %v191 = vld [vmem:[%s0 + $0x4fc] sm:$0xff]
  %v192 = vld [vmem:[%s0 + $0x504] sm:$0xff]
  %v193 = vld [vmem:[%s0 + $0x50c] sm:$0xf]
  %v194 = vld [vmem:[%s0 + $0x510] sm:$0xff]
  %v195 = vld [vmem:[%s0 + $0x518] sm:$0xff]
  %v196 = vld [vmem:[%s0 + $0x520] sm:$0xff]
  %v197 = vld [vmem:[%s0 + $0x528] sm:$0xff]
  %v198 = vld [vmem:[%s0 + $0x530] sm:$0xf]
  %v199 = vld [vmem:[%s0 + $0x534] sm:$0xff]
  %v200 = vld [vmem:[%s0 + $0x53c] sm:$0xff]
  %v201 = vld [vmem:[%s0 + $0x544] sm:$0xff]
  %v202 = vld [vmem:[%s0 + $0x54c] sm:$0xff]
  %v203 = vld [vmem:[%s0 + $0x554] sm:$0xf]
  %v204 = vld [vmem:[%s0 + $0x558] sm:$0xff]
  %v205 = vld [vmem:[%s0 + $0x560] sm:$0xff]
  %v206 = vld [vmem:[%s0 + $0x568] sm:$0xff]
  %v207 = vld [vmem:[%s0 + $0x570] sm:$0xff]
  %v208 = vld [vmem:[%s0 + $0x578] sm:$0xf]
  %v209 = vld [vmem:[%s0 + $0x57c] sm:$0xff]
  %v210 = vld [vmem:[%s0 + $0x584] sm:$0xff]
  %v211 = vld [vmem:[%s0 + $0x58c] sm:$0xff]
  %v212 = vld [vmem:[%s0 + $0x594] sm:$0xff]
  %v213 = vld [vmem:[%s0 + $0x59c] sm:$0xf]
  %v214 = vld [vmem:[%s0 + $0x5a0] sm:$0xff]
  %v215 = vld [vmem:[%s0 + $0x5a8] sm:$0xff]
  %v216 = vld [vmem:[%s0 + $0x5b0] sm:$0xff]
  %v217 = vld [vmem:[%s0 + $0x5b8] sm:$0xff]
  %v218 = vld [vmem:[%s0 + $0x5c0] sm:$0xf]
  %v219 = vld [vmem:[%s0 + $0x5c4] sm:$0xff]
  %v220 = vld [vmem:[%s0 + $0x5cc] sm:$0xff]
  %v221 = vld [vmem:[%s0 + $0x5d4] sm:$0xff]
  %v222 = vld [vmem:[%s0 + $0x5dc] sm:$0xff]
  %v223 = vld [vmem:[%s0 + $0x5e4] sm:$0xf]
  %v224 = vld [vmem:[%s0 + $0x5e8] sm:$0xff]
  %v225 = vld [vmem:[%s0 + $0x5f0] sm:$0xff]
  %v226 = vld [vmem:[%s0 + $0x5f8] sm:$0xff]
  %v227 = vld [vmem:[%s0 + $0x600] sm:$0xff]
  %v228 = vld [vmem:[%s0 + $0x608] sm:$0xf]
  %v229 = vld [vmem:[%s0 + $0x60c] sm:$0xff]
  %v230 = vld [vmem:[%s0 + $0x614] sm:$0xff]
  %v231 = vld [vmem:[%s0 + $0x61c] sm:$0xff]
  %v232 = vld [vmem:[%s0 + $0x624] sm:$0xff]
  %v233 = vld [vmem:[%s0 + $0x62c] sm:$0xf]
  %v234 = vld [vmem:[%s0 + $0x630] sm:$0xff]
  %v235 = vld [vmem:[%s0 + $0x638] sm:$0xff]
  %v236 = vld [vmem:[%s0 + $0x640] sm:$0xff]
  %v237 = vld [vmem:[%s0 + $0x648] sm:$0xff]
  %v238 = vld [vmem:[%s0 + $0x650] sm:$0xf]
  %v239 = vld [vmem:[%s0 + $0x654] sm:$0xff]
  %v240 = vld [vmem:[%s0 + $0x65c] sm:$0xff]
  %v241 = vld [vmem:[%s0 + $0x664] sm:$0xff]
  %v242 = vld [vmem:[%s0 + $0x66c] sm:$0xff]
  %v243 = vld [vmem:[%s0 + $0x674] sm:$0xf]
  %v244 = vld [vmem:[%s0 + $0x678] sm:$0xff]
  %v245 = vld [vmem:[%s0 + $0x680] sm:$0xff]
  %v246 = vld [vmem:[%s0 + $0x688] sm:$0xff]
  %v247 = vld [vmem:[%s0 + $0x690] sm:$0xff]
  %v248 = vld [vmem:[%s0 + $0x698] sm:$0xf]
  %v249 = vld [vmem:[%s0 + $0x69c] sm:$0xff]
  %v250 = vld [vmem:[%s0 + $0x6a4] sm:$0xff]
  %v251 = vld [vmem:[%s0 + $0x6ac] sm:$0xff]
  %v252 = vld [vmem:[%s0 + $0x6b4] sm:$0xff]
  %v253 = vld [vmem:[%s0 + $0x6bc] sm:$0xf]
  %v254 = vld [vmem:[%s0 + $0x6c0] sm:$0xff]
  %v255 = vld [vmem:[%s0 + $0x6c8] sm:$0xff]
  %v256 = vld [vmem:[%s0 + $0x6d0] sm:$0xff]
  %v257 = vld [vmem:[%s0 + $0x6d8] sm:$0xff]
  %v258 = vld [vmem:[%s0 + $0x6e0] sm:$0xf]
  %v259 = vld [vmem:[%s0 + $0x6e4] sm:$0xff]
  %v260 = vld [vmem:[%s0 + $0x6ec] sm:$0xff]
  %v261 = vld [vmem:[%s0 + $0x6f4] sm:$0xff]
  %v262 = vld [vmem:[%s0 + $0x6fc] sm:$0xff]
  %v263 = vld [vmem:[%s0 + $0x704] sm:$0xf]
  %v264 = vld [vmem:[%s0 + $0x708] sm:$0xff]
  %v265 = vld [vmem:[%s0 + $0x710] sm:$0xff]
  %v266 = vld [vmem:[%s0 + $0x718] sm:$0xff]
  %v267 = vld [vmem:[%s0 + $0x720] sm:$0xff]
  %v268 = vld [vmem:[%s0 + $0x728] sm:$0xf]
  %v269 = vld [vmem:[%s0 + $0x72c] sm:$0xff]
  %v270 = vld [vmem:[%s0 + $0x734] sm:$0xff]
  %v271 = vld [vmem:[%s0 + $0x73c] sm:$0xff]
  %v272 = vld [vmem:[%s0 + $0x744] sm:$0xff]
  %v273 = vld [vmem:[%s0 + $0x74c] sm:$0xf]
  %v274 = vld [vmem:[%s0 + $0x750] sm:$0xff]
  %v275 = vld [vmem:[%s0 + $0x758] sm:$0xff]
  %v276 = vld [vmem:[%s0 + $0x760] sm:$0xff]
  %v277 = vld [vmem:[%s0 + $0x768] sm:$0xff]
  %v278 = vld [vmem:[%s0 + $0x770] sm:$0xf]
  %v279 = vld [vmem:[%s0 + $0x774] sm:$0xff]
  %v280 = vld [vmem:[%s0 + $0x77c] sm:$0xff]
  %v281 = vld [vmem:[%s0 + $0x784] sm:$0xff]
  %v282 = vld [vmem:[%s0 + $0x78c] sm:$0xff]
  %v283 = vld [vmem:[%s0 + $0x794] sm:$0xf]
  %v284 = vld [vmem:[%s0 + $0x798] sm:$0xff]
  %v285 = vld [vmem:[%s0 + $0x7a0] sm:$0xff]
  %v286 = vld [vmem:[%s0 + $0x7a8] sm:$0xff]
  %v287 = vld [vmem:[%s0 + $0x7b0] sm:$0xff]
  %v288 = vld [vmem:[%s0 + $0x7b8] sm:$0xf]
  %v289 = vld [vmem:[%s0 + $0x7bc] sm:$0xff]
  %v290 = vld [vmem:[%s0 + $0x7c4] sm:$0xff]
  %v291 = vld [vmem:[%s0 + $0x7cc] sm:$0xff]
  %v292 = vld [vmem:[%s0 + $0x7d4] sm:$0xff]
  %v293 = vld [vmem:[%s0 + $0x7dc] sm:$0xf]
  %v294 = vld [vmem:[%s0 + $0x7e0] sm:$0xff]
  %v295 = vld [vmem:[%s0 + $0x7e8] sm:$0xff]
  %v296 = vld [vmem:[%s0 + $0x7f0] sm:$0xff]
  %v297 = vld [vmem:[%s0 + $0x7f8] sm:$0xff]
  %v298 = vld [vmem:[%s0 + $0x800] sm:$0xf]
  %v299 = vld [vmem:[%s0 + $0x804] sm:$0xff]
  %v300 = vld [vmem:[%s0 + $0x80c] sm:$0xff]
  %v301 = vld [vmem:[%s0 + $0x814] sm:$0xff]
  %v302 = vld [vmem:[%s0 + $0x81c] sm:$0xff]
  %v303 = vld [vmem:[%s0 + $0x824] sm:$0xf]
  %v304 = vld [vmem:[%s0 + $0x828] sm:$0xff]
  %v305 = vld [vmem:[%s0 + $0x830] sm:$0xff]
  %v306 = vld [vmem:[%s0 + $0x838] sm:$0xff]
  %v307 = vld [vmem:[%s0 + $0x840] sm:$0xff]
  %v308 = vld [vmem:[%s0 + $0x848] sm:$0xf]
  %v309 = vld [vmem:[%s0 + $0x84c] sm:$0xff]
  %v310 = vld [vmem:[%s0 + $0x854] sm:$0xff]
  %v311 = vld [vmem:[%s0 + $0x85c] sm:$0xff]
  %v312 = vld [vmem:[%s0 + $0x864] sm:$0xff]
  %v313 = vld [vmem:[%s0 + $0x86c] sm:$0xf]
  %v314 = vld [vmem:[%s0 + $0x870] sm:$0xff]
  %v315 = vld [vmem:[%s0 + $0x878] sm:$0xff]
  %v316 = vld [vmem:[%s0 + $0x880] sm:$0xff]
  %v317 = vld [vmem:[%s0 + $0x888] sm:$0xff]
  %v318 = vld [vmem:[%s0 + $0x890] sm:$0xf]
  %v319 = vld [vmem:[%s0 + $0x894] sm:$0xff]
  %v320 = vld [vmem:[%s0 + $0x89c] sm:$0xff]
  %v321 = vld [vmem:[%s0 + $0x8a4] sm:$0xff]
  %v322 = vld [vmem:[%s0 + $0x8ac] sm:$0xff]
  %v323 = vld [vmem:[%s0 + $0x8b4] sm:$0xf]
  %v324 = vld [vmem:[%s0 + $0x8b8] sm:$0xff]
  %v325 = vld [vmem:[%s0 + $0x8c0] sm:$0xff]
  %v326 = vld [vmem:[%s0 + $0x8c8] sm:$0xff]
  %v327 = vld [vmem:[%s0 + $0x8d0] sm:$0xff]
  %v328 = vld [vmem:[%s0 + $0x8d8] sm:$0xf]
  %v329 = vld [vmem:[%s0 + $0x8dc] sm:$0xff]
  %v330 = vld [vmem:[%s0 + $0x8e4] sm:$0xff]
  %v331 = vld [vmem:[%s0 + $0x8ec] sm:$0xff]
  %v332 = vld [vmem:[%s0 + $0x8f4] sm:$0xff]
  %v333 = vld [vmem:[%s0 + $0x8fc] sm:$0xf]
  %v334 = vld [vmem:[%s1] sm:$0xf]
  %v335 = vld [vmem:[%s1 + $0x4] sm:$0xf]
  %v336 = vld [vmem:[%s1 + $0x8] sm:$0xf]
  %v337 = vld [vmem:[%s1 + $0xc] sm:$0xf]
  %v338 = vld [vmem:[%s1 + $0x10] sm:$0xf]
  %v339 = vld [vmem:[%s1 + $0x14] sm:$0xf]
  %v340 = vld [vmem:[%s1 + $0x18] sm:$0xf]
  %v341 = vld [vmem:[%s1 + $0x1c] sm:$0xf]
  %v342 = vld [vmem:[%s1 + $0x20] sm:$0xf]
  %v343 = vld [vmem:[%s1 + $0x24] sm:$0xf]
  %v344 = vld [vmem:[%s1 + $0x28] sm:$0xf]
  %v345 = vld [vmem:[%s1 + $0x2c] sm:$0xf]
  %v346 = vld [vmem:[%s1 + $0x30] sm:$0xf]
  %v347 = vld [vmem:[%s1 + $0x34] sm:$0xf]
  %v348 = vld [vmem:[%s1 + $0x38] sm:$0xf]
  %v349 = vld [vmem:[%s1 + $0x3c] sm:$0xf]
  %v350 = vld [vmem:[%s1 + $0x40] sm:$0xf]
  %v351 = vld [vmem:[%s1 + $0x44] sm:$0xf]
  %v352 = vld [vmem:[%s1 + $0x48] sm:$0xf]
  %v353 = vld [vmem:[%s1 + $0x4c] sm:$0xf]
  %v354 = vld [vmem:[%s1 + $0x50] sm:$0xf]
  %v355 = vld [vmem:[%s1 + $0x54] sm:$0xf]
  %v356 = vld [vmem:[%s1 + $0x58] sm:$0xf]
  %v357 = vld [vmem:[%s1 + $0x5c] sm:$0xf]
  %v358 = vld [vmem:[%s1 + $0x60] sm:$0xf]
  %v359 = vld [vmem:[%s1 + $0x64] sm:$0xf]
  %v360 = vld [vmem:[%s1 + $0x68] sm:$0xf]
  %v361 = vld [vmem:[%s1 + $0x6c] sm:$0xf]
  %v362 = vld [vmem:[%s1 + $0x70] sm:$0xf]
  %v363 = vld [vmem:[%s1 + $0x74] sm:$0xf]
  %v364 = vld [vmem:[%s1 + $0x78] sm:$0xf]
  %v365 = vld [vmem:[%s1 + $0x7c] sm:$0xf]
  %v366 = vld [vmem:[%s1 + $0x80] sm:$0xf]
  %v367 = vld [vmem:[%s1 + $0x84] sm:$0xf]
  %v368 = vld [vmem:[%s1 + $0x88] sm:$0xf]
  %v369 = vld [vmem:[%s1 + $0x8c] sm:$0xf]
  %v370 = vld [vmem:[%s1 + $0x90] sm:$0xf]
  %v371 = vld [vmem:[%s1 + $0x94] sm:$0xf]
  %v372 = vld [vmem:[%s1 + $0x98] sm:$0xf]
  %v373 = vld [vmem:[%s1 + $0x9c] sm:$0xf]
  %v374 = vld [vmem:[%s1 + $0xa0] sm:$0xf]
  %v375 = vld [vmem:[%s1 + $0xa4] sm:$0xf]
  %v376 = vld [vmem:[%s1 + $0xa8] sm:$0xf]
  %v377 = vld [vmem:[%s1 + $0xac] sm:$0xf]
  %v378 = vld [vmem:[%s1 + $0xb0] sm:$0xf]
  %v379 = vld [vmem:[%s1 + $0xb4] sm:$0xf]
  %v380 = vld [vmem:[%s1 + $0xb8] sm:$0xf]
  %v381 = vld [vmem:[%s1 + $0xbc] sm:$0xf]
  %v382 = vld [vmem:[%s1 + $0xc0] sm:$0xf]
  %v383 = vld [vmem:[%s1 + $0xc4] sm:$0xf]
  %v384 = vld [vmem:[%s1 + $0xc8] sm:$0xf]
  %v385 = vld [vmem:[%s1 + $0xcc] sm:$0xf]
  %v386 = vld [vmem:[%s1 + $0xd0] sm:$0xf]
  %v387 = vld [vmem:[%s1 + $0xd4] sm:$0xf]
  %v388 = vld [vmem:[%s1 + $0xd8] sm:$0xf]
  %v389 = vld [vmem:[%s1 + $0xdc] sm:$0xf]
  %v390 = vld [vmem:[%s1 + $0xe0] sm:$0xf]
  %v391 = vld [vmem:[%s1 + $0xe4] sm:$0xf]
  %v392 = vld [vmem:[%s1 + $0xe8] sm:$0xf]
  %v393 = vld [vmem:[%s1 + $0xec] sm:$0xf]
  %v394 = vld [vmem:[%s1 + $0xf0] sm:$0xf]
  %v395 = vld [vmem:[%s1 + $0xf4] sm:$0xf]
  %v396 = vld [vmem:[%s1 + $0xf8] sm:$0xf]
  %v397 = vld [vmem:[%s1 + $0xfc] sm:$0xf]
  %v398 = vld [vmem:[%s1 + $0x100] sm:$0xf]
  %v399 = vld [vmem:[%s1 + $0x104] sm:$0xf]
  %v400 = vld [vmem:[%s1 + $0x108] sm:$0xf]
  %v401 = vld [vmem:[%s1 + $0x10c] sm:$0xf]
  %v402 = vld [vmem:[%s1 + $0x110] sm:$0xf]
  %v403 = vld [vmem:[%s1 + $0x114] sm:$0xf]
  %v404 = vld [vmem:[%s1 + $0x118] sm:$0xf]
  %v405 = vld [vmem:[%s1 + $0x11c] sm:$0xf]
  %v406 = vld [vmem:[%s1 + $0x120] sm:$0xf]
  %v407 = vld [vmem:[%s1 + $0x124] sm:$0xf]
  %v408 = vld [vmem:[%s1 + $0x128] sm:$0xf]
  %v409 = vld [vmem:[%s1 + $0x12c] sm:$0xf]
  %v410 = vld [vmem:[%s1 + $0x130] sm:$0xf]
  %v411 = vld [vmem:[%s1 + $0x134] sm:$0xf]
  %v412 = vld [vmem:[%s1 + $0x138] sm:$0xf]
  %v413 = vld [vmem:[%s1 + $0x13c] sm:$0xf]
  %v414 = vld [vmem:[%s1 + $0x140] sm:$0xf]
  %v415 = vld [vmem:[%s1 + $0x144] sm:$0xf]
  %v416 = vld [vmem:[%s1 + $0x148] sm:$0xf]
  %v417 = vld [vmem:[%s1 + $0x14c] sm:$0xf]
  %v418 = vld [vmem:[%s1 + $0x150] sm:$0xf]
  %v419 = vld [vmem:[%s1 + $0x154] sm:$0xf]
  %v420 = vld [vmem:[%s1 + $0x158] sm:$0xf]
  %v421 = vld [vmem:[%s1 + $0x15c] sm:$0xf]
  %v422 = vld [vmem:[%s1 + $0x160] sm:$0xf]
  %v423 = vld [vmem:[%s1 + $0x164] sm:$0xf]
  %v424 = vld [vmem:[%s1 + $0x168] sm:$0xf]
  %v425 = vld [vmem:[%s1 + $0x16c] sm:$0xf]
  %v426 = vld [vmem:[%s1 + $0x170] sm:$0xf]
  %v427 = vld [vmem:[%s1 + $0x174] sm:$0xf]
  %v428 = vld [vmem:[%s1 + $0x178] sm:$0xf]
  %v429 = vld [vmem:[%s1 + $0x17c] sm:$0xf]
  %v430 = vld [vmem:[%s1 + $0x180] sm:$0xf]
  %v431 = vld [vmem:[%s1 + $0x184] sm:$0xf]
  %v432 = vld [vmem:[%s1 + $0x188] sm:$0xf]
  %v433 = vld [vmem:[%s1 + $0x18c] sm:$0xf]
  %v434 = vld [vmem:[%s1 + $0x190] sm:$0xf]
  %v435 = vld [vmem:[%s1 + $0x194] sm:$0xf]
  %v436 = vld [vmem:[%s1 + $0x198] sm:$0xf]
  %v437 = vld [vmem:[%s1 + $0x19c] sm:$0xf]
  %v438 = vld [vmem:[%s1 + $0x1a0] sm:$0xf]
  %v439 = vld [vmem:[%s1 + $0x1a4] sm:$0xf]
  %v440 = vld [vmem:[%s1 + $0x1a8] sm:$0xf]
  %v441 = vld [vmem:[%s1 + $0x1ac] sm:$0xf]
  %v442 = vld [vmem:[%s1 + $0x1b0] sm:$0xf]
  %v443 = vld [vmem:[%s1 + $0x1b4] sm:$0xf]
  %v444 = vld [vmem:[%s1 + $0x1b8] sm:$0xf]
  %v445 = vld [vmem:[%s1 + $0x1bc] sm:$0xf]
  %v446 = vld [vmem:[%s1 + $0x1c0] sm:$0xf]
  %v447 = vld [vmem:[%s1 + $0x1c4] sm:$0xf]
  %v448 = vld [vmem:[%s1 + $0x1c8] sm:$0xf]
  %v449 = vld [vmem:[%s1 + $0x1cc] sm:$0xf]
  %v450 = vld [vmem:[%s1 + $0x1d0] sm:$0xf]
  %v451 = vld [vmem:[%s1 + $0x1d4] sm:$0xf]
  %v452 = vld [vmem:[%s1 + $0x1d8] sm:$0xf]
  %v453 = vld [vmem:[%s1 + $0x1dc] sm:$0xf]
  %v454 = vld [vmem:[%s1 + $0x1e0] sm:$0xf]
  %v455 = vld [vmem:[%s1 + $0x1e4] sm:$0xf]
  %v456 = vld [vmem:[%s1 + $0x1e8] sm:$0xf]
  %v457 = vld [vmem:[%s1 + $0x1ec] sm:$0xf]
  %v458 = vld [vmem:[%s1 + $0x1f0] sm:$0xf]
  %v459 = vld [vmem:[%s1 + $0x1f4] sm:$0xf]
  %v460 = vld [vmem:[%s1 + $0x1f8] sm:$0xf]
  %v461 = vld [vmem:[%s1 + $0x1fc] sm:$0xf]
  %v462 = vld [vmem:[%s1 + $0x200] sm:$0xf]
  %v463 = vld [vmem:[%s1 + $0x204] sm:$0xf]
  %v464 = vld [vmem:[%s1 + $0x208] sm:$0xf]
  %v465 = vld [vmem:[%s1 + $0x20c] sm:$0xf]
  %v466 = vld [vmem:[%s1 + $0x210] sm:$0xf]
  %v467 = vld [vmem:[%s1 + $0x214] sm:$0xf]
  %v468 = vld [vmem:[%s1 + $0x218] sm:$0xf]
  %v469 = vld [vmem:[%s1 + $0x21c] sm:$0xf]
  %v470 = vld [vmem:[%s1 + $0x220] sm:$0xf]
  %v471 = vld [vmem:[%s1 + $0x224] sm:$0xf]
  %v472 = vld [vmem:[%s1 + $0x228] sm:$0xf]
  %v473 = vld [vmem:[%s1 + $0x22c] sm:$0xf]
  %v474 = vld [vmem:[%s1 + $0x230] sm:$0xf]
  %v475 = vld [vmem:[%s1 + $0x234] sm:$0xf]
  %v476 = vld [vmem:[%s1 + $0x238] sm:$0xf]
  %v477 = vld [vmem:[%s1 + $0x23c] sm:$0xf]
  %v798 = vunpack.c.l.b16 %v14
  %v799 = vunpack.c.h.b16 %v14
  %v800 = vunpack.c.l.b16 %v15
  %v801 = vunpack.c.h.b16 %v15
  %v802 = vunpack.c.l.b16 %v16
  %v803 = vunpack.c.h.b16 %v16
  %v804 = vunpack.c.l.b16 %v17
  %v805 = vunpack.c.h.b16 %v17
  %v806 = vunpack.c.l.b16 %v18
  %v807 = vunpack.c.l.b16 %v19
  %v808 = vunpack.c.h.b16 %v19
  %v809 = vunpack.c.l.b16 %v20
  %v810 = vunpack.c.h.b16 %v20
  %v811 = vunpack.c.l.b16 %v21
  %v812 = vunpack.c.h.b16 %v21
  %v813 = vunpack.c.l.b16 %v22
  %v814 = vunpack.c.h.b16 %v22
  %v815 = vunpack.c.l.b16 %v23
  %v816 = vunpack.c.l.b16 %v24
  %v817 = vunpack.c.h.b16 %v24
  %v818 = vunpack.c.l.b16 %v25
  %v819 = vunpack.c.h.b16 %v25
  %v820 = vunpack.c.l.b16 %v26
  %v821 = vunpack.c.h.b16 %v26
  %v822 = vunpack.c.l.b16 %v27
  %v823 = vunpack.c.h.b16 %v27
  %v824 = vunpack.c.l.b16 %v28
  %v825 = vunpack.c.l.b16 %v29
  %v826 = vunpack.c.h.b16 %v29
  %v827 = vunpack.c.l.b16 %v30
  %v828 = vunpack.c.h.b16 %v30
  %v829 = vunpack.c.l.b16 %v31
  %v830 = vunpack.c.h.b16 %v31
  %v831 = vunpack.c.l.b16 %v32
  %v832 = vunpack.c.h.b16 %v32
  %v833 = vunpack.c.l.b16 %v33
  %v834 = vunpack.c.l.b16 %v34
  %v835 = vunpack.c.h.b16 %v34
  %v836 = vunpack.c.l.b16 %v35
  %v837 = vunpack.c.h.b16 %v35
  %v838 = vunpack.c.l.b16 %v36
  %v839 = vunpack.c.h.b16 %v36
  %v840 = vunpack.c.l.b16 %v37
  %v841 = vunpack.c.h.b16 %v37
  %v842 = vunpack.c.l.b16 %v38
  %v843 = vunpack.c.l.b16 %v39
  %v844 = vunpack.c.h.b16 %v39
  %v845 = vunpack.c.l.b16 %v40
  %v846 = vunpack.c.h.b16 %v40
  %v847 = vunpack.c.l.b16 %v41
  %v848 = vunpack.c.h.b16 %v41
  %v849 = vunpack.c.l.b16 %v42
  %v850 = vunpack.c.h.b16 %v42
  %v851 = vunpack.c.l.b16 %v43
  %v852 = vunpack.c.l.b16 %v44
  %v853 = vunpack.c.h.b16 %v44
  %v854 = vunpack.c.l.b16 %v45
  %v855 = vunpack.c.h.b16 %v45
  %v856 = vunpack.c.l.b16 %v46
  %v857 = vunpack.c.h.b16 %v46
  %v858 = vunpack.c.l.b16 %v47
  %v859 = vunpack.c.h.b16 %v47
  %v860 = vunpack.c.l.b16 %v48
  %v861 = vunpack.c.l.b16 %v49
  %v862 = vunpack.c.h.b16 %v49
  %v863 = vunpack.c.l.b16 %v50
  %v864 = vunpack.c.h.b16 %v50
  %v865 = vunpack.c.l.b16 %v51
  %v866 = vunpack.c.h.b16 %v51
  %v867 = vunpack.c.l.b16 %v52
  %v868 = vunpack.c.h.b16 %v52
  %v869 = vunpack.c.l.b16 %v53
  %v870 = vunpack.c.l.b16 %v54
  %v871 = vunpack.c.h.b16 %v54
  %v872 = vunpack.c.l.b16 %v55
  %v873 = vunpack.c.h.b16 %v55
  %v874 = vunpack.c.l.b16 %v56
  %v875 = vunpack.c.h.b16 %v56
  %v876 = vunpack.c.l.b16 %v57
  %v877 = vunpack.c.h.b16 %v57
  %v878 = vunpack.c.l.b16 %v58
  %v879 = vunpack.c.l.b16 %v59
  %v880 = vunpack.c.h.b16 %v59
  %v881 = vunpack.c.l.b16 %v60
  %v882 = vunpack.c.h.b16 %v60
  %v883 = vunpack.c.l.b16 %v61
  %v884 = vunpack.c.h.b16 %v61
  %v885 = vunpack.c.l.b16 %v62
  %v886 = vunpack.c.h.b16 %v62
  %v887 = vunpack.c.l.b16 %v63
  %v888 = vunpack.c.l.b16 %v64
  %v889 = vunpack.c.h.b16 %v64
  %v890 = vunpack.c.l.b16 %v65
  %v891 = vunpack.c.h.b16 %v65
  %v892 = vunpack.c.l.b16 %v66
  %v893 = vunpack.c.h.b16 %v66
  %v894 = vunpack.c.l.b16 %v67
  %v895 = vunpack.c.h.b16 %v67
  %v896 = vunpack.c.l.b16 %v68
  %v897 = vunpack.c.l.b16 %v69
  %v898 = vunpack.c.h.b16 %v69
  %v899 = vunpack.c.l.b16 %v70
  %v900 = vunpack.c.h.b16 %v70
  %v901 = vunpack.c.l.b16 %v71
  %v902 = vunpack.c.h.b16 %v71
  %v903 = vunpack.c.l.b16 %v72
  %v904 = vunpack.c.h.b16 %v72
  %v905 = vunpack.c.l.b16 %v73
  %v906 = vunpack.c.l.b16 %v74
  %v907 = vunpack.c.h.b16 %v74
  %v908 = vunpack.c.l.b16 %v75
  %v909 = vunpack.c.h.b16 %v75
  %v910 = vunpack.c.l.b16 %v76
  %v911 = vunpack.c.h.b16 %v76
  %v912 = vunpack.c.l.b16 %v77
  %v913 = vunpack.c.h.b16 %v77
  %v914 = vunpack.c.l.b16 %v78
  %v915 = vunpack.c.l.b16 %v79
  %v916 = vunpack.c.h.b16 %v79
  %v917 = vunpack.c.l.b16 %v80
  %v918 = vunpack.c.h.b16 %v80
  %v919 = vunpack.c.l.b16 %v81
  %v920 = vunpack.c.h.b16 %v81
  %v921 = vunpack.c.l.b16 %v82
  %v922 = vunpack.c.h.b16 %v82
  %v923 = vunpack.c.l.b16 %v83
  %v924 = vunpack.c.l.b16 %v84
  %v925 = vunpack.c.h.b16 %v84
  %v926 = vunpack.c.l.b16 %v85
  %v927 = vunpack.c.h.b16 %v85
  %v928 = vunpack.c.l.b16 %v86
  %v929 = vunpack.c.h.b16 %v86
  %v930 = vunpack.c.l.b16 %v87
  %v931 = vunpack.c.h.b16 %v87
  %v932 = vunpack.c.l.b16 %v88
  %v933 = vunpack.c.l.b16 %v89
  %v934 = vunpack.c.h.b16 %v89
  %v935 = vunpack.c.l.b16 %v90
  %v936 = vunpack.c.h.b16 %v90
  %v937 = vunpack.c.l.b16 %v91
  %v938 = vunpack.c.h.b16 %v91
  %v939 = vunpack.c.l.b16 %v92
  %v940 = vunpack.c.h.b16 %v92
  %v941 = vunpack.c.l.b16 %v93
  %v942 = vunpack.c.l.b16 %v94
  %v943 = vunpack.c.h.b16 %v94
  %v944 = vunpack.c.l.b16 %v95
  %v945 = vunpack.c.h.b16 %v95
  %v946 = vunpack.c.l.b16 %v96
  %v947 = vunpack.c.h.b16 %v96
  %v948 = vunpack.c.l.b16 %v97
  %v949 = vunpack.c.h.b16 %v97
  %v950 = vunpack.c.l.b16 %v98
  %v951 = vunpack.c.l.b16 %v99
  %v952 = vunpack.c.h.b16 %v99
  %v953 = vunpack.c.l.b16 %v100
  %v954 = vunpack.c.h.b16 %v100
  %v955 = vunpack.c.l.b16 %v101
  %v956 = vunpack.c.h.b16 %v101
  %v957 = vunpack.c.l.b16 %v102
  %v958 = vunpack.c.h.b16 %v102
  %v959 = vunpack.c.l.b16 %v103
  %v960 = vunpack.c.l.b16 %v104
  %v961 = vunpack.c.h.b16 %v104
  %v962 = vunpack.c.l.b16 %v105
  %v963 = vunpack.c.h.b16 %v105
  %v964 = vunpack.c.l.b16 %v106
  %v965 = vunpack.c.h.b16 %v106
  %v966 = vunpack.c.l.b16 %v107
  %v967 = vunpack.c.h.b16 %v107
  %v968 = vunpack.c.l.b16 %v108
  %v969 = vunpack.c.l.b16 %v109
  %v970 = vunpack.c.h.b16 %v109
  %v971 = vunpack.c.l.b16 %v110
  %v972 = vunpack.c.h.b16 %v110
  %v973 = vunpack.c.l.b16 %v111
  %v974 = vunpack.c.h.b16 %v111
  %v975 = vunpack.c.l.b16 %v112
  %v976 = vunpack.c.h.b16 %v112
  %v977 = vunpack.c.l.b16 %v113
  %v978 = vunpack.c.l.b16 %v114
  %v979 = vunpack.c.h.b16 %v114
  %v980 = vunpack.c.l.b16 %v115
  %v981 = vunpack.c.h.b16 %v115
  %v982 = vunpack.c.l.b16 %v116
  %v983 = vunpack.c.h.b16 %v116
  %v984 = vunpack.c.l.b16 %v117
  %v985 = vunpack.c.h.b16 %v117
  %v986 = vunpack.c.l.b16 %v118
  %v987 = vunpack.c.l.b16 %v119
  %v988 = vunpack.c.h.b16 %v119
  %v989 = vunpack.c.l.b16 %v120
  %v990 = vunpack.c.h.b16 %v120
  %v991 = vunpack.c.l.b16 %v121
  %v992 = vunpack.c.h.b16 %v121
  %v993 = vunpack.c.l.b16 %v122
  %v994 = vunpack.c.h.b16 %v122
  %v995 = vunpack.c.l.b16 %v123
  %v996 = vunpack.c.l.b16 %v124
  %v997 = vunpack.c.h.b16 %v124
  %v998 = vunpack.c.l.b16 %v125
  %v999 = vunpack.c.h.b16 %v125
  %v1000 = vunpack.c.l.b16 %v126
  %v1001 = vunpack.c.h.b16 %v126
  %v1002 = vunpack.c.l.b16 %v127
  %v1003 = vunpack.c.h.b16 %v127
  %v1004 = vunpack.c.l.b16 %v128
  %v1005 = vunpack.c.l.b16 %v129
  %v1006 = vunpack.c.h.b16 %v129
  %v1007 = vunpack.c.l.b16 %v130
  %v1008 = vunpack.c.h.b16 %v130
  %v1009 = vunpack.c.l.b16 %v131
  %v1010 = vunpack.c.h.b16 %v131
  %v1011 = vunpack.c.l.b16 %v132
  %v1012 = vunpack.c.h.b16 %v132
  %v1013 = vunpack.c.l.b16 %v133
  %v1014 = vunpack.c.l.b16 %v134
  %v1015 = vunpack.c.h.b16 %v134
  %v1016 = vunpack.c.l.b16 %v135
  %v1017 = vunpack.c.h.b16 %v135
  %v1018 = vunpack.c.l.b16 %v136
  %v1019 = vunpack.c.h.b16 %v136
  %v1020 = vunpack.c.l.b16 %v137
  %v1021 = vunpack.c.h.b16 %v137
  %v1022 = vunpack.c.l.b16 %v138
  %v1023 = vunpack.c.l.b16 %v139
  %v1024 = vunpack.c.h.b16 %v139
  %v1025 = vunpack.c.l.b16 %v140
  %v1026 = vunpack.c.h.b16 %v140
  %v1027 = vunpack.c.l.b16 %v141
  %v1028 = vunpack.c.h.b16 %v141
  %v1029 = vunpack.c.l.b16 %v142
  %v1030 = vunpack.c.h.b16 %v142
  %v1031 = vunpack.c.l.b16 %v143
  %v1032 = vunpack.c.l.b16 %v144
  %v1033 = vunpack.c.h.b16 %v144
  %v1034 = vunpack.c.l.b16 %v145
  %v1035 = vunpack.c.h.b16 %v145
  %v1036 = vunpack.c.l.b16 %v146
  %v1037 = vunpack.c.h.b16 %v146
  %v1038 = vunpack.c.l.b16 %v147
  %v1039 = vunpack.c.h.b16 %v147
  %v1040 = vunpack.c.l.b16 %v148
  %v1041 = vunpack.c.l.b16 %v149
  %v1042 = vunpack.c.h.b16 %v149
  %v1043 = vunpack.c.l.b16 %v150
  %v1044 = vunpack.c.h.b16 %v150
  %v1045 = vunpack.c.l.b16 %v151
  %v1046 = vunpack.c.h.b16 %v151
  %v1047 = vunpack.c.l.b16 %v152
  %v1048 = vunpack.c.h.b16 %v152
  %v1049 = vunpack.c.l.b16 %v153
  %v1050 = vunpack.c.l.b16 %v154
  %v1051 = vunpack.c.h.b16 %v154
  %v1052 = vunpack.c.l.b16 %v155
  %v1053 = vunpack.c.h.b16 %v155
  %v1054 = vunpack.c.l.b16 %v156
  %v1055 = vunpack.c.h.b16 %v156
  %v1056 = vunpack.c.l.b16 %v157
  %v1057 = vunpack.c.h.b16 %v157
  %v1058 = vunpack.c.l.b16 %v158
  %v1059 = vunpack.c.l.b16 %v159
  %v1060 = vunpack.c.h.b16 %v159
  %v1061 = vunpack.c.l.b16 %v160
  %v1062 = vunpack.c.h.b16 %v160
  %v1063 = vunpack.c.l.b16 %v161
  %v1064 = vunpack.c.h.b16 %v161
  %v1065 = vunpack.c.l.b16 %v162
  %v1066 = vunpack.c.h.b16 %v162
  %v1067 = vunpack.c.l.b16 %v163
  %v1068 = vunpack.c.l.b16 %v164
  %v1069 = vunpack.c.h.b16 %v164
  %v1070 = vunpack.c.l.b16 %v165
  %v1071 = vunpack.c.h.b16 %v165
  %v1072 = vunpack.c.l.b16 %v166
  %v1073 = vunpack.c.h.b16 %v166
  %v1074 = vunpack.c.l.b16 %v167
  %v1075 = vunpack.c.h.b16 %v167
  %v1076 = vunpack.c.l.b16 %v168
  %v1077 = vunpack.c.l.b16 %v169
  %v1078 = vunpack.c.h.b16 %v169
  %v1079 = vunpack.c.l.b16 %v170
  %v1080 = vunpack.c.h.b16 %v170
  %v1081 = vunpack.c.l.b16 %v171
  %v1082 = vunpack.c.h.b16 %v171
  %v1083 = vunpack.c.l.b16 %v172
  %v1084 = vunpack.c.h.b16 %v172
  %v1085 = vunpack.c.l.b16 %v173
  %v1086 = vunpack.c.l.b16 %v174
  %v1087 = vunpack.c.h.b16 %v174
  %v1088 = vunpack.c.l.b16 %v175
  %v1089 = vunpack.c.h.b16 %v175
  %v1090 = vunpack.c.l.b16 %v176
  %v1091 = vunpack.c.h.b16 %v176
  %v1092 = vunpack.c.l.b16 %v177
  %v1093 = vunpack.c.h.b16 %v177
  %v1094 = vunpack.c.l.b16 %v178
  %v1095 = vunpack.c.l.b16 %v179
  %v1096 = vunpack.c.h.b16 %v179
  %v1097 = vunpack.c.l.b16 %v180
  %v1098 = vunpack.c.h.b16 %v180
  %v1099 = vunpack.c.l.b16 %v181
  %v1100 = vunpack.c.h.b16 %v181
  %v1101 = vunpack.c.l.b16 %v182
  %v1102 = vunpack.c.h.b16 %v182
  %v1103 = vunpack.c.l.b16 %v183
  %v1104 = vunpack.c.l.b16 %v184
  %v1105 = vunpack.c.h.b16 %v184
  %v1106 = vunpack.c.l.b16 %v185
  %v1107 = vunpack.c.h.b16 %v185
  %v1108 = vunpack.c.l.b16 %v186
  %v1109 = vunpack.c.h.b16 %v186
  %v1110 = vunpack.c.l.b16 %v187
  %v1111 = vunpack.c.h.b16 %v187
  %v1112 = vunpack.c.l.b16 %v188
  %v1113 = vunpack.c.l.b16 %v189
  %v1114 = vunpack.c.h.b16 %v189
  %v1115 = vunpack.c.l.b16 %v190
  %v1116 = vunpack.c.h.b16 %v190
  %v1117 = vunpack.c.l.b16 %v191
  %v1118 = vunpack.c.h.b16 %v191
  %v1119 = vunpack.c.l.b16 %v192
  %v1120 = vunpack.c.h.b16 %v192
  %v1121 = vunpack.c.l.b16 %v193
  %v1122 = vunpack.c.l.b16 %v194
  %v1123 = vunpack.c.h.b16 %v194
  %v1124 = vunpack.c.l.b16 %v195
  %v1125 = vunpack.c.h.b16 %v195
  %v1126 = vunpack.c.l.b16 %v196
  %v1127 = vunpack.c.h.b16 %v196
  %v1128 = vunpack.c.l.b16 %v197
  %v1129 = vunpack.c.h.b16 %v197
  %v1130 = vunpack.c.l.b16 %v198
  %v1131 = vunpack.c.l.b16 %v199
  %v1132 = vunpack.c.h.b16 %v199
  %v1133 = vunpack.c.l.b16 %v200
  %v1134 = vunpack.c.h.b16 %v200
  %v1135 = vunpack.c.l.b16 %v201
  %v1136 = vunpack.c.h.b16 %v201
  %v1137 = vunpack.c.l.b16 %v202
  %v1138 = vunpack.c.h.b16 %v202
  %v1139 = vunpack.c.l.b16 %v203
  %v1140 = vunpack.c.l.b16 %v204
  %v1141 = vunpack.c.h.b16 %v204
  %v1142 = vunpack.c.l.b16 %v205
  %v1143 = vunpack.c.h.b16 %v205
  %v1144 = vunpack.c.l.b16 %v206
  %v1145 = vunpack.c.h.b16 %v206
  %v1146 = vunpack.c.l.b16 %v207
  %v1147 = vunpack.c.h.b16 %v207
  %v1148 = vunpack.c.l.b16 %v208
  %v1149 = vunpack.c.l.b16 %v209
  %v1150 = vunpack.c.h.b16 %v209
  %v1151 = vunpack.c.l.b16 %v210
  %v1152 = vunpack.c.h.b16 %v210
  %v1153 = vunpack.c.l.b16 %v211
  %v1154 = vunpack.c.h.b16 %v211
  %v1155 = vunpack.c.l.b16 %v212
  %v1156 = vunpack.c.h.b16 %v212
  %v1157 = vunpack.c.l.b16 %v213
  %v1158 = vunpack.c.l.b16 %v214
  %v1159 = vunpack.c.h.b16 %v214
  %v1160 = vunpack.c.l.b16 %v215
  %v1161 = vunpack.c.h.b16 %v215
  %v1162 = vunpack.c.l.b16 %v216
  %v1163 = vunpack.c.h.b16 %v216
  %v1164 = vunpack.c.l.b16 %v217
  %v1165 = vunpack.c.h.b16 %v217
  %v1166 = vunpack.c.l.b16 %v218
  %v1167 = vunpack.c.l.b16 %v219
  %v1168 = vunpack.c.h.b16 %v219
  %v1169 = vunpack.c.l.b16 %v220
  %v1170 = vunpack.c.h.b16 %v220
  %v1171 = vunpack.c.l.b16 %v221
  %v1172 = vunpack.c.h.b16 %v221
  %v1173 = vunpack.c.l.b16 %v222
  %v1174 = vunpack.c.h.b16 %v222
  %v1175 = vunpack.c.l.b16 %v223
  %v1176 = vunpack.c.l.b16 %v224
  %v1177 = vunpack.c.h.b16 %v224
  %v1178 = vunpack.c.l.b16 %v225
  %v1179 = vunpack.c.h.b16 %v225
  %v1180 = vunpack.c.l.b16 %v226
  %v1181 = vunpack.c.h.b16 %v226
  %v1182 = vunpack.c.l.b16 %v227
  %v1183 = vunpack.c.h.b16 %v227
  %v1184 = vunpack.c.l.b16 %v228
  %v1185 = vunpack.c.l.b16 %v229
  %v1186 = vunpack.c.h.b16 %v229
  %v1187 = vunpack.c.l.b16 %v230
  %v1188 = vunpack.c.h.b16 %v230
  %v1189 = vunpack.c.l.b16 %v231
  %v1190 = vunpack.c.h.b16 %v231
  %v1191 = vunpack.c.l.b16 %v232
  %v1192 = vunpack.c.h.b16 %v232
  %v1193 = vunpack.c.l.b16 %v233
  %v1194 = vunpack.c.l.b16 %v234
  %v1195 = vunpack.c.h.b16 %v234
  %v1196 = vunpack.c.l.b16 %v235
  %v1197 = vunpack.c.h.b16 %v235
  %v1198 = vunpack.c.l.b16 %v236
  %v1199 = vunpack.c.h.b16 %v236
  %v1200 = vunpack.c.l.b16 %v237
  %v1201 = vunpack.c.h.b16 %v237
  %v1202 = vunpack.c.l.b16 %v238
  %v1203 = vunpack.c.l.b16 %v239
  %v1204 = vunpack.c.h.b16 %v239
  %v1205 = vunpack.c.l.b16 %v240
  %v1206 = vunpack.c.h.b16 %v240
  %v1207 = vunpack.c.l.b16 %v241
  %v1208 = vunpack.c.h.b16 %v241
  %v1209 = vunpack.c.l.b16 %v242
  %v1210 = vunpack.c.h.b16 %v242
  %v1211 = vunpack.c.l.b16 %v243
  %v1212 = vunpack.c.l.b16 %v244
  %v1213 = vunpack.c.h.b16 %v244
  %v1214 = vunpack.c.l.b16 %v245
  %v1215 = vunpack.c.h.b16 %v245
  %v1216 = vunpack.c.l.b16 %v246
  %v1217 = vunpack.c.h.b16 %v246
  %v1218 = vunpack.c.l.b16 %v247
  %v1219 = vunpack.c.h.b16 %v247
  %v1220 = vunpack.c.l.b16 %v248
  %v1221 = vunpack.c.l.b16 %v249
  %v1222 = vunpack.c.h.b16 %v249
  %v1223 = vunpack.c.l.b16 %v250
  %v1224 = vunpack.c.h.b16 %v250
  %v1225 = vunpack.c.l.b16 %v251
  %v1226 = vunpack.c.h.b16 %v251
  %v1227 = vunpack.c.l.b16 %v252
  %v1228 = vunpack.c.h.b16 %v252
  %v1229 = vunpack.c.l.b16 %v253
  %v1230 = vunpack.c.l.b16 %v254
  %v1231 = vunpack.c.h.b16 %v254
  %v1232 = vunpack.c.l.b16 %v255
  %v1233 = vunpack.c.h.b16 %v255
  %v1234 = vunpack.c.l.b16 %v256
  %v1235 = vunpack.c.h.b16 %v256
  %v1236 = vunpack.c.l.b16 %v257
  %v1237 = vunpack.c.h.b16 %v257
  %v1238 = vunpack.c.l.b16 %v258
  %v1239 = vunpack.c.l.b16 %v259
  %v1240 = vunpack.c.h.b16 %v259
  %v1241 = vunpack.c.l.b16 %v260
  %v1242 = vunpack.c.h.b16 %v260
  %v1243 = vunpack.c.l.b16 %v261
  %v1244 = vunpack.c.h.b16 %v261
  %v1245 = vunpack.c.l.b16 %v262
  %v1246 = vunpack.c.h.b16 %v262
  %v1247 = vunpack.c.l.b16 %v263
  %v1248 = vunpack.c.l.b16 %v264
  %v1249 = vunpack.c.h.b16 %v264
  %v1250 = vunpack.c.l.b16 %v265
  %v1251 = vunpack.c.h.b16 %v265
  %v1252 = vunpack.c.l.b16 %v266
  %v1253 = vunpack.c.h.b16 %v266
  %v1254 = vunpack.c.l.b16 %v267
  %v1255 = vunpack.c.h.b16 %v267
  %v1256 = vunpack.c.l.b16 %v268
  %v1257 = vunpack.c.l.b16 %v269
  %v1258 = vunpack.c.h.b16 %v269
  %v1259 = vunpack.c.l.b16 %v270
  %v1260 = vunpack.c.h.b16 %v270
  %v1261 = vunpack.c.l.b16 %v271
  %v1262 = vunpack.c.h.b16 %v271
  %v1263 = vunpack.c.l.b16 %v272
  %v1264 = vunpack.c.h.b16 %v272
  %v1265 = vunpack.c.l.b16 %v273
  %v1266 = vunpack.c.l.b16 %v274
  %v1267 = vunpack.c.h.b16 %v274
  %v1268 = vunpack.c.l.b16 %v275
  %v1269 = vunpack.c.h.b16 %v275
  %v1270 = vunpack.c.l.b16 %v276
  %v1271 = vunpack.c.h.b16 %v276
  %v1272 = vunpack.c.l.b16 %v277
  %v1273 = vunpack.c.h.b16 %v277
  %v1274 = vunpack.c.l.b16 %v278
  %v1275 = vunpack.c.l.b16 %v279
  %v1276 = vunpack.c.h.b16 %v279
  %v1277 = vunpack.c.l.b16 %v280
  %v1278 = vunpack.c.h.b16 %v280
  %v1279 = vunpack.c.l.b16 %v281
  %v1280 = vunpack.c.h.b16 %v281
  %v1281 = vunpack.c.l.b16 %v282
  %v1282 = vunpack.c.h.b16 %v282
  %v1283 = vunpack.c.l.b16 %v283
  %v1284 = vunpack.c.l.b16 %v284
  %v1285 = vunpack.c.h.b16 %v284
  %v1286 = vunpack.c.l.b16 %v285
  %v1287 = vunpack.c.h.b16 %v285
  %v1288 = vunpack.c.l.b16 %v286
  %v1289 = vunpack.c.h.b16 %v286
  %v1290 = vunpack.c.l.b16 %v287
  %v1291 = vunpack.c.h.b16 %v287
  %v1292 = vunpack.c.l.b16 %v288
  %v1293 = vunpack.c.l.b16 %v289
  %v1294 = vunpack.c.h.b16 %v289
  %v1295 = vunpack.c.l.b16 %v290
  %v1296 = vunpack.c.h.b16 %v290
  %v1297 = vunpack.c.l.b16 %v291
  %v1298 = vunpack.c.h.b16 %v291
  %v1299 = vunpack.c.l.b16 %v292
  %v1300 = vunpack.c.h.b16 %v292
  %v1301 = vunpack.c.l.b16 %v293
  %v1302 = vunpack.c.l.b16 %v294
  %v1303 = vunpack.c.h.b16 %v294
  %v1304 = vunpack.c.l.b16 %v295
  %v1305 = vunpack.c.h.b16 %v295
  %v1306 = vunpack.c.l.b16 %v296
  %v1307 = vunpack.c.h.b16 %v296
  %v1308 = vunpack.c.l.b16 %v297
  %v1309 = vunpack.c.h.b16 %v297
  %v1310 = vunpack.c.l.b16 %v298
  %v1311 = vunpack.c.l.b16 %v299
  %v1312 = vunpack.c.h.b16 %v299
  %v1313 = vunpack.c.l.b16 %v300
  %v1314 = vunpack.c.h.b16 %v300
  %v1315 = vunpack.c.l.b16 %v301
  %v1316 = vunpack.c.h.b16 %v301
  %v1317 = vunpack.c.l.b16 %v302
  %v1318 = vunpack.c.h.b16 %v302
  %v1319 = vunpack.c.l.b16 %v303
  %v1320 = vunpack.c.l.b16 %v304
  %v1321 = vunpack.c.h.b16 %v304
  %v1322 = vunpack.c.l.b16 %v305
  %v1323 = vunpack.c.h.b16 %v305
  %v1324 = vunpack.c.l.b16 %v306
  %v1325 = vunpack.c.h.b16 %v306
  %v1326 = vunpack.c.l.b16 %v307
  %v1327 = vunpack.c.h.b16 %v307
  %v1328 = vunpack.c.l.b16 %v308
  %v1329 = vunpack.c.l.b16 %v309
  %v1330 = vunpack.c.h.b16 %v309
  %v1331 = vunpack.c.l.b16 %v310
  %v1332 = vunpack.c.h.b16 %v310
  %v1333 = vunpack.c.l.b16 %v311
  %v1334 = vunpack.c.h.b16 %v311
  %v1335 = vunpack.c.l.b16 %v312
  %v1336 = vunpack.c.h.b16 %v312
  %v1337 = vunpack.c.l.b16 %v313
  %v1338 = vunpack.c.l.b16 %v314
  %v1339 = vunpack.c.h.b16 %v314
  %v1340 = vunpack.c.l.b16 %v315
  %v1341 = vunpack.c.h.b16 %v315
  %v1342 = vunpack.c.l.b16 %v316
  %v1343 = vunpack.c.h.b16 %v316
  %v1344 = vunpack.c.l.b16 %v317
  %v1345 = vunpack.c.h.b16 %v317
  %v1346 = vunpack.c.l.b16 %v318
  %v1347 = vunpack.c.l.b16 %v319
  %v1348 = vunpack.c.h.b16 %v319
  %v1349 = vunpack.c.l.b16 %v320
  %v1350 = vunpack.c.h.b16 %v320
  %v1351 = vunpack.c.l.b16 %v321
  %v1352 = vunpack.c.h.b16 %v321
  %v1353 = vunpack.c.l.b16 %v322
  %v1354 = vunpack.c.h.b16 %v322
  %v1355 = vunpack.c.l.b16 %v323
  %v1356 = vunpack.c.l.b16 %v324
  %v1357 = vunpack.c.h.b16 %v324
  %v1358 = vunpack.c.l.b16 %v325
  %v1359 = vunpack.c.h.b16 %v325
  %v1360 = vunpack.c.l.b16 %v326
  %v1361 = vunpack.c.h.b16 %v326
  %v1362 = vunpack.c.l.b16 %v327
  %v1363 = vunpack.c.h.b16 %v327
  %v1364 = vunpack.c.l.b16 %v328
  %v1365 = vunpack.c.l.b16 %v329
  %v1366 = vunpack.c.h.b16 %v329
  %v1367 = vunpack.c.l.b16 %v330
  %v1368 = vunpack.c.h.b16 %v330
  %v1369 = vunpack.c.l.b16 %v331
  %v1370 = vunpack.c.h.b16 %v331
  %v1371 = vunpack.c.l.b16 %v332
  %v1372 = vunpack.c.h.b16 %v332
  %v1373 = vunpack.c.l.b16 %v333
  %v1374 = vpack.c.b16 %v807, %v798
  %v1375 = vpack.c.b16 %v808, %v799
  %v1376 = vpack.c.b16 %v809, %v800
  %v1377 = vpack.c.b16 %v810, %v801
  %v1378 = vpack.c.b16 %v811, %v802
  %v1379 = vpack.c.b16 %v812, %v803
  %v1380 = vpack.c.b16 %v813, %v804
  %v1381 = vpack.c.b16 %v814, %v805
  %v1382 = vpack.c.b16 %v815, %v806
  %v1383 = vpack.c.b16 %v825, %v816
  %v1384 = vpack.c.b16 %v826, %v817
  %v1385 = vpack.c.b16 %v827, %v818
  %v1386 = vpack.c.b16 %v828, %v819
  %v1387 = vpack.c.b16 %v829, %v820
  %v1388 = vpack.c.b16 %v830, %v821
  %v1389 = vpack.c.b16 %v831, %v822
  %v1390 = vpack.c.b16 %v832, %v823
  %v1391 = vpack.c.b16 %v833, %v824
  %v1392 = vpack.c.b16 %v843, %v834
  %v1393 = vpack.c.b16 %v844, %v835
  %v1394 = vpack.c.b16 %v845, %v836
  %v1395 = vpack.c.b16 %v846, %v837
  %v1396 = vpack.c.b16 %v847, %v838
  %v1397 = vpack.c.b16 %v848, %v839
  %v1398 = vpack.c.b16 %v849, %v840
  %v1399 = vpack.c.b16 %v850, %v841
  %v1400 = vpack.c.b16 %v851, %v842
  %v1401 = vpack.c.b16 %v861, %v852
  %v1402 = vpack.c.b16 %v862, %v853
  %v1403 = vpack.c.b16 %v863, %v854
  %v1404 = vpack.c.b16 %v864, %v855
  %v1405 = vpack.c.b16 %v865, %v856
  %v1406 = vpack.c.b16 %v866, %v857
  %v1407 = vpack.c.b16 %v867, %v858
  %v1408 = vpack.c.b16 %v868, %v859
  %v1409 = vpack.c.b16 %v869, %v860
  %v1410 = vpack.c.b16 %v879, %v870
  %v1411 = vpack.c.b16 %v880, %v871
  %v1412 = vpack.c.b16 %v881, %v872
  %v1413 = vpack.c.b16 %v882, %v873
  %v1414 = vpack.c.b16 %v883, %v874
  %v1415 = vpack.c.b16 %v884, %v875
  %v1416 = vpack.c.b16 %v885, %v876
  %v1417 = vpack.c.b16 %v886, %v877
  %v1418 = vpack.c.b16 %v887, %v878
  %v1419 = vpack.c.b16 %v897, %v888
  %v1420 = vpack.c.b16 %v898, %v889
  %v1421 = vpack.c.b16 %v899, %v890
  %v1422 = vpack.c.b16 %v900, %v891
  %v1423 = vpack.c.b16 %v901, %v892
  %v1424 = vpack.c.b16 %v902, %v893
  %v1425 = vpack.c.b16 %v903, %v894
  %v1426 = vpack.c.b16 %v904, %v895
  %v1427 = vpack.c.b16 %v905, %v896
  %v1428 = vpack.c.b16 %v915, %v906
  %v1429 = vpack.c.b16 %v916, %v907
  %v1430 = vpack.c.b16 %v917, %v908
  %v1431 = vpack.c.b16 %v918, %v909
  %v1432 = vpack.c.b16 %v919, %v910
  %v1433 = vpack.c.b16 %v920, %v911
  %v1434 = vpack.c.b16 %v921, %v912
  %v1435 = vpack.c.b16 %v922, %v913
  %v1436 = vpack.c.b16 %v923, %v914
  %v1437 = vpack.c.b16 %v933, %v924
  %v1438 = vpack.c.b16 %v934, %v925
  %v1439 = vpack.c.b16 %v935, %v926
  %v1440 = vpack.c.b16 %v936, %v927
  %v1441 = vpack.c.b16 %v937, %v928
  %v1442 = vpack.c.b16 %v938, %v929
  %v1443 = vpack.c.b16 %v939, %v930
  %v1444 = vpack.c.b16 %v940, %v931
  %v1445 = vpack.c.b16 %v941, %v932
  %v1446 = vpack.c.b16 %v951, %v942
  %v1447 = vpack.c.b16 %v952, %v943
  %v1448 = vpack.c.b16 %v953, %v944
  %v1449 = vpack.c.b16 %v954, %v945
  %v1450 = vpack.c.b16 %v955, %v946
  %v1451 = vpack.c.b16 %v956, %v947
  %v1452 = vpack.c.b16 %v957, %v948
  %v1453 = vpack.c.b16 %v958, %v949
  %v1454 = vpack.c.b16 %v959, %v950
  %v1455 = vpack.c.b16 %v969, %v960
  %v1456 = vpack.c.b16 %v970, %v961
  %v1457 = vpack.c.b16 %v971, %v962
  %v1458 = vpack.c.b16 %v972, %v963
  %v1459 = vpack.c.b16 %v973, %v964
  %v1460 = vpack.c.b16 %v974, %v965
  %v1461 = vpack.c.b16 %v975, %v966
  %v1462 = vpack.c.b16 %v976, %v967
  %v1463 = vpack.c.b16 %v977, %v968
  %v1464 = vpack.c.b16 %v987, %v978
  %v1465 = vpack.c.b16 %v988, %v979
  %v1466 = vpack.c.b16 %v989, %v980
  %v1467 = vpack.c.b16 %v990, %v981
  %v1468 = vpack.c.b16 %v991, %v982
  %v1469 = vpack.c.b16 %v992, %v983
  %v1470 = vpack.c.b16 %v993, %v984
  %v1471 = vpack.c.b16 %v994, %v985
  %v1472 = vpack.c.b16 %v995, %v986
  %v1473 = vpack.c.b16 %v1005, %v996
  %v1474 = vpack.c.b16 %v1006, %v997
  %v1475 = vpack.c.b16 %v1007, %v998
  %v1476 = vpack.c.b16 %v1008, %v999
  %v1477 = vpack.c.b16 %v1009, %v1000
  %v1478 = vpack.c.b16 %v1010, %v1001
  %v1479 = vpack.c.b16 %v1011, %v1002
  %v1480 = vpack.c.b16 %v1012, %v1003
  %v1481 = vpack.c.b16 %v1013, %v1004
  %v1482 = vpack.c.b16 %v1023, %v1014
  %v1483 = vpack.c.b16 %v1024, %v1015
  %v1484 = vpack.c.b16 %v1025, %v1016
  %v1485 = vpack.c.b16 %v1026, %v1017
  %v1486 = vpack.c.b16 %v1027, %v1018
  %v1487 = vpack.c.b16 %v1028, %v1019
  %v1488 = vpack.c.b16 %v1029, %v1020
  %v1489 = vpack.c.b16 %v1030, %v1021
  %v1490 = vpack.c.b16 %v1031, %v1022
  %v1491 = vpack.c.b16 %v1041, %v1032
  %v1492 = vpack.c.b16 %v1042, %v1033
  %v1493 = vpack.c.b16 %v1043, %v1034
  %v1494 = vpack.c.b16 %v1044, %v1035
  %v1495 = vpack.c.b16 %v1045, %v1036
  %v1496 = vpack.c.b16 %v1046, %v1037
  %v1497 = vpack.c.b16 %v1047, %v1038
  %v1498 = vpack.c.b16 %v1048, %v1039
  %v1499 = vpack.c.b16 %v1049, %v1040
  %v1500 = vpack.c.b16 %v1059, %v1050
  %v1501 = vpack.c.b16 %v1060, %v1051
  %v1502 = vpack.c.b16 %v1061, %v1052
  %v1503 = vpack.c.b16 %v1062, %v1053
  %v1504 = vpack.c.b16 %v1063, %v1054
  %v1505 = vpack.c.b16 %v1064, %v1055
  %v1506 = vpack.c.b16 %v1065, %v1056
  %v1507 = vpack.c.b16 %v1066, %v1057
  %v1508 = vpack.c.b16 %v1067, %v1058
  %v1509 = vpack.c.b16 %v1077, %v1068
  %v1510 = vpack.c.b16 %v1078, %v1069
  %v1511 = vpack.c.b16 %v1079, %v1070
  %v1512 = vpack.c.b16 %v1080, %v1071
  %v1513 = vpack.c.b16 %v1081, %v1072
  %v1514 = vpack.c.b16 %v1082, %v1073
  %v1515 = vpack.c.b16 %v1083, %v1074
  %v1516 = vpack.c.b16 %v1084, %v1075
  %v1517 = vpack.c.b16 %v1085, %v1076
  %v1518 = vpack.c.b16 %v1095, %v1086
  %v1519 = vpack.c.b16 %v1096, %v1087
  %v1520 = vpack.c.b16 %v1097, %v1088
  %v1521 = vpack.c.b16 %v1098, %v1089
  %v1522 = vpack.c.b16 %v1099, %v1090
  %v1523 = vpack.c.b16 %v1100, %v1091
  %v1524 = vpack.c.b16 %v1101, %v1092
  %v1525 = vpack.c.b16 %v1102, %v1093
  %v1526 = vpack.c.b16 %v1103, %v1094
  %v1527 = vpack.c.b16 %v1113, %v1104
  %v1528 = vpack.c.b16 %v1114, %v1105
  %v1529 = vpack.c.b16 %v1115, %v1106
  %v1530 = vpack.c.b16 %v1116, %v1107
  %v1531 = vpack.c.b16 %v1117, %v1108
  %v1532 = vpack.c.b16 %v1118, %v1109
  %v1533 = vpack.c.b16 %v1119, %v1110
  %v1534 = vpack.c.b16 %v1120, %v1111
  %v1535 = vpack.c.b16 %v1121, %v1112
  %v1536 = vpack.c.b16 %v1131, %v1122
  %v1537 = vpack.c.b16 %v1132, %v1123
  %v1538 = vpack.c.b16 %v1133, %v1124
  %v1539 = vpack.c.b16 %v1134, %v1125
  %v1540 = vpack.c.b16 %v1135, %v1126
  %v1541 = vpack.c.b16 %v1136, %v1127
  %v1542 = vpack.c.b16 %v1137, %v1128
  %v1543 = vpack.c.b16 %v1138, %v1129
  %v1544 = vpack.c.b16 %v1139, %v1130
  %v1545 = vpack.c.b16 %v1149, %v1140
  %v1546 = vpack.c.b16 %v1150, %v1141
  %v1547 = vpack.c.b16 %v1151, %v1142
  %v1548 = vpack.c.b16 %v1152, %v1143
  %v1549 = vpack.c.b16 %v1153, %v1144
  %v1550 = vpack.c.b16 %v1154, %v1145
  %v1551 = vpack.c.b16 %v1155, %v1146
  %v1552 = vpack.c.b16 %v1156, %v1147
  %v1553 = vpack.c.b16 %v1157, %v1148
  %v1554 = vpack.c.b16 %v1167, %v1158
  %v1555 = vpack.c.b16 %v1168, %v1159
  %v1556 = vpack.c.b16 %v1169, %v1160
  %v1557 = vpack.c.b16 %v1170, %v1161
  %v1558 = vpack.c.b16 %v1171, %v1162
  %v1559 = vpack.c.b16 %v1172, %v1163
  %v1560 = vpack.c.b16 %v1173, %v1164
  %v1561 = vpack.c.b16 %v1174, %v1165
  %v1562 = vpack.c.b16 %v1175, %v1166
  %v1563 = vpack.c.b16 %v1185, %v1176
  %v1564 = vpack.c.b16 %v1186, %v1177
  %v1565 = vpack.c.b16 %v1187, %v1178
  %v1566 = vpack.c.b16 %v1188, %v1179
  %v1567 = vpack.c.b16 %v1189, %v1180
  %v1568 = vpack.c.b16 %v1190, %v1181
  %v1569 = vpack.c.b16 %v1191, %v1182
  %v1570 = vpack.c.b16 %v1192, %v1183
  %v1571 = vpack.c.b16 %v1193, %v1184
  %v1572 = vpack.c.b16 %v1203, %v1194
  %v1573 = vpack.c.b16 %v1204, %v1195
  %v1574 = vpack.c.b16 %v1205, %v1196
  %v1575 = vpack.c.b16 %v1206, %v1197
  %v1576 = vpack.c.b16 %v1207, %v1198
  %v1577 = vpack.c.b16 %v1208, %v1199
  %v1578 = vpack.c.b16 %v1209, %v1200
  %v1579 = vpack.c.b16 %v1210, %v1201
  %v1580 = vpack.c.b16 %v1211, %v1202
  %v1581 = vpack.c.b16 %v1221, %v1212
  %v1582 = vpack.c.b16 %v1222, %v1213
  %v1583 = vpack.c.b16 %v1223, %v1214
  %v1584 = vpack.c.b16 %v1224, %v1215
  %v1585 = vpack.c.b16 %v1225, %v1216
  %v1586 = vpack.c.b16 %v1226, %v1217
  %v1587 = vpack.c.b16 %v1227, %v1218
  %v1588 = vpack.c.b16 %v1228, %v1219
  %v1589 = vpack.c.b16 %v1229, %v1220
  %v1590 = vpack.c.b16 %v1239, %v1230
  %v1591 = vpack.c.b16 %v1240, %v1231
  %v1592 = vpack.c.b16 %v1241, %v1232
  %v1593 = vpack.c.b16 %v1242, %v1233
  %v1594 = vpack.c.b16 %v1243, %v1234
  %v1595 = vpack.c.b16 %v1244, %v1235
  %v1596 = vpack.c.b16 %v1245, %v1236
  %v1597 = vpack.c.b16 %v1246, %v1237
  %v1598 = vpack.c.b16 %v1247, %v1238
  %v1599 = vpack.c.b16 %v1257, %v1248
  %v1600 = vpack.c.b16 %v1258, %v1249
  %v1601 = vpack.c.b16 %v1259, %v1250
  %v1602 = vpack.c.b16 %v1260, %v1251
  %v1603 = vpack.c.b16 %v1261, %v1252
  %v1604 = vpack.c.b16 %v1262, %v1253
  %v1605 = vpack.c.b16 %v1263, %v1254
  %v1606 = vpack.c.b16 %v1264, %v1255
  %v1607 = vpack.c.b16 %v1265, %v1256
  %v1608 = vpack.c.b16 %v1275, %v1266
  %v1609 = vpack.c.b16 %v1276, %v1267
  %v1610 = vpack.c.b16 %v1277, %v1268
  %v1611 = vpack.c.b16 %v1278, %v1269
  %v1612 = vpack.c.b16 %v1279, %v1270
  %v1613 = vpack.c.b16 %v1280, %v1271
  %v1614 = vpack.c.b16 %v1281, %v1272
  %v1615 = vpack.c.b16 %v1282, %v1273
  %v1616 = vpack.c.b16 %v1283, %v1274
  %v1617 = vpack.c.b16 %v1293, %v1284
  %v1618 = vpack.c.b16 %v1294, %v1285
  %v1619 = vpack.c.b16 %v1295, %v1286
  %v1620 = vpack.c.b16 %v1296, %v1287
  %v1621 = vpack.c.b16 %v1297, %v1288
  %v1622 = vpack.c.b16 %v1298, %v1289
  %v1623 = vpack.c.b16 %v1299, %v1290
  %v1624 = vpack.c.b16 %v1300, %v1291
  %v1625 = vpack.c.b16 %v1301, %v1292
  %v1626 = vpack.c.b16 %v1311, %v1302
  %v1627 = vpack.c.b16 %v1312, %v1303
  %v1628 = vpack.c.b16 %v1313, %v1304
  %v1629 = vpack.c.b16 %v1314, %v1305
  %v1630 = vpack.c.b16 %v1315, %v1306
  %v1631 = vpack.c.b16 %v1316, %v1307
  %v1632 = vpack.c.b16 %v1317, %v1308
  %v1633 = vpack.c.b16 %v1318, %v1309
  %v1634 = vpack.c.b16 %v1319, %v1310
  %v1635 = vpack.c.b16 %v1329, %v1320
  %v1636 = vpack.c.b16 %v1330, %v1321
  %v1637 = vpack.c.b16 %v1331, %v1322
  %v1638 = vpack.c.b16 %v1332, %v1323
  %v1639 = vpack.c.b16 %v1333, %v1324
  %v1640 = vpack.c.b16 %v1334, %v1325
  %v1641 = vpack.c.b16 %v1335, %v1326
  %v1642 = vpack.c.b16 %v1336, %v1327
  %v1643 = vpack.c.b16 %v1337, %v1328
  %v1644 = vpack.c.b16 %v1347, %v1338
  %v1645 = vpack.c.b16 %v1348, %v1339
  %v1646 = vpack.c.b16 %v1349, %v1340
  %v1647 = vpack.c.b16 %v1350, %v1341
  %v1648 = vpack.c.b16 %v1351, %v1342
  %v1649 = vpack.c.b16 %v1352, %v1343
  %v1650 = vpack.c.b16 %v1353, %v1344
  %v1651 = vpack.c.b16 %v1354, %v1345
  %v1652 = vpack.c.b16 %v1355, %v1346
  %v1653 = vpack.c.b16 %v1365, %v1356
  %v1654 = vpack.c.b16 %v1366, %v1357
  %v1655 = vpack.c.b16 %v1367, %v1358
  %v1656 = vpack.c.b16 %v1368, %v1359
  %v1657 = vpack.c.b16 %v1369, %v1360
  %v1658 = vpack.c.b16 %v1370, %v1361
  %v1659 = vpack.c.b16 %v1371, %v1362
  %v1660 = vpack.c.b16 %v1372, %v1363
  %v1661 = vpack.c.b16 %v1373, %v1364
  %v2094 = vunpack.c.l.b16 %v334
  %v2095 = vunpack.c.l.b16 %v335
  %v2096 = vunpack.c.l.b16 %v336
  %v2097 = vunpack.c.l.b16 %v337
  %v2098 = vunpack.c.l.b16 %v338
  %v2099 = vunpack.c.l.b16 %v339
  %v2100 = vunpack.c.l.b16 %v340
  %v2101 = vunpack.c.l.b16 %v341
  %v2102 = vunpack.c.l.b16 %v342
  %v2103 = vunpack.c.l.b16 %v343
  %v2104 = vunpack.c.l.b16 %v344
  %v2105 = vunpack.c.l.b16 %v345
  %v2106 = vunpack.c.l.b16 %v346
  %v2107 = vunpack.c.l.b16 %v347
  %v2108 = vunpack.c.l.b16 %v348
  %v2109 = vunpack.c.l.b16 %v349
  %v2110 = vunpack.c.l.b16 %v350
  %v2111 = vunpack.c.l.b16 %v351
  %v2112 = vunpack.c.l.b16 %v352
  %v2113 = vunpack.c.l.b16 %v353
  %v2114 = vunpack.c.l.b16 %v354
  %v2115 = vunpack.c.l.b16 %v355
  %v2116 = vunpack.c.l.b16 %v356
  %v2117 = vunpack.c.l.b16 %v357
  %v2118 = vunpack.c.l.b16 %v358
  %v2119 = vunpack.c.l.b16 %v359
  %v2120 = vunpack.c.l.b16 %v360
  %v2121 = vunpack.c.l.b16 %v361
  %v2122 = vunpack.c.l.b16 %v362
  %v2123 = vunpack.c.l.b16 %v363
  %v2124 = vunpack.c.l.b16 %v364
  %v2125 = vunpack.c.l.b16 %v365
  %v2126 = vunpack.c.l.b16 %v366
  %v2127 = vunpack.c.l.b16 %v367
  %v2128 = vunpack.c.l.b16 %v368
  %v2129 = vunpack.c.l.b16 %v369
  %v2130 = vunpack.c.l.b16 %v370
  %v2131 = vunpack.c.l.b16 %v371
  %v2132 = vunpack.c.l.b16 %v372
  %v2133 = vunpack.c.l.b16 %v373
  %v2134 = vunpack.c.l.b16 %v374
  %v2135 = vunpack.c.l.b16 %v375
  %v2136 = vunpack.c.l.b16 %v376
  %v2137 = vunpack.c.l.b16 %v377
  %v2138 = vunpack.c.l.b16 %v378
  %v2139 = vunpack.c.l.b16 %v379
  %v2140 = vunpack.c.l.b16 %v380
  %v2141 = vunpack.c.l.b16 %v381
  %v2142 = vunpack.c.l.b16 %v382
  %v2143 = vunpack.c.l.b16 %v383
  %v2144 = vunpack.c.l.b16 %v384
  %v2145 = vunpack.c.l.b16 %v385
  %v2146 = vunpack.c.l.b16 %v386
  %v2147 = vunpack.c.l.b16 %v387
  %v2148 = vunpack.c.l.b16 %v388
  %v2149 = vunpack.c.l.b16 %v389
  %v2150 = vunpack.c.l.b16 %v390
  %v2151 = vunpack.c.l.b16 %v391
  %v2152 = vunpack.c.l.b16 %v392
  %v2153 = vunpack.c.l.b16 %v393
  %v2154 = vunpack.c.l.b16 %v394
  %v2155 = vunpack.c.l.b16 %v395
  %v2156 = vunpack.c.l.b16 %v396
  %v2157 = vunpack.c.l.b16 %v397
  %v2158 = vunpack.c.l.b16 %v398
  %v2159 = vunpack.c.l.b16 %v399
  %v2160 = vunpack.c.l.b16 %v400
  %v2161 = vunpack.c.l.b16 %v401
  %v2162 = vunpack.c.l.b16 %v402
  %v2163 = vunpack.c.l.b16 %v403
  %v2164 = vunpack.c.l.b16 %v404
  %v2165 = vunpack.c.l.b16 %v405
  %v2166 = vunpack.c.l.b16 %v406
  %v2167 = vunpack.c.l.b16 %v407
  %v2168 = vunpack.c.l.b16 %v408
  %v2169 = vunpack.c.l.b16 %v409
  %v2170 = vunpack.c.l.b16 %v410
  %v2171 = vunpack.c.l.b16 %v411
  %v2172 = vunpack.c.l.b16 %v412
  %v2173 = vunpack.c.l.b16 %v413
  %v2174 = vunpack.c.l.b16 %v414
  %v2175 = vunpack.c.l.b16 %v415
  %v2176 = vunpack.c.l.b16 %v416
  %v2177 = vunpack.c.l.b16 %v417
  %v2178 = vunpack.c.l.b16 %v418
  %v2179 = vunpack.c.l.b16 %v419
  %v2180 = vunpack.c.l.b16 %v420
  %v2181 = vunpack.c.l.b16 %v421
  %v2182 = vunpack.c.l.b16 %v422
  %v2183 = vunpack.c.l.b16 %v423
  %v2184 = vunpack.c.l.b16 %v424
  %v2185 = vunpack.c.l.b16 %v425
  %v2186 = vunpack.c.l.b16 %v426
  %v2187 = vunpack.c.l.b16 %v427
  %v2188 = vunpack.c.l.b16 %v428
  %v2189 = vunpack.c.l.b16 %v429
  %v2190 = vunpack.c.l.b16 %v430
  %v2191 = vunpack.c.l.b16 %v431
  %v2192 = vunpack.c.l.b16 %v432
  %v2193 = vunpack.c.l.b16 %v433
  %v2194 = vunpack.c.l.b16 %v434
  %v2195 = vunpack.c.l.b16 %v435
  %v2196 = vunpack.c.l.b16 %v436
  %v2197 = vunpack.c.l.b16 %v437
  %v2198 = vunpack.c.l.b16 %v438
  %v2199 = vunpack.c.l.b16 %v439
  %v2200 = vunpack.c.l.b16 %v440
  %v2201 = vunpack.c.l.b16 %v441
  %v2202 = vunpack.c.l.b16 %v442
  %v2203 = vunpack.c.l.b16 %v443
  %v2204 = vunpack.c.l.b16 %v444
  %v2205 = vunpack.c.l.b16 %v445
  %v2206 = vunpack.c.l.b16 %v446
  %v2207 = vunpack.c.l.b16 %v447
  %v2208 = vunpack.c.l.b16 %v448
  %v2209 = vunpack.c.l.b16 %v449
  %v2210 = vunpack.c.l.b16 %v450
  %v2211 = vunpack.c.l.b16 %v451
  %v2212 = vunpack.c.l.b16 %v452
  %v2213 = vunpack.c.l.b16 %v453
  %v2214 = vunpack.c.l.b16 %v454
  %v2215 = vunpack.c.l.b16 %v455
  %v2216 = vunpack.c.l.b16 %v456
  %v2217 = vunpack.c.l.b16 %v457
  %v2218 = vunpack.c.l.b16 %v458
  %v2219 = vunpack.c.l.b16 %v459
  %v2220 = vunpack.c.l.b16 %v460
  %v2221 = vunpack.c.l.b16 %v461
  %v2222 = vunpack.c.l.b16 %v462
  %v2223 = vunpack.c.l.b16 %v463
  %v2224 = vunpack.c.l.b16 %v464
  %v2225 = vunpack.c.l.b16 %v465
  %v2226 = vunpack.c.l.b16 %v466
  %v2227 = vunpack.c.l.b16 %v467
  %v2228 = vunpack.c.l.b16 %v468
  %v2229 = vunpack.c.l.b16 %v469
  %v2230 = vunpack.c.l.b16 %v470
  %v2231 = vunpack.c.l.b16 %v471
  %v2232 = vunpack.c.l.b16 %v472
  %v2233 = vunpack.c.l.b16 %v473
  %v2234 = vunpack.c.l.b16 %v474
  %v2235 = vunpack.c.l.b16 %v475
  %v2236 = vunpack.c.l.b16 %v476
  %v2237 = vunpack.c.l.b16 %v477
  %v2238 = vpack.c.b16 %v2095, %v2094
  %v2239 = vpack.c.b16 %v2097, %v2096
  %v2240 = vpack.c.b16 %v2099, %v2098
  %v2241 = vpack.c.b16 %v2101, %v2100
  %v2242 = vpack.c.b16 %v2103, %v2102
  %v2243 = vpack.c.b16 %v2105, %v2104
  %v2244 = vpack.c.b16 %v2107, %v2106
  %v2245 = vpack.c.b16 %v2109, %v2108
  %v2246 = vpack.c.b16 %v2111, %v2110
  %v2247 = vpack.c.b16 %v2113, %v2112
  %v2248 = vpack.c.b16 %v2115, %v2114
  %v2249 = vpack.c.b16 %v2117, %v2116
  %v2250 = vpack.c.b16 %v2119, %v2118
  %v2251 = vpack.c.b16 %v2121, %v2120
  %v2252 = vpack.c.b16 %v2123, %v2122
  %v2253 = vpack.c.b16 %v2125, %v2124
  %v2254 = vpack.c.b16 %v2127, %v2126
  %v2255 = vpack.c.b16 %v2129, %v2128
  %v2256 = vpack.c.b16 %v2131, %v2130
  %v2257 = vpack.c.b16 %v2133, %v2132
  %v2258 = vpack.c.b16 %v2135, %v2134
  %v2259 = vpack.c.b16 %v2137, %v2136
  %v2260 = vpack.c.b16 %v2139, %v2138
  %v2261 = vpack.c.b16 %v2141, %v2140
  %v2262 = vpack.c.b16 %v2143, %v2142
  %v2263 = vpack.c.b16 %v2145, %v2144
  %v2264 = vpack.c.b16 %v2147, %v2146
  %v2265 = vpack.c.b16 %v2149, %v2148
  %v2266 = vpack.c.b16 %v2151, %v2150
  %v2267 = vpack.c.b16 %v2153, %v2152
  %v2268 = vpack.c.b16 %v2155, %v2154
  %v2269 = vpack.c.b16 %v2157, %v2156
  %v2270 = vpack.c.b16 %v2159, %v2158
  %v2271 = vpack.c.b16 %v2161, %v2160
  %v2272 = vpack.c.b16 %v2163, %v2162
  %v2273 = vpack.c.b16 %v2165, %v2164
  %v2274 = vpack.c.b16 %v2167, %v2166
  %v2275 = vpack.c.b16 %v2169, %v2168
  %v2276 = vpack.c.b16 %v2171, %v2170
  %v2277 = vpack.c.b16 %v2173, %v2172
  %v2278 = vpack.c.b16 %v2175, %v2174
  %v2279 = vpack.c.b16 %v2177, %v2176
  %v2280 = vpack.c.b16 %v2179, %v2178
  %v2281 = vpack.c.b16 %v2181, %v2180
  %v2282 = vpack.c.b16 %v2183, %v2182
  %v2283 = vpack.c.b16 %v2185, %v2184
  %v2284 = vpack.c.b16 %v2187, %v2186
  %v2285 = vpack.c.b16 %v2189, %v2188
  %v2286 = vpack.c.b16 %v2191, %v2190
  %v2287 = vpack.c.b16 %v2193, %v2192
  %v2288 = vpack.c.b16 %v2195, %v2194
  %v2289 = vpack.c.b16 %v2197, %v2196
  %v2290 = vpack.c.b16 %v2199, %v2198
  %v2291 = vpack.c.b16 %v2201, %v2200
  %v2292 = vpack.c.b16 %v2203, %v2202
  %v2293 = vpack.c.b16 %v2205, %v2204
  %v2294 = vpack.c.b16 %v2207, %v2206
  %v2295 = vpack.c.b16 %v2209, %v2208
  %v2296 = vpack.c.b16 %v2211, %v2210
  %v2297 = vpack.c.b16 %v2213, %v2212
  %v2298 = vpack.c.b16 %v2215, %v2214
  %v2299 = vpack.c.b16 %v2217, %v2216
  %v2300 = vpack.c.b16 %v2219, %v2218
  %v2301 = vpack.c.b16 %v2221, %v2220
  %v2302 = vpack.c.b16 %v2223, %v2222
  %v2303 = vpack.c.b16 %v2225, %v2224
  %v2304 = vpack.c.b16 %v2227, %v2226
  %v2305 = vpack.c.b16 %v2229, %v2228
  %v2306 = vpack.c.b16 %v2231, %v2230
  %v2307 = vpack.c.b16 %v2233, %v2232
  %v2308 = vpack.c.b16 %v2235, %v2234
  %v2309 = vpack.c.b16 %v2237, %v2236
  %2382 = vmatprep.subr.bf16.mxu0 0
  %2383 = vmatpush1.bf16.msra.mxu0 %v2238
  %2384 = vmatprep.subr.bf16.mxu0 0
  %2385 = vmatpush1.bf16.msra.mxu0 %v2239
  %2386 = vmatprep.subr.bf16.mxu0 0
  %2387 = vmatpush1.bf16.msra.mxu0 %v2240
  %2388 = vmatprep.subr.bf16.mxu0 0
  %2389 = vmatpush1.bf16.msra.mxu0 %v2241
  %2390 = vmatprep.subr.bf16.mxu0 0
  %2391 = vmatpush1.bf16.msra.mxu0 %v2242
  %2392 = vmatprep.subr.bf16.mxu0 0
  %2393 = vmatpush1.bf16.msra.mxu0 %v2243
  %2394 = vmatprep.subr.bf16.mxu0 0
  %2395 = vmatpush1.bf16.msra.mxu0 %v2244
  %2396 = vmatprep.subr.bf16.mxu0 0
  %2397 = vmatpush1.bf16.msra.mxu0 %v2245
  %2398 = vmatprep.subr.bf16.mxu0 0
  %2399 = vmatpush1.bf16.msra.mxu0 %v2246
  %2400 = vmatprep.subr.bf16.mxu0 0
  %2401 = vmatpush1.bf16.msra.mxu0 %v2247
  %2402 = vmatprep.subr.bf16.mxu0 0
  %2403 = vmatpush1.bf16.msra.mxu0 %v2248
  %2404 = vmatprep.subr.bf16.mxu0 0
  %2405 = vmatpush1.bf16.msra.mxu0 %v2249
  %2406 = vmatprep.subr.bf16.mxu0 0
  %2407 = vmatpush1.bf16.msra.mxu0 %v2250
  %2408 = vmatprep.subr.bf16.mxu0 0
  %2409 = vmatpush1.bf16.msra.mxu0 %v2251
  %2410 = vmatprep.subr.bf16.mxu0 0
  %2411 = vmatpush1.bf16.msra.mxu0 %v2252
  %2412 = vmatprep.subr.bf16.mxu0 0
  %2413 = vmatpush1.bf16.msra.mxu0 %v2253
  %2414 = vmatprep.mubr.bf16.mxu0 %v1375
  %2415 = vmatmul.mubr.bf16.gmra.mrb[0].mxu0 %v1374
  %v2416 = vpop.f32.mrb[0].mxu0
  %v2417 = vadd.f32 0.0, %v2416
  %v2418 = vpop.f32.mrb[0].mxu0
  %v2419 = vpop.f32.mrb[0].mxu0
  %v2420 = vadd.f32 0.0, %v2419
  %v2421 = vpop.f32.mrb[0].mxu0
  %2422 = vmatprep.mubr.bf16.mxu0 %v1384
  %2423 = vmatmul.mubr.bf16.gmra.mrb[0].mxu0 %v1383
  %v2424 = vpop.f32.mrb[0].mxu0
  %v2425 = vadd.f32 0.0, %v2424
  %v2426 = vpop.f32.mrb[0].mxu0
  %v2427 = vpop.f32.mrb[0].mxu0
  %v2428 = vadd.f32 0.0, %v2427
  %v2429 = vpop.f32.mrb[0].mxu0
  %2430 = vmatprep.mubr.bf16.mxu0 %v1393
  %2431 = vmatmul.mubr.bf16.gmra.mrb[0].mxu0 %v1392
  %v2432 = vpop.f32.mrb[0].mxu0
  %v2433 = vadd.f32 0.0, %v2432
  %v2434 = vpop.f32.mrb[0].mxu0
  %v2435 = vpop.f32.mrb[0].mxu0
  %v2436 = vadd.f32 0.0, %v2435
  %v2437 = vpop.f32.mrb[0].mxu0
  %2438 = vmatprep.mubr.bf16.mxu0 %v1402
  %2439 = vmatmul.mubr.bf16.gmra.mrb[0].mxu0 %v1401
  %v2440 = vpop.f32.mrb[0].mxu0
  %v2441 = vadd.f32 0.0, %v2440
  %v2442 = vpop.f32.mrb[0].mxu0
  %v2443 = vpop.f32.mrb[0].mxu0
  %v2444 = vadd.f32 0.0, %v2443
  %v2445 = vpop.f32.mrb[0].mxu0
  %2446 = vmatprep.mubr.bf16.mxu0 %v1411
  %2447 = vmatmul.mubr.bf16.gmra.mrb[0].mxu0 %v1410
  %v2448 = vpop.f32.mrb[0].mxu0
  %v2449 = vadd.f32 0.0, %v2448
  %v2450 = vpop.f32.mrb[0].mxu0
  %v2451 = vpop.f32.mrb[0].mxu0
  %v2452 = vadd.f32 0.0, %v2451
  %v2453 = vpop.f32.mrb[0].mxu0
  %2454 = vmatprep.mubr.bf16.mxu0 %v1420
  %2455 = vmatmul.mubr.bf16.gmra.mrb[0].mxu0 %v1419
  %v2456 = vpop.f32.mrb[0].mxu0
  %v2457 = vadd.f32 0.0, %v2456
  %v2458 = vpop.f32.mrb[0].mxu0
  %v2459 = vpop.f32.mrb[0].mxu0
  %v2460 = vadd.f32 0.0, %v2459
  %v2461 = vpop.f32.mrb[0].mxu0
  %2462 = vmatprep.mubr.bf16.mxu0 %v1429
  %2463 = vmatmul.mubr.bf16.gmra.mrb[0].mxu0 %v1428
  %v2464 = vpop.f32.mrb[0].mxu0
  %v2465 = vadd.f32 0.0, %v2464
  %v2466 = vpop.f32.mrb[0].mxu0
  %v2467 = vpop.f32.mrb[0].mxu0
  %v2468 = vadd.f32 0.0, %v2467
  %v2469 = vpop.f32.mrb[0].mxu0
  %2470 = vmatprep.mubr.bf16.mxu0 %v1438
  %2471 = vmatmul.mubr.bf16.gmra.mrb[0].mxu0 %v1437
  %v2472 = vpop.f32.mrb[0].mxu0
  %v2473 = vadd.f32 0.0, %v2472
  %v2474 = vpop.f32.mrb[0].mxu0
  %v2475 = vpop.f32.mrb[0].mxu0
  %v2476 = vadd.f32 0.0, %v2475
  %v2477 = vpop.f32.mrb[0].mxu0
  %2478 = vmatprep.mubr.bf16.mxu0 %v1447
  %2479 = vmatmul.mubr.bf16.gmra.mrb[0].mxu0 %v1446
  %v2480 = vpop.f32.mrb[0].mxu0
  %v2481 = vadd.f32 0.0, %v2480
  %v2482 = vpop.f32.mrb[0].mxu0
  %v2483 = vpop.f32.mrb[0].mxu0
  %v2484 = vadd.f32 0.0, %v2483
  %v2485 = vpop.f32.mrb[0].mxu0
  %2486 = vmatprep.mubr.bf16.mxu0 %v1456
  %2487 = vmatmul.mubr.bf16.gmra.mrb[0].mxu0 %v1455
  %v2488 = vpop.f32.mrb[0].mxu0
  %v2489 = vadd.f32 0.0, %v2488
  %v2490 = vpop.f32.mrb[0].mxu0
  %v2491 = vpop.f32.mrb[0].mxu0
  %v2492 = vadd.f32 0.0, %v2491
  %v2493 = vpop.f32.mrb[0].mxu0
  %2494 = vmatprep.mubr.bf16.mxu0 %v1465
  %2495 = vmatmul.mubr.bf16.gmra.mrb[0].mxu0 %v1464
  %v2496 = vpop.f32.mrb[0].mxu0
  %v2497 = vadd.f32 0.0, %v2496
  %v2498 = vpop.f32.mrb[0].mxu0
  %v2499 = vpop.f32.mrb[0].mxu0
  %v2500 = vadd.f32 0.0, %v2499
  %v2501 = vpop.f32.mrb[0].mxu0
  %2502 = vmatprep.mubr.bf16.mxu0 %v1474
  %2503 = vmatmul.mubr.bf16.gmra.mrb[0].mxu0 %v1473
  %v2504 = vpop.f32.mrb[0].mxu0
  %v2505 = vadd.f32 0.0, %v2504
  %v2506 = vpop.f32.mrb[0].mxu0
  %v2507 = vpop.f32.mrb[0].mxu0
  %v2508 = vadd.f32 0.0, %v2507
  %v2509 = vpop.f32.mrb[0].mxu0
  %2510 = vmatprep.mubr.bf16.mxu0 %v1483
  %2511 = vmatmul.mubr.bf16.gmra.mrb[0].mxu0 %v1482
  %v2512 = vpop.f32.mrb[0].mxu0
  %v2513 = vadd.f32 0.0, %v2512
  %v2514 = vpop.f32.mrb[0].mxu0
  %v2515 = vpop.f32.mrb[0].mxu0
  %v2516 = vadd.f32 0.0, %v2515
  %v2517 = vpop.f32.mrb[0].mxu0
  %2518 = vmatprep.mubr.bf16.mxu0 %v1492
  %2519 = vmatmul.mubr.bf16.gmra.mrb[0].mxu0 %v1491
  %v2520 = vpop.f32.mrb[0].mxu0
  %v2521 = vadd.f32 0.0, %v2520
  %v2522 = vpop.f32.mrb[0].mxu0
  %v2523 = vpop.f32.mrb[0].mxu0
  %v2524 = vadd.f32 0.0, %v2523
  %v2525 = vpop.f32.mrb[0].mxu0
  %2526 = vmatprep.mubr.bf16.mxu0 %v1501
  %2527 = vmatmul.mubr.bf16.gmra.mrb[0].mxu0 %v1500
  %v2528 = vpop.f32.mrb[0].mxu0
  %v2529 = vadd.f32 0.0, %v2528
  %v2530 = vpop.f32.mrb[0].mxu0
  %v2531 = vpop.f32.mrb[0].mxu0
  %v2532 = vadd.f32 0.0, %v2531
  %v2533 = vpop.f32.mrb[0].mxu0
  %2534 = vmatprep.mubr.bf16.mxu0 %v1510
  %2535 = vmatmul.mubr.bf16.gmra.mrb[0].mxu0 %v1509
  %v2536 = vpop.f32.mrb[0].mxu0
  %v2537 = vadd.f32 0.0, %v2536
  %v2538 = vpop.f32.mrb[0].mxu0
  %v2539 = vpop.f32.mrb[0].mxu0
  %v2540 = vadd.f32 0.0, %v2539
  %v2541 = vpop.f32.mrb[0].mxu0
  %2542 = vmatprep.mubr.bf16.mxu0 %v1519
  %2543 = vmatmul.mubr.bf16.gmra.mrb[0].mxu0 %v1518
  %v2544 = vpop.f32.mrb[0].mxu0
  %v2545 = vadd.f32 0.0, %v2544
  %v2546 = vpop.f32.mrb[0].mxu0
  %v2547 = vpop.f32.mrb[0].mxu0
  %v2548 = vadd.f32 0.0, %v2547
  %v2549 = vpop.f32.mrb[0].mxu0
  %2550 = vmatprep.mubr.bf16.mxu0 %v1528
  %2551 = vmatmul.mubr.bf16.gmra.mrb[0].mxu0 %v1527
  %v2552 = vpop.f32.mrb[0].mxu0
  %v2553 = vadd.f32 0.0, %v2552
  %v2554 = vpop.f32.mrb[0].mxu0
  %v2555 = vpop.f32.mrb[0].mxu0
  %v2556 = vadd.f32 0.0, %v2555
  %v2557 = vpop.f32.mrb[0].mxu0
  %2558 = vmatprep.mubr.bf16.mxu0 %v1537
  %2559 = vmatmul.mubr.bf16.gmra.mrb[0].mxu0 %v1536
  %v2560 = vpop.f32.mrb[0].mxu0
  %v2561 = vadd.f32 0.0, %v2560
  %v2562 = vpop.f32.mrb[0].mxu0
  %v2563 = vpop.f32.mrb[0].mxu0
  %v2564 = vadd.f32 0.0, %v2563
  %v2565 = vpop.f32.mrb[0].mxu0
  %2566 = vmatprep.mubr.bf16.mxu0 %v1546
  %2567 = vmatmul.mubr.bf16.gmra.mrb[0].mxu0 %v1545
  %v2568 = vpop.f32.mrb[0].mxu0
  %v2569 = vadd.f32 0.0, %v2568
  %v2570 = vpop.f32.mrb[0].mxu0
  %v2571 = vpop.f32.mrb[0].mxu0
  %v2572 = vadd.f32 0.0, %v2571
  %v2573 = vpop.f32.mrb[0].mxu0
  %2574 = vmatprep.mubr.bf16.mxu0 %v1555
  %2575 = vmatmul.mubr.bf16.gmra.mrb[0].mxu0 %v1554
  %v2576 = vpop.f32.mrb[0].mxu0
  %v2577 = vadd.f32 0.0, %v2576
  %v2578 = vpop.f32.mrb[0].mxu0
  %v2579 = vpop.f32.mrb[0].mxu0
  %v2580 = vadd.f32 0.0, %v2579
  %v2581 = vpop.f32.mrb[0].mxu0
  %2582 = vmatprep.mubr.bf16.mxu0 %v1564
  %2583 = vmatmul.mubr.bf16.gmra.mrb[0].mxu0 %v1563
  %v2584 = vpop.f32.mrb[0].mxu0
  %v2585 = vadd.f32 0.0, %v2584
  %v2586 = vpop.f32.mrb[0].mxu0
  %v2587 = vpop.f32.mrb[0].mxu0
  %v2588 = vadd.f32 0.0, %v2587
  %v2589 = vpop.f32.mrb[0].mxu0
  %2590 = vmatprep.mubr.bf16.mxu0 %v1573
  %2591 = vmatmul.mubr.bf16.gmra.mrb[0].mxu0 %v1572
  %v2592 = vpop.f32.mrb[0].mxu0
  %v2593 = vadd.f32 0.0, %v2592
  %v2594 = vpop.f32.mrb[0].mxu0
  %v2595 = vpop.f32.mrb[0].mxu0
  %v2596 = vadd.f32 0.0, %v2595
  %v2597 = vpop.f32.mrb[0].mxu0
  %2598 = vmatprep.mubr.bf16.mxu0 %v1582
  %2599 = vmatmul.mubr.bf16.gmra.mrb[0].mxu0 %v1581
  %v2600 = vpop.f32.mrb[0].mxu0
  %v2601 = vadd.f32 0.0, %v2600
  %v2602 = vpop.f32.mrb[0].mxu0
  %v2603 = vpop.f32.mrb[0].mxu0
  %v2604 = vadd.f32 0.0, %v2603
  %v2605 = vpop.f32.mrb[0].mxu0
  %2606 = vmatprep.mubr.bf16.mxu0 %v1591
  %2607 = vmatmul.mubr.bf16.gmra.mrb[0].mxu0 %v1590
  %v2608 = vpop.f32.mrb[0].mxu0
  %v2609 = vadd.f32 0.0, %v2608
  %v2610 = vpop.f32.mrb[0].mxu0
  %v2611 = vpop.f32.mrb[0].mxu0
  %v2612 = vadd.f32 0.0, %v2611
  %v2613 = vpop.f32.mrb[0].mxu0
  %2614 = vmatprep.mubr.bf16.mxu0 %v1600
  %2615 = vmatmul.mubr.bf16.gmra.mrb[0].mxu0 %v1599
  %v2616 = vpop.f32.mrb[0].mxu0
  %v2617 = vadd.f32 0.0, %v2616
  %v2618 = vpop.f32.mrb[0].mxu0
  %v2619 = vpop.f32.mrb[0].mxu0
  %v2620 = vadd.f32 0.0, %v2619
  %v2621 = vpop.f32.mrb[0].mxu0
  %2622 = vmatprep.mubr.bf16.mxu0 %v1609
  %2623 = vmatmul.mubr.bf16.gmra.mrb[0].mxu0 %v1608
  %v2624 = vpop.f32.mrb[0].mxu0
  %v2625 = vadd.f32 0.0, %v2624
  %v2626 = vpop.f32.mrb[0].mxu0
  %v2627 = vpop.f32.mrb[0].mxu0
  %v2628 = vadd.f32 0.0, %v2627
  %v2629 = vpop.f32.mrb[0].mxu0
  %2630 = vmatprep.mubr.bf16.mxu0 %v1618
  %2631 = vmatmul.mubr.bf16.gmra.mrb[0].mxu0 %v1617
  %v2632 = vpop.f32.mrb[0].mxu0
  %v2633 = vadd.f32 0.0, %v2632
  %v2634 = vpop.f32.mrb[0].mxu0
  %v2635 = vpop.f32.mrb[0].mxu0
  %v2636 = vadd.f32 0.0, %v2635
  %v2637 = vpop.f32.mrb[0].mxu0
  %2638 = vmatprep.mubr.bf16.mxu0 %v1627
  %2639 = vmatmul.mubr.bf16.gmra.mrb[0].mxu0 %v1626
  %v2640 = vpop.f32.mrb[0].mxu0
  %v2641 = vadd.f32 0.0, %v2640
  %v2642 = vpop.f32.mrb[0].mxu0
  %v2643 = vpop.f32.mrb[0].mxu0
  %v2644 = vadd.f32 0.0, %v2643
  %v2645 = vpop.f32.mrb[0].mxu0
  %2646 = vmatprep.mubr.bf16.mxu0 %v1636
  %2647 = vmatmul.mubr.bf16.gmra.mrb[0].mxu0 %v1635
  %v2648 = vpop.f32.mrb[0].mxu0
  %v2649 = vadd.f32 0.0, %v2648
  %v2650 = vpop.f32.mrb[0].mxu0
  %v2651 = vpop.f32.mrb[0].mxu0
  %v2652 = vadd.f32 0.0, %v2651
  %v2653 = vpop.f32.mrb[0].mxu0
  %2654 = vmatprep.mubr.bf16.mxu0 %v1645
  %2655 = vmatmul.mubr.bf16.gmra.mrb[0].mxu0 %v1644
  %v2656 = vpop.f32.mrb[0].mxu0
  %v2657 = vadd.f32 0.0, %v2656
  %v2658 = vpop.f32.mrb[0].mxu0
  %v2659 = vpop.f32.mrb[0].mxu0
  %v2660 = vadd.f32 0.0, %v2659
  %v2661 = vpop.f32.mrb[0].mxu0
  %2662 = vmatprep.mubr.bf16.mxu0 %v1654
  %2663 = vmatmul.mubr.bf16.gmra.mrb[0].mxu0 %v1653
  %v2664 = vpop.f32.mrb[0].mxu0
  %v2665 = vadd.f32 0.0, %v2664
  %v2666 = vpop.f32.mrb[0].mxu0
  %v2667 = vpop.f32.mrb[0].mxu0
  %v2668 = vadd.f32 0.0, %v2667
  %v2669 = vpop.f32.mrb[0].mxu0
  %2670 = vdwg.mxu0
  %2671 = vmatprep.subr.bf16.mxu0 0
  %2672 = vmatpush1.bf16.msra.mxu0 %v2254
  %2673 = vmatprep.subr.bf16.mxu0 0
  %2674 = vmatpush1.bf16.msra.mxu0 %v2255
  %2675 = vmatprep.subr.bf16.mxu0 0
  %2676 = vmatpush1.bf16.msra.mxu0 %v2256
  %2677 = vmatprep.subr.bf16.mxu0 0
  %2678 = vmatpush1.bf16.msra.mxu0 %v2257
  %2679 = vmatprep.subr.bf16.mxu0 0
  %2680 = vmatpush1.bf16.msra.mxu0 %v2258
  %2681 = vmatprep.subr.bf16.mxu0 0
  %2682 = vmatpush1.bf16.msra.mxu0 %v2259
  %2683 = vmatprep.subr.bf16.mxu0 0
  %2684 = vmatpush1.bf16.msra.mxu0 %v2260
  %2685 = vmatprep.subr.bf16.mxu0 0
  %2686 = vmatpush1.bf16.msra.mxu0 %v2261
  %2687 = vmatprep.subr.bf16.mxu0 0
  %2688 = vmatpush1.bf16.msra.mxu0 %v2262
  %2689 = vmatprep.subr.bf16.mxu0 0
  %2690 = vmatpush1.bf16.msra.mxu0 %v2263
  %2691 = vmatprep.subr.bf16.mxu0 0
  %2692 = vmatpush1.bf16.msra.mxu0 %v2264
  %2693 = vmatprep.subr.bf16.mxu0 0
  %2694 = vmatpush1.bf16.msra.mxu0 %v2265
  %2695 = vmatprep.subr.bf16.mxu0 0
  %2696 = vmatpush1.bf16.msra.mxu0 %v2266
  %2697 = vmatprep.subr.bf16.mxu0 0
  %2698 = vmatpush1.bf16.msra.mxu0 %v2267
  %2699 = vmatprep.subr.bf16.mxu0 0
  %2700 = vmatpush1.bf16.msra.mxu0 %v2268
  %2701 = vmatprep.subr.bf16.mxu0 0
  %2702 = vmatpush1.bf16.msra.mxu0 %v2269
  %2703 = vmatprep.mubr.bf16.mxu0 %v1377
  %2704 = vmatmul.mubr.bf16.gmra.mrb[0].mxu0 %v1376
  %v2705 = vpop.f32.mrb[0].mxu0
  %v2706 = vadd.f32 %v2417, %v2705
  %v2707 = vpop.f32.mrb[0].mxu0
  %v2708 = vpop.f32.mrb[0].mxu0
  %v2709 = vadd.f32 %v2420, %v2708
  %v2710 = vpop.f32.mrb[0].mxu0
  %2711 = vmatprep.mubr.bf16.mxu0 %v1386
  %2712 = vmatmul.mubr.bf16.gmra.mrb[0].mxu0 %v1385
  %v2713 = vpop.f32.mrb[0].mxu0
  %v2714 = vadd.f32 %v2425, %v2713
  %v2715 = vpop.f32.mrb[0].mxu0
  %v2716 = vpop.f32.mrb[0].mxu0
  %v2717 = vadd.f32 %v2428, %v2716
  %v2718 = vpop.f32.mrb[0].mxu0
  %2719 = vmatprep.mubr.bf16.mxu0 %v1395
  %2720 = vmatmul.mubr.bf16.gmra.mrb[0].mxu0 %v1394
  %v2721 = vpop.f32.mrb[0].mxu0
  %v2722 = vadd.f32 %v2433, %v2721
  %v2723 = vpop.f32.mrb[0].mxu0
  %v2724 = vpop.f32.mrb[0].mxu0
  %v2725 = vadd.f32 %v2436, %v2724
  %v2726 = vpop.f32.mrb[0].mxu0
  %2727 = vmatprep.mubr.bf16.mxu0 %v1404
  %2728 = vmatmul.mubr.bf16.gmra.mrb[0].mxu0 %v1403
  %v2729 = vpop.f32.mrb[0].mxu0
  %v2730 = vadd.f32 %v2441, %v2729
  %v2731 = vpop.f32.mrb[0].mxu0
  %v2732 = vpop.f32.mrb[0].mxu0
  %v2733 = vadd.f32 %v2444, %v2732
  %v2734 = vpop.f32.mrb[0].mxu0
  %2735 = vmatprep.mubr.bf16.mxu0 %v1413
  %2736 = vmatmul.mubr.bf16.gmra.mrb[0].mxu0 %v1412
  %v2737 = vpop.f32.mrb[0].mxu0
  %v2738 = vadd.f32 %v2449, %v2737
  %v2739 = vpop.f32.mrb[0].mxu0
  %v2740 = vpop.f32.mrb[0].mxu0
  %v2741 = vadd.f32 %v2452, %v2740
  %v2742 = vpop.f32.mrb[0].mxu0
  %2743 = vmatprep.mubr.bf16.mxu0 %v1422
  %2744 = vmatmul.mubr.bf16.gmra.mrb[0].mxu0 %v1421
  %v2745 = vpop.f32.mrb[0].mxu0
  %v2746 = vadd.f32 %v2457, %v2745
  %v2747 = vpop.f32.mrb[0].mxu0
  %v2748 = vpop.f32.mrb[0].mxu0
  %v2749 = vadd.f32 %v2460, %v2748
  %v2750 = vpop.f32.mrb[0].mxu0
  %2751 = vmatprep.mubr.bf16.mxu0 %v1431
  %2752 = vmatmul.mubr.bf16.gmra.mrb[0].mxu0 %v1430
  %v2753 = vpop.f32.mrb[0].mxu0
  %v2754 = vadd.f32 %v2465, %v2753
  %v2755 = vpop.f32.mrb[0].mxu0
  %v2756 = vpop.f32.mrb[0].mxu0
  %v2757 = vadd.f32 %v2468, %v2756
  %v2758 = vpop.f32.mrb[0].mxu0
  %2759 = vmatprep.mubr.bf16.mxu0 %v1440
  %2760 = vmatmul.mubr.bf16.gmra.mrb[0].mxu0 %v1439
  %v2761 = vpop.f32.mrb[0].mxu0
  %v2762 = vadd.f32 %v2473, %v2761
  %v2763 = vpop.f32.mrb[0].mxu0
  %v2764 = vpop.f32.mrb[0].mxu0
  %v2765 = vadd.f32 %v2476, %v2764
  %v2766 = vpop.f32.mrb[0].mxu0
  %2767 = vmatprep.mubr.bf16.mxu0 %v1449
  %2768 = vmatmul.mubr.bf16.gmra.mrb[0].mxu0 %v1448
  %v2769 = vpop.f32.mrb[0].mxu0
  %v2770 = vadd.f32 %v2481, %v2769
  %v2771 = vpop.f32.mrb[0].mxu0
  %v2772 = vpop.f32.mrb[0].mxu0
  %v2773 = vadd.f32 %v2484, %v2772
  %v2774 = vpop.f32.mrb[0].mxu0
  %2775 = vmatprep.mubr.bf16.mxu0 %v1458
  %2776 = vmatmul.mubr.bf16.gmra.mrb[0].mxu0 %v1457
  %v2777 = vpop.f32.mrb[0].mxu0
  %v2778 = vadd.f32 %v2489, %v2777
  %v2779 = vpop.f32.mrb[0].mxu0
  %v2780 = vpop.f32.mrb[0].mxu0
  %v2781 = vadd.f32 %v2492, %v2780
  %v2782 = vpop.f32.mrb[0].mxu0
  %2783 = vmatprep.mubr.bf16.mxu0 %v1467
  %2784 = vmatmul.mubr.bf16.gmra.mrb[0].mxu0 %v1466
  %v2785 = vpop.f32.mrb[0].mxu0
  %v2786 = vadd.f32 %v2497, %v2785
  %v2787 = vpop.f32.mrb[0].mxu0
  %v2788 = vpop.f32.mrb[0].mxu0
  %v2789 = vadd.f32 %v2500, %v2788
  %v2790 = vpop.f32.mrb[0].mxu0
  %2791 = vmatprep.mubr.bf16.mxu0 %v1476
  %2792 = vmatmul.mubr.bf16.gmra.mrb[0].mxu0 %v1475
  %v2793 = vpop.f32.mrb[0].mxu0
  %v2794 = vadd.f32 %v2505, %v2793
  %v2795 = vpop.f32.mrb[0].mxu0
  %v2796 = vpop.f32.mrb[0].mxu0
  %v2797 = vadd.f32 %v2508, %v2796
  %v2798 = vpop.f32.mrb[0].mxu0
  %2799 = vmatprep.mubr.bf16.mxu0 %v1485
  %2800 = vmatmul.mubr.bf16.gmra.mrb[0].mxu0 %v1484
  %v2801 = vpop.f32.mrb[0].mxu0
  %v2802 = vadd.f32 %v2513, %v2801
  %v2803 = vpop.f32.mrb[0].mxu0
  %v2804 = vpop.f32.mrb[0].mxu0
  %v2805 = vadd.f32 %v2516, %v2804
  %v2806 = vpop.f32.mrb[0].mxu0
  %2807 = vmatprep.mubr.bf16.mxu0 %v1494
  %2808 = vmatmul.mubr.bf16.gmra.mrb[0].mxu0 %v1493
  %v2809 = vpop.f32.mrb[0].mxu0
  %v2810 = vadd.f32 %v2521, %v2809
  %v2811 = vpop.f32.mrb[0].mxu0
  %v2812 = vpop.f32.mrb[0].mxu0
  %v2813 = vadd.f32 %v2524, %v2812
  %v2814 = vpop.f32.mrb[0].mxu0
  %2815 = vmatprep.mubr.bf16.mxu0 %v1503
  %2816 = vmatmul.mubr.bf16.gmra.mrb[0].mxu0 %v1502
  %v2817 = vpop.f32.mrb[0].mxu0
  %v2818 = vadd.f32 %v2529, %v2817
  %v2819 = vpop.f32.mrb[0].mxu0
  %v2820 = vpop.f32.mrb[0].mxu0
  %v2821 = vadd.f32 %v2532, %v2820
  %v2822 = vpop.f32.mrb[0].mxu0
  %2823 = vmatprep.mubr.bf16.mxu0 %v1512
  %2824 = vmatmul.mubr.bf16.gmra.mrb[0].mxu0 %v1511
  %v2825 = vpop.f32.mrb[0].mxu0
  %v2826 = vadd.f32 %v2537, %v2825
  %v2827 = vpop.f32.mrb[0].mxu0
  %v2828 = vpop.f32.mrb[0].mxu0
  %v2829 = vadd.f32 %v2540, %v2828
  %v2830 = vpop.f32.mrb[0].mxu0
  %2831 = vmatprep.mubr.bf16.mxu0 %v1521
  %2832 = vmatmul.mubr.bf16.gmra.mrb[0].mxu0 %v1520
  %v2833 = vpop.f32.mrb[0].mxu0
  %v2834 = vadd.f32 %v2545, %v2833
  %v2835 = vpop.f32.mrb[0].mxu0
  %v2836 = vpop.f32.mrb[0].mxu0
  %v2837 = vadd.f32 %v2548, %v2836
  %v2838 = vpop.f32.mrb[0].mxu0
  %2839 = vmatprep.mubr.bf16.mxu0 %v1530
  %2840 = vmatmul.mubr.bf16.gmra.mrb[0].mxu0 %v1529
  %v2841 = vpop.f32.mrb[0].mxu0
  %v2842 = vadd.f32 %v2553, %v2841
  %v2843 = vpop.f32.mrb[0].mxu0
  %v2844 = vpop.f32.mrb[0].mxu0
  %v2845 = vadd.f32 %v2556, %v2844
  %v2846 = vpop.f32.mrb[0].mxu0
  %2847 = vmatprep.mubr.bf16.mxu0 %v1539
  %2848 = vmatmul.mubr.bf16.gmra.mrb[0].mxu0 %v1538
  %v2849 = vpop.f32.mrb[0].mxu0
  %v2850 = vadd.f32 %v2561, %v2849
  %v2851 = vpop.f32.mrb[0].mxu0
  %v2852 = vpop.f32.mrb[0].mxu0
  %v2853 = vadd.f32 %v2564, %v2852
  %v2854 = vpop.f32.mrb[0].mxu0
  %2855 = vmatprep.mubr.bf16.mxu0 %v1548
  %2856 = vmatmul.mubr.bf16.gmra.mrb[0].mxu0 %v1547
  %v2857 = vpop.f32.mrb[0].mxu0
  %v2858 = vadd.f32 %v2569, %v2857
  %v2859 = vpop.f32.mrb[0].mxu0
  %v2860 = vpop.f32.mrb[0].mxu0
  %v2861 = vadd.f32 %v2572, %v2860
  %v2862 = vpop.f32.mrb[0].mxu0
  %2863 = vmatprep.mubr.bf16.mxu0 %v1557
  %2864 = vmatmul.mubr.bf16.gmra.mrb[0].mxu0 %v1556
  %v2865 = vpop.f32.mrb[0].mxu0
  %v2866 = vadd.f32 %v2577, %v2865
  %v2867 = vpop.f32.mrb[0].mxu0
  %v2868 = vpop.f32.mrb[0].mxu0
  %v2869 = vadd.f32 %v2580, %v2868
  %v2870 = vpop.f32.mrb[0].mxu0
  %2871 = vmatprep.mubr.bf16.mxu0 %v1566
  %2872 = vmatmul.mubr.bf16.gmra.mrb[0].mxu0 %v1565
  %v2873 = vpop.f32.mrb[0].mxu0
  %v2874 = vadd.f32 %v2585, %v2873
  %v2875 = vpop.f32.mrb[0].mxu0
  %v2876 = vpop.f32.mrb[0].mxu0
  %v2877 = vadd.f32 %v2588, %v2876
  %v2878 = vpop.f32.mrb[0].mxu0
  %2879 = vmatprep.mubr.bf16.mxu0 %v1575
  %2880 = vmatmul.mubr.bf16.gmra.mrb[0].mxu0 %v1574
  %v2881 = vpop.f32.mrb[0].mxu0
  %v2882 = vadd.f32 %v2593, %v2881
  %v2883 = vpop.f32.mrb[0].mxu0
  %v2884 = vpop.f32.mrb[0].mxu0
  %v2885 = vadd.f32 %v2596, %v2884
  %v2886 = vpop.f32.mrb[0].mxu0
  %2887 = vmatprep.mubr.bf16.mxu0 %v1584
  %2888 = vmatmul.mubr.bf16.gmra.mrb[0].mxu0 %v1583
  %v2889 = vpop.f32.mrb[0].mxu0
  %v2890 = vadd.f32 %v2601, %v2889
  %v2891 = vpop.f32.mrb[0].mxu0
  %v2892 = vpop.f32.mrb[0].mxu0
  %v2893 = vadd.f32 %v2604, %v2892
  %v2894 = vpop.f32.mrb[0].mxu0
  %2895 = vmatprep.mubr.bf16.mxu0 %v1593
  %2896 = vmatmul.mubr.bf16.gmra.mrb[0].mxu0 %v1592
  %v2897 = vpop.f32.mrb[0].mxu0
  %v2898 = vadd.f32 %v2609, %v2897
  %v2899 = vpop.f32.mrb[0].mxu0
  %v2900 = vpop.f32.mrb[0].mxu0
  %v2901 = vadd.f32 %v2612, %v2900
  %v2902 = vpop.f32.mrb[0].mxu0
  %2903 = vmatprep.mubr.bf16.mxu0 %v1602
  %2904 = vmatmul.mubr.bf16.gmra.mrb[0].mxu0 %v1601
  %v2905 = vpop.f32.mrb[0].mxu0
  %v2906 = vadd.f32 %v2617, %v2905
  %v2907 = vpop.f32.mrb[0].mxu0
  %v2908 = vpop.f32.mrb[0].mxu0
  %v2909 = vadd.f32 %v2620, %v2908
  %v2910 = vpop.f32.mrb[0].mxu0
  %2911 = vmatprep.mubr.bf16.mxu0 %v1611
  %2912 = vmatmul.mubr.bf16.gmra.mrb[0].mxu0 %v1610
  %v2913 = vpop.f32.mrb[0].mxu0
  %v2914 = vadd.f32 %v2625, %v2913
  %v2915 = vpop.f32.mrb[0].mxu0
  %v2916 = vpop.f32.mrb[0].mxu0
  %v2917 = vadd.f32 %v2628, %v2916
  %v2918 = vpop.f32.mrb[0].mxu0
  %2919 = vmatprep.mubr.bf16.mxu0 %v1620
  %2920 = vmatmul.mubr.bf16.gmra.mrb[0].mxu0 %v1619
  %v2921 = vpop.f32.mrb[0].mxu0
  %v2922 = vadd.f32 %v2633, %v2921
  %v2923 = vpop.f32.mrb[0].mxu0
  %v2924 = vpop.f32.mrb[0].mxu0
  %v2925 = vadd.f32 %v2636, %v2924
  %v2926 = vpop.f32.mrb[0].mxu0
  %2927 = vmatprep.mubr.bf16.mxu0 %v1629
  %2928 = vmatmul.mubr.bf16.gmra.mrb[0].mxu0 %v1628
  %v2929 = vpop.f32.mrb[0].mxu0
  %v2930 = vadd.f32 %v2641, %v2929
  %v2931 = vpop.f32.mrb[0].mxu0
  %v2932 = vpop.f32.mrb[0].mxu0
  %v2933 = vadd.f32 %v2644, %v2932
  %v2934 = vpop.f32.mrb[0].mxu0
  %2935 = vmatprep.mubr.bf16.mxu0 %v1638
  %2936 = vmatmul.mubr.bf16.gmra.mrb[0].mxu0 %v1637
  %v2937 = vpop.f32.mrb[0].mxu0
  %v2938 = vadd.f32 %v2649, %v2937
  %v2939 = vpop.f32.mrb[0].mxu0
  %v2940 = vpop.f32.mrb[0].mxu0
  %v2941 = vadd.f32 %v2652, %v2940
  %v2942 = vpop.f32.mrb[0].mxu0
  %2943 = vmatprep.mubr.bf16.mxu0 %v1647
  %2944 = vmatmul.mubr.bf16.gmra.mrb[0].mxu0 %v1646
  %v2945 = vpop.f32.mrb[0].mxu0
  %v2946 = vadd.f32 %v2657, %v2945
  %v2947 = vpop.f32.mrb[0].mxu0
  %v2948 = vpop.f32.mrb[0].mxu0
  %v2949 = vadd.f32 %v2660, %v2948
  %v2950 = vpop.f32.mrb[0].mxu0
  %2951 = vmatprep.mubr.bf16.mxu0 %v1656
  %2952 = vmatmul.mubr.bf16.gmra.mrb[0].mxu0 %v1655
  %v2953 = vpop.f32.mrb[0].mxu0
  %v2954 = vadd.f32 %v2665, %v2953
  %v2955 = vpop.f32.mrb[0].mxu0
  %v2956 = vpop.f32.mrb[0].mxu0
  %v2957 = vadd.f32 %v2668, %v2956
  %v2958 = vpop.f32.mrb[0].mxu0
  %2959 = vdwg.mxu0
  %2960 = vmatprep.subr.bf16.mxu0 0
  %2961 = vmatpush1.bf16.msra.mxu0 %v2270
  %2962 = vmatprep.subr.bf16.mxu0 0
  %2963 = vmatpush1.bf16.msra.mxu0 %v2271
  %2964 = vmatprep.subr.bf16.mxu0 0
  %2965 = vmatpush1.bf16.msra.mxu0 %v2272
  %2966 = vmatprep.subr.bf16.mxu0 0
  %2967 = vmatpush1.bf16.msra.mxu0 %v2273
  %2968 = vmatprep.subr.bf16.mxu0 0
  %2969 = vmatpush1.bf16.msra.mxu0 %v2274
  %2970 = vmatprep.subr.bf16.mxu0 0
  %2971 = vmatpush1.bf16.msra.mxu0 %v2275
  %2972 = vmatprep.subr.bf16.mxu0 0
  %2973 = vmatpush1.bf16.msra.mxu0 %v2276
  %2974 = vmatprep.subr.bf16.mxu0 0
  %2975 = vmatpush1.bf16.msra.mxu0 %v2277
  %2976 = vmatprep.subr.bf16.mxu0 0
  %2977 = vmatpush1.bf16.msra.mxu0 %v2278
  %2978 = vmatprep.subr.bf16.mxu0 0
  %2979 = vmatpush1.bf16.msra.mxu0 %v2279
  %2980 = vmatprep.subr.bf16.mxu0 0
  %2981 = vmatpush1.bf16.msra.mxu0 %v2280
  %2982 = vmatprep.subr.bf16.mxu0 0
  %2983 = vmatpush1.bf16.msra.mxu0 %v2281
  %2984 = vmatprep.subr.bf16.mxu0 0
  %2985 = vmatpush1.bf16.msra.mxu0 %v2282
  %2986 = vmatprep.subr.bf16.mxu0 0
  %2987 = vmatpush1.bf16.msra.mxu0 %v2283
  %2988 = vmatprep.subr.bf16.mxu0 0
  %2989 = vmatpush1.bf16.msra.mxu0 %v2284
  %2990 = vmatprep.subr.bf16.mxu0 0
  %2991 = vmatpush1.bf16.msra.mxu0 %v2285
  %2992 = vmatprep.mubr.bf16.mxu0 %v1379
  %2993 = vmatmul.mubr.bf16.gmra.mrb[0].mxu0 %v1378
  %v2994 = vpop.f32.mrb[0].mxu0
  %v2995 = vadd.f32 %v2706, %v2994
  %v2996 = vpop.f32.mrb[0].mxu0
  %v2997 = vpop.f32.mrb[0].mxu0
  %v2998 = vadd.f32 %v2709, %v2997
  %v2999 = vpop.f32.mrb[0].mxu0
  %3000 = vmatprep.mubr.bf16.mxu0 %v1388
  %3001 = vmatmul.mubr.bf16.gmra.mrb[0].mxu0 %v1387
  %v3002 = vpop.f32.mrb[0].mxu0
  %v3003 = vadd.f32 %v2714, %v3002
  %v3004 = vpop.f32.mrb[0].mxu0
  %v3005 = vpop.f32.mrb[0].mxu0
  %v3006 = vadd.f32 %v2717, %v3005
  %v3007 = vpop.f32.mrb[0].mxu0
  %3008 = vmatprep.mubr.bf16.mxu0 %v1397
  %3009 = vmatmul.mubr.bf16.gmra.mrb[0].mxu0 %v1396
  %v3010 = vpop.f32.mrb[0].mxu0
  %v3011 = vadd.f32 %v2722, %v3010
  %v3012 = vpop.f32.mrb[0].mxu0
  %v3013 = vpop.f32.mrb[0].mxu0
  %v3014 = vadd.f32 %v2725, %v3013
  %v3015 = vpop.f32.mrb[0].mxu0
  %3016 = vmatprep.mubr.bf16.mxu0 %v1406
  %3017 = vmatmul.mubr.bf16.gmra.mrb[0].mxu0 %v1405
  %v3018 = vpop.f32.mrb[0].mxu0
  %v3019 = vadd.f32 %v2730, %v3018
  %v3020 = vpop.f32.mrb[0].mxu0
  %v3021 = vpop.f32.mrb[0].mxu0
  %v3022 = vadd.f32 %v2733, %v3021
  %v3023 = vpop.f32.mrb[0].mxu0
  %3024 = vmatprep.mubr.bf16.mxu0 %v1415
  %3025 = vmatmul.mubr.bf16.gmra.mrb[0].mxu0 %v1414
  %v3026 = vpop.f32.mrb[0].mxu0
  %v3027 = vadd.f32 %v2738, %v3026
  %v3028 = vpop.f32.mrb[0].mxu0
  %v3029 = vpop.f32.mrb[0].mxu0
  %v3030 = vadd.f32 %v2741, %v3029
  %v3031 = vpop.f32.mrb[0].mxu0
  %3032 = vmatprep.mubr.bf16.mxu0 %v1424
  %3033 = vmatmul.mubr.bf16.gmra.mrb[0].mxu0 %v1423
  %v3034 = vpop.f32.mrb[0].mxu0
  %v3035 = vadd.f32 %v2746, %v3034
  %v3036 = vpop.f32.mrb[0].mxu0
  %v3037 = vpop.f32.mrb[0].mxu0
  %v3038 = vadd.f32 %v2749, %v3037
  %v3039 = vpop.f32.mrb[0].mxu0
  %3040 = vmatprep.mubr.bf16.mxu0 %v1433
  %3041 = vmatmul.mubr.bf16.gmra.mrb[0].mxu0 %v1432
  %v3042 = vpop.f32.mrb[0].mxu0
  %v3043 = vadd.f32 %v2754, %v3042
  %v3044 = vpop.f32.mrb[0].mxu0
  %v3045 = vpop.f32.mrb[0].mxu0
  %v3046 = vadd.f32 %v2757, %v3045
  %v3047 = vpop.f32.mrb[0].mxu0
  %3048 = vmatprep.mubr.bf16.mxu0 %v1442
  %3049 = vmatmul.mubr.bf16.gmra.mrb[0].mxu0 %v1441
  %v3050 = vpop.f32.mrb[0].mxu0
  %v3051 = vadd.f32 %v2762, %v3050
  %v3052 = vpop.f32.mrb[0].mxu0
  %v3053 = vpop.f32.mrb[0].mxu0
  %v3054 = vadd.f32 %v2765, %v3053
  %v3055 = vpop.f32.mrb[0].mxu0
  %3056 = vmatprep.mubr.bf16.mxu0 %v1451
  %3057 = vmatmul.mubr.bf16.gmra.mrb[0].mxu0 %v1450
  %v3058 = vpop.f32.mrb[0].mxu0
  %v3059 = vadd.f32 %v2770, %v3058
  %v3060 = vpop.f32.mrb[0].mxu0
  %v3061 = vpop.f32.mrb[0].mxu0
  %v3062 = vadd.f32 %v2773, %v3061
  %v3063 = vpop.f32.mrb[0].mxu0
  %3064 = vmatprep.mubr.bf16.mxu0 %v1460
  %3065 = vmatmul.mubr.bf16.gmra.mrb[0].mxu0 %v1459
  %v3066 = vpop.f32.mrb[0].mxu0
  %v3067 = vadd.f32 %v2778, %v3066
  %v3068 = vpop.f32.mrb[0].mxu0
  %v3069 = vpop.f32.mrb[0].mxu0
  %v3070 = vadd.f32 %v2781, %v3069
  %v3071 = vpop.f32.mrb[0].mxu0
  %3072 = vmatprep.mubr.bf16.mxu0 %v1469
  %3073 = vmatmul.mubr.bf16.gmra.mrb[0].mxu0 %v1468
  %v3074 = vpop.f32.mrb[0].mxu0
  %v3075 = vadd.f32 %v2786, %v3074
  %v3076 = vpop.f32.mrb[0].mxu0
  %v3077 = vpop.f32.mrb[0].mxu0
  %v3078 = vadd.f32 %v2789, %v3077
  %v3079 = vpop.f32.mrb[0].mxu0
  %3080 = vmatprep.mubr.bf16.mxu0 %v1478
  %3081 = vmatmul.mubr.bf16.gmra.mrb[0].mxu0 %v1477
  %v3082 = vpop.f32.mrb[0].mxu0
  %v3083 = vadd.f32 %v2794, %v3082
  %v3084 = vpop.f32.mrb[0].mxu0
  %v3085 = vpop.f32.mrb[0].mxu0
  %v3086 = vadd.f32 %v2797, %v3085
  %v3087 = vpop.f32.mrb[0].mxu0
  %3088 = vmatprep.mubr.bf16.mxu0 %v1487
  %3089 = vmatmul.mubr.bf16.gmra.mrb[0].mxu0 %v1486
  %v3090 = vpop.f32.mrb[0].mxu0
  %v3091 = vadd.f32 %v2802, %v3090
  %v3092 = vpop.f32.mrb[0].mxu0
  %v3093 = vpop.f32.mrb[0].mxu0
  %v3094 = vadd.f32 %v2805, %v3093
  %v3095 = vpop.f32.mrb[0].mxu0
  %3096 = vmatprep.mubr.bf16.mxu0 %v1496
  %3097 = vmatmul.mubr.bf16.gmra.mrb[0].mxu0 %v1495
  %v3098 = vpop.f32.mrb[0].mxu0
  %v3099 = vadd.f32 %v2810, %v3098
  %v3100 = vpop.f32.mrb[0].mxu0
  %v3101 = vpop.f32.mrb[0].mxu0
  %v3102 = vadd.f32 %v2813, %v3101
  %v3103 = vpop.f32.mrb[0].mxu0
  %3104 = vmatprep.mubr.bf16.mxu0 %v1505
  %3105 = vmatmul.mubr.bf16.gmra.mrb[0].mxu0 %v1504
  %v3106 = vpop.f32.mrb[0].mxu0
  %v3107 = vadd.f32 %v2818, %v3106
  %v3108 = vpop.f32.mrb[0].mxu0
  %v3109 = vpop.f32.mrb[0].mxu0
  %v3110 = vadd.f32 %v2821, %v3109
  %v3111 = vpop.f32.mrb[0].mxu0
  %3112 = vmatprep.mubr.bf16.mxu0 %v1514
  %3113 = vmatmul.mubr.bf16.gmra.mrb[0].mxu0 %v1513
  %v3114 = vpop.f32.mrb[0].mxu0
  %v3115 = vadd.f32 %v2826, %v3114
  %v3116 = vpop.f32.mrb[0].mxu0
  %v3117 = vpop.f32.mrb[0].mxu0
  %v3118 = vadd.f32 %v2829, %v3117
  %v3119 = vpop.f32.mrb[0].mxu0
  %3120 = vmatprep.mubr.bf16.mxu0 %v1523
  %3121 = vmatmul.mubr.bf16.gmra.mrb[0].mxu0 %v1522
  %v3122 = vpop.f32.mrb[0].mxu0
  %v3123 = vadd.f32 %v2834, %v3122
  %v3124 = vpop.f32.mrb[0].mxu0
  %v3125 = vpop.f32.mrb[0].mxu0
  %v3126 = vadd.f32 %v2837, %v3125
  %v3127 = vpop.f32.mrb[0].mxu0
  %3128 = vmatprep.mubr.bf16.mxu0 %v1532
  %3129 = vmatmul.mubr.bf16.gmra.mrb[0].mxu0 %v1531
  %v3130 = vpop.f32.mrb[0].mxu0
  %v3131 = vadd.f32 %v2842, %v3130
  %v3132 = vpop.f32.mrb[0].mxu0
  %v3133 = vpop.f32.mrb[0].mxu0
  %v3134 = vadd.f32 %v2845, %v3133
  %v3135 = vpop.f32.mrb[0].mxu0
  %3136 = vmatprep.mubr.bf16.mxu0 %v1541
  %3137 = vmatmul.mubr.bf16.gmra.mrb[0].mxu0 %v1540
  %v3138 = vpop.f32.mrb[0].mxu0
  %v3139 = vadd.f32 %v2850, %v3138
  %v3140 = vpop.f32.mrb[0].mxu0
  %v3141 = vpop.f32.mrb[0].mxu0
  %v3142 = vadd.f32 %v2853, %v3141
  %v3143 = vpop.f32.mrb[0].mxu0
  %3144 = vmatprep.mubr.bf16.mxu0 %v1550
  %3145 = vmatmul.mubr.bf16.gmra.mrb[0].mxu0 %v1549
  %v3146 = vpop.f32.mrb[0].mxu0
  %v3147 = vadd.f32 %v2858, %v3146
  %v3148 = vpop.f32.mrb[0].mxu0
  %v3149 = vpop.f32.mrb[0].mxu0
  %v3150 = vadd.f32 %v2861, %v3149
  %v3151 = vpop.f32.mrb[0].mxu0
  %3152 = vmatprep.mubr.bf16.mxu0 %v1559
  %3153 = vmatmul.mubr.bf16.gmra.mrb[0].mxu0 %v1558
  %v3154 = vpop.f32.mrb[0].mxu0
  %v3155 = vadd.f32 %v2866, %v3154
  %v3156 = vpop.f32.mrb[0].mxu0
  %v3157 = vpop.f32.mrb[0].mxu0
  %v3158 = vadd.f32 %v2869, %v3157
  %v3159 = vpop.f32.mrb[0].mxu0
  %3160 = vmatprep.mubr.bf16.mxu0 %v1568
  %3161 = vmatmul.mubr.bf16.gmra.mrb[0].mxu0 %v1567
  %v3162 = vpop.f32.mrb[0].mxu0
  %v3163 = vadd.f32 %v2874, %v3162
  %v3164 = vpop.f32.mrb[0].mxu0
  %v3165 = vpop.f32.mrb[0].mxu0
  %v3166 = vadd.f32 %v2877, %v3165
  %v3167 = vpop.f32.mrb[0].mxu0
  %3168 = vmatprep.mubr.bf16.mxu0 %v1577
  %3169 = vmatmul.mubr.bf16.gmra.mrb[0].mxu0 %v1576
  %v3170 = vpop.f32.mrb[0].mxu0
  %v3171 = vadd.f32 %v2882, %v3170
  %v3172 = vpop.f32.mrb[0].mxu0
  %v3173 = vpop.f32.mrb[0].mxu0
  %v3174 = vadd.f32 %v2885, %v3173
  %v3175 = vpop.f32.mrb[0].mxu0
  %3176 = vmatprep.mubr.bf16.mxu0 %v1586
  %3177 = vmatmul.mubr.bf16.gmra.mrb[0].mxu0 %v1585
  %v3178 = vpop.f32.mrb[0].mxu0
  %v3179 = vadd.f32 %v2890, %v3178
  %v3180 = vpop.f32.mrb[0].mxu0
  %v3181 = vpop.f32.mrb[0].mxu0
  %v3182 = vadd.f32 %v2893, %v3181
  %v3183 = vpop.f32.mrb[0].mxu0
  %3184 = vmatprep.mubr.bf16.mxu0 %v1595
  %3185 = vmatmul.mubr.bf16.gmra.mrb[0].mxu0 %v1594
  %v3186 = vpop.f32.mrb[0].mxu0
  %v3187 = vadd.f32 %v2898, %v3186
  %v3188 = vpop.f32.mrb[0].mxu0
  %v3189 = vpop.f32.mrb[0].mxu0
  %v3190 = vadd.f32 %v2901, %v3189
  %v3191 = vpop.f32.mrb[0].mxu0
  %3192 = vmatprep.mubr.bf16.mxu0 %v1604
  %3193 = vmatmul.mubr.bf16.gmra.mrb[0].mxu0 %v1603
  %v3194 = vpop.f32.mrb[0].mxu0
  %v3195 = vadd.f32 %v2906, %v3194
  %v3196 = vpop.f32.mrb[0].mxu0
  %v3197 = vpop.f32.mrb[0].mxu0
  %v3198 = vadd.f32 %v2909, %v3197
  %v3199 = vpop.f32.mrb[0].mxu0
  %3200 = vmatprep.mubr.bf16.mxu0 %v1613
  %3201 = vmatmul.mubr.bf16.gmra.mrb[0].mxu0 %v1612
  %v3202 = vpop.f32.mrb[0].mxu0
  %v3203 = vadd.f32 %v2914, %v3202
  %v3204 = vpop.f32.mrb[0].mxu0
  %v3205 = vpop.f32.mrb[0].mxu0
  %v3206 = vadd.f32 %v2917, %v3205
  %v3207 = vpop.f32.mrb[0].mxu0
  %3208 = vmatprep.mubr.bf16.mxu0 %v1622
  %3209 = vmatmul.mubr.bf16.gmra.mrb[0].mxu0 %v1621
  %v3210 = vpop.f32.mrb[0].mxu0
  %v3211 = vadd.f32 %v2922, %v3210
  %v3212 = vpop.f32.mrb[0].mxu0
  %v3213 = vpop.f32.mrb[0].mxu0
  %v3214 = vadd.f32 %v2925, %v3213
  %v3215 = vpop.f32.mrb[0].mxu0
  %3216 = vmatprep.mubr.bf16.mxu0 %v1631
  %3217 = vmatmul.mubr.bf16.gmra.mrb[0].mxu0 %v1630
  %v3218 = vpop.f32.mrb[0].mxu0
  %v3219 = vadd.f32 %v2930, %v3218
  %v3220 = vpop.f32.mrb[0].mxu0
  %v3221 = vpop.f32.mrb[0].mxu0
  %v3222 = vadd.f32 %v2933, %v3221
  %v3223 = vpop.f32.mrb[0].mxu0
  %3224 = vmatprep.mubr.bf16.mxu0 %v1640
  %3225 = vmatmul.mubr.bf16.gmra.mrb[0].mxu0 %v1639
  %v3226 = vpop.f32.mrb[0].mxu0
  %v3227 = vadd.f32 %v2938, %v3226
  %v3228 = vpop.f32.mrb[0].mxu0
  %v3229 = vpop.f32.mrb[0].mxu0
  %v3230 = vadd.f32 %v2941, %v3229
  %v3231 = vpop.f32.mrb[0].mxu0
  %3232 = vmatprep.mubr.bf16.mxu0 %v1649
  %3233 = vmatmul.mubr.bf16.gmra.mrb[0].mxu0 %v1648
  %v3234 = vpop.f32.mrb[0].mxu0
  %v3235 = vadd.f32 %v2946, %v3234
  %v3236 = vpop.f32.mrb[0].mxu0
  %v3237 = vpop.f32.mrb[0].mxu0
  %v3238 = vadd.f32 %v2949, %v3237
  %v3239 = vpop.f32.mrb[0].mxu0
  %3240 = vmatprep.mubr.bf16.mxu0 %v1658
  %3241 = vmatmul.mubr.bf16.gmra.mrb[0].mxu0 %v1657
  %v3242 = vpop.f32.mrb[0].mxu0
  %v3243 = vadd.f32 %v2954, %v3242
  %v3244 = vpop.f32.mrb[0].mxu0
  %v3245 = vpop.f32.mrb[0].mxu0
  %v3246 = vadd.f32 %v2957, %v3245
  %v3247 = vpop.f32.mrb[0].mxu0
  %3248 = vdwg.mxu0
  %3249 = vmatprep.subr.bf16.mxu0 0
  %3250 = vmatpush1.bf16.msra.mxu0 %v2286
  %3251 = vmatprep.subr.bf16.mxu0 0
  %3252 = vmatpush1.bf16.msra.mxu0 %v2287
  %3253 = vmatprep.subr.bf16.mxu0 0
  %3254 = vmatpush1.bf16.msra.mxu0 %v2288
  %3255 = vmatprep.subr.bf16.mxu0 0
  %3256 = vmatpush1.bf16.msra.mxu0 %v2289
  %3257 = vmatprep.subr.bf16.mxu0 0
  %3258 = vmatpush1.bf16.msra.mxu0 %v2290
  %3259 = vmatprep.subr.bf16.mxu0 0
  %3260 = vmatpush1.bf16.msra.mxu0 %v2291
  %3261 = vmatprep.subr.bf16.mxu0 0
  %3262 = vmatpush1.bf16.msra.mxu0 %v2292
  %3263 = vmatprep.subr.bf16.mxu0 0
  %3264 = vmatpush1.bf16.msra.mxu0 %v2293
  %3265 = vmatprep.subr.bf16.mxu0 0
  %3266 = vmatpush1.bf16.msra.mxu0 %v2294
  %3267 = vmatprep.subr.bf16.mxu0 0
  %3268 = vmatpush1.bf16.msra.mxu0 %v2295
  %3269 = vmatprep.subr.bf16.mxu0 0
  %3270 = vmatpush1.bf16.msra.mxu0 %v2296
  %3271 = vmatprep.subr.bf16.mxu0 0
  %3272 = vmatpush1.bf16.msra.mxu0 %v2297
  %3273 = vmatprep.subr.bf16.mxu0 0
  %3274 = vmatpush1.bf16.msra.mxu0 %v2298
  %3275 = vmatprep.subr.bf16.mxu0 0
  %3276 = vmatpush1.bf16.msra.mxu0 %v2299
  %3277 = vmatprep.subr.bf16.mxu0 0
  %3278 = vmatpush1.bf16.msra.mxu0 %v2300
  %3279 = vmatprep.subr.bf16.mxu0 0
  %3280 = vmatpush1.bf16.msra.mxu0 %v2301
  %3281 = vmatprep.mubr.bf16.mxu0 %v1381
  %3282 = vmatmul.mubr.bf16.gmra.mrb[0].mxu0 %v1380
  %v3283 = vpop.f32.mrb[0].mxu0
  %v3284 = vadd.f32 %v2995, %v3283
  %v3285 = vpop.f32.mrb[0].mxu0
  %v3286 = vpop.f32.mrb[0].mxu0
  %v3287 = vadd.f32 %v2998, %v3286
  %v3288 = vpop.f32.mrb[0].mxu0
  %3289 = vmatprep.mubr.bf16.mxu0 %v1390
  %3290 = vmatmul.mubr.bf16.gmra.mrb[0].mxu0 %v1389
  %v3291 = vpop.f32.mrb[0].mxu0
  %v3292 = vadd.f32 %v3003, %v3291
  %v3293 = vpop.f32.mrb[0].mxu0
  %v3294 = vpop.f32.mrb[0].mxu0
  %v3295 = vadd.f32 %v3006, %v3294
  %v3296 = vpop.f32.mrb[0].mxu0
  %3297 = vmatprep.mubr.bf16.mxu0 %v1399
  %3298 = vmatmul.mubr.bf16.gmra.mrb[0].mxu0 %v1398
  %v3299 = vpop.f32.mrb[0].mxu0
  %v3300 = vadd.f32 %v3011, %v3299
  %v3301 = vpop.f32.mrb[0].mxu0
  %v3302 = vpop.f32.mrb[0].mxu0
  %v3303 = vadd.f32 %v3014, %v3302
  %v3304 = vpop.f32.mrb[0].mxu0
  %3305 = vmatprep.mubr.bf16.mxu0 %v1408
  %3306 = vmatmul.mubr.bf16.gmra.mrb[0].mxu0 %v1407
  %v3307 = vpop.f32.mrb[0].mxu0
  %v3308 = vadd.f32 %v3019, %v3307
  %v3309 = vpop.f32.mrb[0].mxu0
  %v3310 = vpop.f32.mrb[0].mxu0
  %v3311 = vadd.f32 %v3022, %v3310
  %v3312 = vpop.f32.mrb[0].mxu0
  %3313 = vmatprep.mubr.bf16.mxu0 %v1417
  %3314 = vmatmul.mubr.bf16.gmra.mrb[0].mxu0 %v1416
  %v3315 = vpop.f32.mrb[0].mxu0
  %v3316 = vadd.f32 %v3027, %v3315
  %v3317 = vpop.f32.mrb[0].mxu0
  %v3318 = vpop.f32.mrb[0].mxu0
  %v3319 = vadd.f32 %v3030, %v3318
  %v3320 = vpop.f32.mrb[0].mxu0
  %3321 = vmatprep.mubr.bf16.mxu0 %v1426
  %3322 = vmatmul.mubr.bf16.gmra.mrb[0].mxu0 %v1425
  %v3323 = vpop.f32.mrb[0].mxu0
  %v3324 = vadd.f32 %v3035, %v3323
  %v3325 = vpop.f32.mrb[0].mxu0
  %v3326 = vpop.f32.mrb[0].mxu0
  %v3327 = vadd.f32 %v3038, %v3326
  %v3328 = vpop.f32.mrb[0].mxu0
  %3329 = vmatprep.mubr.bf16.mxu0 %v1435
  %3330 = vmatmul.mubr.bf16.gmra.mrb[0].mxu0 %v1434
  %v3331 = vpop.f32.mrb[0].mxu0
  %v3332 = vadd.f32 %v3043, %v3331
  %v3333 = vpop.f32.mrb[0].mxu0
  %v3334 = vpop.f32.mrb[0].mxu0
  %v3335 = vadd.f32 %v3046, %v3334
  %v3336 = vpop.f32.mrb[0].mxu0
  %3337 = vmatprep.mubr.bf16.mxu0 %v1444
  %3338 = vmatmul.mubr.bf16.gmra.mrb[0].mxu0 %v1443
  %v3339 = vpop.f32.mrb[0].mxu0
  %v3340 = vadd.f32 %v3051, %v3339
  %v3341 = vpop.f32.mrb[0].mxu0
  %v3342 = vpop.f32.mrb[0].mxu0
  %v3343 = vadd.f32 %v3054, %v3342
  %v3344 = vpop.f32.mrb[0].mxu0
  %3345 = vmatprep.mubr.bf16.mxu0 %v1453
  %3346 = vmatmul.mubr.bf16.gmra.mrb[0].mxu0 %v1452
  %v3347 = vpop.f32.mrb[0].mxu0
  %v3348 = vadd.f32 %v3059, %v3347
  %v3349 = vpop.f32.mrb[0].mxu0
  %v3350 = vpop.f32.mrb[0].mxu0
  %v3351 = vadd.f32 %v3062, %v3350
  %v3352 = vpop.f32.mrb[0].mxu0
  %3353 = vmatprep.mubr.bf16.mxu0 %v1462
  %3354 = vmatmul.mubr.bf16.gmra.mrb[0].mxu0 %v1461
  %v3355 = vpop.f32.mrb[0].mxu0
  %v3356 = vadd.f32 %v3067, %v3355
  %v3357 = vpop.f32.mrb[0].mxu0
  %v3358 = vpop.f32.mrb[0].mxu0
  %v3359 = vadd.f32 %v3070, %v3358
  %v3360 = vpop.f32.mrb[0].mxu0
  %3361 = vmatprep.mubr.bf16.mxu0 %v1471
  %3362 = vmatmul.mubr.bf16.gmra.mrb[0].mxu0 %v1470
  %v3363 = vpop.f32.mrb[0].mxu0
  %v3364 = vadd.f32 %v3075, %v3363
  %v3365 = vpop.f32.mrb[0].mxu0
  %v3366 = vpop.f32.mrb[0].mxu0
  %v3367 = vadd.f32 %v3078, %v3366
  %v3368 = vpop.f32.mrb[0].mxu0
  %3369 = vmatprep.mubr.bf16.mxu0 %v1480
  %3370 = vmatmul.mubr.bf16.gmra.mrb[0].mxu0 %v1479
  %v3371 = vpop.f32.mrb[0].mxu0
  %v3372 = vadd.f32 %v3083, %v3371
  %v3373 = vpop.f32.mrb[0].mxu0
  %v3374 = vpop.f32.mrb[0].mxu0
  %v3375 = vadd.f32 %v3086, %v3374
  %v3376 = vpop.f32.mrb[0].mxu0
  %3377 = vmatprep.mubr.bf16.mxu0 %v1489
  %3378 = vmatmul.mubr.bf16.gmra.mrb[0].mxu0 %v1488
  %v3379 = vpop.f32.mrb[0].mxu0
  %v3380 = vadd.f32 %v3091, %v3379
  %v3381 = vpop.f32.mrb[0].mxu0
  %v3382 = vpop.f32.mrb[0].mxu0
  %v3383 = vadd.f32 %v3094, %v3382
  %v3384 = vpop.f32.mrb[0].mxu0
  %3385 = vmatprep.mubr.bf16.mxu0 %v1498
  %3386 = vmatmul.mubr.bf16.gmra.mrb[0].mxu0 %v1497
  %v3387 = vpop.f32.mrb[0].mxu0
  %v3388 = vadd.f32 %v3099, %v3387
  %v3389 = vpop.f32.mrb[0].mxu0
  %v3390 = vpop.f32.mrb[0].mxu0
  %v3391 = vadd.f32 %v3102, %v3390
  %v3392 = vpop.f32.mrb[0].mxu0
  %3393 = vmatprep.mubr.bf16.mxu0 %v1507
  %3394 = vmatmul.mubr.bf16.gmra.mrb[0].mxu0 %v1506
  %v3395 = vpop.f32.mrb[0].mxu0
  %v3396 = vadd.f32 %v3107, %v3395
  %v3397 = vpop.f32.mrb[0].mxu0
  %v3398 = vpop.f32.mrb[0].mxu0
  %v3399 = vadd.f32 %v3110, %v3398
  %v3400 = vpop.f32.mrb[0].mxu0
  %3401 = vmatprep.mubr.bf16.mxu0 %v1516
  %3402 = vmatmul.mubr.bf16.gmra.mrb[0].mxu0 %v1515
  %v3403 = vpop.f32.mrb[0].mxu0
  %v3404 = vadd.f32 %v3115, %v3403
  %v3405 = vpop.f32.mrb[0].mxu0
  %v3406 = vpop.f32.mrb[0].mxu0
  %v3407 = vadd.f32 %v3118, %v3406
  %v3408 = vpop.f32.mrb[0].mxu0
  %3409 = vmatprep.mubr.bf16.mxu0 %v1525
  %3410 = vmatmul.mubr.bf16.gmra.mrb[0].mxu0 %v1524
  %v3411 = vpop.f32.mrb[0].mxu0
  %v3412 = vadd.f32 %v3123, %v3411
  %v3413 = vpop.f32.mrb[0].mxu0
  %v3414 = vpop.f32.mrb[0].mxu0
  %v3415 = vadd.f32 %v3126, %v3414
  %v3416 = vpop.f32.mrb[0].mxu0
  %3417 = vmatprep.mubr.bf16.mxu0 %v1534
  %3418 = vmatmul.mubr.bf16.gmra.mrb[0].mxu0 %v1533
  %v3419 = vpop.f32.mrb[0].mxu0
  %v3420 = vadd.f32 %v3131, %v3419
  %v3421 = vpop.f32.mrb[0].mxu0
  %v3422 = vpop.f32.mrb[0].mxu0
  %v3423 = vadd.f32 %v3134, %v3422
  %v3424 = vpop.f32.mrb[0].mxu0
  %3425 = vmatprep.mubr.bf16.mxu0 %v1543
  %3426 = vmatmul.mubr.bf16.gmra.mrb[0].mxu0 %v1542
  %v3427 = vpop.f32.mrb[0].mxu0
  %v3428 = vadd.f32 %v3139, %v3427
  %v3429 = vpop.f32.mrb[0].mxu0
  %v3430 = vpop.f32.mrb[0].mxu0
  %v3431 = vadd.f32 %v3142, %v3430
  %v3432 = vpop.f32.mrb[0].mxu0
  %3433 = vmatprep.mubr.bf16.mxu0 %v1552
  %3434 = vmatmul.mubr.bf16.gmra.mrb[0].mxu0 %v1551
  %v3435 = vpop.f32.mrb[0].mxu0
  %v3436 = vadd.f32 %v3147, %v3435
  %v3437 = vpop.f32.mrb[0].mxu0
  %v3438 = vpop.f32.mrb[0].mxu0
  %v3439 = vadd.f32 %v3150, %v3438
  %v3440 = vpop.f32.mrb[0].mxu0
  %3441 = vmatprep.mubr.bf16.mxu0 %v1561
  %3442 = vmatmul.mubr.bf16.gmra.mrb[0].mxu0 %v1560
  %v3443 = vpop.f32.mrb[0].mxu0
  %v3444 = vadd.f32 %v3155, %v3443
  %v3445 = vpop.f32.mrb[0].mxu0
  %v3446 = vpop.f32.mrb[0].mxu0
  %v3447 = vadd.f32 %v3158, %v3446
  %v3448 = vpop.f32.mrb[0].mxu0
  %3449 = vmatprep.mubr.bf16.mxu0 %v1570
  %3450 = vmatmul.mubr.bf16.gmra.mrb[0].mxu0 %v1569
  %v3451 = vpop.f32.mrb[0].mxu0
  %v3452 = vadd.f32 %v3163, %v3451
  %v3453 = vpop.f32.mrb[0].mxu0
  %v3454 = vpop.f32.mrb[0].mxu0
  %v3455 = vadd.f32 %v3166, %v3454
  %v3456 = vpop.f32.mrb[0].mxu0
  %3457 = vmatprep.mubr.bf16.mxu0 %v1579
  %3458 = vmatmul.mubr.bf16.gmra.mrb[0].mxu0 %v1578
  %v3459 = vpop.f32.mrb[0].mxu0
  %v3460 = vadd.f32 %v3171, %v3459
  %v3461 = vpop.f32.mrb[0].mxu0
  %v3462 = vpop.f32.mrb[0].mxu0
  %v3463 = vadd.f32 %v3174, %v3462
  %v3464 = vpop.f32.mrb[0].mxu0
  %3465 = vmatprep.mubr.bf16.mxu0 %v1588
  %3466 = vmatmul.mubr.bf16.gmra.mrb[0].mxu0 %v1587
  %v3467 = vpop.f32.mrb[0].mxu0
  %v3468 = vadd.f32 %v3179, %v3467
  %v3469 = vpop.f32.mrb[0].mxu0
  %v3470 = vpop.f32.mrb[0].mxu0
  %v3471 = vadd.f32 %v3182, %v3470
  %v3472 = vpop.f32.mrb[0].mxu0
  %3473 = vmatprep.mubr.bf16.mxu0 %v1597
  %3474 = vmatmul.mubr.bf16.gmra.mrb[0].mxu0 %v1596
  %v3475 = vpop.f32.mrb[0].mxu0
  %v3476 = vadd.f32 %v3187, %v3475
  %v3477 = vpop.f32.mrb[0].mxu0
  %v3478 = vpop.f32.mrb[0].mxu0
  %v3479 = vadd.f32 %v3190, %v3478
  %v3480 = vpop.f32.mrb[0].mxu0
  %3481 = vmatprep.mubr.bf16.mxu0 %v1606
  %3482 = vmatmul.mubr.bf16.gmra.mrb[0].mxu0 %v1605
  %v3483 = vpop.f32.mrb[0].mxu0
  %v3484 = vadd.f32 %v3195, %v3483
  %v3485 = vpop.f32.mrb[0].mxu0
  %v3486 = vpop.f32.mrb[0].mxu0
  %v3487 = vadd.f32 %v3198, %v3486
  %v3488 = vpop.f32.mrb[0].mxu0
  %3489 = vmatprep.mubr.bf16.mxu0 %v1615
  %3490 = vmatmul.mubr.bf16.gmra.mrb[0].mxu0 %v1614
  %v3491 = vpop.f32.mrb[0].mxu0
  %v3492 = vadd.f32 %v3203, %v3491
  %v3493 = vpop.f32.mrb[0].mxu0
  %v3494 = vpop.f32.mrb[0].mxu0
  %v3495 = vadd.f32 %v3206, %v3494
  %v3496 = vpop.f32.mrb[0].mxu0
  %3497 = vmatprep.mubr.bf16.mxu0 %v1624
  %3498 = vmatmul.mubr.bf16.gmra.mrb[0].mxu0 %v1623
  %v3499 = vpop.f32.mrb[0].mxu0
  %v3500 = vadd.f32 %v3211, %v3499
  %v3501 = vpop.f32.mrb[0].mxu0
  %v3502 = vpop.f32.mrb[0].mxu0
  %v3503 = vadd.f32 %v3214, %v3502
  %v3504 = vpop.f32.mrb[0].mxu0
  %3505 = vmatprep.mubr.bf16.mxu0 %v1633
  %3506 = vmatmul.mubr.bf16.gmra.mrb[0].mxu0 %v1632
  %v3507 = vpop.f32.mrb[0].mxu0
  %v3508 = vadd.f32 %v3219, %v3507
  %v3509 = vpop.f32.mrb[0].mxu0
  %v3510 = vpop.f32.mrb[0].mxu0
  %v3511 = vadd.f32 %v3222, %v3510
  %v3512 = vpop.f32.mrb[0].mxu0
  %3513 = vmatprep.mubr.bf16.mxu0 %v1642
  %3514 = vmatmul.mubr.bf16.gmra.mrb[0].mxu0 %v1641
  %v3515 = vpop.f32.mrb[0].mxu0
  %v3516 = vadd.f32 %v3227, %v3515
  %v3517 = vpop.f32.mrb[0].mxu0
  %v3518 = vpop.f32.mrb[0].mxu0
  %v3519 = vadd.f32 %v3230, %v3518
  %v3520 = vpop.f32.mrb[0].mxu0
  %3521 = vmatprep.mubr.bf16.mxu0 %v1651
  %3522 = vmatmul.mubr.bf16.gmra.mrb[0].mxu0 %v1650
  %v3523 = vpop.f32.mrb[0].mxu0
  %v3524 = vadd.f32 %v3235, %v3523
  %v3525 = vpop.f32.mrb[0].mxu0
  %v3526 = vpop.f32.mrb[0].mxu0
  %v3527 = vadd.f32 %v3238, %v3526
  %v3528 = vpop.f32.mrb[0].mxu0
  %3529 = vmatprep.mubr.bf16.mxu0 %v1660
  %3530 = vmatmul.mubr.bf16.gmra.mrb[0].mxu0 %v1659
  %v3531 = vpop.f32.mrb[0].mxu0
  %v3532 = vadd.f32 %v3243, %v3531
  %v3533 = vpop.f32.mrb[0].mxu0
  %v3534 = vpop.f32.mrb[0].mxu0
  %v3535 = vadd.f32 %v3246, %v3534
  %v3536 = vpop.f32.mrb[0].mxu0
  %3537 = vdwg.mxu0
  %3538 = vmatprep.subr.bf16.mxu0 0
  %3539 = vmatpush1.bf16.msra.mxu0 %v2302
  %3540 = vmatprep.subr.bf16.mxu0 0
  %3541 = vmatpush1.bf16.msra.mxu0 %v2303
  %3542 = vmatprep.subr.bf16.mxu0 0
  %3543 = vmatpush1.bf16.msra.mxu0 %v2304
  %3544 = vmatprep.subr.bf16.mxu0 0
  %3545 = vmatpush1.bf16.msra.mxu0 %v2305
  %3546 = vmatprep.subr.bf16.mxu0 0
  %3547 = vmatpush1.bf16.msra.mxu0 %v2306
  %3548 = vmatprep.subr.bf16.mxu0 0
  %3549 = vmatpush1.bf16.msra.mxu0 %v2307
  %3550 = vmatprep.subr.bf16.mxu0 0
  %3551 = vmatpush1.bf16.msra.mxu0 %v2308
  %3552 = vmatprep.subr.bf16.mxu0 0
  %3553 = vmatpush1.bf16.msra.mxu0 %v2309
  %3554 = vmatprep.subr.bf16.mxu0 0
  %3555 = vmatpush1.bf16.msra.mxu0 0
  %3556 = vmatprep.subr.bf16.mxu0 0
  %3557 = vmatpush1.bf16.msra.mxu0 0
  %3558 = vmatprep.subr.bf16.mxu0 0
  %3559 = vmatpush1.bf16.msra.mxu0 0
  %3560 = vmatprep.subr.bf16.mxu0 0
  %3561 = vmatpush1.bf16.msra.mxu0 0
  %3562 = vmatprep.subr.bf16.mxu0 0
  %3563 = vmatpush1.bf16.msra.mxu0 0
  %3564 = vmatprep.subr.bf16.mxu0 0
  %3565 = vmatpush1.bf16.msra.mxu0 0
  %3566 = vmatprep.subr.bf16.mxu0 0
  %3567 = vmatpush1.bf16.msra.mxu0 0
  %3568 = vmatprep.subr.bf16.mxu0 0
  %3569 = vmatpush1.bf16.msra.mxu0 0
  %3570 = vmatprep.mubr.bf16.mxu0 0
  %3571 = vmatmul.mubr.bf16.gmra.mrb[0].mxu0 %v1382
  %v3572 = vpop.f32.mrb[0].mxu0
  %v3573 = vadd.f32 %v3284, %v3572
  %v3574 = vpop.f32.mrb[0].mxu0
  %v3575 = vpop.f32.mrb[0].mxu0
  %v3576 = vadd.f32 %v3287, %v3575
  %v3577 = vpop.f32.mrb[0].mxu0
  %3578 = vmatprep.mubr.bf16.mxu0 0
  %3579 = vmatmul.mubr.bf16.gmra.mrb[0].mxu0 %v1391
  %v3580 = vpop.f32.mrb[0].mxu0
  %v3581 = vadd.f32 %v3292, %v3580
  %v3582 = vpop.f32.mrb[0].mxu0
  %v3583 = vpop.f32.mrb[0].mxu0
  %v3584 = vadd.f32 %v3295, %v3583
  %v3585 = vpop.f32.mrb[0].mxu0
  %3586 = vmatprep.mubr.bf16.mxu0 0
  %3587 = vmatmul.mubr.bf16.gmra.mrb[0].mxu0 %v1400
  %v3588 = vpop.f32.mrb[0].mxu0
  %v3589 = vadd.f32 %v3300, %v3588
  %v3590 = vpop.f32.mrb[0].mxu0
  %v3591 = vpop.f32.mrb[0].mxu0
  %v3592 = vadd.f32 %v3303, %v3591
  %v3593 = vpop.f32.mrb[0].mxu0
  %3594 = vmatprep.mubr.bf16.mxu0 0
  %3595 = vmatmul.mubr.bf16.gmra.mrb[0].mxu0 %v1409
  %v3596 = vpop.f32.mrb[0].mxu0
  %v3597 = vadd.f32 %v3308, %v3596
  %v3598 = vpop.f32.mrb[0].mxu0
  %v3599 = vpop.f32.mrb[0].mxu0
  %v3600 = vadd.f32 %v3311, %v3599
  %v3601 = vpop.f32.mrb[0].mxu0
  %3602 = vmatprep.mubr.bf16.mxu0 0
  %3603 = vmatmul.mubr.bf16.gmra.mrb[0].mxu0 %v1418
  %v3604 = vpop.f32.mrb[0].mxu0
  %v3605 = vadd.f32 %v3316, %v3604
  %v3606 = vpop.f32.mrb[0].mxu0
  %v3607 = vpop.f32.mrb[0].mxu0
  %v3608 = vadd.f32 %v3319, %v3607
  %v3609 = vpop.f32.mrb[0].mxu0
  %3610 = vmatprep.mubr.bf16.mxu0 0
  %3611 = vmatmul.mubr.bf16.gmra.mrb[0].mxu0 %v1427
  %v3612 = vpop.f32.mrb[0].mxu0
  %v3613 = vadd.f32 %v3324, %v3612
  %v3614 = vpop.f32.mrb[0].mxu0
  %v3615 = vpop.f32.mrb[0].mxu0
  %v3616 = vadd.f32 %v3327, %v3615
  %v3617 = vpop.f32.mrb[0].mxu0
  %3618 = vmatprep.mubr.bf16.mxu0 0
  %3619 = vmatmul.mubr.bf16.gmra.mrb[0].mxu0 %v1436
  %v3620 = vpop.f32.mrb[0].mxu0
  %v3621 = vadd.f32 %v3332, %v3620
  %v3622 = vpop.f32.mrb[0].mxu0
  %v3623 = vpop.f32.mrb[0].mxu0
  %v3624 = vadd.f32 %v3335, %v3623
  %v3625 = vpop.f32.mrb[0].mxu0
  %3626 = vmatprep.mubr.bf16.mxu0 0
  %3627 = vmatmul.mubr.bf16.gmra.mrb[0].mxu0 %v1445
  %v3628 = vpop.f32.mrb[0].mxu0
  %v3629 = vadd.f32 %v3340, %v3628
  %v3630 = vpop.f32.mrb[0].mxu0
  %v3631 = vpop.f32.mrb[0].mxu0
  %v3632 = vadd.f32 %v3343, %v3631
  %v3633 = vpop.f32.mrb[0].mxu0
  %3634 = vmatprep.mubr.bf16.mxu0 0
  %3635 = vmatmul.mubr.bf16.gmra.mrb[0].mxu0 %v1454
  %v3636 = vpop.f32.mrb[0].mxu0
  %v3637 = vadd.f32 %v3348, %v3636
  %v3638 = vpop.f32.mrb[0].mxu0
  %v3639 = vpop.f32.mrb[0].mxu0
  %v3640 = vadd.f32 %v3351, %v3639
  %v3641 = vpop.f32.mrb[0].mxu0
  %3642 = vmatprep.mubr.bf16.mxu0 0
  %3643 = vmatmul.mubr.bf16.gmra.mrb[0].mxu0 %v1463
  %v3644 = vpop.f32.mrb[0].mxu0
  %v3645 = vadd.f32 %v3356, %v3644
  %v3646 = vpop.f32.mrb[0].mxu0
  %v3647 = vpop.f32.mrb[0].mxu0
  %v3648 = vadd.f32 %v3359, %v3647
  %v3649 = vpop.f32.mrb[0].mxu0
  %3650 = vmatprep.mubr.bf16.mxu0 0
  %3651 = vmatmul.mubr.bf16.gmra.mrb[0].mxu0 %v1472
  %v3652 = vpop.f32.mrb[0].mxu0
  %v3653 = vadd.f32 %v3364, %v3652
  %v3654 = vpop.f32.mrb[0].mxu0
  %v3655 = vpop.f32.mrb[0].mxu0
  %v3656 = vadd.f32 %v3367, %v3655
  %v3657 = vpop.f32.mrb[0].mxu0
  %3658 = vmatprep.mubr.bf16.mxu0 0
  %3659 = vmatmul.mubr.bf16.gmra.mrb[0].mxu0 %v1481
  %v3660 = vpop.f32.mrb[0].mxu0
  %v3661 = vadd.f32 %v3372, %v3660
  %v3662 = vpop.f32.mrb[0].mxu0
  %v3663 = vpop.f32.mrb[0].mxu0
  %v3664 = vadd.f32 %v3375, %v3663
  %v3665 = vpop.f32.mrb[0].mxu0
  %3666 = vmatprep.mubr.bf16.mxu0 0
  %3667 = vmatmul.mubr.bf16.gmra.mrb[0].mxu0 %v1490
  %v3668 = vpop.f32.mrb[0].mxu0
  %v3669 = vadd.f32 %v3380, %v3668
  %v3670 = vpop.f32.mrb[0].mxu0
  %v3671 = vpop.f32.mrb[0].mxu0
  %v3672 = vadd.f32 %v3383, %v3671
  %v3673 = vpop.f32.mrb[0].mxu0
  %3674 = vmatprep.mubr.bf16.mxu0 0
  %3675 = vmatmul.mubr.bf16.gmra.mrb[0].mxu0 %v1499
  %v3676 = vpop.f32.mrb[0].mxu0
  %v3677 = vadd.f32 %v3388, %v3676
  %v3678 = vpop.f32.mrb[0].mxu0
  %v3679 = vpop.f32.mrb[0].mxu0
  %v3680 = vadd.f32 %v3391, %v3679
  %v3681 = vpop.f32.mrb[0].mxu0
  %3682 = vmatprep.mubr.bf16.mxu0 0
  %3683 = vmatmul.mubr.bf16.gmra.mrb[0].mxu0 %v1508
  %v3684 = vpop.f32.mrb[0].mxu0
  %v3685 = vadd.f32 %v3396, %v3684
  %v3686 = vpop.f32.mrb[0].mxu0
  %v3687 = vpop.f32.mrb[0].mxu0
  %v3688 = vadd.f32 %v3399, %v3687
  %v3689 = vpop.f32.mrb[0].mxu0
  %3690 = vmatprep.mubr.bf16.mxu0 0
  %3691 = vmatmul.mubr.bf16.gmra.mrb[0].mxu0 %v1517
  %v3692 = vpop.f32.mrb[0].mxu0
  %v3693 = vadd.f32 %v3404, %v3692
  %v3694 = vpop.f32.mrb[0].mxu0
  %v3695 = vpop.f32.mrb[0].mxu0
  %v3696 = vadd.f32 %v3407, %v3695
  %v3697 = vpop.f32.mrb[0].mxu0
  %3698 = vmatprep.mubr.bf16.mxu0 0
  %3699 = vmatmul.mubr.bf16.gmra.mrb[0].mxu0 %v1526
  %v3700 = vpop.f32.mrb[0].mxu0
  %v3701 = vadd.f32 %v3412, %v3700
  %v3702 = vpop.f32.mrb[0].mxu0
  %v3703 = vpop.f32.mrb[0].mxu0
  %v3704 = vadd.f32 %v3415, %v3703
  %v3705 = vpop.f32.mrb[0].mxu0
  %3706 = vmatprep.mubr.bf16.mxu0 0
  %3707 = vmatmul.mubr.bf16.gmra.mrb[0].mxu0 %v1535
  %v3708 = vpop.f32.mrb[0].mxu0
  %v3709 = vadd.f32 %v3420, %v3708
  %v3710 = vpop.f32.mrb[0].mxu0
  %v3711 = vpop.f32.mrb[0].mxu0
  %v3712 = vadd.f32 %v3423, %v3711
  %v3713 = vpop.f32.mrb[0].mxu0
  %3714 = vmatprep.mubr.bf16.mxu0 0
  %3715 = vmatmul.mubr.bf16.gmra.mrb[0].mxu0 %v1544
  %v3716 = vpop.f32.mrb[0].mxu0
  %v3717 = vadd.f32 %v3428, %v3716
  %v3718 = vpop.f32.mrb[0].mxu0
  %v3719 = vpop.f32.mrb[0].mxu0
  %v3720 = vadd.f32 %v3431, %v3719
  %v3721 = vpop.f32.mrb[0].mxu0
  %3722 = vmatprep.mubr.bf16.mxu0 0
  %3723 = vmatmul.mubr.bf16.gmra.mrb[0].mxu0 %v1553
  %v3724 = vpop.f32.mrb[0].mxu0
  %v3725 = vadd.f32 %v3436, %v3724
  %v3726 = vpop.f32.mrb[0].mxu0
  %v3727 = vpop.f32.mrb[0].mxu0
  %v3728 = vadd.f32 %v3439, %v3727
  %v3729 = vpop.f32.mrb[0].mxu0
  %3730 = vmatprep.mubr.bf16.mxu0 0
  %3731 = vmatmul.mubr.bf16.gmra.mrb[0].mxu0 %v1562
  %v3732 = vpop.f32.mrb[0].mxu0
  %v3733 = vadd.f32 %v3444, %v3732
  %v3734 = vpop.f32.mrb[0].mxu0
  %v3735 = vpop.f32.mrb[0].mxu0
  %v3736 = vadd.f32 %v3447, %v3735
  %v3737 = vpop.f32.mrb[0].mxu0
  %3738 = vmatprep.mubr.bf16.mxu0 0
  %3739 = vmatmul.mubr.bf16.gmra.mrb[0].mxu0 %v1571
  %v3740 = vpop.f32.mrb[0].mxu0
  %v3741 = vadd.f32 %v3452, %v3740
  %v3742 = vpop.f32.mrb[0].mxu0
  %v3743 = vpop.f32.mrb[0].mxu0
  %v3744 = vadd.f32 %v3455, %v3743
  %v3745 = vpop.f32.mrb[0].mxu0
  %3746 = vmatprep.mubr.bf16.mxu0 0
  %3747 = vmatmul.mubr.bf16.gmra.mrb[0].mxu0 %v1580
  %v3748 = vpop.f32.mrb[0].mxu0
  %v3749 = vadd.f32 %v3460, %v3748
  %v3750 = vpop.f32.mrb[0].mxu0
  %v3751 = vpop.f32.mrb[0].mxu0
  %v3752 = vadd.f32 %v3463, %v3751
  %v3753 = vpop.f32.mrb[0].mxu0
  %3754 = vmatprep.mubr.bf16.mxu0 0
  %3755 = vmatmul.mubr.bf16.gmra.mrb[0].mxu0 %v1589
  %v3756 = vpop.f32.mrb[0].mxu0
  %v3757 = vadd.f32 %v3468, %v3756
  %v3758 = vpop.f32.mrb[0].mxu0
  %v3759 = vpop.f32.mrb[0].mxu0
  %v3760 = vadd.f32 %v3471, %v3759
  %v3761 = vpop.f32.mrb[0].mxu0
  %3762 = vmatprep.mubr.bf16.mxu0 0
  %3763 = vmatmul.mubr.bf16.gmra.mrb[0].mxu0 %v1598
  %v3764 = vpop.f32.mrb[0].mxu0
  %v3765 = vadd.f32 %v3476, %v3764
  %v3766 = vpop.f32.mrb[0].mxu0
  %v3767 = vpop.f32.mrb[0].mxu0
  %v3768 = vadd.f32 %v3479, %v3767
  %v3769 = vpop.f32.mrb[0].mxu0
  %3770 = vmatprep.mubr.bf16.mxu0 0
  %3771 = vmatmul.mubr.bf16.gmra.mrb[0].mxu0 %v1607
  %v3772 = vpop.f32.mrb[0].mxu0
  %v3773 = vadd.f32 %v3484, %v3772
  %v3774 = vpop.f32.mrb[0].mxu0
  %v3775 = vpop.f32.mrb[0].mxu0
  %v3776 = vadd.f32 %v3487, %v3775
  %v3777 = vpop.f32.mrb[0].mxu0
  %3778 = vmatprep.mubr.bf16.mxu0 0
  %3779 = vmatmul.mubr.bf16.gmra.mrb[0].mxu0 %v1616
  %v3780 = vpop.f32.mrb[0].mxu0
  %v3781 = vadd.f32 %v3492, %v3780
  %v3782 = vpop.f32.mrb[0].mxu0
  %v3783 = vpop.f32.mrb[0].mxu0
  %v3784 = vadd.f32 %v3495, %v3783
  %v3785 = vpop.f32.mrb[0].mxu0
  %3786 = vmatprep.mubr.bf16.mxu0 0
  %3787 = vmatmul.mubr.bf16.gmra.mrb[0].mxu0 %v1625
  %v3788 = vpop.f32.mrb[0].mxu0
  %v3789 = vadd.f32 %v3500, %v3788
  %v3790 = vpop.f32.mrb[0].mxu0
  %v3791 = vpop.f32.mrb[0].mxu0
  %v3792 = vadd.f32 %v3503, %v3791
  %v3793 = vpop.f32.mrb[0].mxu0
  %3794 = vmatprep.mubr.bf16.mxu0 0
  %3795 = vmatmul.mubr.bf16.gmra.mrb[0].mxu0 %v1634
  %v3796 = vpop.f32.mrb[0].mxu0
  %v3797 = vadd.f32 %v3508, %v3796
  %v3798 = vpop.f32.mrb[0].mxu0
  %v3799 = vpop.f32.mrb[0].mxu0
  %v3800 = vadd.f32 %v3511, %v3799
  %v3801 = vpop.f32.mrb[0].mxu0
  %3802 = vmatprep.mubr.bf16.mxu0 0
  %3803 = vmatmul.mubr.bf16.gmra.mrb[0].mxu0 %v1643
  %v3804 = vpop.f32.mrb[0].mxu0
  %v3805 = vadd.f32 %v3516, %v3804
  %v3806 = vpop.f32.mrb[0].mxu0
  %v3807 = vpop.f32.mrb[0].mxu0
  %v3808 = vadd.f32 %v3519, %v3807
  %v3809 = vpop.f32.mrb[0].mxu0
  %3810 = vmatprep.mubr.bf16.mxu0 0
  %3811 = vmatmul.mubr.bf16.gmra.mrb[0].mxu0 %v1652
  %v3812 = vpop.f32.mrb[0].mxu0
  %v3813 = vadd.f32 %v3524, %v3812
  %v3814 = vpop.f32.mrb[0].mxu0
  %v3815 = vpop.f32.mrb[0].mxu0
  %v3816 = vadd.f32 %v3527, %v3815
  %v3817 = vpop.f32.mrb[0].mxu0
  %3818 = vmatprep.mubr.bf16.mxu0 0
  %3819 = vmatmul.mubr.bf16.gmra.mrb[0].mxu0 %v1661
  %v3820 = vpop.f32.mrb[0].mxu0
  %v3821 = vadd.f32 %v3532, %v3820
  %v3822 = vpop.f32.mrb[0].mxu0
  %v3823 = vpop.f32.mrb[0].mxu0
  %v3824 = vadd.f32 %v3535, %v3823
  %v3825 = vpop.f32.mrb[0].mxu0
  %3826 = vdwg.mxu0
  %v3827 = vpack.c.bf16 %v3576, %v3573
  %v3828 = vpack.c.bf16 %v3584, %v3581
  %v3829 = vpack.c.bf16 %v3592, %v3589
  %v3830 = vpack.c.bf16 %v3600, %v3597
  %v3831 = vpack.c.bf16 %v3608, %v3605
  %v3832 = vpack.c.bf16 %v3616, %v3613
  %v3833 = vpack.c.bf16 %v3624, %v3621
  %v3834 = vpack.c.bf16 %v3632, %v3629
  %v3835 = vpack.c.bf16 %v3640, %v3637
  %v3836 = vpack.c.bf16 %v3648, %v3645
  %v3837 = vpack.c.bf16 %v3656, %v3653
  %v3838 = vpack.c.bf16 %v3664, %v3661
  %v3839 = vpack.c.bf16 %v3672, %v3669
  %v3840 = vpack.c.bf16 %v3680, %v3677
  %v3841 = vpack.c.bf16 %v3688, %v3685
  %v3842 = vpack.c.bf16 %v3696, %v3693
  %v3843 = vpack.c.bf16 %v3704, %v3701
  %v3844 = vpack.c.bf16 %v3712, %v3709
  %v3845 = vpack.c.bf16 %v3720, %v3717
  %v3846 = vpack.c.bf16 %v3728, %v3725
  %v3847 = vpack.c.bf16 %v3736, %v3733
  %v3848 = vpack.c.bf16 %v3744, %v3741
  %v3849 = vpack.c.bf16 %v3752, %v3749
  %v3850 = vpack.c.bf16 %v3760, %v3757
  %v3851 = vpack.c.bf16 %v3768, %v3765
  %v3852 = vpack.c.bf16 %v3776, %v3773
  %v3853 = vpack.c.bf16 %v3784, %v3781
  %v3854 = vpack.c.bf16 %v3792, %v3789
  %v3855 = vpack.c.bf16 %v3800, %v3797
  %v3856 = vpack.c.bf16 %v3808, %v3805
  %v3857 = vpack.c.bf16 %v3816, %v3813
  %v3858 = vpack.c.bf16 %v3824, %v3821
  %v3891 = vunpack.c.l.b16 %v3827
  %v3892 = vunpack.c.h.b16 %v3827
  %v3893 = vunpack.c.l.b16 %v3828
  %v3894 = vunpack.c.h.b16 %v3828
  %v3895 = vunpack.c.l.b16 %v3829
  %v3896 = vunpack.c.h.b16 %v3829
  %v3897 = vunpack.c.l.b16 %v3830
  %v3898 = vunpack.c.h.b16 %v3830
  %v3899 = vunpack.c.l.b16 %v3831
  %v3900 = vunpack.c.h.b16 %v3831
  %v3901 = vunpack.c.l.b16 %v3832
  %v3902 = vunpack.c.h.b16 %v3832
  %v3903 = vunpack.c.l.b16 %v3833
  %v3904 = vunpack.c.h.b16 %v3833
  %v3905 = vunpack.c.l.b16 %v3834
  %v3906 = vunpack.c.h.b16 %v3834
  %v3907 = vunpack.c.l.b16 %v3835
  %v3908 = vunpack.c.h.b16 %v3835
  %v3909 = vunpack.c.l.b16 %v3836
  %v3910 = vunpack.c.h.b16 %v3836
  %v3911 = vunpack.c.l.b16 %v3837
  %v3912 = vunpack.c.h.b16 %v3837
  %v3913 = vunpack.c.l.b16 %v3838
  %v3914 = vunpack.c.h.b16 %v3838
  %v3915 = vunpack.c.l.b16 %v3839
  %v3916 = vunpack.c.h.b16 %v3839
  %v3917 = vunpack.c.l.b16 %v3840
  %v3918 = vunpack.c.h.b16 %v3840
  %v3919 = vunpack.c.l.b16 %v3841
  %v3920 = vunpack.c.h.b16 %v3841
  %v3921 = vunpack.c.l.b16 %v3842
  %v3922 = vunpack.c.h.b16 %v3842
  %v3923 = vunpack.c.l.b16 %v3843
  %v3924 = vunpack.c.h.b16 %v3843
  %v3925 = vunpack.c.l.b16 %v3844
  %v3926 = vunpack.c.h.b16 %v3844
  %v3927 = vunpack.c.l.b16 %v3845
  %v3928 = vunpack.c.h.b16 %v3845
  %v3929 = vunpack.c.l.b16 %v3846
  %v3930 = vunpack.c.h.b16 %v3846
  %v3931 = vunpack.c.l.b16 %v3847
  %v3932 = vunpack.c.h.b16 %v3847
  %v3933 = vunpack.c.l.b16 %v3848
  %v3934 = vunpack.c.h.b16 %v3848
  %v3935 = vunpack.c.l.b16 %v3849
  %v3936 = vunpack.c.h.b16 %v3849
  %v3937 = vunpack.c.l.b16 %v3850
  %v3938 = vunpack.c.h.b16 %v3850
  %v3939 = vunpack.c.l.b16 %v3851
  %v3940 = vunpack.c.h.b16 %v3851
  %v3941 = vunpack.c.l.b16 %v3852
  %v3942 = vunpack.c.h.b16 %v3852
  %v3943 = vunpack.c.l.b16 %v3853
  %v3944 = vunpack.c.h.b16 %v3853
  %v3945 = vunpack.c.l.b16 %v3854
  %v3946 = vunpack.c.h.b16 %v3854
  %v3947 = vunpack.c.l.b16 %v3855
  %v3948 = vunpack.c.h.b16 %v3855
  %v3949 = vunpack.c.l.b16 %v3856
  %v3950 = vunpack.c.h.b16 %v3856
  %v3951 = vunpack.c.l.b16 %v3857
  %v3952 = vunpack.c.h.b16 %v3857
  %v3953 = vunpack.c.l.b16 %v3858
  %v3954 = vunpack.c.h.b16 %v3858
  %v3955 = vpack.c.b16 %v3891, %v3891
  %v3956 = vpack.c.b16 %v3892, %v3892
  %v3957 = vpack.c.b16 %v3893, %v3893
  %v3958 = vpack.c.b16 %v3894, %v3894
  %v3959 = vpack.c.b16 %v3895, %v3895
  %v3960 = vpack.c.b16 %v3896, %v3896
  %v3961 = vpack.c.b16 %v3897, %v3897
  %v3962 = vpack.c.b16 %v3898, %v3898
  %v3963 = vpack.c.b16 %v3899, %v3899
  %v3964 = vpack.c.b16 %v3900, %v3900
  %v3965 = vpack.c.b16 %v3901, %v3901
  %v3966 = vpack.c.b16 %v3902, %v3902
  %v3967 = vpack.c.b16 %v3903, %v3903
  %v3968 = vpack.c.b16 %v3904, %v3904
  %v3969 = vpack.c.b16 %v3905, %v3905
  %v3970 = vpack.c.b16 %v3906, %v3906
  %v3971 = vpack.c.b16 %v3907, %v3907
  %v3972 = vpack.c.b16 %v3908, %v3908
  %v3973 = vpack.c.b16 %v3909, %v3909
  %v3974 = vpack.c.b16 %v3910, %v3910
  %v3975 = vpack.c.b16 %v3911, %v3911
  %v3976 = vpack.c.b16 %v3912, %v3912
  %v3977 = vpack.c.b16 %v3913, %v3913
  %v3978 = vpack.c.b16 %v3914, %v3914
  %v3979 = vpack.c.b16 %v3915, %v3915
  %v3980 = vpack.c.b16 %v3916, %v3916
  %v3981 = vpack.c.b16 %v3917, %v3917
  %v3982 = vpack.c.b16 %v3918, %v3918
  %v3983 = vpack.c.b16 %v3919, %v3919
  %v3984 = vpack.c.b16 %v3920, %v3920
  %v3985 = vpack.c.b16 %v3921, %v3921
  %v3986 = vpack.c.b16 %v3922, %v3922
  %v3987 = vpack.c.b16 %v3923, %v3923
  %v3988 = vpack.c.b16 %v3924, %v3924
  %v3989 = vpack.c.b16 %v3925, %v3925
  %v3990 = vpack.c.b16 %v3926, %v3926
  %v3991 = vpack.c.b16 %v3927, %v3927
  %v3992 = vpack.c.b16 %v3928, %v3928
  %v3993 = vpack.c.b16 %v3929, %v3929
  %v3994 = vpack.c.b16 %v3930, %v3930
  %v3995 = vpack.c.b16 %v3931, %v3931
  %v3996 = vpack.c.b16 %v3932, %v3932
  %v3997 = vpack.c.b16 %v3933, %v3933
  %v3998 = vpack.c.b16 %v3934, %v3934
  %v3999 = vpack.c.b16 %v3935, %v3935
  %v4000 = vpack.c.b16 %v3936, %v3936
  %v4001 = vpack.c.b16 %v3937, %v3937
  %v4002 = vpack.c.b16 %v3938, %v3938
  %v4003 = vpack.c.b16 %v3939, %v3939
  %v4004 = vpack.c.b16 %v3940, %v3940
  %v4005 = vpack.c.b16 %v3941, %v3941
  %v4006 = vpack.c.b16 %v3942, %v3942
  %v4007 = vpack.c.b16 %v3943, %v3943
  %v4008 = vpack.c.b16 %v3944, %v3944
  %v4009 = vpack.c.b16 %v3945, %v3945
  %v4010 = vpack.c.b16 %v3946, %v3946
  %v4011 = vpack.c.b16 %v3947, %v3947
  %v4012 = vpack.c.b16 %v3948, %v3948
  %v4013 = vpack.c.b16 %v3949, %v3949
  %v4014 = vpack.c.b16 %v3950, %v3950
  %v4015 = vpack.c.b16 %v3951, %v3951
  %v4016 = vpack.c.b16 %v3952, %v3952
  %v4017 = vpack.c.b16 %v3953, %v3953
  %v4018 = vpack.c.b16 %v3954, %v3954
  %4083 = vst [vmem:[%s2] sm:$0xf] %v3955
  %4084 = vst [vmem:[%s2 + $0x4] sm:$0xf] %v3956
  %4085 = vst [vmem:[%s2 + $0x8] sm:$0xf] %v3957
  %4086 = vst [vmem:[%s2 + $0xc] sm:$0xf] %v3958
  %4087 = vst [vmem:[%s2 + $0x10] sm:$0xf] %v3959
  %4088 = vst [vmem:[%s2 + $0x14] sm:$0xf] %v3960
  %4089 = vst [vmem:[%s2 + $0x18] sm:$0xf] %v3961
  %4090 = vst [vmem:[%s2 + $0x1c] sm:$0xf] %v3962
  %4091 = vst [vmem:[%s2 + $0x20] sm:$0xf] %v3963
  %4092 = vst [vmem:[%s2 + $0x24] sm:$0xf] %v3964
  %4093 = vst [vmem:[%s2 + $0x28] sm:$0xf] %v3965
  %4094 = vst [vmem:[%s2 + $0x2c] sm:$0xf] %v3966
  %4095 = vst [vmem:[%s2 + $0x30] sm:$0xf] %v3967
  %4096 = vst [vmem:[%s2 + $0x34] sm:$0xf] %v3968
  %4097 = vst [vmem:[%s2 + $0x38] sm:$0xf] %v3969
  %4098 = vst [vmem:[%s2 + $0x3c] sm:$0xf] %v3970
  %4099 = vst [vmem:[%s2 + $0x40] sm:$0xf] %v3971
  %4100 = vst [vmem:[%s2 + $0x44] sm:$0xf] %v3972
  %4101 = vst [vmem:[%s2 + $0x48] sm:$0xf] %v3973
  %4102 = vst [vmem:[%s2 + $0x4c] sm:$0xf] %v3974
  %4103 = vst [vmem:[%s2 + $0x50] sm:$0xf] %v3975
  %4104 = vst [vmem:[%s2 + $0x54] sm:$0xf] %v3976
  %4105 = vst [vmem:[%s2 + $0x58] sm:$0xf] %v3977
  %4106 = vst [vmem:[%s2 + $0x5c] sm:$0xf] %v3978
  %4107 = vst [vmem:[%s2 + $0x60] sm:$0xf] %v3979
  %4108 = vst [vmem:[%s2 + $0x64] sm:$0xf] %v3980
  %4109 = vst [vmem:[%s2 + $0x68] sm:$0xf] %v3981
  %4110 = vst [vmem:[%s2 + $0x6c] sm:$0xf] %v3982
  %4111 = vst [vmem:[%s2 + $0x70] sm:$0xf] %v3983
  %4112 = vst [vmem:[%s2 + $0x74] sm:$0xf] %v3984
  %4113 = vst [vmem:[%s2 + $0x78] sm:$0xf] %v3985
  %4114 = vst [vmem:[%s2 + $0x7c] sm:$0xf] %v3986
  %4115 = vst [vmem:[%s2 + $0x80] sm:$0xf] %v3987
  %4116 = vst [vmem:[%s2 + $0x84] sm:$0xf] %v3988
  %4117 = vst [vmem:[%s2 + $0x88] sm:$0xf] %v3989
  %4118 = vst [vmem:[%s2 + $0x8c] sm:$0xf] %v3990
  %4119 = vst [vmem:[%s2 + $0x90] sm:$0xf] %v3991
  %4120 = vst [vmem:[%s2 + $0x94] sm:$0xf] %v3992
  %4121 = vst [vmem:[%s2 + $0x98] sm:$0xf] %v3993
  %4122 = vst [vmem:[%s2 + $0x9c] sm:$0xf] %v3994
  %4123 = vst [vmem:[%s2 + $0xa0] sm:$0xf] %v3995
  %4124 = vst [vmem:[%s2 + $0xa4] sm:$0xf] %v3996
  %4125 = vst [vmem:[%s2 + $0xa8] sm:$0xf] %v3997
  %4126 = vst [vmem:[%s2 + $0xac] sm:$0xf] %v3998
  %4127 = vst [vmem:[%s2 + $0xb0] sm:$0xf] %v3999
  %4128 = vst [vmem:[%s2 + $0xb4] sm:$0xf] %v4000
  %4129 = vst [vmem:[%s2 + $0xb8] sm:$0xf] %v4001
  %4130 = vst [vmem:[%s2 + $0xbc] sm:$0xf] %v4002
  %4131 = vst [vmem:[%s2 + $0xc0] sm:$0xf] %v4003
  %4132 = vst [vmem:[%s2 + $0xc4] sm:$0xf] %v4004
  %4133 = vst [vmem:[%s2 + $0xc8] sm:$0xf] %v4005
  %4134 = vst [vmem:[%s2 + $0xcc] sm:$0xf] %v4006
  %4135 = vst [vmem:[%s2 + $0xd0] sm:$0xf] %v4007
  %4136 = vst [vmem:[%s2 + $0xd4] sm:$0xf] %v4008
  %4137 = vst [vmem:[%s2 + $0xd8] sm:$0xf] %v4009
  %4138 = vst [vmem:[%s2 + $0xdc] sm:$0xf] %v4010
  %4139 = vst [vmem:[%s2 + $0xe0] sm:$0xf] %v4011
  %4140 = vst [vmem:[%s2 + $0xe4] sm:$0xf] %v4012
  %4141 = vst [vmem:[%s2 + $0xe8] sm:$0xf] %v4013
  %4142 = vst [vmem:[%s2 + $0xec] sm:$0xf] %v4014
  %4143 = vst [vmem:[%s2 + $0xf0] sm:$0xf] %v4015
  %4144 = vst [vmem:[%s2 + $0xf4] sm:$0xf] %v4016
  %4145 = vst [vmem:[%s2 + $0xf8] sm:$0xf] %v4017
  %4146 = vst [vmem:[%s2 + $0xfc] sm:$0xf] %v4018
  %v4147 = vadd.f32 %v3573, %v3576
  %v4148 = vadd.f32 %v4147, %v3581
  %v4149 = vadd.f32 %v4148, %v3584
  %v4150 = vadd.f32 %v4149, %v3589
  %v4151 = vadd.f32 %v4150, %v3592
  %v4152 = vadd.f32 %v4151, %v3597
  %v4153 = vadd.f32 %v4152, %v3600
  %v4154 = vadd.f32 %v4153, %v3605
  %v4155 = vadd.f32 %v4154, %v3608
  %v4156 = vadd.f32 %v4155, %v3613
  %v4157 = vadd.f32 %v4156, %v3616
  %v4158 = vadd.f32 %v4157, %v3621
  %v4159 = vadd.f32 %v4158, %v3624
  %v4160 = vadd.f32 %v4159, %v3629
  %v4161 = vadd.f32 %v4160, %v3632
  %v4162 = vadd.f32 %v4161, %v3637
  %v4163 = vadd.f32 %v4162, %v3640
  %v4164 = vadd.f32 %v4163, %v3645
  %v4165 = vadd.f32 %v4164, %v3648
  %v4166 = vadd.f32 %v4165, %v3653
  %v4167 = vadd.f32 %v4166, %v3656
  %v4168 = vadd.f32 %v4167, %v3661
  %v4169 = vadd.f32 %v4168, %v3664
  %v4170 = vadd.f32 %v4169, %v3669
  %v4171 = vadd.f32 %v4170, %v3672
  %v4172 = vadd.f32 %v4171, %v3677
  %v4173 = vadd.f32 %v4172, %v3680
  %v4174 = vadd.f32 %v4173, %v3685
  %v4175 = vadd.f32 %v4174, %v3688
  %v4176 = vadd.f32 %v4175, %v3693
  %v4177 = vadd.f32 %v4176, %v3696
  %v4178 = vadd.f32 %v4177, %v3701
  %v4179 = vadd.f32 %v4178, %v3704
  %v4180 = vadd.f32 %v4179, %v3709
  %v4181 = vadd.f32 %v4180, %v3712
  %v4182 = vadd.f32 %v4181, %v3717
  %v4183 = vadd.f32 %v4182, %v3720
  %v4184 = vadd.f32 %v4183, %v3725
  %v4185 = vadd.f32 %v4184, %v3728
  %v4186 = vadd.f32 %v4185, %v3733
  %v4187 = vadd.f32 %v4186, %v3736
  %v4188 = vadd.f32 %v4187, %v3741
  %v4189 = vadd.f32 %v4188, %v3744
  %v4190 = vadd.f32 %v4189, %v3749
  %v4191 = vadd.f32 %v4190, %v3752
  %v4192 = vadd.f32 %v4191, %v3757
  %v4193 = vadd.f32 %v4192, %v3760
  %v4194 = vadd.f32 %v4193, %v3765
  %v4195 = vadd.f32 %v4194, %v3768
  %v4196 = vadd.f32 %v4195, %v3773
  %v4197 = vadd.f32 %v4196, %v3776
  %v4198 = vadd.f32 %v4197, %v3781
  %v4199 = vadd.f32 %v4198, %v3784
  %v4200 = vadd.f32 %v4199, %v3789
  %v4201 = vadd.f32 %v4200, %v3792
  %v4202 = vadd.f32 %v4201, %v3797
  %v4203 = vadd.f32 %v4202, %v3800
  %v4204 = vadd.f32 %v4203, %v3805
  %v4205 = vadd.f32 %v4204, %v3808
  %v4206 = vadd.f32 %v4205, %v3813
  %v4207 = vadd.f32 %v4206, %v3816
  %v4208 = vadd.f32 %v4207, %v3821
  %v4209 = vadd.f32 %v4208, %v3824
  %v4210 = vrot.slane %v4209, 4
  %v4211 = vadd.f32 %v4209, %v4210
  %v4212 = vrot.slane %v4211, 2
  %v4213 = vadd.f32 %v4211, %v4212
  %v4214 = vrot.slane %v4213, 1
  %v4215 = vadd.f32 %v4213, %v4214
  %v4216 = vmul.f32 %v3573, %v3573
  %v4217 = vmul.f32 %v3576, %v3576
  %v4218 = vmul.f32 %v3581, %v3581
  %v4219 = vmul.f32 %v3584, %v3584
  %v4220 = vmul.f32 %v3589, %v3589
  %v4221 = vmul.f32 %v3592, %v3592
  %v4222 = vmul.f32 %v3597, %v3597
  %v4223 = vmul.f32 %v3600, %v3600
  %v4224 = vmul.f32 %v3605, %v3605
  %v4225 = vmul.f32 %v3608, %v3608
  %v4226 = vmul.f32 %v3613, %v3613
  %v4227 = vmul.f32 %v3616, %v3616
  %v4228 = vmul.f32 %v3621, %v3621
  %v4229 = vmul.f32 %v3624, %v3624
  %v4230 = vmul.f32 %v3629, %v3629
  %v4231 = vmul.f32 %v3632, %v3632
  %v4232 = vmul.f32 %v3637, %v3637
  %v4233 = vmul.f32 %v3640, %v3640
  %v4234 = vmul.f32 %v3645, %v3645
  %v4235 = vmul.f32 %v3648, %v3648
  %v4236 = vmul.f32 %v3653, %v3653
  %v4237 = vmul.f32 %v3656, %v3656
  %v4238 = vmul.f32 %v3661, %v3661
  %v4239 = vmul.f32 %v3664, %v3664
  %v4240 = vmul.f32 %v3669, %v3669
  %v4241 = vmul.f32 %v3672, %v3672
  %v4242 = vmul.f32 %v3677, %v3677
  %v4243 = vmul.f32 %v3680, %v3680
  %v4244 = vmul.f32 %v3685, %v3685
  %v4245 = vmul.f32 %v3688, %v3688
  %v4246 = vmul.f32 %v3693, %v3693
  %v4247 = vmul.f32 %v3696, %v3696
  %v4248 = vmul.f32 %v3701, %v3701
  %v4249 = vmul.f32 %v3704, %v3704
  %v4250 = vmul.f32 %v3709, %v3709
  %v4251 = vmul.f32 %v3712, %v3712
  %v4252 = vmul.f32 %v3717, %v3717
  %v4253 = vmul.f32 %v3720, %v3720
  %v4254 = vmul.f32 %v3725, %v3725
  %v4255 = vmul.f32 %v3728, %v3728
  %v4256 = vmul.f32 %v3733, %v3733
  %v4257 = vmul.f32 %v3736, %v3736
  %v4258 = vmul.f32 %v3741, %v3741
  %v4259 = vmul.f32 %v3744, %v3744
  %v4260 = vmul.f32 %v3749, %v3749
  %v4261 = vmul.f32 %v3752, %v3752
  %v4262 = vmul.f32 %v3757, %v3757
  %v4263 = vmul.f32 %v3760, %v3760
  %v4264 = vmul.f32 %v3765, %v3765
  %v4265 = vmul.f32 %v3768, %v3768
  %v4266 = vmul.f32 %v3773, %v3773
  %v4267 = vmul.f32 %v3776, %v3776
  %v4268 = vmul.f32 %v3781, %v3781
  %v4269 = vmul.f32 %v3784, %v3784
  %v4270 = vmul.f32 %v3789, %v3789
  %v4271 = vmul.f32 %v3792, %v3792
  %v4272 = vmul.f32 %v3797, %v3797
  %v4273 = vmul.f32 %v3800, %v3800
  %v4274 = vmul.f32 %v3805, %v3805
  %v4275 = vmul.f32 %v3808, %v3808
  %v4276 = vmul.f32 %v3813, %v3813
  %v4277 = vmul.f32 %v3816, %v3816
  %v4278 = vmul.f32 %v3821, %v3821
  %v4279 = vmul.f32 %v3824, %v3824
  %v4280 = vadd.f32 %v4216, %v4217
  %v4281 = vadd.f32 %v4280, %v4218
  %v4282 = vadd.f32 %v4281, %v4219
  %v4283 = vadd.f32 %v4282, %v4220
  %v4284 = vadd.f32 %v4283, %v4221
  %v4285 = vadd.f32 %v4284, %v4222
  %v4286 = vadd.f32 %v4285, %v4223
  %v4287 = vadd.f32 %v4286, %v4224
  %v4288 = vadd.f32 %v4287, %v4225
  %v4289 = vadd.f32 %v4288, %v4226
  %v4290 = vadd.f32 %v4289, %v4227
  %v4291 = vadd.f32 %v4290, %v4228
  %v4292 = vadd.f32 %v4291, %v4229
  %v4293 = vadd.f32 %v4292, %v4230
  %v4294 = vadd.f32 %v4293, %v4231
  %v4295 = vadd.f32 %v4294, %v4232
  %v4296 = vadd.f32 %v4295, %v4233
  %v4297 = vadd.f32 %v4296, %v4234
  %v4298 = vadd.f32 %v4297, %v4235
  %v4299 = vadd.f32 %v4298, %v4236
  %v4300 = vadd.f32 %v4299, %v4237
  %v4301 = vadd.f32 %v4300, %v4238
  %v4302 = vadd.f32 %v4301, %v4239
  %v4303 = vadd.f32 %v4302, %v4240
  %v4304 = vadd.f32 %v4303, %v4241
  %v4305 = vadd.f32 %v4304, %v4242
  %v4306 = vadd.f32 %v4305, %v4243
  %v4307 = vadd.f32 %v4306, %v4244
  %v4308 = vadd.f32 %v4307, %v4245
  %v4309 = vadd.f32 %v4308, %v4246
  %v4310 = vadd.f32 %v4309, %v4247
  %v4311 = vadd.f32 %v4310, %v4248
  %v4312 = vadd.f32 %v4311, %v4249
  %v4313 = vadd.f32 %v4312, %v4250
  %v4314 = vadd.f32 %v4313, %v4251
  %v4315 = vadd.f32 %v4314, %v4252
  %v4316 = vadd.f32 %v4315, %v4253
  %v4317 = vadd.f32 %v4316, %v4254
  %v4318 = vadd.f32 %v4317, %v4255
  %v4319 = vadd.f32 %v4318, %v4256
  %v4320 = vadd.f32 %v4319, %v4257
  %v4321 = vadd.f32 %v4320, %v4258
  %v4322 = vadd.f32 %v4321, %v4259
  %v4323 = vadd.f32 %v4322, %v4260
  %v4324 = vadd.f32 %v4323, %v4261
  %v4325 = vadd.f32 %v4324, %v4262
  %v4326 = vadd.f32 %v4325, %v4263
  %v4327 = vadd.f32 %v4326, %v4264
  %v4328 = vadd.f32 %v4327, %v4265
  %v4329 = vadd.f32 %v4328, %v4266
  %v4330 = vadd.f32 %v4329, %v4267
  %v4331 = vadd.f32 %v4330, %v4268
  %v4332 = vadd.f32 %v4331, %v4269
  %v4333 = vadd.f32 %v4332, %v4270
  %v4334 = vadd.f32 %v4333, %v4271
  %v4335 = vadd.f32 %v4334, %v4272
  %v4336 = vadd.f32 %v4335, %v4273
  %v4337 = vadd.f32 %v4336, %v4274
  %v4338 = vadd.f32 %v4337, %v4275
  %v4339 = vadd.f32 %v4338, %v4276
  %v4340 = vadd.f32 %v4339, %v4277
  %v4341 = vadd.f32 %v4340, %v4278
  %v4342 = vadd.f32 %v4341, %v4279
  %v4343 = vrot.slane %v4342, 4
  %v4344 = vadd.f32 %v4342, %v4343
  %v4345 = vrot.slane %v4344, 2
  %v4346 = vadd.f32 %v4344, %v4345
  %v4347 = vrot.slane %v4346, 1
  %v4348 = vadd.f32 %v4346, %v4347
  %vm4349 = vcmask 1040384
  %v4350 = vsel %vm4349, %v4215, %v4348
  %4351 = vst [vmem:[%s3] sm:$0x3] %v4350
  // Predicated region
  $region10: #{decoder_layer_forward.8} parent=0 // pred_check
    _
  $region11: #{decoder_layer_forward.8} parent=0 // pred_check_branch
    %4353 = sbr.rel (0) target = $region13
  $region12: #{decoder_layer_forward.8} parent=0 // pred_region
    _
  $region13: #{decoder_layer_forward.8} parent=0 // pred_fallthru
    _
  // Predicated region
  $region14: #{decoder_layer_forward.8} parent=0 // pred_check
    _
  $region15: #{decoder_layer_forward.8} parent=0 // pred_check_branch
    %4355 = sbr.rel (0) target = $region17
  $region16: #{decoder_layer_forward.8} parent=0 // pred_region
    _
  $region17: #{decoder_layer_forward.8} parent=0 // pred_fallthru
    _
  // Predicated region
  $region18: #{decoder_layer_forward.8} parent=0 // pred_check
    _
  $region19: #{decoder_layer_forward.8} parent=0 // pred_check_branch
    %4357 = sbr.rel (0) target = $region21
  $region20: #{decoder_layer_forward.8} parent=0 // pred_region
    _
  $region21: #{decoder_layer_forward.8} parent=0 // pred_fallthru
    _
  // Predicated region
  $region22: #{decoder_layer_forward.8} parent=0 // pred_check
    _
  $region23: #{decoder_layer_forward.8} parent=0 // pred_check_branch
    %4359 = sbr.rel (0) target = $region25
  $region24: #{decoder_layer_forward.8} parent=0 // pred_region
    _
  $region25: #{decoder_layer_forward.8} parent=0 // pred_fallthru
    _

// kernel: decoder_layer_forward.11
$region0: #{decoder_layer_forward.11}
  #allocation0 [shape = 'u32[]', space=smem, size = 0x4, offset = 0x4, fixed_abs, tag = 'smem constant byte address 0x4 - core index']
  #allocation1 [shape = 'u32[144,128]{1,0:T(1,128)}', space=vmem, size = 0x12000, scoped, tag = 'internal scratch']
  %s0 = inlined_call_operand.vmem [shape: bf16[1,512,128], index: 0, kind: input, shape index: {}]
  %s1 = inlined_call_operand.vmem [shape: f32[1,128], index: 1, kind: input, shape index: {}]
  %s2 = inlined_call_operand.vmem [shape: f32[1,128], index: 2, kind: input, shape index: {}]
  %s3 = inlined_call_operand.vmem [shape: f32[1,512,128], index: 3, kind: input, shape index: {}, may-alias: {3,4}]
  %s4 = inlined_call_operand.vmem [shape: f32[1,512,128], index: 4, kind: output, shape index: {}, may-alias: {3,4}]
  %s5 = sld [smem:[#allocation0]]
  $region26: #{decoder_layer_forward.11} parent=0
    _
  %s7 = ssub.s32 1, %s5
  %s8 = scalar_select 0, %s7, %s5
  // Predicated region
  $region2: #{decoder_layer_forward.11} parent=0 // pred_check
    _
  $region3: #{decoder_layer_forward.11} parent=0 // pred_check_branch
    %10 = sbr.rel (0) target = $region5
  $region4: #{decoder_layer_forward.11} parent=0 // pred_region
    _
  $region5: #{decoder_layer_forward.11} parent=0 // pred_fallthru
    _
  // Predicated region
  $region6: #{decoder_layer_forward.11} parent=0 // pred_check
    _
  $region7: #{decoder_layer_forward.11} parent=0 // pred_check_branch
    %12 = sbr.rel (0) target = $region9
  $region8: #{decoder_layer_forward.11} parent=0 // pred_region
    _
  $region9: #{decoder_layer_forward.11} parent=0 // pred_fallthru
    _
  // Predicated region
  $region10: #{decoder_layer_forward.11} parent=0 // pred_check
    _
  $region11: #{decoder_layer_forward.11} parent=0 // pred_check_branch
    %14 = sbr.rel (0) target = $region13
  $region12: #{decoder_layer_forward.11} parent=0 // pred_region
    _
  $region13: #{decoder_layer_forward.11} parent=0 // pred_fallthru
    _
  // Predicated region
  $region14: #{decoder_layer_forward.11} parent=0 // pred_check
    _
  $region15: #{decoder_layer_forward.11} parent=0 // pred_check_branch
    %16 = sbr.rel (0) target = $region17
  $region16: #{decoder_layer_forward.11} parent=0 // pred_region
    _
  $region17: #{decoder_layer_forward.11} parent=0 // pred_fallthru
    _
  %v17 = vld [vmem:[%s0] sm:$0xf]
  %v18 = vld [vmem:[%s0 + $0x4] sm:$0xf]
  %v19 = vld [vmem:[%s0 + $0x8] sm:$0xf]
  %v20 = vld [vmem:[%s0 + $0xc] sm:$0xf]
  %v21 = vld [vmem:[%s0 + $0x10] sm:$0xf]
  %v22 = vld [vmem:[%s0 + $0x14] sm:$0xf]
  %v23 = vld [vmem:[%s0 + $0x18] sm:$0xf]
  %v24 = vld [vmem:[%s0 + $0x1c] sm:$0xf]
  %v25 = vld [vmem:[%s0 + $0x20] sm:$0xf]
  %v26 = vld [vmem:[%s0 + $0x24] sm:$0xf]
  %v27 = vld [vmem:[%s0 + $0x28] sm:$0xf]
  %v28 = vld [vmem:[%s0 + $0x2c] sm:$0xf]
  %v29 = vld [vmem:[%s0 + $0x30] sm:$0xf]
  %v30 = vld [vmem:[%s0 + $0x34] sm:$0xf]
  %v31 = vld [vmem:[%s0 + $0x38] sm:$0xf]
  %v32 = vld [vmem:[%s0 + $0x3c] sm:$0xf]
  %v33 = vld [vmem:[%s0 + $0x40] sm:$0xf]
  %v34 = vld [vmem:[%s0 + $0x44] sm:$0xf]
  %v35 = vld [vmem:[%s0 + $0x48] sm:$0xf]
  %v36 = vld [vmem:[%s0 + $0x4c] sm:$0xf]
  %v37 = vld [vmem:[%s0 + $0x50] sm:$0xf]
  %v38 = vld [vmem:[%s0 + $0x54] sm:$0xf]
  %v39 = vld [vmem:[%s0 + $0x58] sm:$0xf]
  %v40 = vld [vmem:[%s0 + $0x5c] sm:$0xf]
  %v41 = vld [vmem:[%s0 + $0x60] sm:$0xf]
  %v42 = vld [vmem:[%s0 + $0x64] sm:$0xf]
  %v43 = vld [vmem:[%s0 + $0x68] sm:$0xf]
  %v44 = vld [vmem:[%s0 + $0x6c] sm:$0xf]
  %v45 = vld [vmem:[%s0 + $0x70] sm:$0xf]
  %v46 = vld [vmem:[%s0 + $0x74] sm:$0xf]
  %v47 = vld [vmem:[%s0 + $0x78] sm:$0xf]
  %v48 = vld [vmem:[%s0 + $0x7c] sm:$0xf]
  %v49 = vld [vmem:[%s0 + $0x80] sm:$0xf]
  %v50 = vld [vmem:[%s0 + $0x84] sm:$0xf]
  %v51 = vld [vmem:[%s0 + $0x88] sm:$0xf]
  %v52 = vld [vmem:[%s0 + $0x8c] sm:$0xf]
  %v53 = vld [vmem:[%s0 + $0x90] sm:$0xf]
  %v54 = vld [vmem:[%s0 + $0x94] sm:$0xf]
  %v55 = vld [vmem:[%s0 + $0x98] sm:$0xf]
  %v56 = vld [vmem:[%s0 + $0x9c] sm:$0xf]
  %v57 = vld [vmem:[%s0 + $0xa0] sm:$0xf]
  %v58 = vld [vmem:[%s0 + $0xa4] sm:$0xf]
  %v59 = vld [vmem:[%s0 + $0xa8] sm:$0xf]
  %v60 = vld [vmem:[%s0 + $0xac] sm:$0xf]
  %v61 = vld [vmem:[%s0 + $0xb0] sm:$0xf]
  %v62 = vld [vmem:[%s0 + $0xb4] sm:$0xf]
  %v63 = vld [vmem:[%s0 + $0xb8] sm:$0xf]
  %v64 = vld [vmem:[%s0 + $0xbc] sm:$0xf]
  %v65 = vld [vmem:[%s0 + $0xc0] sm:$0xf]
  %v66 = vld [vmem:[%s0 + $0xc4] sm:$0xf]
  %v67 = vld [vmem:[%s0 + $0xc8] sm:$0xf]
  %v68 = vld [vmem:[%s0 + $0xcc] sm:$0xf]
  %v69 = vld [vmem:[%s0 + $0xd0] sm:$0xf]
  %v70 = vld [vmem:[%s0 + $0xd4] sm:$0xf]
  %v71 = vld [vmem:[%s0 + $0xd8] sm:$0xf]
  %v72 = vld [vmem:[%s0 + $0xdc] sm:$0xf]
  %v73 = vld [vmem:[%s0 + $0xe0] sm:$0xf]
  %v74 = vld [vmem:[%s0 + $0xe4] sm:$0xf]
  %v75 = vld [vmem:[%s0 + $0xe8] sm:$0xf]
  %v76 = vld [vmem:[%s0 + $0xec] sm:$0xf]
  %v77 = vld [vmem:[%s0 + $0xf0] sm:$0xf]
  %v78 = vld [vmem:[%s0 + $0xf4] sm:$0xf]
  %v79 = vld [vmem:[%s0 + $0xf8] sm:$0xf]
  %v80 = vld [vmem:[%s0 + $0xfc] sm:$0xf]
  %v81 = vunpack.c.l.bf16 %v17
  %v82 = vunpack.c.l.bf16 %v18
  %v83 = vunpack.c.l.bf16 %v19
  %v84 = vunpack.c.l.bf16 %v20
  %v85 = vunpack.c.l.bf16 %v21
  %v86 = vunpack.c.l.bf16 %v22
  %v87 = vunpack.c.l.bf16 %v23
  %v88 = vunpack.c.l.bf16 %v24
  %v89 = vunpack.c.l.bf16 %v25
  %v90 = vunpack.c.l.bf16 %v26
  %v91 = vunpack.c.l.bf16 %v27
  %v92 = vunpack.c.l.bf16 %v28
  %v93 = vunpack.c.l.bf16 %v29
  %v94 = vunpack.c.l.bf16 %v30
  %v95 = vunpack.c.l.bf16 %v31
  %v96 = vunpack.c.l.bf16 %v32
  %v97 = vunpack.c.l.bf16 %v33
  %v98 = vunpack.c.l.bf16 %v34
  %v99 = vunpack.c.l.bf16 %v35
  %v100 = vunpack.c.l.bf16 %v36
  %v101 = vunpack.c.l.bf16 %v37
  %v102 = vunpack.c.l.bf16 %v38
  %v103 = vunpack.c.l.bf16 %v39
  %v104 = vunpack.c.l.bf16 %v40
  %v105 = vunpack.c.l.bf16 %v41
  %v106 = vunpack.c.l.bf16 %v42
  %v107 = vunpack.c.l.bf16 %v43
  %v108 = vunpack.c.l.bf16 %v44
  %v109 = vunpack.c.l.bf16 %v45
  %v110 = vunpack.c.l.bf16 %v46
  %v111 = vunpack.c.l.bf16 %v47
  %v112 = vunpack.c.l.bf16 %v48
  %v113 = vunpack.c.l.bf16 %v49
  %v114 = vunpack.c.l.bf16 %v50
  %v115 = vunpack.c.l.bf16 %v51
  %v116 = vunpack.c.l.bf16 %v52
  %v117 = vunpack.c.l.bf16 %v53
  %v118 = vunpack.c.l.bf16 %v54
  %v119 = vunpack.c.l.bf16 %v55
  %v120 = vunpack.c.l.bf16 %v56
  %v121 = vunpack.c.l.bf16 %v57
  %v122 = vunpack.c.l.bf16 %v58
  %v123 = vunpack.c.l.bf16 %v59
  %v124 = vunpack.c.l.bf16 %v60
  %v125 = vunpack.c.l.bf16 %v61
  %v126 = vunpack.c.l.bf16 %v62
  %v127 = vunpack.c.l.bf16 %v63
  %v128 = vunpack.c.l.bf16 %v64
  %v129 = vunpack.c.l.bf16 %v65
  %v130 = vunpack.c.l.bf16 %v66
  %v131 = vunpack.c.l.bf16 %v67
  %v132 = vunpack.c.l.bf16 %v68
  %v133 = vunpack.c.l.bf16 %v69
  %v134 = vunpack.c.l.bf16 %v70
  %v135 = vunpack.c.l.bf16 %v71
  %v136 = vunpack.c.l.bf16 %v72
  %v137 = vunpack.c.l.bf16 %v73
  %v138 = vunpack.c.l.bf16 %v74
  %v139 = vunpack.c.l.bf16 %v75
  %v140 = vunpack.c.l.bf16 %v76
  %v141 = vunpack.c.l.bf16 %v77
  %v142 = vunpack.c.l.bf16 %v78
  %v143 = vunpack.c.l.bf16 %v79
  %v144 = vunpack.c.l.bf16 %v80
  %v145 = vld [vmem:[%s1] sm:$0x1]
  %v147 = vlaneseq
  %v148 = vshrl.u32 %v147, 7
  %v149 = vsub.s32 0, %v148
  %v150 = vrot.slane %v145, %v149
  %v152 = vmul.f32 %v81, %v150
  %v153 = vmul.f32 %v82, %v150
  %v154 = vmul.f32 %v83, %v150
  %v155 = vmul.f32 %v84, %v150
  %v156 = vmul.f32 %v85, %v150
  %v157 = vmul.f32 %v86, %v150
  %v158 = vmul.f32 %v87, %v150
  %v159 = vmul.f32 %v88, %v150
  %v160 = vmul.f32 %v89, %v150
  %v161 = vmul.f32 %v90, %v150
  %v162 = vmul.f32 %v91, %v150
  %v163 = vmul.f32 %v92, %v150
  %v164 = vmul.f32 %v93, %v150
  %v165 = vmul.f32 %v94, %v150
  %v166 = vmul.f32 %v95, %v150
  %v167 = vmul.f32 %v96, %v150
  %v168 = vmul.f32 %v97, %v150
  %v169 = vmul.f32 %v98, %v150
  %v170 = vmul.f32 %v99, %v150
  %v171 = vmul.f32 %v100, %v150
  %v172 = vmul.f32 %v101, %v150
  %v173 = vmul.f32 %v102, %v150
  %v174 = vmul.f32 %v103, %v150
  %v175 = vmul.f32 %v104, %v150
  %v176 = vmul.f32 %v105, %v150
  %v177 = vmul.f32 %v106, %v150
  %v178 = vmul.f32 %v107, %v150
  %v179 = vmul.f32 %v108, %v150
  %v180 = vmul.f32 %v109, %v150
  %v181 = vmul.f32 %v110, %v150
  %v182 = vmul.f32 %v111, %v150
  %v183 = vmul.f32 %v112, %v150
  %v184 = vmul.f32 %v113, %v150
  %v185 = vmul.f32 %v114, %v150
  %v186 = vmul.f32 %v115, %v150
  %v187 = vmul.f32 %v116, %v150
  %v188 = vmul.f32 %v117, %v150
  %v189 = vmul.f32 %v118, %v150
  %v190 = vmul.f32 %v119, %v150
  %v191 = vmul.f32 %v120, %v150
  %v192 = vmul.f32 %v121, %v150
  %v193 = vmul.f32 %v122, %v150
  %v194 = vmul.f32 %v123, %v150
  %v195 = vmul.f32 %v124, %v150
  %v196 = vmul.f32 %v125, %v150
  %v197 = vmul.f32 %v126, %v150
  %v198 = vmul.f32 %v127, %v150
  %v199 = vmul.f32 %v128, %v150
  %v200 = vmul.f32 %v129, %v150
  %v201 = vmul.f32 %v130, %v150
  %v202 = vmul.f32 %v131, %v150
  %v203 = vmul.f32 %v132, %v150
  %v204 = vmul.f32 %v133, %v150
  %v205 = vmul.f32 %v134, %v150
  %v206 = vmul.f32 %v135, %v150
  %v207 = vmul.f32 %v136, %v150
  %v208 = vmul.f32 %v137, %v150
  %v209 = vmul.f32 %v138, %v150
  %v210 = vmul.f32 %v139, %v150
  %v211 = vmul.f32 %v140, %v150
  %v212 = vmul.f32 %v141, %v150
  %v213 = vmul.f32 %v142, %v150
  %v214 = vmul.f32 %v143, %v150
  %v215 = vmul.f32 %v144, %v150
  %v216 = vld [vmem:[%s2] sm:$0x1]
  %v218 = vlaneseq
  %v219 = vshrl.u32 %v218, 7
  %v220 = vsub.s32 0, %v219
  %v221 = vrot.slane %v216, %v220
  %v223 = vadd.f32 %v152, %v221
  %v224 = vadd.f32 %v153, %v221
  %v225 = vadd.f32 %v154, %v221
  %v226 = vadd.f32 %v155, %v221
  %v227 = vadd.f32 %v156, %v221
  %v228 = vadd.f32 %v157, %v221
  %v229 = vadd.f32 %v158, %v221
  %v230 = vadd.f32 %v159, %v221
  %v231 = vadd.f32 %v160, %v221
  %v232 = vadd.f32 %v161, %v221
  %v233 = vadd.f32 %v162, %v221
  %v234 = vadd.f32 %v163, %v221
  %v235 = vadd.f32 %v164, %v221
  %v236 = vadd.f32 %v165, %v221
  %v237 = vadd.f32 %v166, %v221
  %v238 = vadd.f32 %v167, %v221
  %v239 = vadd.f32 %v168, %v221
  %v240 = vadd.f32 %v169, %v221
  %v241 = vadd.f32 %v170, %v221
  %v242 = vadd.f32 %v171, %v221
  %v243 = vadd.f32 %v172, %v221
  %v244 = vadd.f32 %v173, %v221
  %v245 = vadd.f32 %v174, %v221
  %v246 = vadd.f32 %v175, %v221
  %v247 = vadd.f32 %v176, %v221
  %v248 = vadd.f32 %v177, %v221
  %v249 = vadd.f32 %v178, %v221
  %v250 = vadd.f32 %v179, %v221
  %v251 = vadd.f32 %v180, %v221
  %v252 = vadd.f32 %v181, %v221
  %v253 = vadd.f32 %v182, %v221
  %v254 = vadd.f32 %v183, %v221
  %v255 = vadd.f32 %v184, %v221
  %v256 = vadd.f32 %v185, %v221
  %v257 = vadd.f32 %v186, %v221
  %v258 = vadd.f32 %v187, %v221
  %v259 = vadd.f32 %v188, %v221
  %v260 = vadd.f32 %v189, %v221
  %v261 = vadd.f32 %v190, %v221
  %v262 = vadd.f32 %v191, %v221
  %v263 = vadd.f32 %v192, %v221
  %v264 = vadd.f32 %v193, %v221
  %v265 = vadd.f32 %v194, %v221
  %v266 = vadd.f32 %v195, %v221
  %v267 = vadd.f32 %v196, %v221
  %v268 = vadd.f32 %v197, %v221
  %v269 = vadd.f32 %v198, %v221
  %v270 = vadd.f32 %v199, %v221
  %v271 = vadd.f32 %v200, %v221
  %v272 = vadd.f32 %v201, %v221
  %v273 = vadd.f32 %v202, %v221
  %v274 = vadd.f32 %v203, %v221
  %v275 = vadd.f32 %v204, %v221
  %v276 = vadd.f32 %v205, %v221
  %v277 = vadd.f32 %v206, %v221
  %v278 = vadd.f32 %v207, %v221
  %v279 = vadd.f32 %v208, %v221
  %v280 = vadd.f32 %v209, %v221
  %v281 = vadd.f32 %v210, %v221
  %v282 = vadd.f32 %v211, %v221
  %v283 = vadd.f32 %v212, %v221
  %v284 = vadd.f32 %v213, %v221
  %v285 = vadd.f32 %v214, %v221
  %v286 = vadd.f32 %v215, %v221
  %v287 = vmul.f32 %v223, 0.01
  %v288 = vmul.f32 %v224, 0.01
  %v289 = vmul.f32 %v225, 0.01
  %v290 = vmul.f32 %v226, 0.01
  %v291 = vmul.f32 %v227, 0.01
  %v292 = vmul.f32 %v228, 0.01
  %v293 = vmul.f32 %v229, 0.01
  %v294 = vmul.f32 %v230, 0.01
  %v295 = vmul.f32 %v231, 0.01
  %v296 = vmul.f32 %v232, 0.01
  %v297 = vmul.f32 %v233, 0.01
  %v298 = vmul.f32 %v234, 0.01
  %v299 = vmul.f32 %v235, 0.01
  %v300 = vmul.f32 %v236, 0.01
  %v301 = vmul.f32 %v237, 0.01
  %v302 = vmul.f32 %v238, 0.01
  %v303 = vmul.f32 %v239, 0.01
  %v304 = vmul.f32 %v240, 0.01
  %v305 = vmul.f32 %v241, 0.01
  %v306 = vmul.f32 %v242, 0.01
  %v307 = vmul.f32 %v243, 0.01
  %v308 = vmul.f32 %v244, 0.01
  %v309 = vmul.f32 %v245, 0.01
  %v310 = vmul.f32 %v246, 0.01
  %v311 = vmul.f32 %v247, 0.01
  %v312 = vmul.f32 %v248, 0.01
  %v313 = vmul.f32 %v249, 0.01
  %v314 = vmul.f32 %v250, 0.01
  %v315 = vmul.f32 %v251, 0.01
  %v316 = vmul.f32 %v252, 0.01
  %v317 = vmul.f32 %v253, 0.01
  %v318 = vmul.f32 %v254, 0.01
  %v319 = vmul.f32 %v255, 0.01
  %v320 = vmul.f32 %v256, 0.01
  %v321 = vmul.f32 %v257, 0.01
  %v322 = vmul.f32 %v258, 0.01
  %v323 = vmul.f32 %v259, 0.01
  %v324 = vmul.f32 %v260, 0.01
  %v325 = vmul.f32 %v261, 0.01
  %v326 = vmul.f32 %v262, 0.01
  %v327 = vmul.f32 %v263, 0.01
  %v328 = vmul.f32 %v264, 0.01
  %v329 = vmul.f32 %v265, 0.01
  %v330 = vmul.f32 %v266, 0.01
  %v331 = vmul.f32 %v267, 0.01
  %v332 = vmul.f32 %v268, 0.01
  %v333 = vmul.f32 %v269, 0.01
  %v334 = vmul.f32 %v270, 0.01
  %v335 = vmul.f32 %v271, 0.01
  %v336 = vmul.f32 %v272, 0.01
  %v337 = vmul.f32 %v273, 0.01
  %v338 = vmul.f32 %v274, 0.01
  %v339 = vmul.f32 %v275, 0.01
  %v340 = vmul.f32 %v276, 0.01
  %v341 = vmul.f32 %v277, 0.01
  %v342 = vmul.f32 %v278, 0.01
  %v343 = vmul.f32 %v279, 0.01
  %v344 = vmul.f32 %v280, 0.01
  %v345 = vmul.f32 %v281, 0.01
  %v346 = vmul.f32 %v282, 0.01
  %v347 = vmul.f32 %v283, 0.01
  %v348 = vmul.f32 %v284, 0.01
  %v349 = vmul.f32 %v285, 0.01
  %v350 = vmul.f32 %v286, 0.01
  %v351 = vmax.f32 %v223, %v287
  %v352 = vmax.f32 %v224, %v288
  %v353 = vmax.f32 %v225, %v289
  %v354 = vmax.f32 %v226, %v290
  %v355 = vmax.f32 %v227, %v291
  %v356 = vmax.f32 %v228, %v292
  %v357 = vmax.f32 %v229, %v293
  %v358 = vmax.f32 %v230, %v294
  %v359 = vmax.f32 %v231, %v295
  %v360 = vmax.f32 %v232, %v296
  %v361 = vmax.f32 %v233, %v297
  %v362 = vmax.f32 %v234, %v298
  %v363 = vmax.f32 %v235, %v299
  %v364 = vmax.f32 %v236, %v300
  %v365 = vmax.f32 %v237, %v301
  %v366 = vmax.f32 %v238, %v302
  %v367 = vmax.f32 %v239, %v303
  %v368 = vmax.f32 %v240, %v304
  %v369 = vmax.f32 %v241, %v305
  %v370 = vmax.f32 %v242, %v306
  %v371 = vmax.f32 %v243, %v307
  %v372 = vmax.f32 %v244, %v308
  %v373 = vmax.f32 %v245, %v309
  %v374 = vmax.f32 %v246, %v310
  %v375 = vmax.f32 %v247, %v311
  %v376 = vmax.f32 %v248, %v312
  %v377 = vmax.f32 %v249, %v313
  %v378 = vmax.f32 %v250, %v314
  %v379 = vmax.f32 %v251, %v315
  %v380 = vmax.f32 %v252, %v316
  %v381 = vmax.f32 %v253, %v317
  %v382 = vmax.f32 %v254, %v318
  %v383 = vmax.f32 %v255, %v319
  %v384 = vmax.f32 %v256, %v320
  %v385 = vmax.f32 %v257, %v321
  %v386 = vmax.f32 %v258, %v322
  %v387 = vmax.f32 %v259, %v323
  %v388 = vmax.f32 %v260, %v324
  %v389 = vmax.f32 %v261, %v325
  %v390 = vmax.f32 %v262, %v326
  %v391 = vmax.f32 %v263, %v327
  %v392 = vmax.f32 %v264, %v328
  %v393 = vmax.f32 %v265, %v329
  %v394 = vmax.f32 %v266, %v330
  %v395 = vmax.f32 %v267, %v331
  %v396 = vmax.f32 %v268, %v332
  %v397 = vmax.f32 %v269, %v333
  %v398 = vmax.f32 %v270, %v334
  %v399 = vmax.f32 %v271, %v335
  %v400 = vmax.f32 %v272, %v336
  %v401 = vmax.f32 %v273, %v337
  %v402 = vmax.f32 %v274, %v338
  %v403 = vmax.f32 %v275, %v339
  %v404 = vmax.f32 %v276, %v340
  %v405 = vmax.f32 %v277, %v341
  %v406 = vmax.f32 %v278, %v342
  %v407 = vmax.f32 %v279, %v343
  %v408 = vmax.f32 %v280, %v344
  %v409 = vmax.f32 %v281, %v345
  %v410 = vmax.f32 %v282, %v346
  %v411 = vmax.f32 %v283, %v347
  %v412 = vmax.f32 %v284, %v348
  %v413 = vmax.f32 %v285, %v349
  %v414 = vmax.f32 %v286, %v350
  %v415 = vld [vmem:[%s3] sm:$0xff]
  %v416 = vld [vmem:[%s3 + $0x8] sm:$0xff]
  %v417 = vld [vmem:[%s3 + $0x10] sm:$0xff]
  %v418 = vld [vmem:[%s3 + $0x18] sm:$0xff]
  %v419 = vld [vmem:[%s3 + $0x20] sm:$0xff]
  %v420 = vld [vmem:[%s3 + $0x28] sm:$0xff]
  %v421 = vld [vmem:[%s3 + $0x30] sm:$0xff]
  %v422 = vld [vmem:[%s3 + $0x38] sm:$0xff]
  %v423 = vld [vmem:[%s3 + $0x40] sm:$0xff]
  %v424 = vld [vmem:[%s3 + $0x48] sm:$0xff]
  %v425 = vld [vmem:[%s3 + $0x50] sm:$0xff]
  %v426 = vld [vmem:[%s3 + $0x58] sm:$0xff]
  %v427 = vld [vmem:[%s3 + $0x60] sm:$0xff]
  %v428 = vld [vmem:[%s3 + $0x68] sm:$0xff]
  %v429 = vld [vmem:[%s3 + $0x70] sm:$0xff]
  %v430 = vld [vmem:[%s3 + $0x78] sm:$0xff]
  %v431 = vld [vmem:[%s3 + $0x80] sm:$0xff]
  %v432 = vld [vmem:[%s3 + $0x88] sm:$0xff]
  %v433 = vld [vmem:[%s3 + $0x90] sm:$0xff]
  %v434 = vld [vmem:[%s3 + $0x98] sm:$0xff]
  %v435 = vld [vmem:[%s3 + $0xa0] sm:$0xff]
  %v436 = vld [vmem:[%s3 + $0xa8] sm:$0xff]
  %v437 = vld [vmem:[%s3 + $0xb0] sm:$0xff]
  %v438 = vld [vmem:[%s3 + $0xb8] sm:$0xff]
  %v439 = vld [vmem:[%s3 + $0xc0] sm:$0xff]
  %v440 = vld [vmem:[%s3 + $0xc8] sm:$0xff]
  %v441 = vld [vmem:[%s3 + $0xd0] sm:$0xff]
  %v442 = vld [vmem:[%s3 + $0xd8] sm:$0xff]
  %v443 = vld [vmem:[%s3 + $0xe0] sm:$0xff]
  %v444 = vld [vmem:[%s3 + $0xe8] sm:$0xff]
  %v445 = vld [vmem:[%s3 + $0xf0] sm:$0xff]
  %v446 = vld [vmem:[%s3 + $0xf8] sm:$0xff]
  %v447 = vld [vmem:[%s3 + $0x100] sm:$0xff]
  %v448 = vld [vmem:[%s3 + $0x108] sm:$0xff]
  %v449 = vld [vmem:[%s3 + $0x110] sm:$0xff]
  %v450 = vld [vmem:[%s3 + $0x118] sm:$0xff]
  %v451 = vld [vmem:[%s3 + $0x120] sm:$0xff]
  %v452 = vld [vmem:[%s3 + $0x128] sm:$0xff]
  %v453 = vld [vmem:[%s3 + $0x130] sm:$0xff]
  %v454 = vld [vmem:[%s3 + $0x138] sm:$0xff]
  %v455 = vld [vmem:[%s3 + $0x140] sm:$0xff]
  %v456 = vld [vmem:[%s3 + $0x148] sm:$0xff]
  %v457 = vld [vmem:[%s3 + $0x150] sm:$0xff]
  %v458 = vld [vmem:[%s3 + $0x158] sm:$0xff]
  %v459 = vld [vmem:[%s3 + $0x160] sm:$0xff]
  %v460 = vld [vmem:[%s3 + $0x168] sm:$0xff]
  %v461 = vld [vmem:[%s3 + $0x170] sm:$0xff]
  %v462 = vld [vmem:[%s3 + $0x178] sm:$0xff]
  %v463 = vld [vmem:[%s3 + $0x180] sm:$0xff]
  %v464 = vld [vmem:[%s3 + $0x188] sm:$0xff]
  %v465 = vld [vmem:[%s3 + $0x190] sm:$0xff]
  %v466 = vld [vmem:[%s3 + $0x198] sm:$0xff]
  %v467 = vld [vmem:[%s3 + $0x1a0] sm:$0xff]
  %v468 = vld [vmem:[%s3 + $0x1a8] sm:$0xff]
  %v469 = vld [vmem:[%s3 + $0x1b0] sm:$0xff]
  %v470 = vld [vmem:[%s3 + $0x1b8] sm:$0xff]
  %v471 = vld [vmem:[%s3 + $0x1c0] sm:$0xff]
  %v472 = vld [vmem:[%s3 + $0x1c8] sm:$0xff]
  %v473 = vld [vmem:[%s3 + $0x1d0] sm:$0xff]
  %v474 = vld [vmem:[%s3 + $0x1d8] sm:$0xff]
  %v475 = vld [vmem:[%s3 + $0x1e0] sm:$0xff]
  %v476 = vld [vmem:[%s3 + $0x1e8] sm:$0xff]
  %v477 = vld [vmem:[%s3 + $0x1f0] sm:$0xff]
  %v478 = vld [vmem:[%s3 + $0x1f8] sm:$0xff]
  %v479 = vadd.f32 %v415, %v351
  %v480 = vadd.f32 %v416, %v352
  %v481 = vadd.f32 %v417, %v353
  %v482 = vadd.f32 %v418, %v354
  %v483 = vadd.f32 %v419, %v355
  %v484 = vadd.f32 %v420, %v356
  %v485 = vadd.f32 %v421, %v357
  %v486 = vadd.f32 %v422, %v358
  %v487 = vadd.f32 %v423, %v359
  %v488 = vadd.f32 %v424, %v360
  %v489 = vadd.f32 %v425, %v361
  %v490 = vadd.f32 %v426, %v362
  %v491 = vadd.f32 %v427, %v363
  %v492 = vadd.f32 %v428, %v364
  %v493 = vadd.f32 %v429, %v365
  %v494 = vadd.f32 %v430, %v366
  %v495 = vadd.f32 %v431, %v367
  %v496 = vadd.f32 %v432, %v368
  %v497 = vadd.f32 %v433, %v369
  %v498 = vadd.f32 %v434, %v370
  %v499 = vadd.f32 %v435, %v371
  %v500 = vadd.f32 %v436, %v372
  %v501 = vadd.f32 %v437, %v373
  %v502 = vadd.f32 %v438, %v374
  %v503 = vadd.f32 %v439, %v375
  %v504 = vadd.f32 %v440, %v376
  %v505 = vadd.f32 %v441, %v377
  %v506 = vadd.f32 %v442, %v378
  %v507 = vadd.f32 %v443, %v379
  %v508 = vadd.f32 %v444, %v380
  %v509 = vadd.f32 %v445, %v381
  %v510 = vadd.f32 %v446, %v382
  %v511 = vadd.f32 %v447, %v383
  %v512 = vadd.f32 %v448, %v384
  %v513 = vadd.f32 %v449, %v385
  %v514 = vadd.f32 %v450, %v386
  %v515 = vadd.f32 %v451, %v387
  %v516 = vadd.f32 %v452, %v388
  %v517 = vadd.f32 %v453, %v389
  %v518 = vadd.f32 %v454, %v390
  %v519 = vadd.f32 %v455, %v391
  %v520 = vadd.f32 %v456, %v392
  %v521 = vadd.f32 %v457, %v393
  %v522 = vadd.f32 %v458, %v394
  %v523 = vadd.f32 %v459, %v395
  %v524 = vadd.f32 %v460, %v396
  %v525 = vadd.f32 %v461, %v397
  %v526 = vadd.f32 %v462, %v398
  %v527 = vadd.f32 %v463, %v399
  %v528 = vadd.f32 %v464, %v400
  %v529 = vadd.f32 %v465, %v401
  %v530 = vadd.f32 %v466, %v402
  %v531 = vadd.f32 %v467, %v403
  %v532 = vadd.f32 %v468, %v404
  %v533 = vadd.f32 %v469, %v405
  %v534 = vadd.f32 %v470, %v406
  %v535 = vadd.f32 %v471, %v407
  %v536 = vadd.f32 %v472, %v408
  %v537 = vadd.f32 %v473, %v409
  %v538 = vadd.f32 %v474, %v410
  %v539 = vadd.f32 %v475, %v411
  %v540 = vadd.f32 %v476, %v412
  %v541 = vadd.f32 %v477, %v413
  %v542 = vadd.f32 %v478, %v414
  %543 = vst [vmem:[%s4] sm:$0xff] %v479
  %544 = vst [vmem:[%s4 + $0x8] sm:$0xff] %v480
  %545 = vst [vmem:[%s4 + $0x10] sm:$0xff] %v481
  %546 = vst [vmem:[%s4 + $0x18] sm:$0xff] %v482
  %547 = vst [vmem:[%s4 + $0x20] sm:$0xff] %v483
  %548 = vst [vmem:[%s4 + $0x28] sm:$0xff] %v484
  %549 = vst [vmem:[%s4 + $0x30] sm:$0xff] %v485
  %550 = vst [vmem:[%s4 + $0x38] sm:$0xff] %v486
  %551 = vst [vmem:[%s4 + $0x40] sm:$0xff] %v487
  %552 = vst [vmem:[%s4 + $0x48] sm:$0xff] %v488
  %553 = vst [vmem:[%s4 + $0x50] sm:$0xff] %v489
  %554 = vst [vmem:[%s4 + $0x58] sm:$0xff] %v490
  %555 = vst [vmem:[%s4 + $0x60] sm:$0xff] %v491
  %556 = vst [vmem:[%s4 + $0x68] sm:$0xff] %v492
  %557 = vst [vmem:[%s4 + $0x70] sm:$0xff] %v493
  %558 = vst [vmem:[%s4 + $0x78] sm:$0xff] %v494
  %559 = vst [vmem:[%s4 + $0x80] sm:$0xff] %v495
  %560 = vst [vmem:[%s4 + $0x88] sm:$0xff] %v496
  %561 = vst [vmem:[%s4 + $0x90] sm:$0xff] %v497
  %562 = vst [vmem:[%s4 + $0x98] sm:$0xff] %v498
  %563 = vst [vmem:[%s4 + $0xa0] sm:$0xff] %v499
  %564 = vst [vmem:[%s4 + $0xa8] sm:$0xff] %v500
  %565 = vst [vmem:[%s4 + $0xb0] sm:$0xff] %v501
  %566 = vst [vmem:[%s4 + $0xb8] sm:$0xff] %v502
  %567 = vst [vmem:[%s4 + $0xc0] sm:$0xff] %v503
  %568 = vst [vmem:[%s4 + $0xc8] sm:$0xff] %v504
  %569 = vst [vmem:[%s4 + $0xd0] sm:$0xff] %v505
  %570 = vst [vmem:[%s4 + $0xd8] sm:$0xff] %v506
  %571 = vst [vmem:[%s4 + $0xe0] sm:$0xff] %v507
  %572 = vst [vmem:[%s4 + $0xe8] sm:$0xff] %v508
  %573 = vst [vmem:[%s4 + $0xf0] sm:$0xff] %v509
  %574 = vst [vmem:[%s4 + $0xf8] sm:$0xff] %v510
  %575 = vst [vmem:[%s4 + $0x100] sm:$0xff] %v511
  %576 = vst [vmem:[%s4 + $0x108] sm:$0xff] %v512
  %577 = vst [vmem:[%s4 + $0x110] sm:$0xff] %v513
  %578 = vst [vmem:[%s4 + $0x118] sm:$0xff] %v514
  %579 = vst [vmem:[%s4 + $0x120] sm:$0xff] %v515
  %580 = vst [vmem:[%s4 + $0x128] sm:$0xff] %v516
  %581 = vst [vmem:[%s4 + $0x130] sm:$0xff] %v517
  %582 = vst [vmem:[%s4 + $0x138] sm:$0xff] %v518
  %583 = vst [vmem:[%s4 + $0x140] sm:$0xff] %v519
  %584 = vst [vmem:[%s4 + $0x148] sm:$0xff] %v520
  %585 = vst [vmem:[%s4 + $0x150] sm:$0xff] %v521
  %586 = vst [vmem:[%s4 + $0x158] sm:$0xff] %v522
  %587 = vst [vmem:[%s4 + $0x160] sm:$0xff] %v523
  %588 = vst [vmem:[%s4 + $0x168] sm:$0xff] %v524
  %589 = vst [vmem:[%s4 + $0x170] sm:$0xff] %v525
  %590 = vst [vmem:[%s4 + $0x178] sm:$0xff] %v526
  %591 = vst [vmem:[%s4 + $0x180] sm:$0xff] %v527
  %592 = vst [vmem:[%s4 + $0x188] sm:$0xff] %v528
  %593 = vst [vmem:[%s4 + $0x190] sm:$0xff] %v529
  %594 = vst [vmem:[%s4 + $0x198] sm:$0xff] %v530
  %595 = vst [vmem:[%s4 + $0x1a0] sm:$0xff] %v531
  %596 = vst [vmem:[%s4 + $0x1a8] sm:$0xff] %v532
  %597 = vst [vmem:[%s4 + $0x1b0] sm:$0xff] %v533
  %598 = vst [vmem:[%s4 + $0x1b8] sm:$0xff] %v534
  %599 = vst [vmem:[%s4 + $0x1c0] sm:$0xff] %v535
  %600 = vst [vmem:[%s4 + $0x1c8] sm:$0xff] %v536
  %601 = vst [vmem:[%s4 + $0x1d0] sm:$0xff] %v537
  %602 = vst [vmem:[%s4 + $0x1d8] sm:$0xff] %v538
  %603 = vst [vmem:[%s4 + $0x1e0] sm:$0xff] %v539
  %604 = vst [vmem:[%s4 + $0x1e8] sm:$0xff] %v540
  %605 = vst [vmem:[%s4 + $0x1f0] sm:$0xff] %v541
  %606 = vst [vmem:[%s4 + $0x1f8] sm:$0xff] %v542
  // Predicated region
  $region18: #{decoder_layer_forward.11} parent=0 // pred_check
    _
  $region19: #{decoder_layer_forward.11} parent=0 // pred_check_branch
    %608 = sbr.rel (0) target = $region21
  $region20: #{decoder_layer_forward.11} parent=0 // pred_region
    _
  $region21: #{decoder_layer_forward.11} parent=0 // pred_fallthru
    _
  // Predicated region
  $region22: #{decoder_layer_forward.11} parent=0 // pred_check
    _
  $region23: #{decoder_layer_forward.11} parent=0 // pred_check_branch
    %610 = sbr.rel (0) target = $region25
  $region24: #{decoder_layer_forward.11} parent=0 // pred_region
    _
  $region25: #{decoder_layer_forward.11} parent=0 // pred_fallthru
    _

</llo_original>
